<compile_context>
chip_gen: v5e
topology: v5e:2x2
jax: 0.10.0
libtpu: 0.0.40
codegen_flags: <defaults>
</compile_context>

<pallas_src>
import functools

import numpy as np
import jax
import jax.numpy as jnp
from jax.experimental import pallas as pl
from jax.experimental.pallas import tpu as pltpu


# ----------------------------- fused Pallas kernel ---------------------------

def _fused_prox_kernel(theta_ref, masks_ref, x_ref, w_ref, b_ref,
                       x_out_ref, xs_out_ref, *, img_w: int):
    """conv1..4 -> soft-threshold -> conv5..8 for one block of images, fully in VMEM.

    theta_ref : (1,)              SMEM  soft-threshold parameter
    masks_ref : (9, L)            VMEM  per-tap boundary masks (one row per tap)
    x_ref     : (Cmax, L)         VMEM  input slab, channel-major, lane = batch*space
    w_ref     : (8*9, Cmax, Cmax) VMEM  weights: [layer*9 + tap, cout, cin]
    b_ref     : (8, Cmax, 1)      VMEM  biases
    x_out_ref : (Cmax, L)         VMEM  conv8 output (padded channels/lanes discarded)
    xs_out_ref: (Cmax, L)         VMEM  soft-thresholded conv4 output
    """
    cmax, lanes = x_ref.shape
    theta = theta_ref[0]

    # Lane shift implementing tap (oy, ox): out[p] = act[p + oy*W + ox].  Wrap across
    # row / image / lane-padding boundaries is zeroed by the per-tap masks.
    shifts = [(-((t // 3 - 1) * img_w + (t % 3 - 1))) % lanes for t in range(9)]

    def conv3x3_relu(act, layer):
        # Bias seeds the accumulator (no separate broadcast+add afterwards).
        acc = jnp.broadcast_to(b_ref[layer], (cmax, lanes))
        # 9 accumulating K=cmax dots: taps only ever live as vregs feeding the MXU
        # (no concatenated (9*cmax, L) patch slab, no intermediate vector stores).
        for t, s in enumerate(shifts):
            tap = act if s == 0 else pltpu.roll(act, s, axis=1)   # XLU, cheap
            tap = tap * masks_ref[pl.ds(t, 1), :]                 # (cmax,L) * (1,L)
            acc = acc + jnp.dot(w_ref[layer * 9 + t], tap,
                                preferred_element_type=jnp.float32)
        return jnp.maximum(acc, 0.0)

    act = x_ref[...]
    for layer in range(4):
        act = conv3x3_relu(act, layer)

    # Soft threshold: sign(x)*relu(|x|-theta) == x - clip(x, -theta, theta)
    xs = act - jnp.clip(act, -theta, theta)
    xs_out_ref[...] = xs

    act = xs
    for layer in range(4, 8):
        act = conv3x3_relu(act, layer)
    x_out_ref[...] = act


# ------------------------------ block planning --------------------------------

def _round_up(x, m):
    return -(-x // m) * m


def _plan_blocks(n, hw):
    """Returns (images/block, #blocks, padded batch, padded lane width per block)."""
    target_blocks = 2 if n >= 2 else 1            # keep both v7x TensorCores busy
    imgs_per_block = max(1, n // target_blocks)
    num_blocks = -(-n // imgs_per_block)
    n_padded = num_blocks * imgs_per_block
    block_lanes = _round_up(imgs_per_block * hw, 128)   # lane-dense, unmasked stores
    return imgs_per_block, num_blocks, n_padded, block_lanes


def make_tap_masks(h, w, imgs_per_block, block_lanes):
    """(9, block_lanes) validity masks for the 3x3 'same' conv taps over one block."""
    hw = h * w
    yy = np.arange(hw) // w
    xx = np.arange(hw) % w
    m9 = np.zeros((9, hw), np.float32)
    for t in range(9):
        oy, ox = t // 3 - 1, t % 3 - 1
        m9[t] = ((yy + oy >= 0) & (yy + oy < h) &
                 (xx + ox >= 0) & (xx + ox < w)).astype(np.float32)
    m9 = np.tile(m9, (1, imgs_per_block))              # same mask for every image in block
    if block_lanes > m9.shape[1]:
        m9 = np.pad(m9, ((0, 0), (0, block_lanes - m9.shape[1])))   # padded lanes masked out
    return jnp.asarray(m9)


# ------------------------------- JAX wrapper ---------------------------------

@functools.partial(jax.jit, static_argnames=("channel", "hidden"))
def proximal_mapping_forward(kparams, x_nchw, *, channel, hidden):
    """Matches Proximal_Mapping.forward; returns (x, xs) in NCHW layout."""
    w_all, b_all, theta = kparams["w"], kparams["b"], kparams["theta"]

    n, cin, h, w = x_nchw.shape
    cmax = w_all.shape[1]
    hw = h * w
    ipb, nblk, n_pad, block_lanes = _plan_blocks(n, hw)

    # NCHW -> channel-major (cmax, nblk*block_lanes): zero-pad channels, batch remainder,
    # and each block's lane axis (padding columns carry zero masks -> results discarded).
    x_cm = jnp.transpose(x_nchw, (1, 0, 2, 3)).reshape(cin, n, hw)
    x_cm = jnp.pad(x_cm, ((0, cmax - cin), (0, n_pad - n), (0, 0)))
    x_cm = x_cm.reshape(cmax, nblk, ipb * hw)
    x_cm = jnp.pad(x_cm, ((0, 0), (0, 0), (0, block_lanes - ipb * hw)))
    x_cm = x_cm.reshape(cmax, nblk * block_lanes)

    masks = make_tap_masks(h, w, ipb, block_lanes)       # trace-time constant

    kernel = functools.partial(_fused_prox_kernel, img_w=w)
    x_out, xs_out = pl.pallas_call(
        kernel,
        out_shape=(jax.ShapeDtypeStruct((cmax, nblk * block_lanes), jnp.float32),
                   jax.ShapeDtypeStruct((cmax, nblk * block_lanes), jnp.float32)),
        grid=(nblk,),
        in_specs=[
            pl.BlockSpec(memory_space=pltpu.MemorySpace.SMEM),       # theta scalar
            pl.BlockSpec(masks.shape, lambda i: (0, 0)),             # tap masks (shared)
            pl.BlockSpec((cmax, block_lanes), lambda i: (0, i)),     # this block's images
            pl.BlockSpec(w_all.shape, lambda i: (0, 0, 0)),          # all weights (shared)
            pl.BlockSpec(b_all.shape, lambda i: (0, 0, 0)),          # all biases (shared)
        ],
        out_specs=(pl.BlockSpec((cmax, block_lanes), lambda i: (0, i)),
                   pl.BlockSpec((cmax, block_lanes), lambda i: (0, i))),
        compiler_params=pltpu.CompilerParams(
            dimension_semantics=("parallel",)),
    )(theta, masks, x_cm, w_all, b_all)

    def unflatten(a):
        a = a.reshape(cmax, nblk, block_lanes)[:, :, :ipb * hw]
        a = a.reshape(cmax, n_pad, h, w)[:, :n]
        return jnp.transpose(a, (1, 0, 2, 3))

    return unflatten(x_out)[:, :channel], unflatten(xs_out)[:, :hidden]


# --------------------------- parameter preparation ---------------------------

def stack_params(layers, cmax):
    """Stack per-layer OIHW weights into per-tap (cmax x cmax) tiles + biases, zero-padded."""
    nlayers = len(layers)
    w_all = np.zeros((nlayers * 9, cmax, cmax), np.float32)
    b_all = np.zeros((nlayers, cmax, 1), np.float32)
    for l, (wgt, bias) in enumerate(layers):
        wgt = np.asarray(wgt)
        cout, cin = wgt.shape[0], wgt.shape[1]
        for ky in range(3):
            for kx in range(3):
                t = ky * 3 + kx
                w_all[l * 9 + t, :cout, :cin] = wgt[:, :, ky, kx]
        b_all[l, :cout, 0] = np.asarray(bias)
    return jnp.asarray(w_all), jnp.asarray(b_all)


def init_layers(key, channel, multiplier):
    hidden = 8 * multiplier
    dims = [(channel, hidden)] + [(hidden, hidden)] * 6 + [(hidden, channel)]
    layers = []
    for k, (cin, cout) in zip(jax.random.split(key, len(dims)), dims):
        kw, kb = jax.random.split(k)
        bound = 1.0 / np.sqrt(cin * 9)                      # PyTorch Conv2d default init
        wgt = jax.random.uniform(kw, (cout, cin, 3, 3), jnp.float32, -bound, bound)  # OIHW
        bias = jax.random.uniform(kb, (cout,), jnp.float32, -bound, bound)
        layers.append((wgt, bias))
    return layers


# ------------------------ pure-JAX reference (check) --------------------------

def reference_forward(layers, theta, x_nchw):
    def conv(x, wgt, bias):
        y = jax.lax.conv_general_dilated(
            x, wgt, window_strides=(1, 1), padding="SAME",
            dimension_numbers=("NCHW", "OIHW", "NCHW"))
        return jax.nn.relu(y + bias.reshape(1, -1, 1, 1))
    x = x_nchw
    for l in range(4):
        x = conv(x, *layers[l])
    xs = jnp.sign(x) * jax.nn.relu(jnp.abs(x) - theta[0])
    x = xs
    for l in range(4, 8):
        x = conv(x, *layers[l])
    return x, xs


# ----------------------------------- main -------------------------------------

if __name__ == "__main__":
    channel, multiplier = 4, 1
    hidden = 8 * multiplier
    H, W = 16, 16

    key = jax.random.PRNGKey(0)
    kparam, kx = jax.random.split(key)
    layers = init_layers(kparam, channel, multiplier)
    theta = jnp.full((1,), 0.01, jnp.float32)               # torch.ones(1) * 0.01

    cmax = max(channel, hidden)
    w_all, b_all = stack_params(layers, cmax)
    kparams = {"w": w_all, "b": b_all, "theta": theta}

    # Primary check: batch 4 -> 2 grid blocks x 2 images folded into the lane axis.
    x4 = jax.random.normal(kx, (4, channel, H, W), jnp.float32)
    out_x, out_xs = proximal_mapping_forward(kparams, x4, channel=channel, hidden=hidden)
    jax.block_until_ready((out_x, out_xs))
    ref_x, ref_xs = reference_forward(layers, theta, x4)
    np.testing.assert_allclose(np.asarray(out_x), np.asarray(ref_x), rtol=1e-4, atol=1e-4)
    np.testing.assert_allclose(np.asarray(out_xs), np.asarray(ref_xs), rtol=1e-4, atol=1e-4)

    # Secondary check: batch 2 -> 2 blocks x 1 image (v7x-friendly minimum grid).
    x2 = x4[:2]
    out_x2, out_xs2 = proximal_mapping_forward(kparams, x2, channel=channel, hidden=hidden)
    jax.block_until_ready((out_x2, out_xs2))
    ref_x2, ref_xs2 = reference_forward(layers, theta, x2)
    np.testing.assert_allclose(np.asarray(out_x2), np.asarray(ref_x2), rtol=1e-4, atol=1e-4)
    np.testing.assert_allclose(np.asarray(out_xs2), np.asarray(ref_xs2), rtol=1e-4, atol=1e-4)

    print("KERNEL_OK")
</pallas_src>

<mosaic_0001>
module attributes {stable_mosaic.version = 11 : i64} {
  func.func @_fused_prox_kernel(%arg0: i32, %arg1: memref<1xf32, #tpu.memory_space<smem>>, %arg2: memref<9x512xf32, #tpu.memory_space<vmem>>, %arg3: memref<8x512xf32, #tpu.memory_space<vmem>>, %arg4: memref<72x8x8xf32, #tpu.memory_space<vmem>>, %arg5: memref<8x8x1xf32, #tpu.memory_space<vmem>>, %arg6: memref<8x512xf32, #tpu.memory_space<vmem>>, %arg7: memref<8x512xf32, #tpu.memory_space<vmem>>) attributes {dimension_semantics = [#tpu.dimension_semantics<parallel>], iteration_bounds = array<i64: 2>, scalar_prefetch = 0 : i64, scratch_operands = 0 : i64, tpu.core_type = #tpu.core_type<tc>, window_params = [{transform_indices = @transform_0, window_bounds = array<i64: 1>}, {pipeline_mode = #tpu.pipeline_mode<synchronous>, transform_indices = @transform_1, window_bounds = array<i64: 9, 512>}, {transform_indices = @transform_2, window_bounds = array<i64: 8, 512>}, {pipeline_mode = #tpu.pipeline_mode<synchronous>, transform_indices = @transform_3, window_bounds = array<i64: 72, 8, 8>}, {pipeline_mode = #tpu.pipeline_mode<synchronous>, transform_indices = @transform_4, window_bounds = array<i64: 8, 8, 1>}, {transform_indices = @transform_5, window_bounds = array<i64: 8, 512>}, {transform_indices = @transform_6, window_bounds = array<i64: 8, 512>}]} {
    %c0 = arith.constant 0 : index
    %0 = memref.load %arg1[%c0] : memref<1xf32, #tpu.memory_space<smem>>
    %c0_0 = arith.constant 0 : index
    %c0_1 = arith.constant 0 : index
    %1 = vector.load %arg3[%c0_0, %c0_1] : memref<8x512xf32, #tpu.memory_space<vmem>>, vector<8x512xf32>
    %c0_2 = arith.constant 0 : index
    %c0_3 = arith.constant 0 : index
    %c0_4 = arith.constant 0 : index
    %2 = vector.load %arg5[%c0_2, %c0_3, %c0_4] : memref<8x8x1xf32, #tpu.memory_space<vmem>>, vector<1x8x1xf32>
    %3 = vector.shape_cast %2 : vector<1x8x1xf32> to vector<8x1xf32>
    %4 = vector.shape_cast %3 : vector<8x1xf32> to vector<8x1xf32>
    %5 = vector.broadcast %4 : vector<8x1xf32> to vector<8x512xf32>
    %c17_i32 = arith.constant 17 : i32
    %6 = tpu.dynamic_rotate %1 by %c17_i32 dim 1 : vector<8x512xf32>, i32 -> vector<8x512xf32>
    %c0_5 = arith.constant 0 : index
    %c0_6 = arith.constant 0 : index
    %7 = vector.load %arg2[%c0_5, %c0_6] : memref<9x512xf32, #tpu.memory_space<vmem>>, vector<1x512xf32>
    %8 = vector.broadcast %7 : vector<1x512xf32> to vector<8x512xf32>
    %9 = arith.mulf %6, %8 : vector<8x512xf32>
    %c0_7 = arith.constant 0 : index
    %c0_8 = arith.constant 0 : index
    %c0_9 = arith.constant 0 : index
    %10 = vector.load %arg4[%c0_7, %c0_8, %c0_9] : memref<72x8x8xf32, #tpu.memory_space<vmem>>, vector<1x8x8xf32>
    %11 = vector.shape_cast %10 : vector<1x8x8xf32> to vector<8x8xf32>
    %cst = arith.constant dense<0.000000e+00> : vector<8x512xf32>
    %12 = tpu.matmul %11, %9, %cst {dimension_numbers = #tpu.dot_dimension_numbers<[1], [0], [0], [1], [0, 0, 1, 1], [], []>} : vector<8x8xf32>, vector<8x512xf32>, vector<8x512xf32> -> vector<8x512xf32>
    %13 = arith.addf %5, %12 : vector<8x512xf32>
    %c16_i32 = arith.constant 16 : i32
    %14 = tpu.dynamic_rotate %1 by %c16_i32 dim 1 : vector<8x512xf32>, i32 -> vector<8x512xf32>
    %c1 = arith.constant 1 : index
    %c0_10 = arith.constant 0 : index
    %15 = vector.load %arg2[%c1, %c0_10] : memref<9x512xf32, #tpu.memory_space<vmem>>, vector<1x512xf32>
    %16 = vector.broadcast %15 : vector<1x512xf32> to vector<8x512xf32>
    %17 = arith.mulf %14, %16 : vector<8x512xf32>
    %c1_11 = arith.constant 1 : index
    %c0_12 = arith.constant 0 : index
    %c0_13 = arith.constant 0 : index
    %18 = vector.load %arg4[%c1_11, %c0_12, %c0_13] : memref<72x8x8xf32, #tpu.memory_space<vmem>>, vector<1x8x8xf32>
    %19 = vector.shape_cast %18 : vector<1x8x8xf32> to vector<8x8xf32>
    %cst_14 = arith.constant dense<0.000000e+00> : vector<8x512xf32>
    %20 = tpu.matmul %19, %17, %cst_14 {dimension_numbers = #tpu.dot_dimension_numbers<[1], [0], [0], [1], [0, 0, 1, 1], [], []>} : vector<8x8xf32>, vector<8x512xf32>, vector<8x512xf32> -> vector<8x512xf32>
    %21 = arith.addf %13, %20 : vector<8x512xf32>
    %c15_i32 = arith.constant 15 : i32
    %22 = tpu.dynamic_rotate %1 by %c15_i32 dim 1 : vector<8x512xf32>, i32 -> vector<8x512xf32>
    %c2 = arith.constant 2 : index
    %c0_15 = arith.constant 0 : index
    %23 = vector.load %arg2[%c2, %c0_15] : memref<9x512xf32, #tpu.memory_space<vmem>>, vector<1x512xf32>
    %24 = vector.broadcast %23 : vector<1x512xf32> to vector<8x512xf32>
    %25 = arith.mulf %22, %24 : vector<8x512xf32>
    %c2_16 = arith.constant 2 : index
    %c0_17 = arith.constant 0 : index
    %c0_18 = arith.constant 0 : index
    %26 = vector.load %arg4[%c2_16, %c0_17, %c0_18] : memref<72x8x8xf32, #tpu.memory_space<vmem>>, vector<1x8x8xf32>
    %27 = vector.shape_cast %26 : vector<1x8x8xf32> to vector<8x8xf32>
    %cst_19 = arith.constant dense<0.000000e+00> : vector<8x512xf32>
    %28 = tpu.matmul %27, %25, %cst_19 {dimension_numbers = #tpu.dot_dimension_numbers<[1], [0], [0], [1], [0, 0, 1, 1], [], []>} : vector<8x8xf32>, vector<8x512xf32>, vector<8x512xf32> -> vector<8x512xf32>
    %29 = arith.addf %21, %28 : vector<8x512xf32>
    %c1_i32 = arith.constant 1 : i32
    %30 = tpu.dynamic_rotate %1 by %c1_i32 dim 1 : vector<8x512xf32>, i32 -> vector<8x512xf32>
    %c3 = arith.constant 3 : index
    %c0_20 = arith.constant 0 : index
    %31 = vector.load %arg2[%c3, %c0_20] : memref<9x512xf32, #tpu.memory_space<vmem>>, vector<1x512xf32>
    %32 = vector.broadcast %31 : vector<1x512xf32> to vector<8x512xf32>
    %33 = arith.mulf %30, %32 : vector<8x512xf32>
    %c3_21 = arith.constant 3 : index
    %c0_22 = arith.constant 0 : index
    %c0_23 = arith.constant 0 : index
    %34 = vector.load %arg4[%c3_21, %c0_22, %c0_23] : memref<72x8x8xf32, #tpu.memory_space<vmem>>, vector<1x8x8xf32>
    %35 = vector.shape_cast %34 : vector<1x8x8xf32> to vector<8x8xf32>
    %cst_24 = arith.constant dense<0.000000e+00> : vector<8x512xf32>
    %36 = tpu.matmul %35, %33, %cst_24 {dimension_numbers = #tpu.dot_dimension_numbers<[1], [0], [0], [1], [0, 0, 1, 1], [], []>} : vector<8x8xf32>, vector<8x512xf32>, vector<8x512xf32> -> vector<8x512xf32>
    %37 = arith.addf %29, %36 : vector<8x512xf32>
    %c4 = arith.constant 4 : index
    %c0_25 = arith.constant 0 : index
    %38 = vector.load %arg2[%c4, %c0_25] : memref<9x512xf32, #tpu.memory_space<vmem>>, vector<1x512xf32>
    %39 = vector.broadcast %38 : vector<1x512xf32> to vector<8x512xf32>
    %40 = arith.mulf %1, %39 : vector<8x512xf32>
    %c4_26 = arith.constant 4 : index
    %c0_27 = arith.constant 0 : index
    %c0_28 = arith.constant 0 : index
    %41 = vector.load %arg4[%c4_26, %c0_27, %c0_28] : memref<72x8x8xf32, #tpu.memory_space<vmem>>, vector<1x8x8xf32>
    %42 = vector.shape_cast %41 : vector<1x8x8xf32> to vector<8x8xf32>
    %cst_29 = arith.constant dense<0.000000e+00> : vector<8x512xf32>
    %43 = tpu.matmul %42, %40, %cst_29 {dimension_numbers = #tpu.dot_dimension_numbers<[1], [0], [0], [1], [0, 0, 1, 1], [], []>} : vector<8x8xf32>, vector<8x512xf32>, vector<8x512xf32> -> vector<8x512xf32>
    %44 = arith.addf %37, %43 : vector<8x512xf32>
    %c511_i32 = arith.constant 511 : i32
    %45 = tpu.dynamic_rotate %1 by %c511_i32 dim 1 : vector<8x512xf32>, i32 -> vector<8x512xf32>
    %c5 = arith.constant 5 : index
    %c0_30 = arith.constant 0 : index
    %46 = vector.load %arg2[%c5, %c0_30] : memref<9x512xf32, #tpu.memory_space<vmem>>, vector<1x512xf32>
    %47 = vector.broadcast %46 : vector<1x512xf32> to vector<8x512xf32>
    %48 = arith.mulf %45, %47 : vector<8x512xf32>
    %c5_31 = arith.constant 5 : index
    %c0_32 = arith.constant 0 : index
    %c0_33 = arith.constant 0 : index
    %49 = vector.load %arg4[%c5_31, %c0_32, %c0_33] : memref<72x8x8xf32, #tpu.memory_space<vmem>>, vector<1x8x8xf32>
    %50 = vector.shape_cast %49 : vector<1x8x8xf32> to vector<8x8xf32>
    %cst_34 = arith.constant dense<0.000000e+00> : vector<8x512xf32>
    %51 = tpu.matmul %50, %48, %cst_34 {dimension_numbers = #tpu.dot_dimension_numbers<[1], [0], [0], [1], [0, 0, 1, 1], [], []>} : vector<8x8xf32>, vector<8x512xf32>, vector<8x512xf32> -> vector<8x512xf32>
    %52 = arith.addf %44, %51 : vector<8x512xf32>
    %c497_i32 = arith.constant 497 : i32
    %53 = tpu.dynamic_rotate %1 by %c497_i32 dim 1 : vector<8x512xf32>, i32 -> vector<8x512xf32>
    %c6 = arith.constant 6 : index
    %c0_35 = arith.constant 0 : index
    %54 = vector.load %arg2[%c6, %c0_35] : memref<9x512xf32, #tpu.memory_space<vmem>>, vector<1x512xf32>
    %55 = vector.broadcast %54 : vector<1x512xf32> to vector<8x512xf32>
    %56 = arith.mulf %53, %55 : vector<8x512xf32>
    %c6_36 = arith.constant 6 : index
    %c0_37 = arith.constant 0 : index
    %c0_38 = arith.constant 0 : index
    %57 = vector.load %arg4[%c6_36, %c0_37, %c0_38] : memref<72x8x8xf32, #tpu.memory_space<vmem>>, vector<1x8x8xf32>
    %58 = vector.shape_cast %57 : vector<1x8x8xf32> to vector<8x8xf32>
    %cst_39 = arith.constant dense<0.000000e+00> : vector<8x512xf32>
    %59 = tpu.matmul %58, %56, %cst_39 {dimension_numbers = #tpu.dot_dimension_numbers<[1], [0], [0], [1], [0, 0, 1, 1], [], []>} : vector<8x8xf32>, vector<8x512xf32>, vector<8x512xf32> -> vector<8x512xf32>
    %60 = arith.addf %52, %59 : vector<8x512xf32>
    %c496_i32 = arith.constant 496 : i32
    %61 = tpu.dynamic_rotate %1 by %c496_i32 dim 1 : vector<8x512xf32>, i32 -> vector<8x512xf32>
    %c7 = arith.constant 7 : index
    %c0_40 = arith.constant 0 : index
    %62 = vector.load %arg2[%c7, %c0_40] : memref<9x512xf32, #tpu.memory_space<vmem>>, vector<1x512xf32>
    %63 = vector.broadcast %62 : vector<1x512xf32> to vector<8x512xf32>
    %64 = arith.mulf %61, %63 : vector<8x512xf32>
    %c7_41 = arith.constant 7 : index
    %c0_42 = arith.constant 0 : index
    %c0_43 = arith.constant 0 : index
    %65 = vector.load %arg4[%c7_41, %c0_42, %c0_43] : memref<72x8x8xf32, #tpu.memory_space<vmem>>, vector<1x8x8xf32>
    %66 = vector.shape_cast %65 : vector<1x8x8xf32> to vector<8x8xf32>
    %cst_44 = arith.constant dense<0.000000e+00> : vector<8x512xf32>
    %67 = tpu.matmul %66, %64, %cst_44 {dimension_numbers = #tpu.dot_dimension_numbers<[1], [0], [0], [1], [0, 0, 1, 1], [], []>} : vector<8x8xf32>, vector<8x512xf32>, vector<8x512xf32> -> vector<8x512xf32>
    %68 = arith.addf %60, %67 : vector<8x512xf32>
    %c495_i32 = arith.constant 495 : i32
    %69 = tpu.dynamic_rotate %1 by %c495_i32 dim 1 : vector<8x512xf32>, i32 -> vector<8x512xf32>
    %c8 = arith.constant 8 : index
    %c0_45 = arith.constant 0 : index
    %70 = vector.load %arg2[%c8, %c0_45] : memref<9x512xf32, #tpu.memory_space<vmem>>, vector<1x512xf32>
    %71 = vector.broadcast %70 : vector<1x512xf32> to vector<8x512xf32>
    %72 = arith.mulf %69, %71 : vector<8x512xf32>
    %c8_46 = arith.constant 8 : index
    %c0_47 = arith.constant 0 : index
    %c0_48 = arith.constant 0 : index
    %73 = vector.load %arg4[%c8_46, %c0_47, %c0_48] : memref<72x8x8xf32, #tpu.memory_space<vmem>>, vector<1x8x8xf32>
    %74 = vector.shape_cast %73 : vector<1x8x8xf32> to vector<8x8xf32>
    %cst_49 = arith.constant dense<0.000000e+00> : vector<8x512xf32>
    %75 = tpu.matmul %74, %72, %cst_49 {dimension_numbers = #tpu.dot_dimension_numbers<[1], [0], [0], [1], [0, 0, 1, 1], [], []>} : vector<8x8xf32>, vector<8x512xf32>, vector<8x512xf32> -> vector<8x512xf32>
    %76 = arith.addf %68, %75 : vector<8x512xf32>
    %cst_50 = arith.constant 0.000000e+00 : f32
    %77 = vector.broadcast %cst_50 : f32 to vector<8x512xf32>
    %78 = arith.maximumf %76, %77 : vector<8x512xf32>
    %c1_51 = arith.constant 1 : index
    %c0_52 = arith.constant 0 : index
    %c0_53 = arith.constant 0 : index
    %79 = vector.load %arg5[%c1_51, %c0_52, %c0_53] : memref<8x8x1xf32, #tpu.memory_space<vmem>>, vector<1x8x1xf32>
    %80 = vector.shape_cast %79 : vector<1x8x1xf32> to vector<8x1xf32>
    %81 = vector.shape_cast %80 : vector<8x1xf32> to vector<8x1xf32>
    %82 = vector.broadcast %81 : vector<8x1xf32> to vector<8x512xf32>
    %c17_i32_54 = arith.constant 17 : i32
    %83 = tpu.dynamic_rotate %78 by %c17_i32_54 dim 1 : vector<8x512xf32>, i32 -> vector<8x512xf32>
    %c0_55 = arith.constant 0 : index
    %c0_56 = arith.constant 0 : index
    %84 = vector.load %arg2[%c0_55, %c0_56] : memref<9x512xf32, #tpu.memory_space<vmem>>, vector<1x512xf32>
    %85 = vector.broadcast %84 : vector<1x512xf32> to vector<8x512xf32>
    %86 = arith.mulf %83, %85 : vector<8x512xf32>
    %c9 = arith.constant 9 : index
    %c0_57 = arith.constant 0 : index
    %c0_58 = arith.constant 0 : index
    %87 = vector.load %arg4[%c9, %c0_57, %c0_58] : memref<72x8x8xf32, #tpu.memory_space<vmem>>, vector<1x8x8xf32>
    %88 = vector.shape_cast %87 : vector<1x8x8xf32> to vector<8x8xf32>
    %cst_59 = arith.constant dense<0.000000e+00> : vector<8x512xf32>
    %89 = tpu.matmul %88, %86, %cst_59 {dimension_numbers = #tpu.dot_dimension_numbers<[1], [0], [0], [1], [0, 0, 1, 1], [], []>} : vector<8x8xf32>, vector<8x512xf32>, vector<8x512xf32> -> vector<8x512xf32>
    %90 = arith.addf %82, %89 : vector<8x512xf32>
    %c16_i32_60 = arith.constant 16 : i32
    %91 = tpu.dynamic_rotate %78 by %c16_i32_60 dim 1 : vector<8x512xf32>, i32 -> vector<8x512xf32>
    %c1_61 = arith.constant 1 : index
    %c0_62 = arith.constant 0 : index
    %92 = vector.load %arg2[%c1_61, %c0_62] : memref<9x512xf32, #tpu.memory_space<vmem>>, vector<1x512xf32>
    %93 = vector.broadcast %92 : vector<1x512xf32> to vector<8x512xf32>
    %94 = arith.mulf %91, %93 : vector<8x512xf32>
    %c10 = arith.constant 10 : index
    %c0_63 = arith.constant 0 : index
    %c0_64 = arith.constant 0 : index
    %95 = vector.load %arg4[%c10, %c0_63, %c0_64] : memref<72x8x8xf32, #tpu.memory_space<vmem>>, vector<1x8x8xf32>
    %96 = vector.shape_cast %95 : vector<1x8x8xf32> to vector<8x8xf32>
    %cst_65 = arith.constant dense<0.000000e+00> : vector<8x512xf32>
    %97 = tpu.matmul %96, %94, %cst_65 {dimension_numbers = #tpu.dot_dimension_numbers<[1], [0], [0], [1], [0, 0, 1, 1], [], []>} : vector<8x8xf32>, vector<8x512xf32>, vector<8x512xf32> -> vector<8x512xf32>
    %98 = arith.addf %90, %97 : vector<8x512xf32>
    %c15_i32_66 = arith.constant 15 : i32
    %99 = tpu.dynamic_rotate %78 by %c15_i32_66 dim 1 : vector<8x512xf32>, i32 -> vector<8x512xf32>
    %c2_67 = arith.constant 2 : index
    %c0_68 = arith.constant 0 : index
    %100 = vector.load %arg2[%c2_67, %c0_68] : memref<9x512xf32, #tpu.memory_space<vmem>>, vector<1x512xf32>
    %101 = vector.broadcast %100 : vector<1x512xf32> to vector<8x512xf32>
    %102 = arith.mulf %99, %101 : vector<8x512xf32>
    %c11 = arith.constant 11 : index
    %c0_69 = arith.constant 0 : index
    %c0_70 = arith.constant 0 : index
    %103 = vector.load %arg4[%c11, %c0_69, %c0_70] : memref<72x8x8xf32, #tpu.memory_space<vmem>>, vector<1x8x8xf32>
    %104 = vector.shape_cast %103 : vector<1x8x8xf32> to vector<8x8xf32>
    %cst_71 = arith.constant dense<0.000000e+00> : vector<8x512xf32>
    %105 = tpu.matmul %104, %102, %cst_71 {dimension_numbers = #tpu.dot_dimension_numbers<[1], [0], [0], [1], [0, 0, 1, 1], [], []>} : vector<8x8xf32>, vector<8x512xf32>, vector<8x512xf32> -> vector<8x512xf32>
    %106 = arith.addf %98, %105 : vector<8x512xf32>
    %c1_i32_72 = arith.constant 1 : i32
    %107 = tpu.dynamic_rotate %78 by %c1_i32_72 dim 1 : vector<8x512xf32>, i32 -> vector<8x512xf32>
    %c3_73 = arith.constant 3 : index
    %c0_74 = arith.constant 0 : index
    %108 = vector.load %arg2[%c3_73, %c0_74] : memref<9x512xf32, #tpu.memory_space<vmem>>, vector<1x512xf32>
    %109 = vector.broadcast %108 : vector<1x512xf32> to vector<8x512xf32>
    %110 = arith.mulf %107, %109 : vector<8x512xf32>
    %c12 = arith.constant 12 : index
    %c0_75 = arith.constant 0 : index
    %c0_76 = arith.constant 0 : index
    %111 = vector.load %arg4[%c12, %c0_75, %c0_76] : memref<72x8x8xf32, #tpu.memory_space<vmem>>, vector<1x8x8xf32>
    %112 = vector.shape_cast %111 : vector<1x8x8xf32> to vector<8x8xf32>
    %cst_77 = arith.constant dense<0.000000e+00> : vector<8x512xf32>
    %113 = tpu.matmul %112, %110, %cst_77 {dimension_numbers = #tpu.dot_dimension_numbers<[1], [0], [0], [1], [0, 0, 1, 1], [], []>} : vector<8x8xf32>, vector<8x512xf32>, vector<8x512xf32> -> vector<8x512xf32>
    %114 = arith.addf %106, %113 : vector<8x512xf32>
    %c4_78 = arith.constant 4 : index
    %c0_79 = arith.constant 0 : index
    %115 = vector.load %arg2[%c4_78, %c0_79] : memref<9x512xf32, #tpu.memory_space<vmem>>, vector<1x512xf32>
    %116 = vector.broadcast %115 : vector<1x512xf32> to vector<8x512xf32>
    %117 = arith.mulf %78, %116 : vector<8x512xf32>
    %c13 = arith.constant 13 : index
    %c0_80 = arith.constant 0 : index
    %c0_81 = arith.constant 0 : index
    %118 = vector.load %arg4[%c13, %c0_80, %c0_81] : memref<72x8x8xf32, #tpu.memory_space<vmem>>, vector<1x8x8xf32>
    %119 = vector.shape_cast %118 : vector<1x8x8xf32> to vector<8x8xf32>
    %cst_82 = arith.constant dense<0.000000e+00> : vector<8x512xf32>
    %120 = tpu.matmul %119, %117, %cst_82 {dimension_numbers = #tpu.dot_dimension_numbers<[1], [0], [0], [1], [0, 0, 1, 1], [], []>} : vector<8x8xf32>, vector<8x512xf32>, vector<8x512xf32> -> vector<8x512xf32>
    %121 = arith.addf %114, %120 : vector<8x512xf32>
    %c511_i32_83 = arith.constant 511 : i32
    %122 = tpu.dynamic_rotate %78 by %c511_i32_83 dim 1 : vector<8x512xf32>, i32 -> vector<8x512xf32>
    %c5_84 = arith.constant 5 : index
    %c0_85 = arith.constant 0 : index
    %123 = vector.load %arg2[%c5_84, %c0_85] : memref<9x512xf32, #tpu.memory_space<vmem>>, vector<1x512xf32>
    %124 = vector.broadcast %123 : vector<1x512xf32> to vector<8x512xf32>
    %125 = arith.mulf %122, %124 : vector<8x512xf32>
    %c14 = arith.constant 14 : index
    %c0_86 = arith.constant 0 : index
    %c0_87 = arith.constant 0 : index
    %126 = vector.load %arg4[%c14, %c0_86, %c0_87] : memref<72x8x8xf32, #tpu.memory_space<vmem>>, vector<1x8x8xf32>
    %127 = vector.shape_cast %126 : vector<1x8x8xf32> to vector<8x8xf32>
    %cst_88 = arith.constant dense<0.000000e+00> : vector<8x512xf32>
    %128 = tpu.matmul %127, %125, %cst_88 {dimension_numbers = #tpu.dot_dimension_numbers<[1], [0], [0], [1], [0, 0, 1, 1], [], []>} : vector<8x8xf32>, vector<8x512xf32>, vector<8x512xf32> -> vector<8x512xf32>
    %129 = arith.addf %121, %128 : vector<8x512xf32>
    %c497_i32_89 = arith.constant 497 : i32
    %130 = tpu.dynamic_rotate %78 by %c497_i32_89 dim 1 : vector<8x512xf32>, i32 -> vector<8x512xf32>
    %c6_90 = arith.constant 6 : index
    %c0_91 = arith.constant 0 : index
    %131 = vector.load %arg2[%c6_90, %c0_91] : memref<9x512xf32, #tpu.memory_space<vmem>>, vector<1x512xf32>
    %132 = vector.broadcast %131 : vector<1x512xf32> to vector<8x512xf32>
    %133 = arith.mulf %130, %132 : vector<8x512xf32>
    %c15 = arith.constant 15 : index
    %c0_92 = arith.constant 0 : index
    %c0_93 = arith.constant 0 : index
    %134 = vector.load %arg4[%c15, %c0_92, %c0_93] : memref<72x8x8xf32, #tpu.memory_space<vmem>>, vector<1x8x8xf32>
    %135 = vector.shape_cast %134 : vector<1x8x8xf32> to vector<8x8xf32>
    %cst_94 = arith.constant dense<0.000000e+00> : vector<8x512xf32>
    %136 = tpu.matmul %135, %133, %cst_94 {dimension_numbers = #tpu.dot_dimension_numbers<[1], [0], [0], [1], [0, 0, 1, 1], [], []>} : vector<8x8xf32>, vector<8x512xf32>, vector<8x512xf32> -> vector<8x512xf32>
    %137 = arith.addf %129, %136 : vector<8x512xf32>
    %c496_i32_95 = arith.constant 496 : i32
    %138 = tpu.dynamic_rotate %78 by %c496_i32_95 dim 1 : vector<8x512xf32>, i32 -> vector<8x512xf32>
    %c7_96 = arith.constant 7 : index
    %c0_97 = arith.constant 0 : index
    %139 = vector.load %arg2[%c7_96, %c0_97] : memref<9x512xf32, #tpu.memory_space<vmem>>, vector<1x512xf32>
    %140 = vector.broadcast %139 : vector<1x512xf32> to vector<8x512xf32>
    %141 = arith.mulf %138, %140 : vector<8x512xf32>
    %c16 = arith.constant 16 : index
    %c0_98 = arith.constant 0 : index
    %c0_99 = arith.constant 0 : index
    %142 = vector.load %arg4[%c16, %c0_98, %c0_99] : memref<72x8x8xf32, #tpu.memory_space<vmem>>, vector<1x8x8xf32>
    %143 = vector.shape_cast %142 : vector<1x8x8xf32> to vector<8x8xf32>
    %cst_100 = arith.constant dense<0.000000e+00> : vector<8x512xf32>
    %144 = tpu.matmul %143, %141, %cst_100 {dimension_numbers = #tpu.dot_dimension_numbers<[1], [0], [0], [1], [0, 0, 1, 1], [], []>} : vector<8x8xf32>, vector<8x512xf32>, vector<8x512xf32> -> vector<8x512xf32>
    %145 = arith.addf %137, %144 : vector<8x512xf32>
    %c495_i32_101 = arith.constant 495 : i32
    %146 = tpu.dynamic_rotate %78 by %c495_i32_101 dim 1 : vector<8x512xf32>, i32 -> vector<8x512xf32>
    %c8_102 = arith.constant 8 : index
    %c0_103 = arith.constant 0 : index
    %147 = vector.load %arg2[%c8_102, %c0_103] : memref<9x512xf32, #tpu.memory_space<vmem>>, vector<1x512xf32>
    %148 = vector.broadcast %147 : vector<1x512xf32> to vector<8x512xf32>
    %149 = arith.mulf %146, %148 : vector<8x512xf32>
    %c17 = arith.constant 17 : index
    %c0_104 = arith.constant 0 : index
    %c0_105 = arith.constant 0 : index
    %150 = vector.load %arg4[%c17, %c0_104, %c0_105] : memref<72x8x8xf32, #tpu.memory_space<vmem>>, vector<1x8x8xf32>
    %151 = vector.shape_cast %150 : vector<1x8x8xf32> to vector<8x8xf32>
    %cst_106 = arith.constant dense<0.000000e+00> : vector<8x512xf32>
    %152 = tpu.matmul %151, %149, %cst_106 {dimension_numbers = #tpu.dot_dimension_numbers<[1], [0], [0], [1], [0, 0, 1, 1], [], []>} : vector<8x8xf32>, vector<8x512xf32>, vector<8x512xf32> -> vector<8x512xf32>
    %153 = arith.addf %145, %152 : vector<8x512xf32>
    %cst_107 = arith.constant 0.000000e+00 : f32
    %154 = vector.broadcast %cst_107 : f32 to vector<8x512xf32>
    %155 = arith.maximumf %153, %154 : vector<8x512xf32>
    %c2_108 = arith.constant 2 : index
    %c0_109 = arith.constant 0 : index
    %c0_110 = arith.constant 0 : index
    %156 = vector.load %arg5[%c2_108, %c0_109, %c0_110] : memref<8x8x1xf32, #tpu.memory_space<vmem>>, vector<1x8x1xf32>
    %157 = vector.shape_cast %156 : vector<1x8x1xf32> to vector<8x1xf32>
    %158 = vector.shape_cast %157 : vector<8x1xf32> to vector<8x1xf32>
    %159 = vector.broadcast %158 : vector<8x1xf32> to vector<8x512xf32>
    %c17_i32_111 = arith.constant 17 : i32
    %160 = tpu.dynamic_rotate %155 by %c17_i32_111 dim 1 : vector<8x512xf32>, i32 -> vector<8x512xf32>
    %c0_112 = arith.constant 0 : index
    %c0_113 = arith.constant 0 : index
    %161 = vector.load %arg2[%c0_112, %c0_113] : memref<9x512xf32, #tpu.memory_space<vmem>>, vector<1x512xf32>
    %162 = vector.broadcast %161 : vector<1x512xf32> to vector<8x512xf32>
    %163 = arith.mulf %160, %162 : vector<8x512xf32>
    %c18 = arith.constant 18 : index
    %c0_114 = arith.constant 0 : index
    %c0_115 = arith.constant 0 : index
    %164 = vector.load %arg4[%c18, %c0_114, %c0_115] : memref<72x8x8xf32, #tpu.memory_space<vmem>>, vector<1x8x8xf32>
    %165 = vector.shape_cast %164 : vector<1x8x8xf32> to vector<8x8xf32>
    %cst_116 = arith.constant dense<0.000000e+00> : vector<8x512xf32>
    %166 = tpu.matmul %165, %163, %cst_116 {dimension_numbers = #tpu.dot_dimension_numbers<[1], [0], [0], [1], [0, 0, 1, 1], [], []>} : vector<8x8xf32>, vector<8x512xf32>, vector<8x512xf32> -> vector<8x512xf32>
    %167 = arith.addf %159, %166 : vector<8x512xf32>
    %c16_i32_117 = arith.constant 16 : i32
    %168 = tpu.dynamic_rotate %155 by %c16_i32_117 dim 1 : vector<8x512xf32>, i32 -> vector<8x512xf32>
    %c1_118 = arith.constant 1 : index
    %c0_119 = arith.constant 0 : index
    %169 = vector.load %arg2[%c1_118, %c0_119] : memref<9x512xf32, #tpu.memory_space<vmem>>, vector<1x512xf32>
    %170 = vector.broadcast %169 : vector<1x512xf32> to vector<8x512xf32>
    %171 = arith.mulf %168, %170 : vector<8x512xf32>
    %c19 = arith.constant 19 : index
    %c0_120 = arith.constant 0 : index
    %c0_121 = arith.constant 0 : index
    %172 = vector.load %arg4[%c19, %c0_120, %c0_121] : memref<72x8x8xf32, #tpu.memory_space<vmem>>, vector<1x8x8xf32>
    %173 = vector.shape_cast %172 : vector<1x8x8xf32> to vector<8x8xf32>
    %cst_122 = arith.constant dense<0.000000e+00> : vector<8x512xf32>
    %174 = tpu.matmul %173, %171, %cst_122 {dimension_numbers = #tpu.dot_dimension_numbers<[1], [0], [0], [1], [0, 0, 1, 1], [], []>} : vector<8x8xf32>, vector<8x512xf32>, vector<8x512xf32> -> vector<8x512xf32>
    %175 = arith.addf %167, %174 : vector<8x512xf32>
    %c15_i32_123 = arith.constant 15 : i32
    %176 = tpu.dynamic_rotate %155 by %c15_i32_123 dim 1 : vector<8x512xf32>, i32 -> vector<8x512xf32>
    %c2_124 = arith.constant 2 : index
    %c0_125 = arith.constant 0 : index
    %177 = vector.load %arg2[%c2_124, %c0_125] : memref<9x512xf32, #tpu.memory_space<vmem>>, vector<1x512xf32>
    %178 = vector.broadcast %177 : vector<1x512xf32> to vector<8x512xf32>
    %179 = arith.mulf %176, %178 : vector<8x512xf32>
    %c20 = arith.constant 20 : index
    %c0_126 = arith.constant 0 : index
    %c0_127 = arith.constant 0 : index
    %180 = vector.load %arg4[%c20, %c0_126, %c0_127] : memref<72x8x8xf32, #tpu.memory_space<vmem>>, vector<1x8x8xf32>
    %181 = vector.shape_cast %180 : vector<1x8x8xf32> to vector<8x8xf32>
    %cst_128 = arith.constant dense<0.000000e+00> : vector<8x512xf32>
    %182 = tpu.matmul %181, %179, %cst_128 {dimension_numbers = #tpu.dot_dimension_numbers<[1], [0], [0], [1], [0, 0, 1, 1], [], []>} : vector<8x8xf32>, vector<8x512xf32>, vector<8x512xf32> -> vector<8x512xf32>
    %183 = arith.addf %175, %182 : vector<8x512xf32>
    %c1_i32_129 = arith.constant 1 : i32
    %184 = tpu.dynamic_rotate %155 by %c1_i32_129 dim 1 : vector<8x512xf32>, i32 -> vector<8x512xf32>
    %c3_130 = arith.constant 3 : index
    %c0_131 = arith.constant 0 : index
    %185 = vector.load %arg2[%c3_130, %c0_131] : memref<9x512xf32, #tpu.memory_space<vmem>>, vector<1x512xf32>
    %186 = vector.broadcast %185 : vector<1x512xf32> to vector<8x512xf32>
    %187 = arith.mulf %184, %186 : vector<8x512xf32>
    %c21 = arith.constant 21 : index
    %c0_132 = arith.constant 0 : index
    %c0_133 = arith.constant 0 : index
    %188 = vector.load %arg4[%c21, %c0_132, %c0_133] : memref<72x8x8xf32, #tpu.memory_space<vmem>>, vector<1x8x8xf32>
    %189 = vector.shape_cast %188 : vector<1x8x8xf32> to vector<8x8xf32>
    %cst_134 = arith.constant dense<0.000000e+00> : vector<8x512xf32>
    %190 = tpu.matmul %189, %187, %cst_134 {dimension_numbers = #tpu.dot_dimension_numbers<[1], [0], [0], [1], [0, 0, 1, 1], [], []>} : vector<8x8xf32>, vector<8x512xf32>, vector<8x512xf32> -> vector<8x512xf32>
    %191 = arith.addf %183, %190 : vector<8x512xf32>
    %c4_135 = arith.constant 4 : index
    %c0_136 = arith.constant 0 : index
    %192 = vector.load %arg2[%c4_135, %c0_136] : memref<9x512xf32, #tpu.memory_space<vmem>>, vector<1x512xf32>
    %193 = vector.broadcast %192 : vector<1x512xf32> to vector<8x512xf32>
    %194 = arith.mulf %155, %193 : vector<8x512xf32>
    %c22 = arith.constant 22 : index
    %c0_137 = arith.constant 0 : index
    %c0_138 = arith.constant 0 : index
    %195 = vector.load %arg4[%c22, %c0_137, %c0_138] : memref<72x8x8xf32, #tpu.memory_space<vmem>>, vector<1x8x8xf32>
    %196 = vector.shape_cast %195 : vector<1x8x8xf32> to vector<8x8xf32>
    %cst_139 = arith.constant dense<0.000000e+00> : vector<8x512xf32>
    %197 = tpu.matmul %196, %194, %cst_139 {dimension_numbers = #tpu.dot_dimension_numbers<[1], [0], [0], [1], [0, 0, 1, 1], [], []>} : vector<8x8xf32>, vector<8x512xf32>, vector<8x512xf32> -> vector<8x512xf32>
    %198 = arith.addf %191, %197 : vector<8x512xf32>
    %c511_i32_140 = arith.constant 511 : i32
    %199 = tpu.dynamic_rotate %155 by %c511_i32_140 dim 1 : vector<8x512xf32>, i32 -> vector<8x512xf32>
    %c5_141 = arith.constant 5 : index
    %c0_142 = arith.constant 0 : index
    %200 = vector.load %arg2[%c5_141, %c0_142] : memref<9x512xf32, #tpu.memory_space<vmem>>, vector<1x512xf32>
    %201 = vector.broadcast %200 : vector<1x512xf32> to vector<8x512xf32>
    %202 = arith.mulf %199, %201 : vector<8x512xf32>
    %c23 = arith.constant 23 : index
    %c0_143 = arith.constant 0 : index
    %c0_144 = arith.constant 0 : index
    %203 = vector.load %arg4[%c23, %c0_143, %c0_144] : memref<72x8x8xf32, #tpu.memory_space<vmem>>, vector<1x8x8xf32>
    %204 = vector.shape_cast %203 : vector<1x8x8xf32> to vector<8x8xf32>
    %cst_145 = arith.constant dense<0.000000e+00> : vector<8x512xf32>
    %205 = tpu.matmul %204, %202, %cst_145 {dimension_numbers = #tpu.dot_dimension_numbers<[1], [0], [0], [1], [0, 0, 1, 1], [], []>} : vector<8x8xf32>, vector<8x512xf32>, vector<8x512xf32> -> vector<8x512xf32>
    %206 = arith.addf %198, %205 : vector<8x512xf32>
    %c497_i32_146 = arith.constant 497 : i32
    %207 = tpu.dynamic_rotate %155 by %c497_i32_146 dim 1 : vector<8x512xf32>, i32 -> vector<8x512xf32>
    %c6_147 = arith.constant 6 : index
    %c0_148 = arith.constant 0 : index
    %208 = vector.load %arg2[%c6_147, %c0_148] : memref<9x512xf32, #tpu.memory_space<vmem>>, vector<1x512xf32>
    %209 = vector.broadcast %208 : vector<1x512xf32> to vector<8x512xf32>
    %210 = arith.mulf %207, %209 : vector<8x512xf32>
    %c24 = arith.constant 24 : index
    %c0_149 = arith.constant 0 : index
    %c0_150 = arith.constant 0 : index
    %211 = vector.load %arg4[%c24, %c0_149, %c0_150] : memref<72x8x8xf32, #tpu.memory_space<vmem>>, vector<1x8x8xf32>
    %212 = vector.shape_cast %211 : vector<1x8x8xf32> to vector<8x8xf32>
    %cst_151 = arith.constant dense<0.000000e+00> : vector<8x512xf32>
    %213 = tpu.matmul %212, %210, %cst_151 {dimension_numbers = #tpu.dot_dimension_numbers<[1], [0], [0], [1], [0, 0, 1, 1], [], []>} : vector<8x8xf32>, vector<8x512xf32>, vector<8x512xf32> -> vector<8x512xf32>
    %214 = arith.addf %206, %213 : vector<8x512xf32>
    %c496_i32_152 = arith.constant 496 : i32
    %215 = tpu.dynamic_rotate %155 by %c496_i32_152 dim 1 : vector<8x512xf32>, i32 -> vector<8x512xf32>
    %c7_153 = arith.constant 7 : index
    %c0_154 = arith.constant 0 : index
    %216 = vector.load %arg2[%c7_153, %c0_154] : memref<9x512xf32, #tpu.memory_space<vmem>>, vector<1x512xf32>
    %217 = vector.broadcast %216 : vector<1x512xf32> to vector<8x512xf32>
    %218 = arith.mulf %215, %217 : vector<8x512xf32>
    %c25 = arith.constant 25 : index
    %c0_155 = arith.constant 0 : index
    %c0_156 = arith.constant 0 : index
    %219 = vector.load %arg4[%c25, %c0_155, %c0_156] : memref<72x8x8xf32, #tpu.memory_space<vmem>>, vector<1x8x8xf32>
    %220 = vector.shape_cast %219 : vector<1x8x8xf32> to vector<8x8xf32>
    %cst_157 = arith.constant dense<0.000000e+00> : vector<8x512xf32>
    %221 = tpu.matmul %220, %218, %cst_157 {dimension_numbers = #tpu.dot_dimension_numbers<[1], [0], [0], [1], [0, 0, 1, 1], [], []>} : vector<8x8xf32>, vector<8x512xf32>, vector<8x512xf32> -> vector<8x512xf32>
    %222 = arith.addf %214, %221 : vector<8x512xf32>
    %c495_i32_158 = arith.constant 495 : i32
    %223 = tpu.dynamic_rotate %155 by %c495_i32_158 dim 1 : vector<8x512xf32>, i32 -> vector<8x512xf32>
    %c8_159 = arith.constant 8 : index
    %c0_160 = arith.constant 0 : index
    %224 = vector.load %arg2[%c8_159, %c0_160] : memref<9x512xf32, #tpu.memory_space<vmem>>, vector<1x512xf32>
    %225 = vector.broadcast %224 : vector<1x512xf32> to vector<8x512xf32>
    %226 = arith.mulf %223, %225 : vector<8x512xf32>
    %c26 = arith.constant 26 : index
    %c0_161 = arith.constant 0 : index
    %c0_162 = arith.constant 0 : index
    %227 = vector.load %arg4[%c26, %c0_161, %c0_162] : memref<72x8x8xf32, #tpu.memory_space<vmem>>, vector<1x8x8xf32>
    %228 = vector.shape_cast %227 : vector<1x8x8xf32> to vector<8x8xf32>
    %cst_163 = arith.constant dense<0.000000e+00> : vector<8x512xf32>
    %229 = tpu.matmul %228, %226, %cst_163 {dimension_numbers = #tpu.dot_dimension_numbers<[1], [0], [0], [1], [0, 0, 1, 1], [], []>} : vector<8x8xf32>, vector<8x512xf32>, vector<8x512xf32> -> vector<8x512xf32>
    %230 = arith.addf %222, %229 : vector<8x512xf32>
    %cst_164 = arith.constant 0.000000e+00 : f32
    %231 = vector.broadcast %cst_164 : f32 to vector<8x512xf32>
    %232 = arith.maximumf %230, %231 : vector<8x512xf32>
    %c3_165 = arith.constant 3 : index
    %c0_166 = arith.constant 0 : index
    %c0_167 = arith.constant 0 : index
    %233 = vector.load %arg5[%c3_165, %c0_166, %c0_167] : memref<8x8x1xf32, #tpu.memory_space<vmem>>, vector<1x8x1xf32>
    %234 = vector.shape_cast %233 : vector<1x8x1xf32> to vector<8x1xf32>
    %235 = vector.shape_cast %234 : vector<8x1xf32> to vector<8x1xf32>
    %236 = vector.broadcast %235 : vector<8x1xf32> to vector<8x512xf32>
    %c17_i32_168 = arith.constant 17 : i32
    %237 = tpu.dynamic_rotate %232 by %c17_i32_168 dim 1 : vector<8x512xf32>, i32 -> vector<8x512xf32>
    %c0_169 = arith.constant 0 : index
    %c0_170 = arith.constant 0 : index
    %238 = vector.load %arg2[%c0_169, %c0_170] : memref<9x512xf32, #tpu.memory_space<vmem>>, vector<1x512xf32>
    %239 = vector.broadcast %238 : vector<1x512xf32> to vector<8x512xf32>
    %240 = arith.mulf %237, %239 : vector<8x512xf32>
    %c27 = arith.constant 27 : index
    %c0_171 = arith.constant 0 : index
    %c0_172 = arith.constant 0 : index
    %241 = vector.load %arg4[%c27, %c0_171, %c0_172] : memref<72x8x8xf32, #tpu.memory_space<vmem>>, vector<1x8x8xf32>
    %242 = vector.shape_cast %241 : vector<1x8x8xf32> to vector<8x8xf32>
    %cst_173 = arith.constant dense<0.000000e+00> : vector<8x512xf32>
    %243 = tpu.matmul %242, %240, %cst_173 {dimension_numbers = #tpu.dot_dimension_numbers<[1], [0], [0], [1], [0, 0, 1, 1], [], []>} : vector<8x8xf32>, vector<8x512xf32>, vector<8x512xf32> -> vector<8x512xf32>
    %244 = arith.addf %236, %243 : vector<8x512xf32>
    %c16_i32_174 = arith.constant 16 : i32
    %245 = tpu.dynamic_rotate %232 by %c16_i32_174 dim 1 : vector<8x512xf32>, i32 -> vector<8x512xf32>
    %c1_175 = arith.constant 1 : index
    %c0_176 = arith.constant 0 : index
    %246 = vector.load %arg2[%c1_175, %c0_176] : memref<9x512xf32, #tpu.memory_space<vmem>>, vector<1x512xf32>
    %247 = vector.broadcast %246 : vector<1x512xf32> to vector<8x512xf32>
    %248 = arith.mulf %245, %247 : vector<8x512xf32>
    %c28 = arith.constant 28 : index
    %c0_177 = arith.constant 0 : index
    %c0_178 = arith.constant 0 : index
    %249 = vector.load %arg4[%c28, %c0_177, %c0_178] : memref<72x8x8xf32, #tpu.memory_space<vmem>>, vector<1x8x8xf32>
    %250 = vector.shape_cast %249 : vector<1x8x8xf32> to vector<8x8xf32>
    %cst_179 = arith.constant dense<0.000000e+00> : vector<8x512xf32>
    %251 = tpu.matmul %250, %248, %cst_179 {dimension_numbers = #tpu.dot_dimension_numbers<[1], [0], [0], [1], [0, 0, 1, 1], [], []>} : vector<8x8xf32>, vector<8x512xf32>, vector<8x512xf32> -> vector<8x512xf32>
    %252 = arith.addf %244, %251 : vector<8x512xf32>
    %c15_i32_180 = arith.constant 15 : i32
    %253 = tpu.dynamic_rotate %232 by %c15_i32_180 dim 1 : vector<8x512xf32>, i32 -> vector<8x512xf32>
    %c2_181 = arith.constant 2 : index
    %c0_182 = arith.constant 0 : index
    %254 = vector.load %arg2[%c2_181, %c0_182] : memref<9x512xf32, #tpu.memory_space<vmem>>, vector<1x512xf32>
    %255 = vector.broadcast %254 : vector<1x512xf32> to vector<8x512xf32>
    %256 = arith.mulf %253, %255 : vector<8x512xf32>
    %c29 = arith.constant 29 : index
    %c0_183 = arith.constant 0 : index
    %c0_184 = arith.constant 0 : index
    %257 = vector.load %arg4[%c29, %c0_183, %c0_184] : memref<72x8x8xf32, #tpu.memory_space<vmem>>, vector<1x8x8xf32>
    %258 = vector.shape_cast %257 : vector<1x8x8xf32> to vector<8x8xf32>
    %cst_185 = arith.constant dense<0.000000e+00> : vector<8x512xf32>
    %259 = tpu.matmul %258, %256, %cst_185 {dimension_numbers = #tpu.dot_dimension_numbers<[1], [0], [0], [1], [0, 0, 1, 1], [], []>} : vector<8x8xf32>, vector<8x512xf32>, vector<8x512xf32> -> vector<8x512xf32>
    %260 = arith.addf %252, %259 : vector<8x512xf32>
    %c1_i32_186 = arith.constant 1 : i32
    %261 = tpu.dynamic_rotate %232 by %c1_i32_186 dim 1 : vector<8x512xf32>, i32 -> vector<8x512xf32>
    %c3_187 = arith.constant 3 : index
    %c0_188 = arith.constant 0 : index
    %262 = vector.load %arg2[%c3_187, %c0_188] : memref<9x512xf32, #tpu.memory_space<vmem>>, vector<1x512xf32>
    %263 = vector.broadcast %262 : vector<1x512xf32> to vector<8x512xf32>
    %264 = arith.mulf %261, %263 : vector<8x512xf32>
    %c30 = arith.constant 30 : index
    %c0_189 = arith.constant 0 : index
    %c0_190 = arith.constant 0 : index
    %265 = vector.load %arg4[%c30, %c0_189, %c0_190] : memref<72x8x8xf32, #tpu.memory_space<vmem>>, vector<1x8x8xf32>
    %266 = vector.shape_cast %265 : vector<1x8x8xf32> to vector<8x8xf32>
    %cst_191 = arith.constant dense<0.000000e+00> : vector<8x512xf32>
    %267 = tpu.matmul %266, %264, %cst_191 {dimension_numbers = #tpu.dot_dimension_numbers<[1], [0], [0], [1], [0, 0, 1, 1], [], []>} : vector<8x8xf32>, vector<8x512xf32>, vector<8x512xf32> -> vector<8x512xf32>
    %268 = arith.addf %260, %267 : vector<8x512xf32>
    %c4_192 = arith.constant 4 : index
    %c0_193 = arith.constant 0 : index
    %269 = vector.load %arg2[%c4_192, %c0_193] : memref<9x512xf32, #tpu.memory_space<vmem>>, vector<1x512xf32>
    %270 = vector.broadcast %269 : vector<1x512xf32> to vector<8x512xf32>
    %271 = arith.mulf %232, %270 : vector<8x512xf32>
    %c31 = arith.constant 31 : index
    %c0_194 = arith.constant 0 : index
    %c0_195 = arith.constant 0 : index
    %272 = vector.load %arg4[%c31, %c0_194, %c0_195] : memref<72x8x8xf32, #tpu.memory_space<vmem>>, vector<1x8x8xf32>
    %273 = vector.shape_cast %272 : vector<1x8x8xf32> to vector<8x8xf32>
    %cst_196 = arith.constant dense<0.000000e+00> : vector<8x512xf32>
    %274 = tpu.matmul %273, %271, %cst_196 {dimension_numbers = #tpu.dot_dimension_numbers<[1], [0], [0], [1], [0, 0, 1, 1], [], []>} : vector<8x8xf32>, vector<8x512xf32>, vector<8x512xf32> -> vector<8x512xf32>
    %275 = arith.addf %268, %274 : vector<8x512xf32>
    %c511_i32_197 = arith.constant 511 : i32
    %276 = tpu.dynamic_rotate %232 by %c511_i32_197 dim 1 : vector<8x512xf32>, i32 -> vector<8x512xf32>
    %c5_198 = arith.constant 5 : index
    %c0_199 = arith.constant 0 : index
    %277 = vector.load %arg2[%c5_198, %c0_199] : memref<9x512xf32, #tpu.memory_space<vmem>>, vector<1x512xf32>
    %278 = vector.broadcast %277 : vector<1x512xf32> to vector<8x512xf32>
    %279 = arith.mulf %276, %278 : vector<8x512xf32>
    %c32 = arith.constant 32 : index
    %c0_200 = arith.constant 0 : index
    %c0_201 = arith.constant 0 : index
    %280 = vector.load %arg4[%c32, %c0_200, %c0_201] : memref<72x8x8xf32, #tpu.memory_space<vmem>>, vector<1x8x8xf32>
    %281 = vector.shape_cast %280 : vector<1x8x8xf32> to vector<8x8xf32>
    %cst_202 = arith.constant dense<0.000000e+00> : vector<8x512xf32>
    %282 = tpu.matmul %281, %279, %cst_202 {dimension_numbers = #tpu.dot_dimension_numbers<[1], [0], [0], [1], [0, 0, 1, 1], [], []>} : vector<8x8xf32>, vector<8x512xf32>, vector<8x512xf32> -> vector<8x512xf32>
    %283 = arith.addf %275, %282 : vector<8x512xf32>
    %c497_i32_203 = arith.constant 497 : i32
    %284 = tpu.dynamic_rotate %232 by %c497_i32_203 dim 1 : vector<8x512xf32>, i32 -> vector<8x512xf32>
    %c6_204 = arith.constant 6 : index
    %c0_205 = arith.constant 0 : index
    %285 = vector.load %arg2[%c6_204, %c0_205] : memref<9x512xf32, #tpu.memory_space<vmem>>, vector<1x512xf32>
    %286 = vector.broadcast %285 : vector<1x512xf32> to vector<8x512xf32>
    %287 = arith.mulf %284, %286 : vector<8x512xf32>
    %c33 = arith.constant 33 : index
    %c0_206 = arith.constant 0 : index
    %c0_207 = arith.constant 0 : index
    %288 = vector.load %arg4[%c33, %c0_206, %c0_207] : memref<72x8x8xf32, #tpu.memory_space<vmem>>, vector<1x8x8xf32>
    %289 = vector.shape_cast %288 : vector<1x8x8xf32> to vector<8x8xf32>
    %cst_208 = arith.constant dense<0.000000e+00> : vector<8x512xf32>
    %290 = tpu.matmul %289, %287, %cst_208 {dimension_numbers = #tpu.dot_dimension_numbers<[1], [0], [0], [1], [0, 0, 1, 1], [], []>} : vector<8x8xf32>, vector<8x512xf32>, vector<8x512xf32> -> vector<8x512xf32>
    %291 = arith.addf %283, %290 : vector<8x512xf32>
    %c496_i32_209 = arith.constant 496 : i32
    %292 = tpu.dynamic_rotate %232 by %c496_i32_209 dim 1 : vector<8x512xf32>, i32 -> vector<8x512xf32>
    %c7_210 = arith.constant 7 : index
    %c0_211 = arith.constant 0 : index
    %293 = vector.load %arg2[%c7_210, %c0_211] : memref<9x512xf32, #tpu.memory_space<vmem>>, vector<1x512xf32>
    %294 = vector.broadcast %293 : vector<1x512xf32> to vector<8x512xf32>
    %295 = arith.mulf %292, %294 : vector<8x512xf32>
    %c34 = arith.constant 34 : index
    %c0_212 = arith.constant 0 : index
    %c0_213 = arith.constant 0 : index
    %296 = vector.load %arg4[%c34, %c0_212, %c0_213] : memref<72x8x8xf32, #tpu.memory_space<vmem>>, vector<1x8x8xf32>
    %297 = vector.shape_cast %296 : vector<1x8x8xf32> to vector<8x8xf32>
    %cst_214 = arith.constant dense<0.000000e+00> : vector<8x512xf32>
    %298 = tpu.matmul %297, %295, %cst_214 {dimension_numbers = #tpu.dot_dimension_numbers<[1], [0], [0], [1], [0, 0, 1, 1], [], []>} : vector<8x8xf32>, vector<8x512xf32>, vector<8x512xf32> -> vector<8x512xf32>
    %299 = arith.addf %291, %298 : vector<8x512xf32>
    %c495_i32_215 = arith.constant 495 : i32
    %300 = tpu.dynamic_rotate %232 by %c495_i32_215 dim 1 : vector<8x512xf32>, i32 -> vector<8x512xf32>
    %c8_216 = arith.constant 8 : index
    %c0_217 = arith.constant 0 : index
    %301 = vector.load %arg2[%c8_216, %c0_217] : memref<9x512xf32, #tpu.memory_space<vmem>>, vector<1x512xf32>
    %302 = vector.broadcast %301 : vector<1x512xf32> to vector<8x512xf32>
    %303 = arith.mulf %300, %302 : vector<8x512xf32>
    %c35 = arith.constant 35 : index
    %c0_218 = arith.constant 0 : index
    %c0_219 = arith.constant 0 : index
    %304 = vector.load %arg4[%c35, %c0_218, %c0_219] : memref<72x8x8xf32, #tpu.memory_space<vmem>>, vector<1x8x8xf32>
    %305 = vector.shape_cast %304 : vector<1x8x8xf32> to vector<8x8xf32>
    %cst_220 = arith.constant dense<0.000000e+00> : vector<8x512xf32>
    %306 = tpu.matmul %305, %303, %cst_220 {dimension_numbers = #tpu.dot_dimension_numbers<[1], [0], [0], [1], [0, 0, 1, 1], [], []>} : vector<8x8xf32>, vector<8x512xf32>, vector<8x512xf32> -> vector<8x512xf32>
    %307 = arith.addf %299, %306 : vector<8x512xf32>
    %cst_221 = arith.constant 0.000000e+00 : f32
    %308 = vector.broadcast %cst_221 : f32 to vector<8x512xf32>
    %309 = arith.maximumf %307, %308 : vector<8x512xf32>
    %cst_222 = arith.constant 0.000000e+00 : f32
    %310 = arith.subf %cst_222, %0 : f32
    %311 = vector.broadcast %310 : f32 to vector<8x512xf32>
    %312 = arith.maximumf %311, %309 : vector<8x512xf32>
    %313 = vector.broadcast %0 : f32 to vector<8x512xf32>
    %314 = arith.minimumf %313, %312 : vector<8x512xf32>
    %315 = arith.subf %309, %314 : vector<8x512xf32>
    %c0_223 = arith.constant 0 : index
    %c0_224 = arith.constant 0 : index
    %316 = vector.load %arg7[%c0_223, %c0_224] : memref<8x512xf32, #tpu.memory_space<vmem>>, vector<8x512xf32>
    tpu.vector_store %arg7[%c0_223, %c0_224], %315 {strides = array<i32>} : memref<8x512xf32, #tpu.memory_space<vmem>>, vector<8x512xf32>,
    %c4_225 = arith.constant 4 : index
    %c0_226 = arith.constant 0 : index
    %c0_227 = arith.constant 0 : index
    %317 = vector.load %arg5[%c4_225, %c0_226, %c0_227] : memref<8x8x1xf32, #tpu.memory_space<vmem>>, vector<1x8x1xf32>
    %318 = vector.shape_cast %317 : vector<1x8x1xf32> to vector<8x1xf32>
    %319 = vector.shape_cast %318 : vector<8x1xf32> to vector<8x1xf32>
    %320 = vector.broadcast %319 : vector<8x1xf32> to vector<8x512xf32>
    %c17_i32_228 = arith.constant 17 : i32
    %321 = tpu.dynamic_rotate %315 by %c17_i32_228 dim 1 : vector<8x512xf32>, i32 -> vector<8x512xf32>
    %c0_229 = arith.constant 0 : index
    %c0_230 = arith.constant 0 : index
    %322 = vector.load %arg2[%c0_229, %c0_230] : memref<9x512xf32, #tpu.memory_space<vmem>>, vector<1x512xf32>
    %323 = vector.broadcast %322 : vector<1x512xf32> to vector<8x512xf32>
    %324 = arith.mulf %321, %323 : vector<8x512xf32>
    %c36 = arith.constant 36 : index
    %c0_231 = arith.constant 0 : index
    %c0_232 = arith.constant 0 : index
    %325 = vector.load %arg4[%c36, %c0_231, %c0_232] : memref<72x8x8xf32, #tpu.memory_space<vmem>>, vector<1x8x8xf32>
    %326 = vector.shape_cast %325 : vector<1x8x8xf32> to vector<8x8xf32>
    %cst_233 = arith.constant dense<0.000000e+00> : vector<8x512xf32>
    %327 = tpu.matmul %326, %324, %cst_233 {dimension_numbers = #tpu.dot_dimension_numbers<[1], [0], [0], [1], [0, 0, 1, 1], [], []>} : vector<8x8xf32>, vector<8x512xf32>, vector<8x512xf32> -> vector<8x512xf32>
    %328 = arith.addf %320, %327 : vector<8x512xf32>
    %c16_i32_234 = arith.constant 16 : i32
    %329 = tpu.dynamic_rotate %315 by %c16_i32_234 dim 1 : vector<8x512xf32>, i32 -> vector<8x512xf32>
    %c1_235 = arith.constant 1 : index
    %c0_236 = arith.constant 0 : index
    %330 = vector.load %arg2[%c1_235, %c0_236] : memref<9x512xf32, #tpu.memory_space<vmem>>, vector<1x512xf32>
    %331 = vector.broadcast %330 : vector<1x512xf32> to vector<8x512xf32>
    %332 = arith.mulf %329, %331 : vector<8x512xf32>
    %c37 = arith.constant 37 : index
    %c0_237 = arith.constant 0 : index
    %c0_238 = arith.constant 0 : index
    %333 = vector.load %arg4[%c37, %c0_237, %c0_238] : memref<72x8x8xf32, #tpu.memory_space<vmem>>, vector<1x8x8xf32>
    %334 = vector.shape_cast %333 : vector<1x8x8xf32> to vector<8x8xf32>
    %cst_239 = arith.constant dense<0.000000e+00> : vector<8x512xf32>
    %335 = tpu.matmul %334, %332, %cst_239 {dimension_numbers = #tpu.dot_dimension_numbers<[1], [0], [0], [1], [0, 0, 1, 1], [], []>} : vector<8x8xf32>, vector<8x512xf32>, vector<8x512xf32> -> vector<8x512xf32>
    %336 = arith.addf %328, %335 : vector<8x512xf32>
    %c15_i32_240 = arith.constant 15 : i32
    %337 = tpu.dynamic_rotate %315 by %c15_i32_240 dim 1 : vector<8x512xf32>, i32 -> vector<8x512xf32>
    %c2_241 = arith.constant 2 : index
    %c0_242 = arith.constant 0 : index
    %338 = vector.load %arg2[%c2_241, %c0_242] : memref<9x512xf32, #tpu.memory_space<vmem>>, vector<1x512xf32>
    %339 = vector.broadcast %338 : vector<1x512xf32> to vector<8x512xf32>
    %340 = arith.mulf %337, %339 : vector<8x512xf32>
    %c38 = arith.constant 38 : index
    %c0_243 = arith.constant 0 : index
    %c0_244 = arith.constant 0 : index
    %341 = vector.load %arg4[%c38, %c0_243, %c0_244] : memref<72x8x8xf32, #tpu.memory_space<vmem>>, vector<1x8x8xf32>
    %342 = vector.shape_cast %341 : vector<1x8x8xf32> to vector<8x8xf32>
    %cst_245 = arith.constant dense<0.000000e+00> : vector<8x512xf32>
    %343 = tpu.matmul %342, %340, %cst_245 {dimension_numbers = #tpu.dot_dimension_numbers<[1], [0], [0], [1], [0, 0, 1, 1], [], []>} : vector<8x8xf32>, vector<8x512xf32>, vector<8x512xf32> -> vector<8x512xf32>
    %344 = arith.addf %336, %343 : vector<8x512xf32>
    %c1_i32_246 = arith.constant 1 : i32
    %345 = tpu.dynamic_rotate %315 by %c1_i32_246 dim 1 : vector<8x512xf32>, i32 -> vector<8x512xf32>
    %c3_247 = arith.constant 3 : index
    %c0_248 = arith.constant 0 : index
    %346 = vector.load %arg2[%c3_247, %c0_248] : memref<9x512xf32, #tpu.memory_space<vmem>>, vector<1x512xf32>
    %347 = vector.broadcast %346 : vector<1x512xf32> to vector<8x512xf32>
    %348 = arith.mulf %345, %347 : vector<8x512xf32>
    %c39 = arith.constant 39 : index
    %c0_249 = arith.constant 0 : index
    %c0_250 = arith.constant 0 : index
    %349 = vector.load %arg4[%c39, %c0_249, %c0_250] : memref<72x8x8xf32, #tpu.memory_space<vmem>>, vector<1x8x8xf32>
    %350 = vector.shape_cast %349 : vector<1x8x8xf32> to vector<8x8xf32>
    %cst_251 = arith.constant dense<0.000000e+00> : vector<8x512xf32>
    %351 = tpu.matmul %350, %348, %cst_251 {dimension_numbers = #tpu.dot_dimension_numbers<[1], [0], [0], [1], [0, 0, 1, 1], [], []>} : vector<8x8xf32>, vector<8x512xf32>, vector<8x512xf32> -> vector<8x512xf32>
    %352 = arith.addf %344, %351 : vector<8x512xf32>
    %c4_252 = arith.constant 4 : index
    %c0_253 = arith.constant 0 : index
    %353 = vector.load %arg2[%c4_252, %c0_253] : memref<9x512xf32, #tpu.memory_space<vmem>>, vector<1x512xf32>
    %354 = vector.broadcast %353 : vector<1x512xf32> to vector<8x512xf32>
    %355 = arith.mulf %315, %354 : vector<8x512xf32>
    %c40 = arith.constant 40 : index
    %c0_254 = arith.constant 0 : index
    %c0_255 = arith.constant 0 : index
    %356 = vector.load %arg4[%c40, %c0_254, %c0_255] : memref<72x8x8xf32, #tpu.memory_space<vmem>>, vector<1x8x8xf32>
    %357 = vector.shape_cast %356 : vector<1x8x8xf32> to vector<8x8xf32>
    %cst_256 = arith.constant dense<0.000000e+00> : vector<8x512xf32>
    %358 = tpu.matmul %357, %355, %cst_256 {dimension_numbers = #tpu.dot_dimension_numbers<[1], [0], [0], [1], [0, 0, 1, 1], [], []>} : vector<8x8xf32>, vector<8x512xf32>, vector<8x512xf32> -> vector<8x512xf32>
    %359 = arith.addf %352, %358 : vector<8x512xf32>
    %c511_i32_257 = arith.constant 511 : i32
    %360 = tpu.dynamic_rotate %315 by %c511_i32_257 dim 1 : vector<8x512xf32>, i32 -> vector<8x512xf32>
    %c5_258 = arith.constant 5 : index
    %c0_259 = arith.constant 0 : index
    %361 = vector.load %arg2[%c5_258, %c0_259] : memref<9x512xf32, #tpu.memory_space<vmem>>, vector<1x512xf32>
    %362 = vector.broadcast %361 : vector<1x512xf32> to vector<8x512xf32>
    %363 = arith.mulf %360, %362 : vector<8x512xf32>
    %c41 = arith.constant 41 : index
    %c0_260 = arith.constant 0 : index
    %c0_261 = arith.constant 0 : index
    %364 = vector.load %arg4[%c41, %c0_260, %c0_261] : memref<72x8x8xf32, #tpu.memory_space<vmem>>, vector<1x8x8xf32>
    %365 = vector.shape_cast %364 : vector<1x8x8xf32> to vector<8x8xf32>
    %cst_262 = arith.constant dense<0.000000e+00> : vector<8x512xf32>
    %366 = tpu.matmul %365, %363, %cst_262 {dimension_numbers = #tpu.dot_dimension_numbers<[1], [0], [0], [1], [0, 0, 1, 1], [], []>} : vector<8x8xf32>, vector<8x512xf32>, vector<8x512xf32> -> vector<8x512xf32>
    %367 = arith.addf %359, %366 : vector<8x512xf32>
    %c497_i32_263 = arith.constant 497 : i32
    %368 = tpu.dynamic_rotate %315 by %c497_i32_263 dim 1 : vector<8x512xf32>, i32 -> vector<8x512xf32>
    %c6_264 = arith.constant 6 : index
    %c0_265 = arith.constant 0 : index
    %369 = vector.load %arg2[%c6_264, %c0_265] : memref<9x512xf32, #tpu.memory_space<vmem>>, vector<1x512xf32>
    %370 = vector.broadcast %369 : vector<1x512xf32> to vector<8x512xf32>
    %371 = arith.mulf %368, %370 : vector<8x512xf32>
    %c42 = arith.constant 42 : index
    %c0_266 = arith.constant 0 : index
    %c0_267 = arith.constant 0 : index
    %372 = vector.load %arg4[%c42, %c0_266, %c0_267] : memref<72x8x8xf32, #tpu.memory_space<vmem>>, vector<1x8x8xf32>
    %373 = vector.shape_cast %372 : vector<1x8x8xf32> to vector<8x8xf32>
    %cst_268 = arith.constant dense<0.000000e+00> : vector<8x512xf32>
    %374 = tpu.matmul %373, %371, %cst_268 {dimension_numbers = #tpu.dot_dimension_numbers<[1], [0], [0], [1], [0, 0, 1, 1], [], []>} : vector<8x8xf32>, vector<8x512xf32>, vector<8x512xf32> -> vector<8x512xf32>
    %375 = arith.addf %367, %374 : vector<8x512xf32>
    %c496_i32_269 = arith.constant 496 : i32
    %376 = tpu.dynamic_rotate %315 by %c496_i32_269 dim 1 : vector<8x512xf32>, i32 -> vector<8x512xf32>
    %c7_270 = arith.constant 7 : index
    %c0_271 = arith.constant 0 : index
    %377 = vector.load %arg2[%c7_270, %c0_271] : memref<9x512xf32, #tpu.memory_space<vmem>>, vector<1x512xf32>
    %378 = vector.broadcast %377 : vector<1x512xf32> to vector<8x512xf32>
    %379 = arith.mulf %376, %378 : vector<8x512xf32>
    %c43 = arith.constant 43 : index
    %c0_272 = arith.constant 0 : index
    %c0_273 = arith.constant 0 : index
    %380 = vector.load %arg4[%c43, %c0_272, %c0_273] : memref<72x8x8xf32, #tpu.memory_space<vmem>>, vector<1x8x8xf32>
    %381 = vector.shape_cast %380 : vector<1x8x8xf32> to vector<8x8xf32>
    %cst_274 = arith.constant dense<0.000000e+00> : vector<8x512xf32>
    %382 = tpu.matmul %381, %379, %cst_274 {dimension_numbers = #tpu.dot_dimension_numbers<[1], [0], [0], [1], [0, 0, 1, 1], [], []>} : vector<8x8xf32>, vector<8x512xf32>, vector<8x512xf32> -> vector<8x512xf32>
    %383 = arith.addf %375, %382 : vector<8x512xf32>
    %c495_i32_275 = arith.constant 495 : i32
    %384 = tpu.dynamic_rotate %315 by %c495_i32_275 dim 1 : vector<8x512xf32>, i32 -> vector<8x512xf32>
    %c8_276 = arith.constant 8 : index
    %c0_277 = arith.constant 0 : index
    %385 = vector.load %arg2[%c8_276, %c0_277] : memref<9x512xf32, #tpu.memory_space<vmem>>, vector<1x512xf32>
    %386 = vector.broadcast %385 : vector<1x512xf32> to vector<8x512xf32>
    %387 = arith.mulf %384, %386 : vector<8x512xf32>
    %c44 = arith.constant 44 : index
    %c0_278 = arith.constant 0 : index
    %c0_279 = arith.constant 0 : index
    %388 = vector.load %arg4[%c44, %c0_278, %c0_279] : memref<72x8x8xf32, #tpu.memory_space<vmem>>, vector<1x8x8xf32>
    %389 = vector.shape_cast %388 : vector<1x8x8xf32> to vector<8x8xf32>
    %cst_280 = arith.constant dense<0.000000e+00> : vector<8x512xf32>
    %390 = tpu.matmul %389, %387, %cst_280 {dimension_numbers = #tpu.dot_dimension_numbers<[1], [0], [0], [1], [0, 0, 1, 1], [], []>} : vector<8x8xf32>, vector<8x512xf32>, vector<8x512xf32> -> vector<8x512xf32>
    %391 = arith.addf %383, %390 : vector<8x512xf32>
    %cst_281 = arith.constant 0.000000e+00 : f32
    %392 = vector.broadcast %cst_281 : f32 to vector<8x512xf32>
    %393 = arith.maximumf %391, %392 : vector<8x512xf32>
    %c5_282 = arith.constant 5 : index
    %c0_283 = arith.constant 0 : index
    %c0_284 = arith.constant 0 : index
    %394 = vector.load %arg5[%c5_282, %c0_283, %c0_284] : memref<8x8x1xf32, #tpu.memory_space<vmem>>, vector<1x8x1xf32>
    %395 = vector.shape_cast %394 : vector<1x8x1xf32> to vector<8x1xf32>
    %396 = vector.shape_cast %395 : vector<8x1xf32> to vector<8x1xf32>
    %397 = vector.broadcast %396 : vector<8x1xf32> to vector<8x512xf32>
    %c17_i32_285 = arith.constant 17 : i32
    %398 = tpu.dynamic_rotate %393 by %c17_i32_285 dim 1 : vector<8x512xf32>, i32 -> vector<8x512xf32>
    %c0_286 = arith.constant 0 : index
    %c0_287 = arith.constant 0 : index
    %399 = vector.load %arg2[%c0_286, %c0_287] : memref<9x512xf32, #tpu.memory_space<vmem>>, vector<1x512xf32>
    %400 = vector.broadcast %399 : vector<1x512xf32> to vector<8x512xf32>
    %401 = arith.mulf %398, %400 : vector<8x512xf32>
    %c45 = arith.constant 45 : index
    %c0_288 = arith.constant 0 : index
    %c0_289 = arith.constant 0 : index
    %402 = vector.load %arg4[%c45, %c0_288, %c0_289] : memref<72x8x8xf32, #tpu.memory_space<vmem>>, vector<1x8x8xf32>
    %403 = vector.shape_cast %402 : vector<1x8x8xf32> to vector<8x8xf32>
    %cst_290 = arith.constant dense<0.000000e+00> : vector<8x512xf32>
    %404 = tpu.matmul %403, %401, %cst_290 {dimension_numbers = #tpu.dot_dimension_numbers<[1], [0], [0], [1], [0, 0, 1, 1], [], []>} : vector<8x8xf32>, vector<8x512xf32>, vector<8x512xf32> -> vector<8x512xf32>
    %405 = arith.addf %397, %404 : vector<8x512xf32>
    %c16_i32_291 = arith.constant 16 : i32
    %406 = tpu.dynamic_rotate %393 by %c16_i32_291 dim 1 : vector<8x512xf32>, i32 -> vector<8x512xf32>
    %c1_292 = arith.constant 1 : index
    %c0_293 = arith.constant 0 : index
    %407 = vector.load %arg2[%c1_292, %c0_293] : memref<9x512xf32, #tpu.memory_space<vmem>>, vector<1x512xf32>
    %408 = vector.broadcast %407 : vector<1x512xf32> to vector<8x512xf32>
    %409 = arith.mulf %406, %408 : vector<8x512xf32>
    %c46 = arith.constant 46 : index
    %c0_294 = arith.constant 0 : index
    %c0_295 = arith.constant 0 : index
    %410 = vector.load %arg4[%c46, %c0_294, %c0_295] : memref<72x8x8xf32, #tpu.memory_space<vmem>>, vector<1x8x8xf32>
    %411 = vector.shape_cast %410 : vector<1x8x8xf32> to vector<8x8xf32>
    %cst_296 = arith.constant dense<0.000000e+00> : vector<8x512xf32>
    %412 = tpu.matmul %411, %409, %cst_296 {dimension_numbers = #tpu.dot_dimension_numbers<[1], [0], [0], [1], [0, 0, 1, 1], [], []>} : vector<8x8xf32>, vector<8x512xf32>, vector<8x512xf32> -> vector<8x512xf32>
    %413 = arith.addf %405, %412 : vector<8x512xf32>
    %c15_i32_297 = arith.constant 15 : i32
    %414 = tpu.dynamic_rotate %393 by %c15_i32_297 dim 1 : vector<8x512xf32>, i32 -> vector<8x512xf32>
    %c2_298 = arith.constant 2 : index
    %c0_299 = arith.constant 0 : index
    %415 = vector.load %arg2[%c2_298, %c0_299] : memref<9x512xf32, #tpu.memory_space<vmem>>, vector<1x512xf32>
    %416 = vector.broadcast %415 : vector<1x512xf32> to vector<8x512xf32>
    %417 = arith.mulf %414, %416 : vector<8x512xf32>
    %c47 = arith.constant 47 : index
    %c0_300 = arith.constant 0 : index
    %c0_301 = arith.constant 0 : index
    %418 = vector.load %arg4[%c47, %c0_300, %c0_301] : memref<72x8x8xf32, #tpu.memory_space<vmem>>, vector<1x8x8xf32>
    %419 = vector.shape_cast %418 : vector<1x8x8xf32> to vector<8x8xf32>
    %cst_302 = arith.constant dense<0.000000e+00> : vector<8x512xf32>
    %420 = tpu.matmul %419, %417, %cst_302 {dimension_numbers = #tpu.dot_dimension_numbers<[1], [0], [0], [1], [0, 0, 1, 1], [], []>} : vector<8x8xf32>, vector<8x512xf32>, vector<8x512xf32> -> vector<8x512xf32>
    %421 = arith.addf %413, %420 : vector<8x512xf32>
    %c1_i32_303 = arith.constant 1 : i32
    %422 = tpu.dynamic_rotate %393 by %c1_i32_303 dim 1 : vector<8x512xf32>, i32 -> vector<8x512xf32>
    %c3_304 = arith.constant 3 : index
    %c0_305 = arith.constant 0 : index
    %423 = vector.load %arg2[%c3_304, %c0_305] : memref<9x512xf32, #tpu.memory_space<vmem>>, vector<1x512xf32>
    %424 = vector.broadcast %423 : vector<1x512xf32> to vector<8x512xf32>
    %425 = arith.mulf %422, %424 : vector<8x512xf32>
    %c48 = arith.constant 48 : index
    %c0_306 = arith.constant 0 : index
    %c0_307 = arith.constant 0 : index
    %426 = vector.load %arg4[%c48, %c0_306, %c0_307] : memref<72x8x8xf32, #tpu.memory_space<vmem>>, vector<1x8x8xf32>
    %427 = vector.shape_cast %426 : vector<1x8x8xf32> to vector<8x8xf32>
    %cst_308 = arith.constant dense<0.000000e+00> : vector<8x512xf32>
    %428 = tpu.matmul %427, %425, %cst_308 {dimension_numbers = #tpu.dot_dimension_numbers<[1], [0], [0], [1], [0, 0, 1, 1], [], []>} : vector<8x8xf32>, vector<8x512xf32>, vector<8x512xf32> -> vector<8x512xf32>
    %429 = arith.addf %421, %428 : vector<8x512xf32>
    %c4_309 = arith.constant 4 : index
    %c0_310 = arith.constant 0 : index
    %430 = vector.load %arg2[%c4_309, %c0_310] : memref<9x512xf32, #tpu.memory_space<vmem>>, vector<1x512xf32>
    %431 = vector.broadcast %430 : vector<1x512xf32> to vector<8x512xf32>
    %432 = arith.mulf %393, %431 : vector<8x512xf32>
    %c49 = arith.constant 49 : index
    %c0_311 = arith.constant 0 : index
    %c0_312 = arith.constant 0 : index
    %433 = vector.load %arg4[%c49, %c0_311, %c0_312] : memref<72x8x8xf32, #tpu.memory_space<vmem>>, vector<1x8x8xf32>
    %434 = vector.shape_cast %433 : vector<1x8x8xf32> to vector<8x8xf32>
    %cst_313 = arith.constant dense<0.000000e+00> : vector<8x512xf32>
    %435 = tpu.matmul %434, %432, %cst_313 {dimension_numbers = #tpu.dot_dimension_numbers<[1], [0], [0], [1], [0, 0, 1, 1], [], []>} : vector<8x8xf32>, vector<8x512xf32>, vector<8x512xf32> -> vector<8x512xf32>
    %436 = arith.addf %429, %435 : vector<8x512xf32>
    %c511_i32_314 = arith.constant 511 : i32
    %437 = tpu.dynamic_rotate %393 by %c511_i32_314 dim 1 : vector<8x512xf32>, i32 -> vector<8x512xf32>
    %c5_315 = arith.constant 5 : index
    %c0_316 = arith.constant 0 : index
    %438 = vector.load %arg2[%c5_315, %c0_316] : memref<9x512xf32, #tpu.memory_space<vmem>>, vector<1x512xf32>
    %439 = vector.broadcast %438 : vector<1x512xf32> to vector<8x512xf32>
    %440 = arith.mulf %437, %439 : vector<8x512xf32>
    %c50 = arith.constant 50 : index
    %c0_317 = arith.constant 0 : index
    %c0_318 = arith.constant 0 : index
    %441 = vector.load %arg4[%c50, %c0_317, %c0_318] : memref<72x8x8xf32, #tpu.memory_space<vmem>>, vector<1x8x8xf32>
    %442 = vector.shape_cast %441 : vector<1x8x8xf32> to vector<8x8xf32>
    %cst_319 = arith.constant dense<0.000000e+00> : vector<8x512xf32>
    %443 = tpu.matmul %442, %440, %cst_319 {dimension_numbers = #tpu.dot_dimension_numbers<[1], [0], [0], [1], [0, 0, 1, 1], [], []>} : vector<8x8xf32>, vector<8x512xf32>, vector<8x512xf32> -> vector<8x512xf32>
    %444 = arith.addf %436, %443 : vector<8x512xf32>
    %c497_i32_320 = arith.constant 497 : i32
    %445 = tpu.dynamic_rotate %393 by %c497_i32_320 dim 1 : vector<8x512xf32>, i32 -> vector<8x512xf32>
    %c6_321 = arith.constant 6 : index
    %c0_322 = arith.constant 0 : index
    %446 = vector.load %arg2[%c6_321, %c0_322] : memref<9x512xf32, #tpu.memory_space<vmem>>, vector<1x512xf32>
    %447 = vector.broadcast %446 : vector<1x512xf32> to vector<8x512xf32>
    %448 = arith.mulf %445, %447 : vector<8x512xf32>
    %c51 = arith.constant 51 : index
    %c0_323 = arith.constant 0 : index
    %c0_324 = arith.constant 0 : index
    %449 = vector.load %arg4[%c51, %c0_323, %c0_324] : memref<72x8x8xf32, #tpu.memory_space<vmem>>, vector<1x8x8xf32>
    %450 = vector.shape_cast %449 : vector<1x8x8xf32> to vector<8x8xf32>
    %cst_325 = arith.constant dense<0.000000e+00> : vector<8x512xf32>
    %451 = tpu.matmul %450, %448, %cst_325 {dimension_numbers = #tpu.dot_dimension_numbers<[1], [0], [0], [1], [0, 0, 1, 1], [], []>} : vector<8x8xf32>, vector<8x512xf32>, vector<8x512xf32> -> vector<8x512xf32>
    %452 = arith.addf %444, %451 : vector<8x512xf32>
    %c496_i32_326 = arith.constant 496 : i32
    %453 = tpu.dynamic_rotate %393 by %c496_i32_326 dim 1 : vector<8x512xf32>, i32 -> vector<8x512xf32>
    %c7_327 = arith.constant 7 : index
    %c0_328 = arith.constant 0 : index
    %454 = vector.load %arg2[%c7_327, %c0_328] : memref<9x512xf32, #tpu.memory_space<vmem>>, vector<1x512xf32>
    %455 = vector.broadcast %454 : vector<1x512xf32> to vector<8x512xf32>
    %456 = arith.mulf %453, %455 : vector<8x512xf32>
    %c52 = arith.constant 52 : index
    %c0_329 = arith.constant 0 : index
    %c0_330 = arith.constant 0 : index
    %457 = vector.load %arg4[%c52, %c0_329, %c0_330] : memref<72x8x8xf32, #tpu.memory_space<vmem>>, vector<1x8x8xf32>
    %458 = vector.shape_cast %457 : vector<1x8x8xf32> to vector<8x8xf32>
    %cst_331 = arith.constant dense<0.000000e+00> : vector<8x512xf32>
    %459 = tpu.matmul %458, %456, %cst_331 {dimension_numbers = #tpu.dot_dimension_numbers<[1], [0], [0], [1], [0, 0, 1, 1], [], []>} : vector<8x8xf32>, vector<8x512xf32>, vector<8x512xf32> -> vector<8x512xf32>
    %460 = arith.addf %452, %459 : vector<8x512xf32>
    %c495_i32_332 = arith.constant 495 : i32
    %461 = tpu.dynamic_rotate %393 by %c495_i32_332 dim 1 : vector<8x512xf32>, i32 -> vector<8x512xf32>
    %c8_333 = arith.constant 8 : index
    %c0_334 = arith.constant 0 : index
    %462 = vector.load %arg2[%c8_333, %c0_334] : memref<9x512xf32, #tpu.memory_space<vmem>>, vector<1x512xf32>
    %463 = vector.broadcast %462 : vector<1x512xf32> to vector<8x512xf32>
    %464 = arith.mulf %461, %463 : vector<8x512xf32>
    %c53 = arith.constant 53 : index
    %c0_335 = arith.constant 0 : index
    %c0_336 = arith.constant 0 : index
    %465 = vector.load %arg4[%c53, %c0_335, %c0_336] : memref<72x8x8xf32, #tpu.memory_space<vmem>>, vector<1x8x8xf32>
    %466 = vector.shape_cast %465 : vector<1x8x8xf32> to vector<8x8xf32>
    %cst_337 = arith.constant dense<0.000000e+00> : vector<8x512xf32>
    %467 = tpu.matmul %466, %464, %cst_337 {dimension_numbers = #tpu.dot_dimension_numbers<[1], [0], [0], [1], [0, 0, 1, 1], [], []>} : vector<8x8xf32>, vector<8x512xf32>, vector<8x512xf32> -> vector<8x512xf32>
    %468 = arith.addf %460, %467 : vector<8x512xf32>
    %cst_338 = arith.constant 0.000000e+00 : f32
    %469 = vector.broadcast %cst_338 : f32 to vector<8x512xf32>
    %470 = arith.maximumf %468, %469 : vector<8x512xf32>
    %c6_339 = arith.constant 6 : index
    %c0_340 = arith.constant 0 : index
    %c0_341 = arith.constant 0 : index
    %471 = vector.load %arg5[%c6_339, %c0_340, %c0_341] : memref<8x8x1xf32, #tpu.memory_space<vmem>>, vector<1x8x1xf32>
    %472 = vector.shape_cast %471 : vector<1x8x1xf32> to vector<8x1xf32>
    %473 = vector.shape_cast %472 : vector<8x1xf32> to vector<8x1xf32>
    %474 = vector.broadcast %473 : vector<8x1xf32> to vector<8x512xf32>
    %c17_i32_342 = arith.constant 17 : i32
    %475 = tpu.dynamic_rotate %470 by %c17_i32_342 dim 1 : vector<8x512xf32>, i32 -> vector<8x512xf32>
    %c0_343 = arith.constant 0 : index
    %c0_344 = arith.constant 0 : index
    %476 = vector.load %arg2[%c0_343, %c0_344] : memref<9x512xf32, #tpu.memory_space<vmem>>, vector<1x512xf32>
    %477 = vector.broadcast %476 : vector<1x512xf32> to vector<8x512xf32>
    %478 = arith.mulf %475, %477 : vector<8x512xf32>
    %c54 = arith.constant 54 : index
    %c0_345 = arith.constant 0 : index
    %c0_346 = arith.constant 0 : index
    %479 = vector.load %arg4[%c54, %c0_345, %c0_346] : memref<72x8x8xf32, #tpu.memory_space<vmem>>, vector<1x8x8xf32>
    %480 = vector.shape_cast %479 : vector<1x8x8xf32> to vector<8x8xf32>
    %cst_347 = arith.constant dense<0.000000e+00> : vector<8x512xf32>
    %481 = tpu.matmul %480, %478, %cst_347 {dimension_numbers = #tpu.dot_dimension_numbers<[1], [0], [0], [1], [0, 0, 1, 1], [], []>} : vector<8x8xf32>, vector<8x512xf32>, vector<8x512xf32> -> vector<8x512xf32>
    %482 = arith.addf %474, %481 : vector<8x512xf32>
    %c16_i32_348 = arith.constant 16 : i32
    %483 = tpu.dynamic_rotate %470 by %c16_i32_348 dim 1 : vector<8x512xf32>, i32 -> vector<8x512xf32>
    %c1_349 = arith.constant 1 : index
    %c0_350 = arith.constant 0 : index
    %484 = vector.load %arg2[%c1_349, %c0_350] : memref<9x512xf32, #tpu.memory_space<vmem>>, vector<1x512xf32>
    %485 = vector.broadcast %484 : vector<1x512xf32> to vector<8x512xf32>
    %486 = arith.mulf %483, %485 : vector<8x512xf32>
    %c55 = arith.constant 55 : index
    %c0_351 = arith.constant 0 : index
    %c0_352 = arith.constant 0 : index
    %487 = vector.load %arg4[%c55, %c0_351, %c0_352] : memref<72x8x8xf32, #tpu.memory_space<vmem>>, vector<1x8x8xf32>
    %488 = vector.shape_cast %487 : vector<1x8x8xf32> to vector<8x8xf32>
    %cst_353 = arith.constant dense<0.000000e+00> : vector<8x512xf32>
    %489 = tpu.matmul %488, %486, %cst_353 {dimension_numbers = #tpu.dot_dimension_numbers<[1], [0], [0], [1], [0, 0, 1, 1], [], []>} : vector<8x8xf32>, vector<8x512xf32>, vector<8x512xf32> -> vector<8x512xf32>
    %490 = arith.addf %482, %489 : vector<8x512xf32>
    %c15_i32_354 = arith.constant 15 : i32
    %491 = tpu.dynamic_rotate %470 by %c15_i32_354 dim 1 : vector<8x512xf32>, i32 -> vector<8x512xf32>
    %c2_355 = arith.constant 2 : index
    %c0_356 = arith.constant 0 : index
    %492 = vector.load %arg2[%c2_355, %c0_356] : memref<9x512xf32, #tpu.memory_space<vmem>>, vector<1x512xf32>
    %493 = vector.broadcast %492 : vector<1x512xf32> to vector<8x512xf32>
    %494 = arith.mulf %491, %493 : vector<8x512xf32>
    %c56 = arith.constant 56 : index
    %c0_357 = arith.constant 0 : index
    %c0_358 = arith.constant 0 : index
    %495 = vector.load %arg4[%c56, %c0_357, %c0_358] : memref<72x8x8xf32, #tpu.memory_space<vmem>>, vector<1x8x8xf32>
    %496 = vector.shape_cast %495 : vector<1x8x8xf32> to vector<8x8xf32>
    %cst_359 = arith.constant dense<0.000000e+00> : vector<8x512xf32>
    %497 = tpu.matmul %496, %494, %cst_359 {dimension_numbers = #tpu.dot_dimension_numbers<[1], [0], [0], [1], [0, 0, 1, 1], [], []>} : vector<8x8xf32>, vector<8x512xf32>, vector<8x512xf32> -> vector<8x512xf32>
    %498 = arith.addf %490, %497 : vector<8x512xf32>
    %c1_i32_360 = arith.constant 1 : i32
    %499 = tpu.dynamic_rotate %470 by %c1_i32_360 dim 1 : vector<8x512xf32>, i32 -> vector<8x512xf32>
    %c3_361 = arith.constant 3 : index
    %c0_362 = arith.constant 0 : index
    %500 = vector.load %arg2[%c3_361, %c0_362] : memref<9x512xf32, #tpu.memory_space<vmem>>, vector<1x512xf32>
    %501 = vector.broadcast %500 : vector<1x512xf32> to vector<8x512xf32>
    %502 = arith.mulf %499, %501 : vector<8x512xf32>
    %c57 = arith.constant 57 : index
    %c0_363 = arith.constant 0 : index
    %c0_364 = arith.constant 0 : index
    %503 = vector.load %arg4[%c57, %c0_363, %c0_364] : memref<72x8x8xf32, #tpu.memory_space<vmem>>, vector<1x8x8xf32>
    %504 = vector.shape_cast %503 : vector<1x8x8xf32> to vector<8x8xf32>
    %cst_365 = arith.constant dense<0.000000e+00> : vector<8x512xf32>
    %505 = tpu.matmul %504, %502, %cst_365 {dimension_numbers = #tpu.dot_dimension_numbers<[1], [0], [0], [1], [0, 0, 1, 1], [], []>} : vector<8x8xf32>, vector<8x512xf32>, vector<8x512xf32> -> vector<8x512xf32>
    %506 = arith.addf %498, %505 : vector<8x512xf32>
    %c4_366 = arith.constant 4 : index
    %c0_367 = arith.constant 0 : index
    %507 = vector.load %arg2[%c4_366, %c0_367] : memref<9x512xf32, #tpu.memory_space<vmem>>, vector<1x512xf32>
    %508 = vector.broadcast %507 : vector<1x512xf32> to vector<8x512xf32>
    %509 = arith.mulf %470, %508 : vector<8x512xf32>
    %c58 = arith.constant 58 : index
    %c0_368 = arith.constant 0 : index
    %c0_369 = arith.constant 0 : index
    %510 = vector.load %arg4[%c58, %c0_368, %c0_369] : memref<72x8x8xf32, #tpu.memory_space<vmem>>, vector<1x8x8xf32>
    %511 = vector.shape_cast %510 : vector<1x8x8xf32> to vector<8x8xf32>
    %cst_370 = arith.constant dense<0.000000e+00> : vector<8x512xf32>
    %512 = tpu.matmul %511, %509, %cst_370 {dimension_numbers = #tpu.dot_dimension_numbers<[1], [0], [0], [1], [0, 0, 1, 1], [], []>} : vector<8x8xf32>, vector<8x512xf32>, vector<8x512xf32> -> vector<8x512xf32>
    %513 = arith.addf %506, %512 : vector<8x512xf32>
    %c511_i32_371 = arith.constant 511 : i32
    %514 = tpu.dynamic_rotate %470 by %c511_i32_371 dim 1 : vector<8x512xf32>, i32 -> vector<8x512xf32>
    %c5_372 = arith.constant 5 : index
    %c0_373 = arith.constant 0 : index
    %515 = vector.load %arg2[%c5_372, %c0_373] : memref<9x512xf32, #tpu.memory_space<vmem>>, vector<1x512xf32>
    %516 = vector.broadcast %515 : vector<1x512xf32> to vector<8x512xf32>
    %517 = arith.mulf %514, %516 : vector<8x512xf32>
    %c59 = arith.constant 59 : index
    %c0_374 = arith.constant 0 : index
    %c0_375 = arith.constant 0 : index
    %518 = vector.load %arg4[%c59, %c0_374, %c0_375] : memref<72x8x8xf32, #tpu.memory_space<vmem>>, vector<1x8x8xf32>
    %519 = vector.shape_cast %518 : vector<1x8x8xf32> to vector<8x8xf32>
    %cst_376 = arith.constant dense<0.000000e+00> : vector<8x512xf32>
    %520 = tpu.matmul %519, %517, %cst_376 {dimension_numbers = #tpu.dot_dimension_numbers<[1], [0], [0], [1], [0, 0, 1, 1], [], []>} : vector<8x8xf32>, vector<8x512xf32>, vector<8x512xf32> -> vector<8x512xf32>
    %521 = arith.addf %513, %520 : vector<8x512xf32>
    %c497_i32_377 = arith.constant 497 : i32
    %522 = tpu.dynamic_rotate %470 by %c497_i32_377 dim 1 : vector<8x512xf32>, i32 -> vector<8x512xf32>
    %c6_378 = arith.constant 6 : index
    %c0_379 = arith.constant 0 : index
    %523 = vector.load %arg2[%c6_378, %c0_379] : memref<9x512xf32, #tpu.memory_space<vmem>>, vector<1x512xf32>
    %524 = vector.broadcast %523 : vector<1x512xf32> to vector<8x512xf32>
    %525 = arith.mulf %522, %524 : vector<8x512xf32>
    %c60 = arith.constant 60 : index
    %c0_380 = arith.constant 0 : index
    %c0_381 = arith.constant 0 : index
    %526 = vector.load %arg4[%c60, %c0_380, %c0_381] : memref<72x8x8xf32, #tpu.memory_space<vmem>>, vector<1x8x8xf32>
    %527 = vector.shape_cast %526 : vector<1x8x8xf32> to vector<8x8xf32>
    %cst_382 = arith.constant dense<0.000000e+00> : vector<8x512xf32>
    %528 = tpu.matmul %527, %525, %cst_382 {dimension_numbers = #tpu.dot_dimension_numbers<[1], [0], [0], [1], [0, 0, 1, 1], [], []>} : vector<8x8xf32>, vector<8x512xf32>, vector<8x512xf32> -> vector<8x512xf32>
    %529 = arith.addf %521, %528 : vector<8x512xf32>
    %c496_i32_383 = arith.constant 496 : i32
    %530 = tpu.dynamic_rotate %470 by %c496_i32_383 dim 1 : vector<8x512xf32>, i32 -> vector<8x512xf32>
    %c7_384 = arith.constant 7 : index
    %c0_385 = arith.constant 0 : index
    %531 = vector.load %arg2[%c7_384, %c0_385] : memref<9x512xf32, #tpu.memory_space<vmem>>, vector<1x512xf32>
    %532 = vector.broadcast %531 : vector<1x512xf32> to vector<8x512xf32>
    %533 = arith.mulf %530, %532 : vector<8x512xf32>
    %c61 = arith.constant 61 : index
    %c0_386 = arith.constant 0 : index
    %c0_387 = arith.constant 0 : index
    %534 = vector.load %arg4[%c61, %c0_386, %c0_387] : memref<72x8x8xf32, #tpu.memory_space<vmem>>, vector<1x8x8xf32>
    %535 = vector.shape_cast %534 : vector<1x8x8xf32> to vector<8x8xf32>
    %cst_388 = arith.constant dense<0.000000e+00> : vector<8x512xf32>
    %536 = tpu.matmul %535, %533, %cst_388 {dimension_numbers = #tpu.dot_dimension_numbers<[1], [0], [0], [1], [0, 0, 1, 1], [], []>} : vector<8x8xf32>, vector<8x512xf32>, vector<8x512xf32> -> vector<8x512xf32>
    %537 = arith.addf %529, %536 : vector<8x512xf32>
    %c495_i32_389 = arith.constant 495 : i32
    %538 = tpu.dynamic_rotate %470 by %c495_i32_389 dim 1 : vector<8x512xf32>, i32 -> vector<8x512xf32>
    %c8_390 = arith.constant 8 : index
    %c0_391 = arith.constant 0 : index
    %539 = vector.load %arg2[%c8_390, %c0_391] : memref<9x512xf32, #tpu.memory_space<vmem>>, vector<1x512xf32>
    %540 = vector.broadcast %539 : vector<1x512xf32> to vector<8x512xf32>
    %541 = arith.mulf %538, %540 : vector<8x512xf32>
    %c62 = arith.constant 62 : index
    %c0_392 = arith.constant 0 : index
    %c0_393 = arith.constant 0 : index
    %542 = vector.load %arg4[%c62, %c0_392, %c0_393] : memref<72x8x8xf32, #tpu.memory_space<vmem>>, vector<1x8x8xf32>
    %543 = vector.shape_cast %542 : vector<1x8x8xf32> to vector<8x8xf32>
    %cst_394 = arith.constant dense<0.000000e+00> : vector<8x512xf32>
    %544 = tpu.matmul %543, %541, %cst_394 {dimension_numbers = #tpu.dot_dimension_numbers<[1], [0], [0], [1], [0, 0, 1, 1], [], []>} : vector<8x8xf32>, vector<8x512xf32>, vector<8x512xf32> -> vector<8x512xf32>
    %545 = arith.addf %537, %544 : vector<8x512xf32>
    %cst_395 = arith.constant 0.000000e+00 : f32
    %546 = vector.broadcast %cst_395 : f32 to vector<8x512xf32>
    %547 = arith.maximumf %545, %546 : vector<8x512xf32>
    %c7_396 = arith.constant 7 : index
    %c0_397 = arith.constant 0 : index
    %c0_398 = arith.constant 0 : index
    %548 = vector.load %arg5[%c7_396, %c0_397, %c0_398] : memref<8x8x1xf32, #tpu.memory_space<vmem>>, vector<1x8x1xf32>
    %549 = vector.shape_cast %548 : vector<1x8x1xf32> to vector<8x1xf32>
    %550 = vector.shape_cast %549 : vector<8x1xf32> to vector<8x1xf32>
    %551 = vector.broadcast %550 : vector<8x1xf32> to vector<8x512xf32>
    %c17_i32_399 = arith.constant 17 : i32
    %552 = tpu.dynamic_rotate %547 by %c17_i32_399 dim 1 : vector<8x512xf32>, i32 -> vector<8x512xf32>
    %c0_400 = arith.constant 0 : index
    %c0_401 = arith.constant 0 : index
    %553 = vector.load %arg2[%c0_400, %c0_401] : memref<9x512xf32, #tpu.memory_space<vmem>>, vector<1x512xf32>
    %554 = vector.broadcast %553 : vector<1x512xf32> to vector<8x512xf32>
    %555 = arith.mulf %552, %554 : vector<8x512xf32>
    %c63 = arith.constant 63 : index
    %c0_402 = arith.constant 0 : index
    %c0_403 = arith.constant 0 : index
    %556 = vector.load %arg4[%c63, %c0_402, %c0_403] : memref<72x8x8xf32, #tpu.memory_space<vmem>>, vector<1x8x8xf32>
    %557 = vector.shape_cast %556 : vector<1x8x8xf32> to vector<8x8xf32>
    %cst_404 = arith.constant dense<0.000000e+00> : vector<8x512xf32>
    %558 = tpu.matmul %557, %555, %cst_404 {dimension_numbers = #tpu.dot_dimension_numbers<[1], [0], [0], [1], [0, 0, 1, 1], [], []>} : vector<8x8xf32>, vector<8x512xf32>, vector<8x512xf32> -> vector<8x512xf32>
    %559 = arith.addf %551, %558 : vector<8x512xf32>
    %c16_i32_405 = arith.constant 16 : i32
    %560 = tpu.dynamic_rotate %547 by %c16_i32_405 dim 1 : vector<8x512xf32>, i32 -> vector<8x512xf32>
    %c1_406 = arith.constant 1 : index
    %c0_407 = arith.constant 0 : index
    %561 = vector.load %arg2[%c1_406, %c0_407] : memref<9x512xf32, #tpu.memory_space<vmem>>, vector<1x512xf32>
    %562 = vector.broadcast %561 : vector<1x512xf32> to vector<8x512xf32>
    %563 = arith.mulf %560, %562 : vector<8x512xf32>
    %c64 = arith.constant 64 : index
    %c0_408 = arith.constant 0 : index
    %c0_409 = arith.constant 0 : index
    %564 = vector.load %arg4[%c64, %c0_408, %c0_409] : memref<72x8x8xf32, #tpu.memory_space<vmem>>, vector<1x8x8xf32>
    %565 = vector.shape_cast %564 : vector<1x8x8xf32> to vector<8x8xf32>
    %cst_410 = arith.constant dense<0.000000e+00> : vector<8x512xf32>
    %566 = tpu.matmul %565, %563, %cst_410 {dimension_numbers = #tpu.dot_dimension_numbers<[1], [0], [0], [1], [0, 0, 1, 1], [], []>} : vector<8x8xf32>, vector<8x512xf32>, vector<8x512xf32> -> vector<8x512xf32>
    %567 = arith.addf %559, %566 : vector<8x512xf32>
    %c15_i32_411 = arith.constant 15 : i32
    %568 = tpu.dynamic_rotate %547 by %c15_i32_411 dim 1 : vector<8x512xf32>, i32 -> vector<8x512xf32>
    %c2_412 = arith.constant 2 : index
    %c0_413 = arith.constant 0 : index
    %569 = vector.load %arg2[%c2_412, %c0_413] : memref<9x512xf32, #tpu.memory_space<vmem>>, vector<1x512xf32>
    %570 = vector.broadcast %569 : vector<1x512xf32> to vector<8x512xf32>
    %571 = arith.mulf %568, %570 : vector<8x512xf32>
    %c65 = arith.constant 65 : index
    %c0_414 = arith.constant 0 : index
    %c0_415 = arith.constant 0 : index
    %572 = vector.load %arg4[%c65, %c0_414, %c0_415] : memref<72x8x8xf32, #tpu.memory_space<vmem>>, vector<1x8x8xf32>
    %573 = vector.shape_cast %572 : vector<1x8x8xf32> to vector<8x8xf32>
    %cst_416 = arith.constant dense<0.000000e+00> : vector<8x512xf32>
    %574 = tpu.matmul %573, %571, %cst_416 {dimension_numbers = #tpu.dot_dimension_numbers<[1], [0], [0], [1], [0, 0, 1, 1], [], []>} : vector<8x8xf32>, vector<8x512xf32>, vector<8x512xf32> -> vector<8x512xf32>
    %575 = arith.addf %567, %574 : vector<8x512xf32>
    %c1_i32_417 = arith.constant 1 : i32
    %576 = tpu.dynamic_rotate %547 by %c1_i32_417 dim 1 : vector<8x512xf32>, i32 -> vector<8x512xf32>
    %c3_418 = arith.constant 3 : index
    %c0_419 = arith.constant 0 : index
    %577 = vector.load %arg2[%c3_418, %c0_419] : memref<9x512xf32, #tpu.memory_space<vmem>>, vector<1x512xf32>
    %578 = vector.broadcast %577 : vector<1x512xf32> to vector<8x512xf32>
    %579 = arith.mulf %576, %578 : vector<8x512xf32>
    %c66 = arith.constant 66 : index
    %c0_420 = arith.constant 0 : index
    %c0_421 = arith.constant 0 : index
    %580 = vector.load %arg4[%c66, %c0_420, %c0_421] : memref<72x8x8xf32, #tpu.memory_space<vmem>>, vector<1x8x8xf32>
    %581 = vector.shape_cast %580 : vector<1x8x8xf32> to vector<8x8xf32>
    %cst_422 = arith.constant dense<0.000000e+00> : vector<8x512xf32>
    %582 = tpu.matmul %581, %579, %cst_422 {dimension_numbers = #tpu.dot_dimension_numbers<[1], [0], [0], [1], [0, 0, 1, 1], [], []>} : vector<8x8xf32>, vector<8x512xf32>, vector<8x512xf32> -> vector<8x512xf32>
    %583 = arith.addf %575, %582 : vector<8x512xf32>
    %c4_423 = arith.constant 4 : index
    %c0_424 = arith.constant 0 : index
    %584 = vector.load %arg2[%c4_423, %c0_424] : memref<9x512xf32, #tpu.memory_space<vmem>>, vector<1x512xf32>
    %585 = vector.broadcast %584 : vector<1x512xf32> to vector<8x512xf32>
    %586 = arith.mulf %547, %585 : vector<8x512xf32>
    %c67 = arith.constant 67 : index
    %c0_425 = arith.constant 0 : index
    %c0_426 = arith.constant 0 : index
    %587 = vector.load %arg4[%c67, %c0_425, %c0_426] : memref<72x8x8xf32, #tpu.memory_space<vmem>>, vector<1x8x8xf32>
    %588 = vector.shape_cast %587 : vector<1x8x8xf32> to vector<8x8xf32>
    %cst_427 = arith.constant dense<0.000000e+00> : vector<8x512xf32>
    %589 = tpu.matmul %588, %586, %cst_427 {dimension_numbers = #tpu.dot_dimension_numbers<[1], [0], [0], [1], [0, 0, 1, 1], [], []>} : vector<8x8xf32>, vector<8x512xf32>, vector<8x512xf32> -> vector<8x512xf32>
    %590 = arith.addf %583, %589 : vector<8x512xf32>
    %c511_i32_428 = arith.constant 511 : i32
    %591 = tpu.dynamic_rotate %547 by %c511_i32_428 dim 1 : vector<8x512xf32>, i32 -> vector<8x512xf32>
    %c5_429 = arith.constant 5 : index
    %c0_430 = arith.constant 0 : index
    %592 = vector.load %arg2[%c5_429, %c0_430] : memref<9x512xf32, #tpu.memory_space<vmem>>, vector<1x512xf32>
    %593 = vector.broadcast %592 : vector<1x512xf32> to vector<8x512xf32>
    %594 = arith.mulf %591, %593 : vector<8x512xf32>
    %c68 = arith.constant 68 : index
    %c0_431 = arith.constant 0 : index
    %c0_432 = arith.constant 0 : index
    %595 = vector.load %arg4[%c68, %c0_431, %c0_432] : memref<72x8x8xf32, #tpu.memory_space<vmem>>, vector<1x8x8xf32>
    %596 = vector.shape_cast %595 : vector<1x8x8xf32> to vector<8x8xf32>
    %cst_433 = arith.constant dense<0.000000e+00> : vector<8x512xf32>
    %597 = tpu.matmul %596, %594, %cst_433 {dimension_numbers = #tpu.dot_dimension_numbers<[1], [0], [0], [1], [0, 0, 1, 1], [], []>} : vector<8x8xf32>, vector<8x512xf32>, vector<8x512xf32> -> vector<8x512xf32>
    %598 = arith.addf %590, %597 : vector<8x512xf32>
    %c497_i32_434 = arith.constant 497 : i32
    %599 = tpu.dynamic_rotate %547 by %c497_i32_434 dim 1 : vector<8x512xf32>, i32 -> vector<8x512xf32>
    %c6_435 = arith.constant 6 : index
    %c0_436 = arith.constant 0 : index
    %600 = vector.load %arg2[%c6_435, %c0_436] : memref<9x512xf32, #tpu.memory_space<vmem>>, vector<1x512xf32>
    %601 = vector.broadcast %600 : vector<1x512xf32> to vector<8x512xf32>
    %602 = arith.mulf %599, %601 : vector<8x512xf32>
    %c69 = arith.constant 69 : index
    %c0_437 = arith.constant 0 : index
    %c0_438 = arith.constant 0 : index
    %603 = vector.load %arg4[%c69, %c0_437, %c0_438] : memref<72x8x8xf32, #tpu.memory_space<vmem>>, vector<1x8x8xf32>
    %604 = vector.shape_cast %603 : vector<1x8x8xf32> to vector<8x8xf32>
    %cst_439 = arith.constant dense<0.000000e+00> : vector<8x512xf32>
    %605 = tpu.matmul %604, %602, %cst_439 {dimension_numbers = #tpu.dot_dimension_numbers<[1], [0], [0], [1], [0, 0, 1, 1], [], []>} : vector<8x8xf32>, vector<8x512xf32>, vector<8x512xf32> -> vector<8x512xf32>
    %606 = arith.addf %598, %605 : vector<8x512xf32>
    %c496_i32_440 = arith.constant 496 : i32
    %607 = tpu.dynamic_rotate %547 by %c496_i32_440 dim 1 : vector<8x512xf32>, i32 -> vector<8x512xf32>
    %c7_441 = arith.constant 7 : index
    %c0_442 = arith.constant 0 : index
    %608 = vector.load %arg2[%c7_441, %c0_442] : memref<9x512xf32, #tpu.memory_space<vmem>>, vector<1x512xf32>
    %609 = vector.broadcast %608 : vector<1x512xf32> to vector<8x512xf32>
    %610 = arith.mulf %607, %609 : vector<8x512xf32>
    %c70 = arith.constant 70 : index
    %c0_443 = arith.constant 0 : index
    %c0_444 = arith.constant 0 : index
    %611 = vector.load %arg4[%c70, %c0_443, %c0_444] : memref<72x8x8xf32, #tpu.memory_space<vmem>>, vector<1x8x8xf32>
    %612 = vector.shape_cast %611 : vector<1x8x8xf32> to vector<8x8xf32>
    %cst_445 = arith.constant dense<0.000000e+00> : vector<8x512xf32>
    %613 = tpu.matmul %612, %610, %cst_445 {dimension_numbers = #tpu.dot_dimension_numbers<[1], [0], [0], [1], [0, 0, 1, 1], [], []>} : vector<8x8xf32>, vector<8x512xf32>, vector<8x512xf32> -> vector<8x512xf32>
    %614 = arith.addf %606, %613 : vector<8x512xf32>
    %c495_i32_446 = arith.constant 495 : i32
    %615 = tpu.dynamic_rotate %547 by %c495_i32_446 dim 1 : vector<8x512xf32>, i32 -> vector<8x512xf32>
    %c8_447 = arith.constant 8 : index
    %c0_448 = arith.constant 0 : index
    %616 = vector.load %arg2[%c8_447, %c0_448] : memref<9x512xf32, #tpu.memory_space<vmem>>, vector<1x512xf32>
    %617 = vector.broadcast %616 : vector<1x512xf32> to vector<8x512xf32>
    %618 = arith.mulf %615, %617 : vector<8x512xf32>
    %c71 = arith.constant 71 : index
    %c0_449 = arith.constant 0 : index
    %c0_450 = arith.constant 0 : index
    %619 = vector.load %arg4[%c71, %c0_449, %c0_450] : memref<72x8x8xf32, #tpu.memory_space<vmem>>, vector<1x8x8xf32>
    %620 = vector.shape_cast %619 : vector<1x8x8xf32> to vector<8x8xf32>
    %cst_451 = arith.constant dense<0.000000e+00> : vector<8x512xf32>
    %621 = tpu.matmul %620, %618, %cst_451 {dimension_numbers = #tpu.dot_dimension_numbers<[1], [0], [0], [1], [0, 0, 1, 1], [], []>} : vector<8x8xf32>, vector<8x512xf32>, vector<8x512xf32> -> vector<8x512xf32>
    %622 = arith.addf %614, %621 : vector<8x512xf32>
    %cst_452 = arith.constant 0.000000e+00 : f32
    %623 = vector.broadcast %cst_452 : f32 to vector<8x512xf32>
    %624 = arith.maximumf %622, %623 : vector<8x512xf32>
    %c0_453 = arith.constant 0 : index
    %c0_454 = arith.constant 0 : index
    %625 = vector.load %arg6[%c0_453, %c0_454] : memref<8x512xf32, #tpu.memory_space<vmem>>, vector<8x512xf32>
    tpu.vector_store %arg6[%c0_453, %c0_454], %624 {strides = array<i32>} : memref<8x512xf32, #tpu.memory_space<vmem>>, vector<8x512xf32>,
    return
  }
  func.func @transform_0(%arg0: i32) -> i32 {
    %c0_i32 = arith.constant 0 : i32
    %c0_i32_0 = arith.constant 0 : i32
    return %c0_i32 : i32
  }
  func.func @transform_1(%arg0: i32) -> (i32, i32) {
    %c0_i32 = arith.constant 0 : i32
    %c0_i32_0 = arith.constant 0 : i32
    %c0_i32_1 = arith.constant 0 : i32
    return %c0_i32, %c0_i32_0 : i32, i32
  }
  func.func @transform_2(%arg0: i32) -> (i32, i32) {
    %c0_i32 = arith.constant 0 : i32
    %c0_i32_0 = arith.constant 0 : i32
    return %c0_i32, %arg0 : i32, i32
  }
  func.func @transform_3(%arg0: i32) -> (i32, i32, i32) {
    %c0_i32 = arith.constant 0 : i32
    %c0_i32_0 = arith.constant 0 : i32
    %c0_i32_1 = arith.constant 0 : i32
    %c0_i32_2 = arith.constant 0 : i32
    return %c0_i32, %c0_i32_0, %c0_i32_1 : i32, i32, i32
  }
  func.func @transform_4(%arg0: i32) -> (i32, i32, i32) {
    %c0_i32 = arith.constant 0 : i32
    %c0_i32_0 = arith.constant 0 : i32
    %c0_i32_1 = arith.constant 0 : i32
    %c0_i32_2 = arith.constant 0 : i32
    return %c0_i32, %c0_i32_0, %c0_i32_1 : i32, i32, i32
  }
  func.func @transform_5(%arg0: i32) -> (i32, i32) {
    %c0_i32 = arith.constant 0 : i32
    %c0_i32_0 = arith.constant 0 : i32
    return %c0_i32, %arg0 : i32, i32
  }
  func.func @transform_6(%arg0: i32) -> (i32, i32) {
    %c0_i32 = arith.constant 0 : i32
    %c0_i32_0 = arith.constant 0 : i32
    return %c0_i32, %arg0 : i32, i32
  }
}

</mosaic_0001>

<llo_original>
// kernel: proximal_mapping_forward.1
$region0: #{proximal_mapping_forward.1}
  #allocation0 [shape = 'u32[]', space=smem, size = 0x4, offset = 0x4, fixed_abs, tag = 'smem constant byte address 0x4 - core index']
  #allocation1 [shape = 'u32[72,128]{1,0:T(1,128)}', space=vmem, size = 0x9000, scoped, tag = 'internal scratch']
  #allocation2 [shape = 'f32[1]{0:T(128)S(6)}', space=smem, size = 0x200, scoped, tag = 'scoped memory for proximal_mapping_forward.1']
  %s0 = inlined_call_operand.<no memory space> [shape: f32[1], index: 0, kind: input, shape index: {}]
  %s1 = inlined_call_operand.vmem [shape: f32[9,512], index: 1, kind: input, shape index: {}]
  %s2 = inlined_call_operand.vmem [shape: f32[8,1024], index: 2, kind: input, shape index: {}]
  %s3 = inlined_call_operand.vmem [shape: f32[72,8,8], index: 3, kind: input, shape index: {}]
  %s4 = inlined_call_operand.vmem [shape: f32[8,8,1], index: 4, kind: input, shape index: {}]
  %s5 = inlined_call_operand.vmem [shape: f32[8,1024], index: 5, kind: output, shape index: {0}]
  %s6 = inlined_call_operand.vmem [shape: f32[8,1024], index: 6, kind: output, shape index: {1}]
  %7 = xla_tuple %s5, %s6
  %s8 = sld [smem:[#allocation0]]
  $region61: #{proximal_mapping_forward.1} parent=0
    _
  %s10 = ssub.s32 1, %s8
  %s11 = scalar_select 0, %s10, %s8
  %12 = sst [smem:[#allocation2]] %s0
  loop: start=0, step=1, limit=4
  $region2: #{proximal_mapping_forward.1} parent=0 // loop_pre_header
    _
  $region3: #{proximal_mapping_forward.1} parent=0 // loop_header
    %s14 = sphi 0, %s18
    %p15 = scmp.ge.s32.totalorder %s14, 4
    %s22 = sphi 0, %s22
    %s24 = sphi 0, %s22
    %s25 = sphi 0, %s24
    %s39 = sphi 0, %s25
    %s43 = sphi 0, %s43
    %s45 = sphi 0, %s43
    %s46 = sphi 0, %s45
    %s60 = sphi 0, %s46
    %s66 = sphi 0, %s68
    %s69 = sphi 0, %s66
    %s70 = sphi 0, %s69
    %s86 = sphi 0, %s70
    %s90 = sphi 0, %s90
    %s92 = sphi 0, %s90
    %s93 = sphi 0, %s92
    %s107 = sphi 0, %s93
    %s111 = sphi 0, %s111
    %s113 = sphi 0, %s111
    %s114 = sphi 0, %s113
    %s128 = sphi 0, %s114
    %s134 = sphi 0, %s136
    %s137 = sphi 0, %s134
    %s138 = sphi 0, %s137
    %s154 = sphi 0, %s138
    %s160 = sphi 0, %s162
    %s163 = sphi 0, %s160
    %s164 = sphi 0, %s163
    %s180 = sphi 0, %s164
  $region4: #{proximal_mapping_forward.1} parent=0 // loop_header_branch
    %17 = sbr.rel (%p15) target = $region8
  $region5: #{proximal_mapping_forward.1} parent=0 // loop_body
    %s19 = ssub.s32 %s14, 1
    %s20 = ssub.s32 %s14, 2
    %s21 = sadd.s32 %s14, 1
    %s23 = sadd.s32 %s22, 1
    %p26 = scmp.eq.s32.totalorder %s14, 1
    %p27 = scmp.ne.s32.totalorder %s22, %s24
    %p28 = scmp.eq.s32.totalorder %s14, 0
    %p29 = por %p27, %p28
    %p30 = scmp.ne.s32.totalorder %s22, %s24
    %p31 = scmp.eq.s32.totalorder %s19, 1
    %p32 = por %p30, %p31
    %p33 = scmp.ne.s32.totalorder %s24, %s25
    %p34 = scmp.eq.s32.totalorder %s19, 0
    %p35 = por %p33, %p34
    %p36 = scmp.ne.s32.totalorder %s24, %s25
    %p37 = scmp.eq.s32.totalorder %s20, 1
    %p38 = por %p36, %p37
    %p40 = scmp.ne.s32.totalorder %s25, %s39
    %p41 = scmp.eq.s32.totalorder %s20, 0
    %p42 = por %p40, %p41
    %s44 = sadd.s32 %s43, 1
    %p47 = scmp.eq.s32.totalorder %s14, 1
    %p48 = scmp.ne.s32.totalorder %s43, %s45
    %p49 = scmp.eq.s32.totalorder %s14, 0
    %p50 = por %p48, %p49
    %p51 = scmp.ne.s32.totalorder %s43, %s45
    %p52 = scmp.eq.s32.totalorder %s19, 1
    %p53 = por %p51, %p52
    %p54 = scmp.ne.s32.totalorder %s45, %s46
    %p55 = scmp.eq.s32.totalorder %s19, 0
    %p56 = por %p54, %p55
    %p57 = scmp.ne.s32.totalorder %s45, %s46
    %p58 = scmp.eq.s32.totalorder %s20, 1
    %p59 = por %p57, %p58
    %p61 = scmp.ne.s32.totalorder %s46, %s60
    %p62 = scmp.eq.s32.totalorder %s20, 0
    %p63 = por %p61, %p62
    %s64 = ssub.s32 %s14, %s21
    %p65 = scmp.eq.s32.totalorder %s64, 0
    %s67 = sadd.s32 %s66, 1
    %s68 = scalar_select %p65, %s66, %s67
    %p71 = pneg %p65
    %p72 = scmp.eq.s32.totalorder %s14, 1
    %p73 = por %p71, %p72
    %p74 = scmp.ne.s32.totalorder %s66, %s69
    %p75 = scmp.eq.s32.totalorder %s14, 0
    %p76 = por %p74, %p75
    %p77 = scmp.ne.s32.totalorder %s66, %s69
    %p78 = scmp.eq.s32.totalorder %s19, 1
    %p79 = por %p77, %p78
    %p80 = scmp.ne.s32.totalorder %s69, %s70
    %p81 = scmp.eq.s32.totalorder %s19, 0
    %p82 = por %p80, %p81
    %p83 = scmp.ne.s32.totalorder %s69, %s70
    %p84 = scmp.eq.s32.totalorder %s20, 1
    %p85 = por %p83, %p84
    %p87 = scmp.ne.s32.totalorder %s70, %s86
    %p88 = scmp.eq.s32.totalorder %s20, 0
    %p89 = por %p87, %p88
    %s91 = sadd.s32 %s90, 1
    %p94 = scmp.eq.s32.totalorder %s14, 1
    %p95 = scmp.ne.s32.totalorder %s90, %s92
    %p96 = scmp.eq.s32.totalorder %s14, 0
    %p97 = por %p95, %p96
    %p98 = scmp.ne.s32.totalorder %s90, %s92
    %p99 = scmp.eq.s32.totalorder %s19, 1
    %p100 = por %p98, %p99
    %p101 = scmp.ne.s32.totalorder %s92, %s93
    %p102 = scmp.eq.s32.totalorder %s19, 0
    %p103 = por %p101, %p102
    %p104 = scmp.ne.s32.totalorder %s92, %s93
    %p105 = scmp.eq.s32.totalorder %s20, 1
    %p106 = por %p104, %p105
    %p108 = scmp.ne.s32.totalorder %s93, %s107
    %p109 = scmp.eq.s32.totalorder %s20, 0
    %p110 = por %p108, %p109
    %s112 = sadd.s32 %s111, 1
    %p115 = scmp.eq.s32.totalorder %s14, 1
    %p116 = scmp.ne.s32.totalorder %s111, %s113
    %p117 = scmp.eq.s32.totalorder %s14, 0
    %p118 = por %p116, %p117
    %p119 = scmp.ne.s32.totalorder %s111, %s113
    %p120 = scmp.eq.s32.totalorder %s19, 1
    %p121 = por %p119, %p120
    %p122 = scmp.ne.s32.totalorder %s113, %s114
    %p123 = scmp.eq.s32.totalorder %s19, 0
    %p124 = por %p122, %p123
    %p125 = scmp.ne.s32.totalorder %s113, %s114
    %p126 = scmp.eq.s32.totalorder %s20, 1
    %p127 = por %p125, %p126
    %p129 = scmp.ne.s32.totalorder %s114, %s128
    %p130 = scmp.eq.s32.totalorder %s20, 0
    %p131 = por %p129, %p130
    %s132 = ssub.s32 %s14, %s21
    %p133 = scmp.eq.s32.totalorder %s132, 0
    %s135 = sadd.s32 %s134, 1
    %s136 = scalar_select %p133, %s134, %s135
    %p139 = pneg %p133
    %p140 = scmp.eq.s32.totalorder %s14, 1
    %p141 = por %p139, %p140
    %p142 = scmp.ne.s32.totalorder %s134, %s137
    %p143 = scmp.eq.s32.totalorder %s14, 0
    %p144 = por %p142, %p143
    %p145 = scmp.ne.s32.totalorder %s134, %s137
    %p146 = scmp.eq.s32.totalorder %s19, 1
    %p147 = por %p145, %p146
    %p148 = scmp.ne.s32.totalorder %s137, %s138
    %p149 = scmp.eq.s32.totalorder %s19, 0
    %p150 = por %p148, %p149
    %p151 = scmp.ne.s32.totalorder %s137, %s138
    %p152 = scmp.eq.s32.totalorder %s20, 1
    %p153 = por %p151, %p152
    %p155 = scmp.ne.s32.totalorder %s138, %s154
    %p156 = scmp.eq.s32.totalorder %s20, 0
    %p157 = por %p155, %p156
    %s158 = ssub.s32 %s14, %s21
    %p159 = scmp.eq.s32.totalorder %s158, 0
    %s161 = sadd.s32 %s160, 1
    %s162 = scalar_select %p159, %s160, %s161
    %p165 = pneg %p159
    %p166 = scmp.eq.s32.totalorder %s14, 1
    %p167 = por %p165, %p166
    %p168 = scmp.ne.s32.totalorder %s160, %s163
    %p169 = scmp.eq.s32.totalorder %s14, 0
    %p170 = por %p168, %p169
    %p171 = scmp.ne.s32.totalorder %s160, %s163
    %p172 = scmp.eq.s32.totalorder %s19, 1
    %p173 = por %p171, %p172
    %p174 = scmp.ne.s32.totalorder %s163, %s164
    %p175 = scmp.eq.s32.totalorder %s19, 0
    %p176 = por %p174, %p175
    %p177 = scmp.ne.s32.totalorder %s163, %s164
    %p178 = scmp.eq.s32.totalorder %s20, 1
    %p179 = por %p177, %p178
    %p181 = scmp.ne.s32.totalorder %s164, %s180
    %p182 = scmp.eq.s32.totalorder %s20, 0
    %p183 = por %p181, %p182
    %p184 = scmp.le.s32.totalorder 1, %s14
    %p185 = scmp.lt.s32.totalorder %s14, 3
    %p186 = pnand %p184, %p185
    %p187 = pneg %p186
    // Predicated region
    $region9: #{proximal_mapping_forward.1} parent=5 // pred_check
      _
    $region10: #{proximal_mapping_forward.1} parent=5 // pred_check_branch
      %189 = sbr.rel (%p186) target = $region12
    $region11: #{proximal_mapping_forward.1} parent=5 // pred_region
      %s190 = ssub.s32 %s14, 1
      // Predicated region
      $region13: #{proximal_mapping_forward.1} parent=11 // pred_check
        %p191 = pneg %p35
      $region14: #{proximal_mapping_forward.1} parent=11 // pred_check_branch
        %193 = sbr.rel (%p191) target = $region16
      $region15: #{proximal_mapping_forward.1} parent=11 // pred_region
        _
      $region16: #{proximal_mapping_forward.1} parent=11 // pred_fallthru
        _
      // Predicated region
      $region17: #{proximal_mapping_forward.1} parent=11 // pred_check
        %p194 = pneg %p56
      $region18: #{proximal_mapping_forward.1} parent=11 // pred_check_branch
        %196 = sbr.rel (%p194) target = $region20
      $region19: #{proximal_mapping_forward.1} parent=11 // pred_region
        _
      $region20: #{proximal_mapping_forward.1} parent=11 // pred_fallthru
        _
      // Predicated region
      $region21: #{proximal_mapping_forward.1} parent=11 // pred_check
        %p197 = pneg %p103
      $region22: #{proximal_mapping_forward.1} parent=11 // pred_check_branch
        %199 = sbr.rel (%p197) target = $region24
      $region23: #{proximal_mapping_forward.1} parent=11 // pred_region
        _
      $region24: #{proximal_mapping_forward.1} parent=11 // pred_fallthru
        _
      // Predicated region
      $region25: #{proximal_mapping_forward.1} parent=11 // pred_check
        %p200 = pneg %p124
      $region26: #{proximal_mapping_forward.1} parent=11 // pred_check_branch
        %202 = sbr.rel (%p200) target = $region28
      $region27: #{proximal_mapping_forward.1} parent=11 // pred_region
        _
      $region28: #{proximal_mapping_forward.1} parent=11 // pred_fallthru
        _
    $region12: #{proximal_mapping_forward.1} parent=5 // pred_fallthru
      _
    %p203 = scmp.lt.s32.totalorder %s14, 2
    // Predicated region
    $region29: #{proximal_mapping_forward.1} parent=5 // pred_check
      %p204 = pneg %p203
    $region30: #{proximal_mapping_forward.1} parent=5 // pred_check_branch
      %206 = sbr.rel (%p204) target = $region32
    $region31: #{proximal_mapping_forward.1} parent=5 // pred_region
      // Predicated region
      $region33: #{proximal_mapping_forward.1} parent=31 // pred_check
        %p207 = pneg %p76
      $region34: #{proximal_mapping_forward.1} parent=31 // pred_check_branch
        %209 = sbr.rel (%p207) target = $region36
      $region35: #{proximal_mapping_forward.1} parent=31 // pred_region
        %s210 = smul.u32 4, %s14
        %p211 = scmp.lt.s32.totalorder %s210, 7
        %s212 = scalar_select %p211, %s210, 7
        %s213 = smul.addr %s212, 8
        %s214 = scalar_lea.vmem %s2, %s213
        %s215 = smul.u32 4, %s14
      $region36: #{proximal_mapping_forward.1} parent=31 // pred_fallthru
        _
    $region32: #{proximal_mapping_forward.1} parent=5 // pred_fallthru
      _
    %p216 = scmp.le.s32.totalorder 1, %s14
    %p217 = scmp.lt.s32.totalorder %s14, 3
    %p218 = pnand %p216, %p217
    %p219 = pneg %p218
    // Predicated region
    $region37: #{proximal_mapping_forward.1} parent=5 // pred_check
      _
    $region38: #{proximal_mapping_forward.1} parent=5 // pred_check_branch
      %221 = sbr.rel (%p218) target = $region40
    $region39: #{proximal_mapping_forward.1} parent=5 // pred_region
      %s222 = ssub.s32 %s14, 1
      %p223 = pneg %p35
      %p224 = pneg %p32
      %p225 = pneg %p56
      %p226 = pneg %p53
      %s227 = smul.u32 4, %s19
      %p228 = scmp.lt.s32.totalorder %s227, 7
      %s229 = scalar_select %p228, %s227, 7
      %s230 = smul.addr %s229, 8
      %s231 = scalar_lea.vmem %s2, %s230
      %p232 = pneg %p82
      %p233 = pneg %p79
      %p234 = pneg %p103
      %p235 = pneg %p100
      %p236 = pneg %p124
      %p237 = pneg %p121
      %p238 = pneg %p150
      %p239 = pneg %p147
      %s240 = smul.u32 4, %s19
      %p241 = scmp.lt.s32.totalorder %s240, 7
      %s242 = scalar_select %p241, %s240, 7
      %s243 = smul.addr %s242, 8
      %s244 = scalar_lea.vmem %s5, %s243
      %p245 = pneg %p176
      %p246 = pneg %p173
      %s247 = smul.u32 4, %s19
      %p248 = scmp.lt.s32.totalorder %s247, 7
      %s249 = scalar_select %p248, %s247, 7
      %s250 = smul.addr %s249, 8
      %s251 = scalar_lea.vmem %s6, %s250
      %s252 = smul.u32 4, %s19
      %p253 = scmp.lt.s32.totalorder %s252, 7
      %s254 = scalar_select %p253, %s252, 7
      %s255 = smul.addr %s254, 8
      %s256 = scalar_lea.vmem %s2, %s255
      %s257 = smul.u32 4, %s19
      %s258 = smul.u32 4, %s19
      %p259 = scmp.lt.s32.totalorder %s258, 7
      %s260 = scalar_select %p259, %s258, 7
      %s261 = smul.addr %s260, 8
      %s262 = scalar_lea.vmem %s5, %s261
      %s263 = smul.u32 4, %s19
      %s264 = smul.u32 4, %s19
      %p265 = scmp.lt.s32.totalorder %s264, 7
      %s266 = scalar_select %p265, %s264, 7
      %s267 = smul.addr %s266, 8
      %s268 = scalar_lea.vmem %s6, %s267
      %s269 = smul.u32 4, %s19
      %s270 = sld [smem:[#allocation2]]
      %v271 = vld [vmem:[%s256] sm:$0xff]
      %v272 = vld [vmem:[%s256 + $0x8] sm:$0xff]
      %v273 = vld [vmem:[%s256 + $0x10] sm:$0xff]
      %v274 = vld [vmem:[%s256 + $0x18] sm:$0xff]
      %v275 = vld [vmem:[%s4] sm:$0xff]
      %277 = vset.pattern.permute.xlu0 0
      %278 = vperm.xlu0 %277, %v275
      %v279 = vpop.permute.xlu0 %278
      %281 = vrot.lane.b32.xlu0 %v271, 17
      %v282 = vpop.permute.xlu0 %281
      %283 = vrot.lane.b32.xlu0 %v272, 17
      %v284 = vpop.permute.xlu0 %283
      %285 = vrot.lane.b32.xlu0 %v273, 17
      %v286 = vpop.permute.xlu0 %285
      %287 = vrot.lane.b32.xlu0 %v274, 17
      %v288 = vpop.permute.xlu0 %287
      %v289 = vlaneseq
      %v290 = vand.u32 %v289, 127
      %vm291 = vcmp.lt.s32.totalorder %v290, 17
      %v292 = vsel %vm291, %v286, %v288
      %v293 = vsel %vm291, %v284, %v286
      %v294 = vsel %vm291, %v282, %v284
      %v295 = vsel %vm291, %v288, %v282
      %v296 = vld [vmem:[%s1] ss:$8 sm:$0xf]
      %v298 = vperm.slane %v296, 0
      %v299 = vperm.slane %v296, 1
      %v300 = vperm.slane %v296, 2
      %v301 = vperm.slane %v296, 3
      %v306 = vmul.f32 %v295, %v298
      %v307 = vmul.f32 %v294, %v299
      %v308 = vmul.f32 %v293, %v300
      %v309 = vmul.f32 %v292, %v301
      %v310 = vld [vmem:[%s3] sm:$0xff]
      %vm311 = vcmask 64512
      %v313 = vsel %vm311, %v310, 0
      %315 = vmatpush.msra.mxu0 0.0
      %316 = vmatpush.msra.mxu0 0.0
      %317 = vmatpush.msra.mxu0 0.0
      %318 = vmatpush.msra.mxu0 0.0
      %319 = vmatpush.msra.mxu0 0.0
      %320 = vmatpush.msra.mxu0 0.0
      %321 = vmatpush.msra.mxu0 0.0
      %322 = vmatpush.msra.mxu0 0.0
      %323 = vmatpush.msra.mxu0 0.0
      %324 = vmatpush.msra.mxu0 0.0
      %325 = vmatpush.msra.mxu0 0.0
      %326 = vmatpush.msra.mxu0 0.0
      %327 = vmatpush.msra.mxu0 0.0
      %328 = vmatpush.msra.mxu0 0.0
      %329 = vmatpush.msra.mxu0 0.0
      %330 = vmatpush.msra.mxu0 %v306
      %331 = vmatmul.f32.gmra.mxu0 %v313
      %v332 = vpop.f32.mrf.mxu0
      %v333 = vadd.f32 0.0, %v332
      %334 = vdwg.mxu0
      %335 = vmatpush.msra.mxu0 0.0
      %336 = vmatpush.msra.mxu0 0.0
      %337 = vmatpush.msra.mxu0 0.0
      %338 = vmatpush.msra.mxu0 0.0
      %339 = vmatpush.msra.mxu0 0.0
      %340 = vmatpush.msra.mxu0 0.0
      %341 = vmatpush.msra.mxu0 0.0
      %342 = vmatpush.msra.mxu0 0.0
      %343 = vmatpush.msra.mxu0 0.0
      %344 = vmatpush.msra.mxu0 0.0
      %345 = vmatpush.msra.mxu0 0.0
      %346 = vmatpush.msra.mxu0 0.0
      %347 = vmatpush.msra.mxu0 0.0
      %348 = vmatpush.msra.mxu0 0.0
      %349 = vmatpush.msra.mxu0 0.0
      %350 = vmatpush.msra.mxu0 %v307
      %351 = vmatmul.f32.gmra.mxu0 %v313
      %v352 = vpop.f32.mrf.mxu0
      %v353 = vadd.f32 0.0, %v352
      %354 = vdwg.mxu0
      %355 = vmatpush.msra.mxu0 0.0
      %356 = vmatpush.msra.mxu0 0.0
      %357 = vmatpush.msra.mxu0 0.0
      %358 = vmatpush.msra.mxu0 0.0
      %359 = vmatpush.msra.mxu0 0.0
      %360 = vmatpush.msra.mxu0 0.0
      %361 = vmatpush.msra.mxu0 0.0
      %362 = vmatpush.msra.mxu0 0.0
      %363 = vmatpush.msra.mxu0 0.0
      %364 = vmatpush.msra.mxu0 0.0
      %365 = vmatpush.msra.mxu0 0.0
      %366 = vmatpush.msra.mxu0 0.0
      %367 = vmatpush.msra.mxu0 0.0
      %368 = vmatpush.msra.mxu0 0.0
      %369 = vmatpush.msra.mxu0 0.0
      %370 = vmatpush.msra.mxu0 %v308
      %371 = vmatmul.f32.gmra.mxu0 %v313
      %v372 = vpop.f32.mrf.mxu0
      %v373 = vadd.f32 0.0, %v372
      %374 = vdwg.mxu0
      %375 = vmatpush.msra.mxu0 0.0
      %376 = vmatpush.msra.mxu0 0.0
      %377 = vmatpush.msra.mxu0 0.0
      %378 = vmatpush.msra.mxu0 0.0
      %379 = vmatpush.msra.mxu0 0.0
      %380 = vmatpush.msra.mxu0 0.0
      %381 = vmatpush.msra.mxu0 0.0
      %382 = vmatpush.msra.mxu0 0.0
      %383 = vmatpush.msra.mxu0 0.0
      %384 = vmatpush.msra.mxu0 0.0
      %385 = vmatpush.msra.mxu0 0.0
      %386 = vmatpush.msra.mxu0 0.0
      %387 = vmatpush.msra.mxu0 0.0
      %388 = vmatpush.msra.mxu0 0.0
      %389 = vmatpush.msra.mxu0 0.0
      %390 = vmatpush.msra.mxu0 %v309
      %391 = vmatmul.f32.gmra.mxu0 %v313
      %v392 = vpop.f32.mrf.mxu0
      %v393 = vadd.f32 0.0, %v392
      %394 = vdwg.mxu0
      %v395 = vadd.f32 %v279, %v333
      %v396 = vadd.f32 %v279, %v353
      %v397 = vadd.f32 %v279, %v373
      %v398 = vadd.f32 %v279, %v393
      %399 = vrot.lane.b32.xlu0 %v271, 16
      %v400 = vpop.permute.xlu0 %399
      %401 = vrot.lane.b32.xlu0 %v272, 16
      %v402 = vpop.permute.xlu0 %401
      %403 = vrot.lane.b32.xlu0 %v273, 16
      %v404 = vpop.permute.xlu0 %403
      %405 = vrot.lane.b32.xlu0 %v274, 16
      %v406 = vpop.permute.xlu0 %405
      %vm407 = vcmp.lt.s32.totalorder %v290, 16
      %v408 = vsel %vm407, %v404, %v406
      %v409 = vsel %vm407, %v402, %v404
      %v410 = vsel %vm407, %v400, %v402
      %v411 = vsel %vm407, %v406, %v400
      %s412 = scalar_lea.vmem %s1, 1
      %v413 = vld [vmem:[%s412] ss:$8 sm:$0xf]
      %v415 = vperm.slane %v413, 0
      %v416 = vperm.slane %v413, 1
      %v417 = vperm.slane %v413, 2
      %v418 = vperm.slane %v413, 3
      %v423 = vmul.f32 %v411, %v415
      %v424 = vmul.f32 %v410, %v416
      %v425 = vmul.f32 %v409, %v417
      %v426 = vmul.f32 %v408, %v418
      %s427 = scalar_lea.vmem %s3, 8
      %v428 = vld [vmem:[%s427] sm:$0xff]
      %v430 = vsel %vm311, %v428, 0
      %432 = vmatpush.msra.mxu0 0.0
      %433 = vmatpush.msra.mxu0 0.0
      %434 = vmatpush.msra.mxu0 0.0
      %435 = vmatpush.msra.mxu0 0.0
      %436 = vmatpush.msra.mxu0 0.0
      %437 = vmatpush.msra.mxu0 0.0
      %438 = vmatpush.msra.mxu0 0.0
      %439 = vmatpush.msra.mxu0 0.0
      %440 = vmatpush.msra.mxu0 0.0
      %441 = vmatpush.msra.mxu0 0.0
      %442 = vmatpush.msra.mxu0 0.0
      %443 = vmatpush.msra.mxu0 0.0
      %444 = vmatpush.msra.mxu0 0.0
      %445 = vmatpush.msra.mxu0 0.0
      %446 = vmatpush.msra.mxu0 0.0
      %447 = vmatpush.msra.mxu0 %v423
      %448 = vmatmul.f32.gmra.mxu0 %v430
      %v449 = vpop.f32.mrf.mxu0
      %v450 = vadd.f32 0.0, %v449
      %451 = vdwg.mxu0
      %452 = vmatpush.msra.mxu0 0.0
      %453 = vmatpush.msra.mxu0 0.0
      %454 = vmatpush.msra.mxu0 0.0
      %455 = vmatpush.msra.mxu0 0.0
      %456 = vmatpush.msra.mxu0 0.0
      %457 = vmatpush.msra.mxu0 0.0
      %458 = vmatpush.msra.mxu0 0.0
      %459 = vmatpush.msra.mxu0 0.0
      %460 = vmatpush.msra.mxu0 0.0
      %461 = vmatpush.msra.mxu0 0.0
      %462 = vmatpush.msra.mxu0 0.0
      %463 = vmatpush.msra.mxu0 0.0
      %464 = vmatpush.msra.mxu0 0.0
      %465 = vmatpush.msra.mxu0 0.0
      %466 = vmatpush.msra.mxu0 0.0
      %467 = vmatpush.msra.mxu0 %v424
      %468 = vmatmul.f32.gmra.mxu0 %v430
      %v469 = vpop.f32.mrf.mxu0
      %v470 = vadd.f32 0.0, %v469
      %471 = vdwg.mxu0
      %472 = vmatpush.msra.mxu0 0.0
      %473 = vmatpush.msra.mxu0 0.0
      %474 = vmatpush.msra.mxu0 0.0
      %475 = vmatpush.msra.mxu0 0.0
      %476 = vmatpush.msra.mxu0 0.0
      %477 = vmatpush.msra.mxu0 0.0
      %478 = vmatpush.msra.mxu0 0.0
      %479 = vmatpush.msra.mxu0 0.0
      %480 = vmatpush.msra.mxu0 0.0
      %481 = vmatpush.msra.mxu0 0.0
      %482 = vmatpush.msra.mxu0 0.0
      %483 = vmatpush.msra.mxu0 0.0
      %484 = vmatpush.msra.mxu0 0.0
      %485 = vmatpush.msra.mxu0 0.0
      %486 = vmatpush.msra.mxu0 0.0
      %487 = vmatpush.msra.mxu0 %v425
      %488 = vmatmul.f32.gmra.mxu0 %v430
      %v489 = vpop.f32.mrf.mxu0
      %v490 = vadd.f32 0.0, %v489
      %491 = vdwg.mxu0
      %492 = vmatpush.msra.mxu0 0.0
      %493 = vmatpush.msra.mxu0 0.0
      %494 = vmatpush.msra.mxu0 0.0
      %495 = vmatpush.msra.mxu0 0.0
      %496 = vmatpush.msra.mxu0 0.0
      %497 = vmatpush.msra.mxu0 0.0
      %498 = vmatpush.msra.mxu0 0.0
      %499 = vmatpush.msra.mxu0 0.0
      %500 = vmatpush.msra.mxu0 0.0
      %501 = vmatpush.msra.mxu0 0.0
      %502 = vmatpush.msra.mxu0 0.0
      %503 = vmatpush.msra.mxu0 0.0
      %504 = vmatpush.msra.mxu0 0.0
      %505 = vmatpush.msra.mxu0 0.0
      %506 = vmatpush.msra.mxu0 0.0
      %507 = vmatpush.msra.mxu0 %v426
      %508 = vmatmul.f32.gmra.mxu0 %v430
      %v509 = vpop.f32.mrf.mxu0
      %v510 = vadd.f32 0.0, %v509
      %511 = vdwg.mxu0
      %v512 = vadd.f32 %v395, %v450
      %v513 = vadd.f32 %v396, %v470
      %v514 = vadd.f32 %v397, %v490
      %v515 = vadd.f32 %v398, %v510
      %516 = vrot.lane.b32.xlu0 %v271, 15
      %v517 = vpop.permute.xlu0 %516
      %518 = vrot.lane.b32.xlu0 %v272, 15
      %v519 = vpop.permute.xlu0 %518
      %520 = vrot.lane.b32.xlu0 %v273, 15
      %v521 = vpop.permute.xlu0 %520
      %522 = vrot.lane.b32.xlu0 %v274, 15
      %v523 = vpop.permute.xlu0 %522
      %vm524 = vcmp.lt.s32.totalorder %v290, 15
      %v525 = vsel %vm524, %v521, %v523
      %v526 = vsel %vm524, %v519, %v521
      %v527 = vsel %vm524, %v517, %v519
      %v528 = vsel %vm524, %v523, %v517
      %s529 = scalar_lea.vmem %s1, 2
      %v530 = vld [vmem:[%s529] ss:$8 sm:$0xf]
      %v532 = vperm.slane %v530, 0
      %v533 = vperm.slane %v530, 1
      %v534 = vperm.slane %v530, 2
      %v535 = vperm.slane %v530, 3
      %v540 = vmul.f32 %v528, %v532
      %v541 = vmul.f32 %v527, %v533
      %v542 = vmul.f32 %v526, %v534
      %v543 = vmul.f32 %v525, %v535
      %s544 = scalar_lea.vmem %s3, 16
      %v545 = vld [vmem:[%s544] sm:$0xff]
      %v547 = vsel %vm311, %v545, 0
      %549 = vmatpush.msra.mxu0 0.0
      %550 = vmatpush.msra.mxu0 0.0
      %551 = vmatpush.msra.mxu0 0.0
      %552 = vmatpush.msra.mxu0 0.0
      %553 = vmatpush.msra.mxu0 0.0
      %554 = vmatpush.msra.mxu0 0.0
      %555 = vmatpush.msra.mxu0 0.0
      %556 = vmatpush.msra.mxu0 0.0
      %557 = vmatpush.msra.mxu0 0.0
      %558 = vmatpush.msra.mxu0 0.0
      %559 = vmatpush.msra.mxu0 0.0
      %560 = vmatpush.msra.mxu0 0.0
      %561 = vmatpush.msra.mxu0 0.0
      %562 = vmatpush.msra.mxu0 0.0
      %563 = vmatpush.msra.mxu0 0.0
      %564 = vmatpush.msra.mxu0 %v540
      %565 = vmatmul.f32.gmra.mxu0 %v547
      %v566 = vpop.f32.mrf.mxu0
      %v567 = vadd.f32 0.0, %v566
      %568 = vdwg.mxu0
      %569 = vmatpush.msra.mxu0 0.0
      %570 = vmatpush.msra.mxu0 0.0
      %571 = vmatpush.msra.mxu0 0.0
      %572 = vmatpush.msra.mxu0 0.0
      %573 = vmatpush.msra.mxu0 0.0
      %574 = vmatpush.msra.mxu0 0.0
      %575 = vmatpush.msra.mxu0 0.0
      %576 = vmatpush.msra.mxu0 0.0
      %577 = vmatpush.msra.mxu0 0.0
      %578 = vmatpush.msra.mxu0 0.0
      %579 = vmatpush.msra.mxu0 0.0
      %580 = vmatpush.msra.mxu0 0.0
      %581 = vmatpush.msra.mxu0 0.0
      %582 = vmatpush.msra.mxu0 0.0
      %583 = vmatpush.msra.mxu0 0.0
      %584 = vmatpush.msra.mxu0 %v541
      %585 = vmatmul.f32.gmra.mxu0 %v547
      %v586 = vpop.f32.mrf.mxu0
      %v587 = vadd.f32 0.0, %v586
      %588 = vdwg.mxu0
      %589 = vmatpush.msra.mxu0 0.0
      %590 = vmatpush.msra.mxu0 0.0
      %591 = vmatpush.msra.mxu0 0.0
      %592 = vmatpush.msra.mxu0 0.0
      %593 = vmatpush.msra.mxu0 0.0
      %594 = vmatpush.msra.mxu0 0.0
      %595 = vmatpush.msra.mxu0 0.0
      %596 = vmatpush.msra.mxu0 0.0
      %597 = vmatpush.msra.mxu0 0.0
      %598 = vmatpush.msra.mxu0 0.0
      %599 = vmatpush.msra.mxu0 0.0
      %600 = vmatpush.msra.mxu0 0.0
      %601 = vmatpush.msra.mxu0 0.0
      %602 = vmatpush.msra.mxu0 0.0
      %603 = vmatpush.msra.mxu0 0.0
      %604 = vmatpush.msra.mxu0 %v542
      %605 = vmatmul.f32.gmra.mxu0 %v547
      %v606 = vpop.f32.mrf.mxu0
      %v607 = vadd.f32 0.0, %v606
      %608 = vdwg.mxu0
      %609 = vmatpush.msra.mxu0 0.0
      %610 = vmatpush.msra.mxu0 0.0
      %611 = vmatpush.msra.mxu0 0.0
      %612 = vmatpush.msra.mxu0 0.0
      %613 = vmatpush.msra.mxu0 0.0
      %614 = vmatpush.msra.mxu0 0.0
      %615 = vmatpush.msra.mxu0 0.0
      %616 = vmatpush.msra.mxu0 0.0
      %617 = vmatpush.msra.mxu0 0.0
      %618 = vmatpush.msra.mxu0 0.0
      %619 = vmatpush.msra.mxu0 0.0
      %620 = vmatpush.msra.mxu0 0.0
      %621 = vmatpush.msra.mxu0 0.0
      %622 = vmatpush.msra.mxu0 0.0
      %623 = vmatpush.msra.mxu0 0.0
      %624 = vmatpush.msra.mxu0 %v543
      %625 = vmatmul.f32.gmra.mxu0 %v547
      %v626 = vpop.f32.mrf.mxu0
      %v627 = vadd.f32 0.0, %v626
      %628 = vdwg.mxu0
      %v629 = vadd.f32 %v512, %v567
      %v630 = vadd.f32 %v513, %v587
      %v631 = vadd.f32 %v514, %v607
      %v632 = vadd.f32 %v515, %v627
      %633 = vrot.lane.b32.xlu0 %v271, 1
      %v634 = vpop.permute.xlu0 %633
      %635 = vrot.lane.b32.xlu0 %v272, 1
      %v636 = vpop.permute.xlu0 %635
      %637 = vrot.lane.b32.xlu0 %v273, 1
      %v638 = vpop.permute.xlu0 %637
      %639 = vrot.lane.b32.xlu0 %v274, 1
      %v640 = vpop.permute.xlu0 %639
      %vm641 = vcmp.lt.s32.totalorder %v290, 1
      %v642 = vsel %vm641, %v638, %v640
      %v643 = vsel %vm641, %v636, %v638
      %v644 = vsel %vm641, %v634, %v636
      %v645 = vsel %vm641, %v640, %v634
      %s646 = scalar_lea.vmem %s1, 3
      %v647 = vld [vmem:[%s646] ss:$8 sm:$0xf]
      %v649 = vperm.slane %v647, 0
      %v650 = vperm.slane %v647, 1
      %v651 = vperm.slane %v647, 2
      %v652 = vperm.slane %v647, 3
      %v657 = vmul.f32 %v645, %v649
      %v658 = vmul.f32 %v644, %v650
      %v659 = vmul.f32 %v643, %v651
      %v660 = vmul.f32 %v642, %v652
      %s661 = scalar_lea.vmem %s3, 24
      %v662 = vld [vmem:[%s661] sm:$0xff]
      %v664 = vsel %vm311, %v662, 0
      %666 = vmatpush.msra.mxu0 0.0
      %667 = vmatpush.msra.mxu0 0.0
      %668 = vmatpush.msra.mxu0 0.0
      %669 = vmatpush.msra.mxu0 0.0
      %670 = vmatpush.msra.mxu0 0.0
      %671 = vmatpush.msra.mxu0 0.0
      %672 = vmatpush.msra.mxu0 0.0
      %673 = vmatpush.msra.mxu0 0.0
      %674 = vmatpush.msra.mxu0 0.0
      %675 = vmatpush.msra.mxu0 0.0
      %676 = vmatpush.msra.mxu0 0.0
      %677 = vmatpush.msra.mxu0 0.0
      %678 = vmatpush.msra.mxu0 0.0
      %679 = vmatpush.msra.mxu0 0.0
      %680 = vmatpush.msra.mxu0 0.0
      %681 = vmatpush.msra.mxu0 %v657
      %682 = vmatmul.f32.gmra.mxu0 %v664
      %v683 = vpop.f32.mrf.mxu0
      %v684 = vadd.f32 0.0, %v683
      %685 = vdwg.mxu0
      %686 = vmatpush.msra.mxu0 0.0
      %687 = vmatpush.msra.mxu0 0.0
      %688 = vmatpush.msra.mxu0 0.0
      %689 = vmatpush.msra.mxu0 0.0
      %690 = vmatpush.msra.mxu0 0.0
      %691 = vmatpush.msra.mxu0 0.0
      %692 = vmatpush.msra.mxu0 0.0
      %693 = vmatpush.msra.mxu0 0.0
      %694 = vmatpush.msra.mxu0 0.0
      %695 = vmatpush.msra.mxu0 0.0
      %696 = vmatpush.msra.mxu0 0.0
      %697 = vmatpush.msra.mxu0 0.0
      %698 = vmatpush.msra.mxu0 0.0
      %699 = vmatpush.msra.mxu0 0.0
      %700 = vmatpush.msra.mxu0 0.0
      %701 = vmatpush.msra.mxu0 %v658
      %702 = vmatmul.f32.gmra.mxu0 %v664
      %v703 = vpop.f32.mrf.mxu0
      %v704 = vadd.f32 0.0, %v703
      %705 = vdwg.mxu0
      %706 = vmatpush.msra.mxu0 0.0
      %707 = vmatpush.msra.mxu0 0.0
      %708 = vmatpush.msra.mxu0 0.0
      %709 = vmatpush.msra.mxu0 0.0
      %710 = vmatpush.msra.mxu0 0.0
      %711 = vmatpush.msra.mxu0 0.0
      %712 = vmatpush.msra.mxu0 0.0
      %713 = vmatpush.msra.mxu0 0.0
      %714 = vmatpush.msra.mxu0 0.0
      %715 = vmatpush.msra.mxu0 0.0
      %716 = vmatpush.msra.mxu0 0.0
      %717 = vmatpush.msra.mxu0 0.0
      %718 = vmatpush.msra.mxu0 0.0
      %719 = vmatpush.msra.mxu0 0.0
      %720 = vmatpush.msra.mxu0 0.0
      %721 = vmatpush.msra.mxu0 %v659
      %722 = vmatmul.f32.gmra.mxu0 %v664
      %v723 = vpop.f32.mrf.mxu0
      %v724 = vadd.f32 0.0, %v723
      %725 = vdwg.mxu0
      %726 = vmatpush.msra.mxu0 0.0
      %727 = vmatpush.msra.mxu0 0.0
      %728 = vmatpush.msra.mxu0 0.0
      %729 = vmatpush.msra.mxu0 0.0
      %730 = vmatpush.msra.mxu0 0.0
      %731 = vmatpush.msra.mxu0 0.0
      %732 = vmatpush.msra.mxu0 0.0
      %733 = vmatpush.msra.mxu0 0.0
      %734 = vmatpush.msra.mxu0 0.0
      %735 = vmatpush.msra.mxu0 0.0
      %736 = vmatpush.msra.mxu0 0.0
      %737 = vmatpush.msra.mxu0 0.0
      %738 = vmatpush.msra.mxu0 0.0
      %739 = vmatpush.msra.mxu0 0.0
      %740 = vmatpush.msra.mxu0 0.0
      %741 = vmatpush.msra.mxu0 %v660
      %742 = vmatmul.f32.gmra.mxu0 %v664
      %v743 = vpop.f32.mrf.mxu0
      %v744 = vadd.f32 0.0, %v743
      %745 = vdwg.mxu0
      %v746 = vadd.f32 %v629, %v684
      %v747 = vadd.f32 %v630, %v704
      %v748 = vadd.f32 %v631, %v724
      %v749 = vadd.f32 %v632, %v744
      %s750 = scalar_lea.vmem %s1, 4
      %v751 = vld [vmem:[%s750] ss:$8 sm:$0xf]
      %v753 = vperm.slane %v751, 0
      %v754 = vperm.slane %v751, 1
      %v755 = vperm.slane %v751, 2
      %v756 = vperm.slane %v751, 3
      %v761 = vmul.f32 %v271, %v753
      %v762 = vmul.f32 %v272, %v754
      %v763 = vmul.f32 %v273, %v755
      %v764 = vmul.f32 %v274, %v756
      %s765 = scalar_lea.vmem %s3, 32
      %v766 = vld [vmem:[%s765] sm:$0xff]
      %v768 = vsel %vm311, %v766, 0
      %770 = vmatpush.msra.mxu0 0.0
      %771 = vmatpush.msra.mxu0 0.0
      %772 = vmatpush.msra.mxu0 0.0
      %773 = vmatpush.msra.mxu0 0.0
      %774 = vmatpush.msra.mxu0 0.0
      %775 = vmatpush.msra.mxu0 0.0
      %776 = vmatpush.msra.mxu0 0.0
      %777 = vmatpush.msra.mxu0 0.0
      %778 = vmatpush.msra.mxu0 0.0
      %779 = vmatpush.msra.mxu0 0.0
      %780 = vmatpush.msra.mxu0 0.0
      %781 = vmatpush.msra.mxu0 0.0
      %782 = vmatpush.msra.mxu0 0.0
      %783 = vmatpush.msra.mxu0 0.0
      %784 = vmatpush.msra.mxu0 0.0
      %785 = vmatpush.msra.mxu0 %v761
      %786 = vmatmul.f32.gmra.mxu0 %v768
      %v787 = vpop.f32.mrf.mxu0
      %v788 = vadd.f32 0.0, %v787
      %789 = vdwg.mxu0
      %790 = vmatpush.msra.mxu0 0.0
      %791 = vmatpush.msra.mxu0 0.0
      %792 = vmatpush.msra.mxu0 0.0
      %793 = vmatpush.msra.mxu0 0.0
      %794 = vmatpush.msra.mxu0 0.0
      %795 = vmatpush.msra.mxu0 0.0
      %796 = vmatpush.msra.mxu0 0.0
      %797 = vmatpush.msra.mxu0 0.0
      %798 = vmatpush.msra.mxu0 0.0
      %799 = vmatpush.msra.mxu0 0.0
      %800 = vmatpush.msra.mxu0 0.0
      %801 = vmatpush.msra.mxu0 0.0
      %802 = vmatpush.msra.mxu0 0.0
      %803 = vmatpush.msra.mxu0 0.0
      %804 = vmatpush.msra.mxu0 0.0
      %805 = vmatpush.msra.mxu0 %v762
      %806 = vmatmul.f32.gmra.mxu0 %v768
      %v807 = vpop.f32.mrf.mxu0
      %v808 = vadd.f32 0.0, %v807
      %809 = vdwg.mxu0
      %810 = vmatpush.msra.mxu0 0.0
      %811 = vmatpush.msra.mxu0 0.0
      %812 = vmatpush.msra.mxu0 0.0
      %813 = vmatpush.msra.mxu0 0.0
      %814 = vmatpush.msra.mxu0 0.0
      %815 = vmatpush.msra.mxu0 0.0
      %816 = vmatpush.msra.mxu0 0.0
      %817 = vmatpush.msra.mxu0 0.0
      %818 = vmatpush.msra.mxu0 0.0
      %819 = vmatpush.msra.mxu0 0.0
      %820 = vmatpush.msra.mxu0 0.0
      %821 = vmatpush.msra.mxu0 0.0
      %822 = vmatpush.msra.mxu0 0.0
      %823 = vmatpush.msra.mxu0 0.0
      %824 = vmatpush.msra.mxu0 0.0
      %825 = vmatpush.msra.mxu0 %v763
      %826 = vmatmul.f32.gmra.mxu0 %v768
      %v827 = vpop.f32.mrf.mxu0
      %v828 = vadd.f32 0.0, %v827
      %829 = vdwg.mxu0
      %830 = vmatpush.msra.mxu0 0.0
      %831 = vmatpush.msra.mxu0 0.0
      %832 = vmatpush.msra.mxu0 0.0
      %833 = vmatpush.msra.mxu0 0.0
      %834 = vmatpush.msra.mxu0 0.0
      %835 = vmatpush.msra.mxu0 0.0
      %836 = vmatpush.msra.mxu0 0.0
      %837 = vmatpush.msra.mxu0 0.0
      %838 = vmatpush.msra.mxu0 0.0
      %839 = vmatpush.msra.mxu0 0.0
      %840 = vmatpush.msra.mxu0 0.0
      %841 = vmatpush.msra.mxu0 0.0
      %842 = vmatpush.msra.mxu0 0.0
      %843 = vmatpush.msra.mxu0 0.0
      %844 = vmatpush.msra.mxu0 0.0
      %845 = vmatpush.msra.mxu0 %v764
      %846 = vmatmul.f32.gmra.mxu0 %v768
      %v847 = vpop.f32.mrf.mxu0
      %v848 = vadd.f32 0.0, %v847
      %849 = vdwg.mxu0
      %v850 = vadd.f32 %v746, %v788
      %v851 = vadd.f32 %v747, %v808
      %v852 = vadd.f32 %v748, %v828
      %v853 = vadd.f32 %v749, %v848
      %854 = vrot.lane.b32.xlu0 %v271, 127
      %v855 = vpop.permute.xlu0 %854
      %856 = vrot.lane.b32.xlu0 %v272, 127
      %v857 = vpop.permute.xlu0 %856
      %858 = vrot.lane.b32.xlu0 %v273, 127
      %v859 = vpop.permute.xlu0 %858
      %860 = vrot.lane.b32.xlu0 %v274, 127
      %v861 = vpop.permute.xlu0 %860
      %vm862 = vcmp.lt.s32.totalorder %v290, 127
      %v863 = vsel %vm862, %v859, %v861
      %v864 = vsel %vm862, %v857, %v859
      %v865 = vsel %vm862, %v855, %v857
      %v866 = vsel %vm862, %v861, %v855
      %s867 = scalar_lea.vmem %s1, 5
      %v868 = vld [vmem:[%s867] ss:$8 sm:$0xf]
      %v870 = vperm.slane %v868, 0
      %v871 = vperm.slane %v868, 1
      %v872 = vperm.slane %v868, 2
      %v873 = vperm.slane %v868, 3
      %v878 = vmul.f32 %v865, %v870
      %v879 = vmul.f32 %v864, %v871
      %v880 = vmul.f32 %v863, %v872
      %v881 = vmul.f32 %v866, %v873
      %s882 = scalar_lea.vmem %s3, 40
      %v883 = vld [vmem:[%s882] sm:$0xff]
      %v885 = vsel %vm311, %v883, 0
      %887 = vmatpush.msra.mxu0 0.0
      %888 = vmatpush.msra.mxu0 0.0
      %889 = vmatpush.msra.mxu0 0.0
      %890 = vmatpush.msra.mxu0 0.0
      %891 = vmatpush.msra.mxu0 0.0
      %892 = vmatpush.msra.mxu0 0.0
      %893 = vmatpush.msra.mxu0 0.0
      %894 = vmatpush.msra.mxu0 0.0
      %895 = vmatpush.msra.mxu0 0.0
      %896 = vmatpush.msra.mxu0 0.0
      %897 = vmatpush.msra.mxu0 0.0
      %898 = vmatpush.msra.mxu0 0.0
      %899 = vmatpush.msra.mxu0 0.0
      %900 = vmatpush.msra.mxu0 0.0
      %901 = vmatpush.msra.mxu0 0.0
      %902 = vmatpush.msra.mxu0 %v878
      %903 = vmatmul.f32.gmra.mxu0 %v885
      %v904 = vpop.f32.mrf.mxu0
      %v905 = vadd.f32 0.0, %v904
      %906 = vdwg.mxu0
      %907 = vmatpush.msra.mxu0 0.0
      %908 = vmatpush.msra.mxu0 0.0
      %909 = vmatpush.msra.mxu0 0.0
      %910 = vmatpush.msra.mxu0 0.0
      %911 = vmatpush.msra.mxu0 0.0
      %912 = vmatpush.msra.mxu0 0.0
      %913 = vmatpush.msra.mxu0 0.0
      %914 = vmatpush.msra.mxu0 0.0
      %915 = vmatpush.msra.mxu0 0.0
      %916 = vmatpush.msra.mxu0 0.0
      %917 = vmatpush.msra.mxu0 0.0
      %918 = vmatpush.msra.mxu0 0.0
      %919 = vmatpush.msra.mxu0 0.0
      %920 = vmatpush.msra.mxu0 0.0
      %921 = vmatpush.msra.mxu0 0.0
      %922 = vmatpush.msra.mxu0 %v879
      %923 = vmatmul.f32.gmra.mxu0 %v885
      %v924 = vpop.f32.mrf.mxu0
      %v925 = vadd.f32 0.0, %v924
      %926 = vdwg.mxu0
      %927 = vmatpush.msra.mxu0 0.0
      %928 = vmatpush.msra.mxu0 0.0
      %929 = vmatpush.msra.mxu0 0.0
      %930 = vmatpush.msra.mxu0 0.0
      %931 = vmatpush.msra.mxu0 0.0
      %932 = vmatpush.msra.mxu0 0.0
      %933 = vmatpush.msra.mxu0 0.0
      %934 = vmatpush.msra.mxu0 0.0
      %935 = vmatpush.msra.mxu0 0.0
      %936 = vmatpush.msra.mxu0 0.0
      %937 = vmatpush.msra.mxu0 0.0
      %938 = vmatpush.msra.mxu0 0.0
      %939 = vmatpush.msra.mxu0 0.0
      %940 = vmatpush.msra.mxu0 0.0
      %941 = vmatpush.msra.mxu0 0.0
      %942 = vmatpush.msra.mxu0 %v880
      %943 = vmatmul.f32.gmra.mxu0 %v885
      %v944 = vpop.f32.mrf.mxu0
      %v945 = vadd.f32 0.0, %v944
      %946 = vdwg.mxu0
      %947 = vmatpush.msra.mxu0 0.0
      %948 = vmatpush.msra.mxu0 0.0
      %949 = vmatpush.msra.mxu0 0.0
      %950 = vmatpush.msra.mxu0 0.0
      %951 = vmatpush.msra.mxu0 0.0
      %952 = vmatpush.msra.mxu0 0.0
      %953 = vmatpush.msra.mxu0 0.0
      %954 = vmatpush.msra.mxu0 0.0
      %955 = vmatpush.msra.mxu0 0.0
      %956 = vmatpush.msra.mxu0 0.0
      %957 = vmatpush.msra.mxu0 0.0
      %958 = vmatpush.msra.mxu0 0.0
      %959 = vmatpush.msra.mxu0 0.0
      %960 = vmatpush.msra.mxu0 0.0
      %961 = vmatpush.msra.mxu0 0.0
      %962 = vmatpush.msra.mxu0 %v881
      %963 = vmatmul.f32.gmra.mxu0 %v885
      %v964 = vpop.f32.mrf.mxu0
      %v965 = vadd.f32 0.0, %v964
      %966 = vdwg.mxu0
      %v967 = vadd.f32 %v850, %v905
      %v968 = vadd.f32 %v851, %v925
      %v969 = vadd.f32 %v852, %v945
      %v970 = vadd.f32 %v853, %v965
      %971 = vrot.lane.b32.xlu0 %v271, 113
      %v972 = vpop.permute.xlu0 %971
      %973 = vrot.lane.b32.xlu0 %v272, 113
      %v974 = vpop.permute.xlu0 %973
      %975 = vrot.lane.b32.xlu0 %v273, 113
      %v976 = vpop.permute.xlu0 %975
      %977 = vrot.lane.b32.xlu0 %v274, 113
      %v978 = vpop.permute.xlu0 %977
      %vm979 = vcmp.lt.s32.totalorder %v290, 113
      %v980 = vsel %vm979, %v976, %v978
      %v981 = vsel %vm979, %v974, %v976
      %v982 = vsel %vm979, %v972, %v974
      %v983 = vsel %vm979, %v978, %v972
      %s984 = scalar_lea.vmem %s1, 6
      %v985 = vld [vmem:[%s984] ss:$8 sm:$0xf]
      %v987 = vperm.slane %v985, 0
      %v988 = vperm.slane %v985, 1
      %v989 = vperm.slane %v985, 2
      %v990 = vperm.slane %v985, 3
      %v995 = vmul.f32 %v982, %v987
      %v996 = vmul.f32 %v981, %v988
      %v997 = vmul.f32 %v980, %v989
      %v998 = vmul.f32 %v983, %v990
      %s999 = scalar_lea.vmem %s3, 48
      %v1000 = vld [vmem:[%s999] sm:$0xff]
      %v1002 = vsel %vm311, %v1000, 0
      %1004 = vmatpush.msra.mxu0 0.0
      %1005 = vmatpush.msra.mxu0 0.0
      %1006 = vmatpush.msra.mxu0 0.0
      %1007 = vmatpush.msra.mxu0 0.0
      %1008 = vmatpush.msra.mxu0 0.0
      %1009 = vmatpush.msra.mxu0 0.0
      %1010 = vmatpush.msra.mxu0 0.0
      %1011 = vmatpush.msra.mxu0 0.0
      %1012 = vmatpush.msra.mxu0 0.0
      %1013 = vmatpush.msra.mxu0 0.0
      %1014 = vmatpush.msra.mxu0 0.0
      %1015 = vmatpush.msra.mxu0 0.0
      %1016 = vmatpush.msra.mxu0 0.0
      %1017 = vmatpush.msra.mxu0 0.0
      %1018 = vmatpush.msra.mxu0 0.0
      %1019 = vmatpush.msra.mxu0 %v995
      %1020 = vmatmul.f32.gmra.mxu0 %v1002
      %v1021 = vpop.f32.mrf.mxu0
      %v1022 = vadd.f32 0.0, %v1021
      %1023 = vdwg.mxu0
      %1024 = vmatpush.msra.mxu0 0.0
      %1025 = vmatpush.msra.mxu0 0.0
      %1026 = vmatpush.msra.mxu0 0.0
      %1027 = vmatpush.msra.mxu0 0.0
      %1028 = vmatpush.msra.mxu0 0.0
      %1029 = vmatpush.msra.mxu0 0.0
      %1030 = vmatpush.msra.mxu0 0.0
      %1031 = vmatpush.msra.mxu0 0.0
      %1032 = vmatpush.msra.mxu0 0.0
      %1033 = vmatpush.msra.mxu0 0.0
      %1034 = vmatpush.msra.mxu0 0.0
      %1035 = vmatpush.msra.mxu0 0.0
      %1036 = vmatpush.msra.mxu0 0.0
      %1037 = vmatpush.msra.mxu0 0.0
      %1038 = vmatpush.msra.mxu0 0.0
      %1039 = vmatpush.msra.mxu0 %v996
      %1040 = vmatmul.f32.gmra.mxu0 %v1002
      %v1041 = vpop.f32.mrf.mxu0
      %v1042 = vadd.f32 0.0, %v1041
      %1043 = vdwg.mxu0
      %1044 = vmatpush.msra.mxu0 0.0
      %1045 = vmatpush.msra.mxu0 0.0
      %1046 = vmatpush.msra.mxu0 0.0
      %1047 = vmatpush.msra.mxu0 0.0
      %1048 = vmatpush.msra.mxu0 0.0
      %1049 = vmatpush.msra.mxu0 0.0
      %1050 = vmatpush.msra.mxu0 0.0
      %1051 = vmatpush.msra.mxu0 0.0
      %1052 = vmatpush.msra.mxu0 0.0
      %1053 = vmatpush.msra.mxu0 0.0
      %1054 = vmatpush.msra.mxu0 0.0
      %1055 = vmatpush.msra.mxu0 0.0
      %1056 = vmatpush.msra.mxu0 0.0
      %1057 = vmatpush.msra.mxu0 0.0
      %1058 = vmatpush.msra.mxu0 0.0
      %1059 = vmatpush.msra.mxu0 %v997
      %1060 = vmatmul.f32.gmra.mxu0 %v1002
      %v1061 = vpop.f32.mrf.mxu0
      %v1062 = vadd.f32 0.0, %v1061
      %1063 = vdwg.mxu0
      %1064 = vmatpush.msra.mxu0 0.0
      %1065 = vmatpush.msra.mxu0 0.0
      %1066 = vmatpush.msra.mxu0 0.0
      %1067 = vmatpush.msra.mxu0 0.0
      %1068 = vmatpush.msra.mxu0 0.0
      %1069 = vmatpush.msra.mxu0 0.0
      %1070 = vmatpush.msra.mxu0 0.0
      %1071 = vmatpush.msra.mxu0 0.0
      %1072 = vmatpush.msra.mxu0 0.0
      %1073 = vmatpush.msra.mxu0 0.0
      %1074 = vmatpush.msra.mxu0 0.0
      %1075 = vmatpush.msra.mxu0 0.0
      %1076 = vmatpush.msra.mxu0 0.0
      %1077 = vmatpush.msra.mxu0 0.0
      %1078 = vmatpush.msra.mxu0 0.0
      %1079 = vmatpush.msra.mxu0 %v998
      %1080 = vmatmul.f32.gmra.mxu0 %v1002
      %v1081 = vpop.f32.mrf.mxu0
      %v1082 = vadd.f32 0.0, %v1081
      %1083 = vdwg.mxu0
      %v1084 = vadd.f32 %v967, %v1022
      %v1085 = vadd.f32 %v968, %v1042
      %v1086 = vadd.f32 %v969, %v1062
      %v1087 = vadd.f32 %v970, %v1082
      %1088 = vrot.lane.b32.xlu0 %v271, 112
      %v1089 = vpop.permute.xlu0 %1088
      %1090 = vrot.lane.b32.xlu0 %v272, 112
      %v1091 = vpop.permute.xlu0 %1090
      %1092 = vrot.lane.b32.xlu0 %v273, 112
      %v1093 = vpop.permute.xlu0 %1092
      %1094 = vrot.lane.b32.xlu0 %v274, 112
      %v1095 = vpop.permute.xlu0 %1094
      %vm1096 = vcmp.lt.s32.totalorder %v290, 112
      %v1097 = vsel %vm1096, %v1093, %v1095
      %v1098 = vsel %vm1096, %v1091, %v1093
      %v1099 = vsel %vm1096, %v1089, %v1091
      %v1100 = vsel %vm1096, %v1095, %v1089
      %s1101 = scalar_lea.vmem %s1, 7
      %v1102 = vld [vmem:[%s1101] ss:$8 sm:$0xf]
      %v1104 = vperm.slane %v1102, 0
      %v1105 = vperm.slane %v1102, 1
      %v1106 = vperm.slane %v1102, 2
      %v1107 = vperm.slane %v1102, 3
      %v1112 = vmul.f32 %v1099, %v1104
      %v1113 = vmul.f32 %v1098, %v1105
      %v1114 = vmul.f32 %v1097, %v1106
      %v1115 = vmul.f32 %v1100, %v1107
      %s1116 = scalar_lea.vmem %s3, 56
      %v1117 = vld [vmem:[%s1116] sm:$0xff]
      %v1119 = vsel %vm311, %v1117, 0
      %1121 = vmatpush.msra.mxu0 0.0
      %1122 = vmatpush.msra.mxu0 0.0
      %1123 = vmatpush.msra.mxu0 0.0
      %1124 = vmatpush.msra.mxu0 0.0
      %1125 = vmatpush.msra.mxu0 0.0
      %1126 = vmatpush.msra.mxu0 0.0
      %1127 = vmatpush.msra.mxu0 0.0
      %1128 = vmatpush.msra.mxu0 0.0
      %1129 = vmatpush.msra.mxu0 0.0
      %1130 = vmatpush.msra.mxu0 0.0
      %1131 = vmatpush.msra.mxu0 0.0
      %1132 = vmatpush.msra.mxu0 0.0
      %1133 = vmatpush.msra.mxu0 0.0
      %1134 = vmatpush.msra.mxu0 0.0
      %1135 = vmatpush.msra.mxu0 0.0
      %1136 = vmatpush.msra.mxu0 %v1112
      %1137 = vmatmul.f32.gmra.mxu0 %v1119
      %v1138 = vpop.f32.mrf.mxu0
      %v1139 = vadd.f32 0.0, %v1138
      %1140 = vdwg.mxu0
      %1141 = vmatpush.msra.mxu0 0.0
      %1142 = vmatpush.msra.mxu0 0.0
      %1143 = vmatpush.msra.mxu0 0.0
      %1144 = vmatpush.msra.mxu0 0.0
      %1145 = vmatpush.msra.mxu0 0.0
      %1146 = vmatpush.msra.mxu0 0.0
      %1147 = vmatpush.msra.mxu0 0.0
      %1148 = vmatpush.msra.mxu0 0.0
      %1149 = vmatpush.msra.mxu0 0.0
      %1150 = vmatpush.msra.mxu0 0.0
      %1151 = vmatpush.msra.mxu0 0.0
      %1152 = vmatpush.msra.mxu0 0.0
      %1153 = vmatpush.msra.mxu0 0.0
      %1154 = vmatpush.msra.mxu0 0.0
      %1155 = vmatpush.msra.mxu0 0.0
      %1156 = vmatpush.msra.mxu0 %v1113
      %1157 = vmatmul.f32.gmra.mxu0 %v1119
      %v1158 = vpop.f32.mrf.mxu0
      %v1159 = vadd.f32 0.0, %v1158
      %1160 = vdwg.mxu0
      %1161 = vmatpush.msra.mxu0 0.0
      %1162 = vmatpush.msra.mxu0 0.0
      %1163 = vmatpush.msra.mxu0 0.0
      %1164 = vmatpush.msra.mxu0 0.0
      %1165 = vmatpush.msra.mxu0 0.0
      %1166 = vmatpush.msra.mxu0 0.0
      %1167 = vmatpush.msra.mxu0 0.0
      %1168 = vmatpush.msra.mxu0 0.0
      %1169 = vmatpush.msra.mxu0 0.0
      %1170 = vmatpush.msra.mxu0 0.0
      %1171 = vmatpush.msra.mxu0 0.0
      %1172 = vmatpush.msra.mxu0 0.0
      %1173 = vmatpush.msra.mxu0 0.0
      %1174 = vmatpush.msra.mxu0 0.0
      %1175 = vmatpush.msra.mxu0 0.0
      %1176 = vmatpush.msra.mxu0 %v1114
      %1177 = vmatmul.f32.gmra.mxu0 %v1119
      %v1178 = vpop.f32.mrf.mxu0
      %v1179 = vadd.f32 0.0, %v1178
      %1180 = vdwg.mxu0
      %1181 = vmatpush.msra.mxu0 0.0
      %1182 = vmatpush.msra.mxu0 0.0
      %1183 = vmatpush.msra.mxu0 0.0
      %1184 = vmatpush.msra.mxu0 0.0
      %1185 = vmatpush.msra.mxu0 0.0
      %1186 = vmatpush.msra.mxu0 0.0
      %1187 = vmatpush.msra.mxu0 0.0
      %1188 = vmatpush.msra.mxu0 0.0
      %1189 = vmatpush.msra.mxu0 0.0
      %1190 = vmatpush.msra.mxu0 0.0
      %1191 = vmatpush.msra.mxu0 0.0
      %1192 = vmatpush.msra.mxu0 0.0
      %1193 = vmatpush.msra.mxu0 0.0
      %1194 = vmatpush.msra.mxu0 0.0
      %1195 = vmatpush.msra.mxu0 0.0
      %1196 = vmatpush.msra.mxu0 %v1115
      %1197 = vmatmul.f32.gmra.mxu0 %v1119
      %v1198 = vpop.f32.mrf.mxu0
      %v1199 = vadd.f32 0.0, %v1198
      %1200 = vdwg.mxu0
      %v1201 = vadd.f32 %v1084, %v1139
      %v1202 = vadd.f32 %v1085, %v1159
      %v1203 = vadd.f32 %v1086, %v1179
      %v1204 = vadd.f32 %v1087, %v1199
      %1205 = vrot.lane.b32.xlu0 %v271, 111
      %v1206 = vpop.permute.xlu0 %1205
      %1207 = vrot.lane.b32.xlu0 %v272, 111
      %v1208 = vpop.permute.xlu0 %1207
      %1209 = vrot.lane.b32.xlu0 %v273, 111
      %v1210 = vpop.permute.xlu0 %1209
      %1211 = vrot.lane.b32.xlu0 %v274, 111
      %v1212 = vpop.permute.xlu0 %1211
      %vm1213 = vcmp.lt.s32.totalorder %v290, 111
      %v1214 = vsel %vm1213, %v1210, %v1212
      %v1215 = vsel %vm1213, %v1208, %v1210
      %v1216 = vsel %vm1213, %v1206, %v1208
      %v1217 = vsel %vm1213, %v1212, %v1206
      %s1218 = scalar_lea.vmem %s1, 32
      %v1219 = vld [vmem:[%s1218] ss:$8 sm:$0xf]
      %v1221 = vperm.slane %v1219, 0
      %v1222 = vperm.slane %v1219, 1
      %v1223 = vperm.slane %v1219, 2
      %v1224 = vperm.slane %v1219, 3
      %v1229 = vmul.f32 %v1216, %v1221
      %v1230 = vmul.f32 %v1215, %v1222
      %v1231 = vmul.f32 %v1214, %v1223
      %v1232 = vmul.f32 %v1217, %v1224
      %s1233 = scalar_lea.vmem %s3, 64
      %v1234 = vld [vmem:[%s1233] sm:$0xff]
      %v1236 = vsel %vm311, %v1234, 0
      %1238 = vmatpush.msra.mxu0 0.0
      %1239 = vmatpush.msra.mxu0 0.0
      %1240 = vmatpush.msra.mxu0 0.0
      %1241 = vmatpush.msra.mxu0 0.0
      %1242 = vmatpush.msra.mxu0 0.0
      %1243 = vmatpush.msra.mxu0 0.0
      %1244 = vmatpush.msra.mxu0 0.0
      %1245 = vmatpush.msra.mxu0 0.0
      %1246 = vmatpush.msra.mxu0 0.0
      %1247 = vmatpush.msra.mxu0 0.0
      %1248 = vmatpush.msra.mxu0 0.0
      %1249 = vmatpush.msra.mxu0 0.0
      %1250 = vmatpush.msra.mxu0 0.0
      %1251 = vmatpush.msra.mxu0 0.0
      %1252 = vmatpush.msra.mxu0 0.0
      %1253 = vmatpush.msra.mxu0 %v1229
      %1254 = vmatmul.f32.gmra.mxu0 %v1236
      %v1255 = vpop.f32.mrf.mxu0
      %v1256 = vadd.f32 0.0, %v1255
      %1257 = vdwg.mxu0
      %1258 = vmatpush.msra.mxu0 0.0
      %1259 = vmatpush.msra.mxu0 0.0
      %1260 = vmatpush.msra.mxu0 0.0
      %1261 = vmatpush.msra.mxu0 0.0
      %1262 = vmatpush.msra.mxu0 0.0
      %1263 = vmatpush.msra.mxu0 0.0
      %1264 = vmatpush.msra.mxu0 0.0
      %1265 = vmatpush.msra.mxu0 0.0
      %1266 = vmatpush.msra.mxu0 0.0
      %1267 = vmatpush.msra.mxu0 0.0
      %1268 = vmatpush.msra.mxu0 0.0
      %1269 = vmatpush.msra.mxu0 0.0
      %1270 = vmatpush.msra.mxu0 0.0
      %1271 = vmatpush.msra.mxu0 0.0
      %1272 = vmatpush.msra.mxu0 0.0
      %1273 = vmatpush.msra.mxu0 %v1230
      %1274 = vmatmul.f32.gmra.mxu0 %v1236
      %v1275 = vpop.f32.mrf.mxu0
      %v1276 = vadd.f32 0.0, %v1275
      %1277 = vdwg.mxu0
      %1278 = vmatpush.msra.mxu0 0.0
      %1279 = vmatpush.msra.mxu0 0.0
      %1280 = vmatpush.msra.mxu0 0.0
      %1281 = vmatpush.msra.mxu0 0.0
      %1282 = vmatpush.msra.mxu0 0.0
      %1283 = vmatpush.msra.mxu0 0.0
      %1284 = vmatpush.msra.mxu0 0.0
      %1285 = vmatpush.msra.mxu0 0.0
      %1286 = vmatpush.msra.mxu0 0.0
      %1287 = vmatpush.msra.mxu0 0.0
      %1288 = vmatpush.msra.mxu0 0.0
      %1289 = vmatpush.msra.mxu0 0.0
      %1290 = vmatpush.msra.mxu0 0.0
      %1291 = vmatpush.msra.mxu0 0.0
      %1292 = vmatpush.msra.mxu0 0.0
      %1293 = vmatpush.msra.mxu0 %v1231
      %1294 = vmatmul.f32.gmra.mxu0 %v1236
      %v1295 = vpop.f32.mrf.mxu0
      %v1296 = vadd.f32 0.0, %v1295
      %1297 = vdwg.mxu0
      %1298 = vmatpush.msra.mxu0 0.0
      %1299 = vmatpush.msra.mxu0 0.0
      %1300 = vmatpush.msra.mxu0 0.0
      %1301 = vmatpush.msra.mxu0 0.0
      %1302 = vmatpush.msra.mxu0 0.0
      %1303 = vmatpush.msra.mxu0 0.0
      %1304 = vmatpush.msra.mxu0 0.0
      %1305 = vmatpush.msra.mxu0 0.0
      %1306 = vmatpush.msra.mxu0 0.0
      %1307 = vmatpush.msra.mxu0 0.0
      %1308 = vmatpush.msra.mxu0 0.0
      %1309 = vmatpush.msra.mxu0 0.0
      %1310 = vmatpush.msra.mxu0 0.0
      %1311 = vmatpush.msra.mxu0 0.0
      %1312 = vmatpush.msra.mxu0 0.0
      %1313 = vmatpush.msra.mxu0 %v1232
      %1314 = vmatmul.f32.gmra.mxu0 %v1236
      %v1315 = vpop.f32.mrf.mxu0
      %v1316 = vadd.f32 0.0, %v1315
      %1317 = vdwg.mxu0
      %v1318 = vadd.f32 %v1201, %v1256
      %v1319 = vadd.f32 %v1202, %v1276
      %v1320 = vadd.f32 %v1203, %v1296
      %v1321 = vadd.f32 %v1204, %v1316
      %v1322 = vmax.f32 %v1318, 0.0
      %v1323 = vmax.f32 %v1319, 0.0
      %v1324 = vmax.f32 %v1320, 0.0
      %v1325 = vmax.f32 %v1321, 0.0
      %s1326 = scalar_lea.vmem %s4, 8
      %v1327 = vld [vmem:[%s1326] sm:$0xff]
      %1329 = vset.pattern.permute.xlu0 0
      %1330 = vperm.xlu0 %1329, %v1327
      %v1331 = vpop.permute.xlu0 %1330
      %1333 = vrot.lane.b32.xlu0 %v1322, 17
      %v1334 = vpop.permute.xlu0 %1333
      %1335 = vrot.lane.b32.xlu0 %v1323, 17
      %v1336 = vpop.permute.xlu0 %1335
      %1337 = vrot.lane.b32.xlu0 %v1324, 17
      %v1338 = vpop.permute.xlu0 %1337
      %1339 = vrot.lane.b32.xlu0 %v1325, 17
      %v1340 = vpop.permute.xlu0 %1339
      %v1341 = vsel %vm291, %v1338, %v1340
      %v1342 = vsel %vm291, %v1336, %v1338
      %v1343 = vsel %vm291, %v1334, %v1336
      %v1344 = vsel %vm291, %v1340, %v1334
      %v1345 = vmul.f32 %v1344, %v298
      %v1346 = vmul.f32 %v1343, %v299
      %v1347 = vmul.f32 %v1342, %v300
      %v1348 = vmul.f32 %v1341, %v301
      %s1349 = scalar_lea.vmem %s3, 72
      %v1350 = vld [vmem:[%s1349] sm:$0xff]
      %v1352 = vsel %vm311, %v1350, 0
      %1354 = vmatpush.msra.mxu0 0.0
      %1355 = vmatpush.msra.mxu0 0.0
      %1356 = vmatpush.msra.mxu0 0.0
      %1357 = vmatpush.msra.mxu0 0.0
      %1358 = vmatpush.msra.mxu0 0.0
      %1359 = vmatpush.msra.mxu0 0.0
      %1360 = vmatpush.msra.mxu0 0.0
      %1361 = vmatpush.msra.mxu0 0.0
      %1362 = vmatpush.msra.mxu0 0.0
      %1363 = vmatpush.msra.mxu0 0.0
      %1364 = vmatpush.msra.mxu0 0.0
      %1365 = vmatpush.msra.mxu0 0.0
      %1366 = vmatpush.msra.mxu0 0.0
      %1367 = vmatpush.msra.mxu0 0.0
      %1368 = vmatpush.msra.mxu0 0.0
      %1369 = vmatpush.msra.mxu0 %v1345
      %1370 = vmatmul.f32.gmra.mxu0 %v1352
      %v1371 = vpop.f32.mrf.mxu0
      %v1372 = vadd.f32 0.0, %v1371
      %1373 = vdwg.mxu0
      %1374 = vmatpush.msra.mxu0 0.0
      %1375 = vmatpush.msra.mxu0 0.0
      %1376 = vmatpush.msra.mxu0 0.0
      %1377 = vmatpush.msra.mxu0 0.0
      %1378 = vmatpush.msra.mxu0 0.0
      %1379 = vmatpush.msra.mxu0 0.0
      %1380 = vmatpush.msra.mxu0 0.0
      %1381 = vmatpush.msra.mxu0 0.0
      %1382 = vmatpush.msra.mxu0 0.0
      %1383 = vmatpush.msra.mxu0 0.0
      %1384 = vmatpush.msra.mxu0 0.0
      %1385 = vmatpush.msra.mxu0 0.0
      %1386 = vmatpush.msra.mxu0 0.0
      %1387 = vmatpush.msra.mxu0 0.0
      %1388 = vmatpush.msra.mxu0 0.0
      %1389 = vmatpush.msra.mxu0 %v1346
      %1390 = vmatmul.f32.gmra.mxu0 %v1352
      %v1391 = vpop.f32.mrf.mxu0
      %v1392 = vadd.f32 0.0, %v1391
      %1393 = vdwg.mxu0
      %1394 = vmatpush.msra.mxu0 0.0
      %1395 = vmatpush.msra.mxu0 0.0
      %1396 = vmatpush.msra.mxu0 0.0
      %1397 = vmatpush.msra.mxu0 0.0
      %1398 = vmatpush.msra.mxu0 0.0
      %1399 = vmatpush.msra.mxu0 0.0
      %1400 = vmatpush.msra.mxu0 0.0
      %1401 = vmatpush.msra.mxu0 0.0
      %1402 = vmatpush.msra.mxu0 0.0
      %1403 = vmatpush.msra.mxu0 0.0
      %1404 = vmatpush.msra.mxu0 0.0
      %1405 = vmatpush.msra.mxu0 0.0
      %1406 = vmatpush.msra.mxu0 0.0
      %1407 = vmatpush.msra.mxu0 0.0
      %1408 = vmatpush.msra.mxu0 0.0
      %1409 = vmatpush.msra.mxu0 %v1347
      %1410 = vmatmul.f32.gmra.mxu0 %v1352
      %v1411 = vpop.f32.mrf.mxu0
      %v1412 = vadd.f32 0.0, %v1411
      %1413 = vdwg.mxu0
      %1414 = vmatpush.msra.mxu0 0.0
      %1415 = vmatpush.msra.mxu0 0.0
      %1416 = vmatpush.msra.mxu0 0.0
      %1417 = vmatpush.msra.mxu0 0.0
      %1418 = vmatpush.msra.mxu0 0.0
      %1419 = vmatpush.msra.mxu0 0.0
      %1420 = vmatpush.msra.mxu0 0.0
      %1421 = vmatpush.msra.mxu0 0.0
      %1422 = vmatpush.msra.mxu0 0.0
      %1423 = vmatpush.msra.mxu0 0.0
      %1424 = vmatpush.msra.mxu0 0.0
      %1425 = vmatpush.msra.mxu0 0.0
      %1426 = vmatpush.msra.mxu0 0.0
      %1427 = vmatpush.msra.mxu0 0.0
      %1428 = vmatpush.msra.mxu0 0.0
      %1429 = vmatpush.msra.mxu0 %v1348
      %1430 = vmatmul.f32.gmra.mxu0 %v1352
      %v1431 = vpop.f32.mrf.mxu0
      %v1432 = vadd.f32 0.0, %v1431
      %1433 = vdwg.mxu0
      %v1434 = vadd.f32 %v1331, %v1372
      %v1435 = vadd.f32 %v1331, %v1392
      %v1436 = vadd.f32 %v1331, %v1412
      %v1437 = vadd.f32 %v1331, %v1432
      %1438 = vrot.lane.b32.xlu0 %v1322, 16
      %v1439 = vpop.permute.xlu0 %1438
      %1440 = vrot.lane.b32.xlu0 %v1323, 16
      %v1441 = vpop.permute.xlu0 %1440
      %1442 = vrot.lane.b32.xlu0 %v1324, 16
      %v1443 = vpop.permute.xlu0 %1442
      %1444 = vrot.lane.b32.xlu0 %v1325, 16
      %v1445 = vpop.permute.xlu0 %1444
      %v1446 = vsel %vm407, %v1443, %v1445
      %v1447 = vsel %vm407, %v1441, %v1443
      %v1448 = vsel %vm407, %v1439, %v1441
      %v1449 = vsel %vm407, %v1445, %v1439
      %v1450 = vmul.f32 %v1449, %v415
      %v1451 = vmul.f32 %v1448, %v416
      %v1452 = vmul.f32 %v1447, %v417
      %v1453 = vmul.f32 %v1446, %v418
      %s1454 = scalar_lea.vmem %s3, 80
      %v1455 = vld [vmem:[%s1454] sm:$0xff]
      %v1457 = vsel %vm311, %v1455, 0
      %1459 = vmatpush.msra.mxu0 0.0
      %1460 = vmatpush.msra.mxu0 0.0
      %1461 = vmatpush.msra.mxu0 0.0
      %1462 = vmatpush.msra.mxu0 0.0
      %1463 = vmatpush.msra.mxu0 0.0
      %1464 = vmatpush.msra.mxu0 0.0
      %1465 = vmatpush.msra.mxu0 0.0
      %1466 = vmatpush.msra.mxu0 0.0
      %1467 = vmatpush.msra.mxu0 0.0
      %1468 = vmatpush.msra.mxu0 0.0
      %1469 = vmatpush.msra.mxu0 0.0
      %1470 = vmatpush.msra.mxu0 0.0
      %1471 = vmatpush.msra.mxu0 0.0
      %1472 = vmatpush.msra.mxu0 0.0
      %1473 = vmatpush.msra.mxu0 0.0
      %1474 = vmatpush.msra.mxu0 %v1450
      %1475 = vmatmul.f32.gmra.mxu0 %v1457
      %v1476 = vpop.f32.mrf.mxu0
      %v1477 = vadd.f32 0.0, %v1476
      %1478 = vdwg.mxu0
      %1479 = vmatpush.msra.mxu0 0.0
      %1480 = vmatpush.msra.mxu0 0.0
      %1481 = vmatpush.msra.mxu0 0.0
      %1482 = vmatpush.msra.mxu0 0.0
      %1483 = vmatpush.msra.mxu0 0.0
      %1484 = vmatpush.msra.mxu0 0.0
      %1485 = vmatpush.msra.mxu0 0.0
      %1486 = vmatpush.msra.mxu0 0.0
      %1487 = vmatpush.msra.mxu0 0.0
      %1488 = vmatpush.msra.mxu0 0.0
      %1489 = vmatpush.msra.mxu0 0.0
      %1490 = vmatpush.msra.mxu0 0.0
      %1491 = vmatpush.msra.mxu0 0.0
      %1492 = vmatpush.msra.mxu0 0.0
      %1493 = vmatpush.msra.mxu0 0.0
      %1494 = vmatpush.msra.mxu0 %v1451
      %1495 = vmatmul.f32.gmra.mxu0 %v1457
      %v1496 = vpop.f32.mrf.mxu0
      %v1497 = vadd.f32 0.0, %v1496
      %1498 = vdwg.mxu0
      %1499 = vmatpush.msra.mxu0 0.0
      %1500 = vmatpush.msra.mxu0 0.0
      %1501 = vmatpush.msra.mxu0 0.0
      %1502 = vmatpush.msra.mxu0 0.0
      %1503 = vmatpush.msra.mxu0 0.0
      %1504 = vmatpush.msra.mxu0 0.0
      %1505 = vmatpush.msra.mxu0 0.0
      %1506 = vmatpush.msra.mxu0 0.0
      %1507 = vmatpush.msra.mxu0 0.0
      %1508 = vmatpush.msra.mxu0 0.0
      %1509 = vmatpush.msra.mxu0 0.0
      %1510 = vmatpush.msra.mxu0 0.0
      %1511 = vmatpush.msra.mxu0 0.0
      %1512 = vmatpush.msra.mxu0 0.0
      %1513 = vmatpush.msra.mxu0 0.0
      %1514 = vmatpush.msra.mxu0 %v1452
      %1515 = vmatmul.f32.gmra.mxu0 %v1457
      %v1516 = vpop.f32.mrf.mxu0
      %v1517 = vadd.f32 0.0, %v1516
      %1518 = vdwg.mxu0
      %1519 = vmatpush.msra.mxu0 0.0
      %1520 = vmatpush.msra.mxu0 0.0
      %1521 = vmatpush.msra.mxu0 0.0
      %1522 = vmatpush.msra.mxu0 0.0
      %1523 = vmatpush.msra.mxu0 0.0
      %1524 = vmatpush.msra.mxu0 0.0
      %1525 = vmatpush.msra.mxu0 0.0
      %1526 = vmatpush.msra.mxu0 0.0
      %1527 = vmatpush.msra.mxu0 0.0
      %1528 = vmatpush.msra.mxu0 0.0
      %1529 = vmatpush.msra.mxu0 0.0
      %1530 = vmatpush.msra.mxu0 0.0
      %1531 = vmatpush.msra.mxu0 0.0
      %1532 = vmatpush.msra.mxu0 0.0
      %1533 = vmatpush.msra.mxu0 0.0
      %1534 = vmatpush.msra.mxu0 %v1453
      %1535 = vmatmul.f32.gmra.mxu0 %v1457
      %v1536 = vpop.f32.mrf.mxu0
      %v1537 = vadd.f32 0.0, %v1536
      %1538 = vdwg.mxu0
      %v1539 = vadd.f32 %v1434, %v1477
      %v1540 = vadd.f32 %v1435, %v1497
      %v1541 = vadd.f32 %v1436, %v1517
      %v1542 = vadd.f32 %v1437, %v1537
      %1543 = vrot.lane.b32.xlu0 %v1322, 15
      %v1544 = vpop.permute.xlu0 %1543
      %1545 = vrot.lane.b32.xlu0 %v1323, 15
      %v1546 = vpop.permute.xlu0 %1545
      %1547 = vrot.lane.b32.xlu0 %v1324, 15
      %v1548 = vpop.permute.xlu0 %1547
      %1549 = vrot.lane.b32.xlu0 %v1325, 15
      %v1550 = vpop.permute.xlu0 %1549
      %v1551 = vsel %vm524, %v1548, %v1550
      %v1552 = vsel %vm524, %v1546, %v1548
      %v1553 = vsel %vm524, %v1544, %v1546
      %v1554 = vsel %vm524, %v1550, %v1544
      %v1555 = vmul.f32 %v1554, %v532
      %v1556 = vmul.f32 %v1553, %v533
      %v1557 = vmul.f32 %v1552, %v534
      %v1558 = vmul.f32 %v1551, %v535
      %s1559 = scalar_lea.vmem %s3, 88
      %v1560 = vld [vmem:[%s1559] sm:$0xff]
      %v1562 = vsel %vm311, %v1560, 0
      %1564 = vmatpush.msra.mxu0 0.0
      %1565 = vmatpush.msra.mxu0 0.0
      %1566 = vmatpush.msra.mxu0 0.0
      %1567 = vmatpush.msra.mxu0 0.0
      %1568 = vmatpush.msra.mxu0 0.0
      %1569 = vmatpush.msra.mxu0 0.0
      %1570 = vmatpush.msra.mxu0 0.0
      %1571 = vmatpush.msra.mxu0 0.0
      %1572 = vmatpush.msra.mxu0 0.0
      %1573 = vmatpush.msra.mxu0 0.0
      %1574 = vmatpush.msra.mxu0 0.0
      %1575 = vmatpush.msra.mxu0 0.0
      %1576 = vmatpush.msra.mxu0 0.0
      %1577 = vmatpush.msra.mxu0 0.0
      %1578 = vmatpush.msra.mxu0 0.0
      %1579 = vmatpush.msra.mxu0 %v1555
      %1580 = vmatmul.f32.gmra.mxu0 %v1562
      %v1581 = vpop.f32.mrf.mxu0
      %v1582 = vadd.f32 0.0, %v1581
      %1583 = vdwg.mxu0
      %1584 = vmatpush.msra.mxu0 0.0
      %1585 = vmatpush.msra.mxu0 0.0
      %1586 = vmatpush.msra.mxu0 0.0
      %1587 = vmatpush.msra.mxu0 0.0
      %1588 = vmatpush.msra.mxu0 0.0
      %1589 = vmatpush.msra.mxu0 0.0
      %1590 = vmatpush.msra.mxu0 0.0
      %1591 = vmatpush.msra.mxu0 0.0
      %1592 = vmatpush.msra.mxu0 0.0
      %1593 = vmatpush.msra.mxu0 0.0
      %1594 = vmatpush.msra.mxu0 0.0
      %1595 = vmatpush.msra.mxu0 0.0
      %1596 = vmatpush.msra.mxu0 0.0
      %1597 = vmatpush.msra.mxu0 0.0
      %1598 = vmatpush.msra.mxu0 0.0
      %1599 = vmatpush.msra.mxu0 %v1556
      %1600 = vmatmul.f32.gmra.mxu0 %v1562
      %v1601 = vpop.f32.mrf.mxu0
      %v1602 = vadd.f32 0.0, %v1601
      %1603 = vdwg.mxu0
      %1604 = vmatpush.msra.mxu0 0.0
      %1605 = vmatpush.msra.mxu0 0.0
      %1606 = vmatpush.msra.mxu0 0.0
      %1607 = vmatpush.msra.mxu0 0.0
      %1608 = vmatpush.msra.mxu0 0.0
      %1609 = vmatpush.msra.mxu0 0.0
      %1610 = vmatpush.msra.mxu0 0.0
      %1611 = vmatpush.msra.mxu0 0.0
      %1612 = vmatpush.msra.mxu0 0.0
      %1613 = vmatpush.msra.mxu0 0.0
      %1614 = vmatpush.msra.mxu0 0.0
      %1615 = vmatpush.msra.mxu0 0.0
      %1616 = vmatpush.msra.mxu0 0.0
      %1617 = vmatpush.msra.mxu0 0.0
      %1618 = vmatpush.msra.mxu0 0.0
      %1619 = vmatpush.msra.mxu0 %v1557
      %1620 = vmatmul.f32.gmra.mxu0 %v1562
      %v1621 = vpop.f32.mrf.mxu0
      %v1622 = vadd.f32 0.0, %v1621
      %1623 = vdwg.mxu0
      %1624 = vmatpush.msra.mxu0 0.0
      %1625 = vmatpush.msra.mxu0 0.0
      %1626 = vmatpush.msra.mxu0 0.0
      %1627 = vmatpush.msra.mxu0 0.0
      %1628 = vmatpush.msra.mxu0 0.0
      %1629 = vmatpush.msra.mxu0 0.0
      %1630 = vmatpush.msra.mxu0 0.0
      %1631 = vmatpush.msra.mxu0 0.0
      %1632 = vmatpush.msra.mxu0 0.0
      %1633 = vmatpush.msra.mxu0 0.0
      %1634 = vmatpush.msra.mxu0 0.0
      %1635 = vmatpush.msra.mxu0 0.0
      %1636 = vmatpush.msra.mxu0 0.0
      %1637 = vmatpush.msra.mxu0 0.0
      %1638 = vmatpush.msra.mxu0 0.0
      %1639 = vmatpush.msra.mxu0 %v1558
      %1640 = vmatmul.f32.gmra.mxu0 %v1562
      %v1641 = vpop.f32.mrf.mxu0
      %v1642 = vadd.f32 0.0, %v1641
      %1643 = vdwg.mxu0
      %v1644 = vadd.f32 %v1539, %v1582
      %v1645 = vadd.f32 %v1540, %v1602
      %v1646 = vadd.f32 %v1541, %v1622
      %v1647 = vadd.f32 %v1542, %v1642
      %1648 = vrot.lane.b32.xlu0 %v1322, 1
      %v1649 = vpop.permute.xlu0 %1648
      %1650 = vrot.lane.b32.xlu0 %v1323, 1
      %v1651 = vpop.permute.xlu0 %1650
      %1652 = vrot.lane.b32.xlu0 %v1324, 1
      %v1653 = vpop.permute.xlu0 %1652
      %1654 = vrot.lane.b32.xlu0 %v1325, 1
      %v1655 = vpop.permute.xlu0 %1654
      %v1656 = vsel %vm641, %v1653, %v1655
      %v1657 = vsel %vm641, %v1651, %v1653
      %v1658 = vsel %vm641, %v1649, %v1651
      %v1659 = vsel %vm641, %v1655, %v1649
      %v1660 = vmul.f32 %v1659, %v649
      %v1661 = vmul.f32 %v1658, %v650
      %v1662 = vmul.f32 %v1657, %v651
      %v1663 = vmul.f32 %v1656, %v652
      %s1664 = scalar_lea.vmem %s3, 96
      %v1665 = vld [vmem:[%s1664] sm:$0xff]
      %v1667 = vsel %vm311, %v1665, 0
      %1669 = vmatpush.msra.mxu0 0.0
      %1670 = vmatpush.msra.mxu0 0.0
      %1671 = vmatpush.msra.mxu0 0.0
      %1672 = vmatpush.msra.mxu0 0.0
      %1673 = vmatpush.msra.mxu0 0.0
      %1674 = vmatpush.msra.mxu0 0.0
      %1675 = vmatpush.msra.mxu0 0.0
      %1676 = vmatpush.msra.mxu0 0.0
      %1677 = vmatpush.msra.mxu0 0.0
      %1678 = vmatpush.msra.mxu0 0.0
      %1679 = vmatpush.msra.mxu0 0.0
      %1680 = vmatpush.msra.mxu0 0.0
      %1681 = vmatpush.msra.mxu0 0.0
      %1682 = vmatpush.msra.mxu0 0.0
      %1683 = vmatpush.msra.mxu0 0.0
      %1684 = vmatpush.msra.mxu0 %v1660
      %1685 = vmatmul.f32.gmra.mxu0 %v1667
      %v1686 = vpop.f32.mrf.mxu0
      %v1687 = vadd.f32 0.0, %v1686
      %1688 = vdwg.mxu0
      %1689 = vmatpush.msra.mxu0 0.0
      %1690 = vmatpush.msra.mxu0 0.0
      %1691 = vmatpush.msra.mxu0 0.0
      %1692 = vmatpush.msra.mxu0 0.0
      %1693 = vmatpush.msra.mxu0 0.0
      %1694 = vmatpush.msra.mxu0 0.0
      %1695 = vmatpush.msra.mxu0 0.0
      %1696 = vmatpush.msra.mxu0 0.0
      %1697 = vmatpush.msra.mxu0 0.0
      %1698 = vmatpush.msra.mxu0 0.0
      %1699 = vmatpush.msra.mxu0 0.0
      %1700 = vmatpush.msra.mxu0 0.0
      %1701 = vmatpush.msra.mxu0 0.0
      %1702 = vmatpush.msra.mxu0 0.0
      %1703 = vmatpush.msra.mxu0 0.0
      %1704 = vmatpush.msra.mxu0 %v1661
      %1705 = vmatmul.f32.gmra.mxu0 %v1667
      %v1706 = vpop.f32.mrf.mxu0
      %v1707 = vadd.f32 0.0, %v1706
      %1708 = vdwg.mxu0
      %1709 = vmatpush.msra.mxu0 0.0
      %1710 = vmatpush.msra.mxu0 0.0
      %1711 = vmatpush.msra.mxu0 0.0
      %1712 = vmatpush.msra.mxu0 0.0
      %1713 = vmatpush.msra.mxu0 0.0
      %1714 = vmatpush.msra.mxu0 0.0
      %1715 = vmatpush.msra.mxu0 0.0
      %1716 = vmatpush.msra.mxu0 0.0
      %1717 = vmatpush.msra.mxu0 0.0
      %1718 = vmatpush.msra.mxu0 0.0
      %1719 = vmatpush.msra.mxu0 0.0
      %1720 = vmatpush.msra.mxu0 0.0
      %1721 = vmatpush.msra.mxu0 0.0
      %1722 = vmatpush.msra.mxu0 0.0
      %1723 = vmatpush.msra.mxu0 0.0
      %1724 = vmatpush.msra.mxu0 %v1662
      %1725 = vmatmul.f32.gmra.mxu0 %v1667
      %v1726 = vpop.f32.mrf.mxu0
      %v1727 = vadd.f32 0.0, %v1726
      %1728 = vdwg.mxu0
      %1729 = vmatpush.msra.mxu0 0.0
      %1730 = vmatpush.msra.mxu0 0.0
      %1731 = vmatpush.msra.mxu0 0.0
      %1732 = vmatpush.msra.mxu0 0.0
      %1733 = vmatpush.msra.mxu0 0.0
      %1734 = vmatpush.msra.mxu0 0.0
      %1735 = vmatpush.msra.mxu0 0.0
      %1736 = vmatpush.msra.mxu0 0.0
      %1737 = vmatpush.msra.mxu0 0.0
      %1738 = vmatpush.msra.mxu0 0.0
      %1739 = vmatpush.msra.mxu0 0.0
      %1740 = vmatpush.msra.mxu0 0.0
      %1741 = vmatpush.msra.mxu0 0.0
      %1742 = vmatpush.msra.mxu0 0.0
      %1743 = vmatpush.msra.mxu0 0.0
      %1744 = vmatpush.msra.mxu0 %v1663
      %1745 = vmatmul.f32.gmra.mxu0 %v1667
      %v1746 = vpop.f32.mrf.mxu0
      %v1747 = vadd.f32 0.0, %v1746
      %1748 = vdwg.mxu0
      %v1749 = vadd.f32 %v1644, %v1687
      %v1750 = vadd.f32 %v1645, %v1707
      %v1751 = vadd.f32 %v1646, %v1727
      %v1752 = vadd.f32 %v1647, %v1747
      %v1753 = vmul.f32 %v1322, %v753
      %v1754 = vmul.f32 %v1323, %v754
      %v1755 = vmul.f32 %v1324, %v755
      %v1756 = vmul.f32 %v1325, %v756
      %s1757 = scalar_lea.vmem %s3, 104
      %v1758 = vld [vmem:[%s1757] sm:$0xff]
      %v1760 = vsel %vm311, %v1758, 0
      %1762 = vmatpush.msra.mxu0 0.0
      %1763 = vmatpush.msra.mxu0 0.0
      %1764 = vmatpush.msra.mxu0 0.0
      %1765 = vmatpush.msra.mxu0 0.0
      %1766 = vmatpush.msra.mxu0 0.0
      %1767 = vmatpush.msra.mxu0 0.0
      %1768 = vmatpush.msra.mxu0 0.0
      %1769 = vmatpush.msra.mxu0 0.0
      %1770 = vmatpush.msra.mxu0 0.0
      %1771 = vmatpush.msra.mxu0 0.0
      %1772 = vmatpush.msra.mxu0 0.0
      %1773 = vmatpush.msra.mxu0 0.0
      %1774 = vmatpush.msra.mxu0 0.0
      %1775 = vmatpush.msra.mxu0 0.0
      %1776 = vmatpush.msra.mxu0 0.0
      %1777 = vmatpush.msra.mxu0 %v1753
      %1778 = vmatmul.f32.gmra.mxu0 %v1760
      %v1779 = vpop.f32.mrf.mxu0
      %v1780 = vadd.f32 0.0, %v1779
      %1781 = vdwg.mxu0
      %1782 = vmatpush.msra.mxu0 0.0
      %1783 = vmatpush.msra.mxu0 0.0
      %1784 = vmatpush.msra.mxu0 0.0
      %1785 = vmatpush.msra.mxu0 0.0
      %1786 = vmatpush.msra.mxu0 0.0
      %1787 = vmatpush.msra.mxu0 0.0
      %1788 = vmatpush.msra.mxu0 0.0
      %1789 = vmatpush.msra.mxu0 0.0
      %1790 = vmatpush.msra.mxu0 0.0
      %1791 = vmatpush.msra.mxu0 0.0
      %1792 = vmatpush.msra.mxu0 0.0
      %1793 = vmatpush.msra.mxu0 0.0
      %1794 = vmatpush.msra.mxu0 0.0
      %1795 = vmatpush.msra.mxu0 0.0
      %1796 = vmatpush.msra.mxu0 0.0
      %1797 = vmatpush.msra.mxu0 %v1754
      %1798 = vmatmul.f32.gmra.mxu0 %v1760
      %v1799 = vpop.f32.mrf.mxu0
      %v1800 = vadd.f32 0.0, %v1799
      %1801 = vdwg.mxu0
      %1802 = vmatpush.msra.mxu0 0.0
      %1803 = vmatpush.msra.mxu0 0.0
      %1804 = vmatpush.msra.mxu0 0.0
      %1805 = vmatpush.msra.mxu0 0.0
      %1806 = vmatpush.msra.mxu0 0.0
      %1807 = vmatpush.msra.mxu0 0.0
      %1808 = vmatpush.msra.mxu0 0.0
      %1809 = vmatpush.msra.mxu0 0.0
      %1810 = vmatpush.msra.mxu0 0.0
      %1811 = vmatpush.msra.mxu0 0.0
      %1812 = vmatpush.msra.mxu0 0.0
      %1813 = vmatpush.msra.mxu0 0.0
      %1814 = vmatpush.msra.mxu0 0.0
      %1815 = vmatpush.msra.mxu0 0.0
      %1816 = vmatpush.msra.mxu0 0.0
      %1817 = vmatpush.msra.mxu0 %v1755
      %1818 = vmatmul.f32.gmra.mxu0 %v1760
      %v1819 = vpop.f32.mrf.mxu0
      %v1820 = vadd.f32 0.0, %v1819
      %1821 = vdwg.mxu0
      %1822 = vmatpush.msra.mxu0 0.0
      %1823 = vmatpush.msra.mxu0 0.0
      %1824 = vmatpush.msra.mxu0 0.0
      %1825 = vmatpush.msra.mxu0 0.0
      %1826 = vmatpush.msra.mxu0 0.0
      %1827 = vmatpush.msra.mxu0 0.0
      %1828 = vmatpush.msra.mxu0 0.0
      %1829 = vmatpush.msra.mxu0 0.0
      %1830 = vmatpush.msra.mxu0 0.0
      %1831 = vmatpush.msra.mxu0 0.0
      %1832 = vmatpush.msra.mxu0 0.0
      %1833 = vmatpush.msra.mxu0 0.0
      %1834 = vmatpush.msra.mxu0 0.0
      %1835 = vmatpush.msra.mxu0 0.0
      %1836 = vmatpush.msra.mxu0 0.0
      %1837 = vmatpush.msra.mxu0 %v1756
      %1838 = vmatmul.f32.gmra.mxu0 %v1760
      %v1839 = vpop.f32.mrf.mxu0
      %v1840 = vadd.f32 0.0, %v1839
      %1841 = vdwg.mxu0
      %v1842 = vadd.f32 %v1749, %v1780
      %v1843 = vadd.f32 %v1750, %v1800
      %v1844 = vadd.f32 %v1751, %v1820
      %v1845 = vadd.f32 %v1752, %v1840
      %1846 = vrot.lane.b32.xlu0 %v1322, 127
      %v1847 = vpop.permute.xlu0 %1846
      %1848 = vrot.lane.b32.xlu0 %v1323, 127
      %v1849 = vpop.permute.xlu0 %1848
      %1850 = vrot.lane.b32.xlu0 %v1324, 127
      %v1851 = vpop.permute.xlu0 %1850
      %1852 = vrot.lane.b32.xlu0 %v1325, 127
      %v1853 = vpop.permute.xlu0 %1852
      %v1854 = vsel %vm862, %v1851, %v1853
      %v1855 = vsel %vm862, %v1849, %v1851
      %v1856 = vsel %vm862, %v1847, %v1849
      %v1857 = vsel %vm862, %v1853, %v1847
      %v1858 = vmul.f32 %v1856, %v870
      %v1859 = vmul.f32 %v1855, %v871
      %v1860 = vmul.f32 %v1854, %v872
      %v1861 = vmul.f32 %v1857, %v873
      %s1862 = scalar_lea.vmem %s3, 112
      %v1863 = vld [vmem:[%s1862] sm:$0xff]
      %v1865 = vsel %vm311, %v1863, 0
      %1867 = vmatpush.msra.mxu0 0.0
      %1868 = vmatpush.msra.mxu0 0.0
      %1869 = vmatpush.msra.mxu0 0.0
      %1870 = vmatpush.msra.mxu0 0.0
      %1871 = vmatpush.msra.mxu0 0.0
      %1872 = vmatpush.msra.mxu0 0.0
      %1873 = vmatpush.msra.mxu0 0.0
      %1874 = vmatpush.msra.mxu0 0.0
      %1875 = vmatpush.msra.mxu0 0.0
      %1876 = vmatpush.msra.mxu0 0.0
      %1877 = vmatpush.msra.mxu0 0.0
      %1878 = vmatpush.msra.mxu0 0.0
      %1879 = vmatpush.msra.mxu0 0.0
      %1880 = vmatpush.msra.mxu0 0.0
      %1881 = vmatpush.msra.mxu0 0.0
      %1882 = vmatpush.msra.mxu0 %v1858
      %1883 = vmatmul.f32.gmra.mxu0 %v1865
      %v1884 = vpop.f32.mrf.mxu0
      %v1885 = vadd.f32 0.0, %v1884
      %1886 = vdwg.mxu0
      %1887 = vmatpush.msra.mxu0 0.0
      %1888 = vmatpush.msra.mxu0 0.0
      %1889 = vmatpush.msra.mxu0 0.0
      %1890 = vmatpush.msra.mxu0 0.0
      %1891 = vmatpush.msra.mxu0 0.0
      %1892 = vmatpush.msra.mxu0 0.0
      %1893 = vmatpush.msra.mxu0 0.0
      %1894 = vmatpush.msra.mxu0 0.0
      %1895 = vmatpush.msra.mxu0 0.0
      %1896 = vmatpush.msra.mxu0 0.0
      %1897 = vmatpush.msra.mxu0 0.0
      %1898 = vmatpush.msra.mxu0 0.0
      %1899 = vmatpush.msra.mxu0 0.0
      %1900 = vmatpush.msra.mxu0 0.0
      %1901 = vmatpush.msra.mxu0 0.0
      %1902 = vmatpush.msra.mxu0 %v1859
      %1903 = vmatmul.f32.gmra.mxu0 %v1865
      %v1904 = vpop.f32.mrf.mxu0
      %v1905 = vadd.f32 0.0, %v1904
      %1906 = vdwg.mxu0
      %1907 = vmatpush.msra.mxu0 0.0
      %1908 = vmatpush.msra.mxu0 0.0
      %1909 = vmatpush.msra.mxu0 0.0
      %1910 = vmatpush.msra.mxu0 0.0
      %1911 = vmatpush.msra.mxu0 0.0
      %1912 = vmatpush.msra.mxu0 0.0
      %1913 = vmatpush.msra.mxu0 0.0
      %1914 = vmatpush.msra.mxu0 0.0
      %1915 = vmatpush.msra.mxu0 0.0
      %1916 = vmatpush.msra.mxu0 0.0
      %1917 = vmatpush.msra.mxu0 0.0
      %1918 = vmatpush.msra.mxu0 0.0
      %1919 = vmatpush.msra.mxu0 0.0
      %1920 = vmatpush.msra.mxu0 0.0
      %1921 = vmatpush.msra.mxu0 0.0
      %1922 = vmatpush.msra.mxu0 %v1860
      %1923 = vmatmul.f32.gmra.mxu0 %v1865
      %v1924 = vpop.f32.mrf.mxu0
      %v1925 = vadd.f32 0.0, %v1924
      %1926 = vdwg.mxu0
      %1927 = vmatpush.msra.mxu0 0.0
      %1928 = vmatpush.msra.mxu0 0.0
      %1929 = vmatpush.msra.mxu0 0.0
      %1930 = vmatpush.msra.mxu0 0.0
      %1931 = vmatpush.msra.mxu0 0.0
      %1932 = vmatpush.msra.mxu0 0.0
      %1933 = vmatpush.msra.mxu0 0.0
      %1934 = vmatpush.msra.mxu0 0.0
      %1935 = vmatpush.msra.mxu0 0.0
      %1936 = vmatpush.msra.mxu0 0.0
      %1937 = vmatpush.msra.mxu0 0.0
      %1938 = vmatpush.msra.mxu0 0.0
      %1939 = vmatpush.msra.mxu0 0.0
      %1940 = vmatpush.msra.mxu0 0.0
      %1941 = vmatpush.msra.mxu0 0.0
      %1942 = vmatpush.msra.mxu0 %v1861
      %1943 = vmatmul.f32.gmra.mxu0 %v1865
      %v1944 = vpop.f32.mrf.mxu0
      %v1945 = vadd.f32 0.0, %v1944
      %1946 = vdwg.mxu0
      %v1947 = vadd.f32 %v1842, %v1885
      %v1948 = vadd.f32 %v1843, %v1905
      %v1949 = vadd.f32 %v1844, %v1925
      %v1950 = vadd.f32 %v1845, %v1945
      %1951 = vrot.lane.b32.xlu0 %v1322, 113
      %v1952 = vpop.permute.xlu0 %1951
      %1953 = vrot.lane.b32.xlu0 %v1323, 113
      %v1954 = vpop.permute.xlu0 %1953
      %1955 = vrot.lane.b32.xlu0 %v1324, 113
      %v1956 = vpop.permute.xlu0 %1955
      %1957 = vrot.lane.b32.xlu0 %v1325, 113
      %v1958 = vpop.permute.xlu0 %1957
      %v1959 = vsel %vm979, %v1956, %v1958
      %v1960 = vsel %vm979, %v1954, %v1956
      %v1961 = vsel %vm979, %v1952, %v1954
      %v1962 = vsel %vm979, %v1958, %v1952
      %v1963 = vmul.f32 %v1961, %v987
      %v1964 = vmul.f32 %v1960, %v988
      %v1965 = vmul.f32 %v1959, %v989
      %v1966 = vmul.f32 %v1962, %v990
      %s1967 = scalar_lea.vmem %s3, 120
      %v1968 = vld [vmem:[%s1967] sm:$0xff]
      %v1970 = vsel %vm311, %v1968, 0
      %1972 = vmatpush.msra.mxu0 0.0
      %1973 = vmatpush.msra.mxu0 0.0
      %1974 = vmatpush.msra.mxu0 0.0
      %1975 = vmatpush.msra.mxu0 0.0
      %1976 = vmatpush.msra.mxu0 0.0
      %1977 = vmatpush.msra.mxu0 0.0
      %1978 = vmatpush.msra.mxu0 0.0
      %1979 = vmatpush.msra.mxu0 0.0
      %1980 = vmatpush.msra.mxu0 0.0
      %1981 = vmatpush.msra.mxu0 0.0
      %1982 = vmatpush.msra.mxu0 0.0
      %1983 = vmatpush.msra.mxu0 0.0
      %1984 = vmatpush.msra.mxu0 0.0
      %1985 = vmatpush.msra.mxu0 0.0
      %1986 = vmatpush.msra.mxu0 0.0
      %1987 = vmatpush.msra.mxu0 %v1963
      %1988 = vmatmul.f32.gmra.mxu0 %v1970
      %v1989 = vpop.f32.mrf.mxu0
      %v1990 = vadd.f32 0.0, %v1989
      %1991 = vdwg.mxu0
      %1992 = vmatpush.msra.mxu0 0.0
      %1993 = vmatpush.msra.mxu0 0.0
      %1994 = vmatpush.msra.mxu0 0.0
      %1995 = vmatpush.msra.mxu0 0.0
      %1996 = vmatpush.msra.mxu0 0.0
      %1997 = vmatpush.msra.mxu0 0.0
      %1998 = vmatpush.msra.mxu0 0.0
      %1999 = vmatpush.msra.mxu0 0.0
      %2000 = vmatpush.msra.mxu0 0.0
      %2001 = vmatpush.msra.mxu0 0.0
      %2002 = vmatpush.msra.mxu0 0.0
      %2003 = vmatpush.msra.mxu0 0.0
      %2004 = vmatpush.msra.mxu0 0.0
      %2005 = vmatpush.msra.mxu0 0.0
      %2006 = vmatpush.msra.mxu0 0.0
      %2007 = vmatpush.msra.mxu0 %v1964
      %2008 = vmatmul.f32.gmra.mxu0 %v1970
      %v2009 = vpop.f32.mrf.mxu0
      %v2010 = vadd.f32 0.0, %v2009
      %2011 = vdwg.mxu0
      %2012 = vmatpush.msra.mxu0 0.0
      %2013 = vmatpush.msra.mxu0 0.0
      %2014 = vmatpush.msra.mxu0 0.0
      %2015 = vmatpush.msra.mxu0 0.0
      %2016 = vmatpush.msra.mxu0 0.0
      %2017 = vmatpush.msra.mxu0 0.0
      %2018 = vmatpush.msra.mxu0 0.0
      %2019 = vmatpush.msra.mxu0 0.0
      %2020 = vmatpush.msra.mxu0 0.0
      %2021 = vmatpush.msra.mxu0 0.0
      %2022 = vmatpush.msra.mxu0 0.0
      %2023 = vmatpush.msra.mxu0 0.0
      %2024 = vmatpush.msra.mxu0 0.0
      %2025 = vmatpush.msra.mxu0 0.0
      %2026 = vmatpush.msra.mxu0 0.0
      %2027 = vmatpush.msra.mxu0 %v1965
      %2028 = vmatmul.f32.gmra.mxu0 %v1970
      %v2029 = vpop.f32.mrf.mxu0
      %v2030 = vadd.f32 0.0, %v2029
      %2031 = vdwg.mxu0
      %2032 = vmatpush.msra.mxu0 0.0
      %2033 = vmatpush.msra.mxu0 0.0
      %2034 = vmatpush.msra.mxu0 0.0
      %2035 = vmatpush.msra.mxu0 0.0
      %2036 = vmatpush.msra.mxu0 0.0
      %2037 = vmatpush.msra.mxu0 0.0
      %2038 = vmatpush.msra.mxu0 0.0
      %2039 = vmatpush.msra.mxu0 0.0
      %2040 = vmatpush.msra.mxu0 0.0
      %2041 = vmatpush.msra.mxu0 0.0
      %2042 = vmatpush.msra.mxu0 0.0
      %2043 = vmatpush.msra.mxu0 0.0
      %2044 = vmatpush.msra.mxu0 0.0
      %2045 = vmatpush.msra.mxu0 0.0
      %2046 = vmatpush.msra.mxu0 0.0
      %2047 = vmatpush.msra.mxu0 %v1966
      %2048 = vmatmul.f32.gmra.mxu0 %v1970
      %v2049 = vpop.f32.mrf.mxu0
      %v2050 = vadd.f32 0.0, %v2049
      %2051 = vdwg.mxu0
      %v2052 = vadd.f32 %v1947, %v1990
      %v2053 = vadd.f32 %v1948, %v2010
      %v2054 = vadd.f32 %v1949, %v2030
      %v2055 = vadd.f32 %v1950, %v2050
      %2056 = vrot.lane.b32.xlu0 %v1322, 112
      %v2057 = vpop.permute.xlu0 %2056
      %2058 = vrot.lane.b32.xlu0 %v1323, 112
      %v2059 = vpop.permute.xlu0 %2058
      %2060 = vrot.lane.b32.xlu0 %v1324, 112
      %v2061 = vpop.permute.xlu0 %2060
      %2062 = vrot.lane.b32.xlu0 %v1325, 112
      %v2063 = vpop.permute.xlu0 %2062
      %v2064 = vsel %vm1096, %v2061, %v2063
      %v2065 = vsel %vm1096, %v2059, %v2061
      %v2066 = vsel %vm1096, %v2057, %v2059
      %v2067 = vsel %vm1096, %v2063, %v2057
      %v2068 = vmul.f32 %v2066, %v1104
      %v2069 = vmul.f32 %v2065, %v1105
      %v2070 = vmul.f32 %v2064, %v1106
      %v2071 = vmul.f32 %v2067, %v1107
      %s2072 = scalar_lea.vmem %s3, 128
      %v2073 = vld [vmem:[%s2072] sm:$0xff]
      %v2075 = vsel %vm311, %v2073, 0
      %2077 = vmatpush.msra.mxu0 0.0
      %2078 = vmatpush.msra.mxu0 0.0
      %2079 = vmatpush.msra.mxu0 0.0
      %2080 = vmatpush.msra.mxu0 0.0
      %2081 = vmatpush.msra.mxu0 0.0
      %2082 = vmatpush.msra.mxu0 0.0
      %2083 = vmatpush.msra.mxu0 0.0
      %2084 = vmatpush.msra.mxu0 0.0
      %2085 = vmatpush.msra.mxu0 0.0
      %2086 = vmatpush.msra.mxu0 0.0
      %2087 = vmatpush.msra.mxu0 0.0
      %2088 = vmatpush.msra.mxu0 0.0
      %2089 = vmatpush.msra.mxu0 0.0
      %2090 = vmatpush.msra.mxu0 0.0
      %2091 = vmatpush.msra.mxu0 0.0
      %2092 = vmatpush.msra.mxu0 %v2068
      %2093 = vmatmul.f32.gmra.mxu0 %v2075
      %v2094 = vpop.f32.mrf.mxu0
      %v2095 = vadd.f32 0.0, %v2094
      %2096 = vdwg.mxu0
      %2097 = vmatpush.msra.mxu0 0.0
      %2098 = vmatpush.msra.mxu0 0.0
      %2099 = vmatpush.msra.mxu0 0.0
      %2100 = vmatpush.msra.mxu0 0.0
      %2101 = vmatpush.msra.mxu0 0.0
      %2102 = vmatpush.msra.mxu0 0.0
      %2103 = vmatpush.msra.mxu0 0.0
      %2104 = vmatpush.msra.mxu0 0.0
      %2105 = vmatpush.msra.mxu0 0.0
      %2106 = vmatpush.msra.mxu0 0.0
      %2107 = vmatpush.msra.mxu0 0.0
      %2108 = vmatpush.msra.mxu0 0.0
      %2109 = vmatpush.msra.mxu0 0.0
      %2110 = vmatpush.msra.mxu0 0.0
      %2111 = vmatpush.msra.mxu0 0.0
      %2112 = vmatpush.msra.mxu0 %v2069
      %2113 = vmatmul.f32.gmra.mxu0 %v2075
      %v2114 = vpop.f32.mrf.mxu0
      %v2115 = vadd.f32 0.0, %v2114
      %2116 = vdwg.mxu0
      %2117 = vmatpush.msra.mxu0 0.0
      %2118 = vmatpush.msra.mxu0 0.0
      %2119 = vmatpush.msra.mxu0 0.0
      %2120 = vmatpush.msra.mxu0 0.0
      %2121 = vmatpush.msra.mxu0 0.0
      %2122 = vmatpush.msra.mxu0 0.0
      %2123 = vmatpush.msra.mxu0 0.0
      %2124 = vmatpush.msra.mxu0 0.0
      %2125 = vmatpush.msra.mxu0 0.0
      %2126 = vmatpush.msra.mxu0 0.0
      %2127 = vmatpush.msra.mxu0 0.0
      %2128 = vmatpush.msra.mxu0 0.0
      %2129 = vmatpush.msra.mxu0 0.0
      %2130 = vmatpush.msra.mxu0 0.0
      %2131 = vmatpush.msra.mxu0 0.0
      %2132 = vmatpush.msra.mxu0 %v2070
      %2133 = vmatmul.f32.gmra.mxu0 %v2075
      %v2134 = vpop.f32.mrf.mxu0
      %v2135 = vadd.f32 0.0, %v2134
      %2136 = vdwg.mxu0
      %2137 = vmatpush.msra.mxu0 0.0
      %2138 = vmatpush.msra.mxu0 0.0
      %2139 = vmatpush.msra.mxu0 0.0
      %2140 = vmatpush.msra.mxu0 0.0
      %2141 = vmatpush.msra.mxu0 0.0
      %2142 = vmatpush.msra.mxu0 0.0
      %2143 = vmatpush.msra.mxu0 0.0
      %2144 = vmatpush.msra.mxu0 0.0
      %2145 = vmatpush.msra.mxu0 0.0
      %2146 = vmatpush.msra.mxu0 0.0
      %2147 = vmatpush.msra.mxu0 0.0
      %2148 = vmatpush.msra.mxu0 0.0
      %2149 = vmatpush.msra.mxu0 0.0
      %2150 = vmatpush.msra.mxu0 0.0
      %2151 = vmatpush.msra.mxu0 0.0
      %2152 = vmatpush.msra.mxu0 %v2071
      %2153 = vmatmul.f32.gmra.mxu0 %v2075
      %v2154 = vpop.f32.mrf.mxu0
      %v2155 = vadd.f32 0.0, %v2154
      %2156 = vdwg.mxu0
      %v2157 = vadd.f32 %v2052, %v2095
      %v2158 = vadd.f32 %v2053, %v2115
      %v2159 = vadd.f32 %v2054, %v2135
      %v2160 = vadd.f32 %v2055, %v2155
      %2161 = vrot.lane.b32.xlu0 %v1322, 111
      %v2162 = vpop.permute.xlu0 %2161
      %2163 = vrot.lane.b32.xlu0 %v1323, 111
      %v2164 = vpop.permute.xlu0 %2163
      %2165 = vrot.lane.b32.xlu0 %v1324, 111
      %v2166 = vpop.permute.xlu0 %2165
      %2167 = vrot.lane.b32.xlu0 %v1325, 111
      %v2168 = vpop.permute.xlu0 %2167
      %v2169 = vsel %vm1213, %v2166, %v2168
      %v2170 = vsel %vm1213, %v2164, %v2166
      %v2171 = vsel %vm1213, %v2162, %v2164
      %v2172 = vsel %vm1213, %v2168, %v2162
      %v2173 = vmul.f32 %v2171, %v1221
      %v2174 = vmul.f32 %v2170, %v1222
      %v2175 = vmul.f32 %v2169, %v1223
      %v2176 = vmul.f32 %v2172, %v1224
      %s2177 = scalar_lea.vmem %s3, 136
      %v2178 = vld [vmem:[%s2177] sm:$0xff]
      %v2180 = vsel %vm311, %v2178, 0
      %2182 = vmatpush.msra.mxu0 0.0
      %2183 = vmatpush.msra.mxu0 0.0
      %2184 = vmatpush.msra.mxu0 0.0
      %2185 = vmatpush.msra.mxu0 0.0
      %2186 = vmatpush.msra.mxu0 0.0
      %2187 = vmatpush.msra.mxu0 0.0
      %2188 = vmatpush.msra.mxu0 0.0
      %2189 = vmatpush.msra.mxu0 0.0
      %2190 = vmatpush.msra.mxu0 0.0
      %2191 = vmatpush.msra.mxu0 0.0
      %2192 = vmatpush.msra.mxu0 0.0
      %2193 = vmatpush.msra.mxu0 0.0
      %2194 = vmatpush.msra.mxu0 0.0
      %2195 = vmatpush.msra.mxu0 0.0
      %2196 = vmatpush.msra.mxu0 0.0
      %2197 = vmatpush.msra.mxu0 %v2173
      %2198 = vmatmul.f32.gmra.mxu0 %v2180
      %v2199 = vpop.f32.mrf.mxu0
      %v2200 = vadd.f32 0.0, %v2199
      %2201 = vdwg.mxu0
      %2202 = vmatpush.msra.mxu0 0.0
      %2203 = vmatpush.msra.mxu0 0.0
      %2204 = vmatpush.msra.mxu0 0.0
      %2205 = vmatpush.msra.mxu0 0.0
      %2206 = vmatpush.msra.mxu0 0.0
      %2207 = vmatpush.msra.mxu0 0.0
      %2208 = vmatpush.msra.mxu0 0.0
      %2209 = vmatpush.msra.mxu0 0.0
      %2210 = vmatpush.msra.mxu0 0.0
      %2211 = vmatpush.msra.mxu0 0.0
      %2212 = vmatpush.msra.mxu0 0.0
      %2213 = vmatpush.msra.mxu0 0.0
      %2214 = vmatpush.msra.mxu0 0.0
      %2215 = vmatpush.msra.mxu0 0.0
      %2216 = vmatpush.msra.mxu0 0.0
      %2217 = vmatpush.msra.mxu0 %v2174
      %2218 = vmatmul.f32.gmra.mxu0 %v2180
      %v2219 = vpop.f32.mrf.mxu0
      %v2220 = vadd.f32 0.0, %v2219
      %2221 = vdwg.mxu0
      %2222 = vmatpush.msra.mxu0 0.0
      %2223 = vmatpush.msra.mxu0 0.0
      %2224 = vmatpush.msra.mxu0 0.0
      %2225 = vmatpush.msra.mxu0 0.0
      %2226 = vmatpush.msra.mxu0 0.0
      %2227 = vmatpush.msra.mxu0 0.0
      %2228 = vmatpush.msra.mxu0 0.0
      %2229 = vmatpush.msra.mxu0 0.0
      %2230 = vmatpush.msra.mxu0 0.0
      %2231 = vmatpush.msra.mxu0 0.0
      %2232 = vmatpush.msra.mxu0 0.0
      %2233 = vmatpush.msra.mxu0 0.0
      %2234 = vmatpush.msra.mxu0 0.0
      %2235 = vmatpush.msra.mxu0 0.0
      %2236 = vmatpush.msra.mxu0 0.0
      %2237 = vmatpush.msra.mxu0 %v2175
      %2238 = vmatmul.f32.gmra.mxu0 %v2180
      %v2239 = vpop.f32.mrf.mxu0
      %v2240 = vadd.f32 0.0, %v2239
      %2241 = vdwg.mxu0
      %2242 = vmatpush.msra.mxu0 0.0
      %2243 = vmatpush.msra.mxu0 0.0
      %2244 = vmatpush.msra.mxu0 0.0
      %2245 = vmatpush.msra.mxu0 0.0
      %2246 = vmatpush.msra.mxu0 0.0
      %2247 = vmatpush.msra.mxu0 0.0
      %2248 = vmatpush.msra.mxu0 0.0
      %2249 = vmatpush.msra.mxu0 0.0
      %2250 = vmatpush.msra.mxu0 0.0
      %2251 = vmatpush.msra.mxu0 0.0
      %2252 = vmatpush.msra.mxu0 0.0
      %2253 = vmatpush.msra.mxu0 0.0
      %2254 = vmatpush.msra.mxu0 0.0
      %2255 = vmatpush.msra.mxu0 0.0
      %2256 = vmatpush.msra.mxu0 0.0
      %2257 = vmatpush.msra.mxu0 %v2176
      %2258 = vmatmul.f32.gmra.mxu0 %v2180
      %v2259 = vpop.f32.mrf.mxu0
      %v2260 = vadd.f32 0.0, %v2259
      %2261 = vdwg.mxu0
      %v2262 = vadd.f32 %v2157, %v2200
      %v2263 = vadd.f32 %v2158, %v2220
      %v2264 = vadd.f32 %v2159, %v2240
      %v2265 = vadd.f32 %v2160, %v2260
      %v2266 = vmax.f32 %v2262, 0.0
      %v2267 = vmax.f32 %v2263, 0.0
      %v2268 = vmax.f32 %v2264, 0.0
      %v2269 = vmax.f32 %v2265, 0.0
      %s2270 = scalar_lea.vmem %s4, 16
      %v2271 = vld [vmem:[%s2270] sm:$0xff]
      %2273 = vset.pattern.permute.xlu0 0
      %2274 = vperm.xlu0 %2273, %v2271
      %v2275 = vpop.permute.xlu0 %2274
      %2277 = vrot.lane.b32.xlu0 %v2266, 17
      %v2278 = vpop.permute.xlu0 %2277
      %2279 = vrot.lane.b32.xlu0 %v2267, 17
      %v2280 = vpop.permute.xlu0 %2279
      %2281 = vrot.lane.b32.xlu0 %v2268, 17
      %v2282 = vpop.permute.xlu0 %2281
      %2283 = vrot.lane.b32.xlu0 %v2269, 17
      %v2284 = vpop.permute.xlu0 %2283
      %v2285 = vsel %vm291, %v2282, %v2284
      %v2286 = vsel %vm291, %v2280, %v2282
      %v2287 = vsel %vm291, %v2278, %v2280
      %v2288 = vsel %vm291, %v2284, %v2278
      %v2289 = vmul.f32 %v2288, %v298
      %v2290 = vmul.f32 %v2287, %v299
      %v2291 = vmul.f32 %v2286, %v300
      %v2292 = vmul.f32 %v2285, %v301
      %s2293 = scalar_lea.vmem %s3, 144
      %v2294 = vld [vmem:[%s2293] sm:$0xff]
      %v2296 = vsel %vm311, %v2294, 0
      %2298 = vmatpush.msra.mxu0 0.0
      %2299 = vmatpush.msra.mxu0 0.0
      %2300 = vmatpush.msra.mxu0 0.0
      %2301 = vmatpush.msra.mxu0 0.0
      %2302 = vmatpush.msra.mxu0 0.0
      %2303 = vmatpush.msra.mxu0 0.0
      %2304 = vmatpush.msra.mxu0 0.0
      %2305 = vmatpush.msra.mxu0 0.0
      %2306 = vmatpush.msra.mxu0 0.0
      %2307 = vmatpush.msra.mxu0 0.0
      %2308 = vmatpush.msra.mxu0 0.0
      %2309 = vmatpush.msra.mxu0 0.0
      %2310 = vmatpush.msra.mxu0 0.0
      %2311 = vmatpush.msra.mxu0 0.0
      %2312 = vmatpush.msra.mxu0 0.0
      %2313 = vmatpush.msra.mxu0 %v2289
      %2314 = vmatmul.f32.gmra.mxu0 %v2296
      %v2315 = vpop.f32.mrf.mxu0
      %v2316 = vadd.f32 0.0, %v2315
      %2317 = vdwg.mxu0
      %2318 = vmatpush.msra.mxu0 0.0
      %2319 = vmatpush.msra.mxu0 0.0
      %2320 = vmatpush.msra.mxu0 0.0
      %2321 = vmatpush.msra.mxu0 0.0
      %2322 = vmatpush.msra.mxu0 0.0
      %2323 = vmatpush.msra.mxu0 0.0
      %2324 = vmatpush.msra.mxu0 0.0
      %2325 = vmatpush.msra.mxu0 0.0
      %2326 = vmatpush.msra.mxu0 0.0
      %2327 = vmatpush.msra.mxu0 0.0
      %2328 = vmatpush.msra.mxu0 0.0
      %2329 = vmatpush.msra.mxu0 0.0
      %2330 = vmatpush.msra.mxu0 0.0
      %2331 = vmatpush.msra.mxu0 0.0
      %2332 = vmatpush.msra.mxu0 0.0
      %2333 = vmatpush.msra.mxu0 %v2290
      %2334 = vmatmul.f32.gmra.mxu0 %v2296
      %v2335 = vpop.f32.mrf.mxu0
      %v2336 = vadd.f32 0.0, %v2335
      %2337 = vdwg.mxu0
      %2338 = vmatpush.msra.mxu0 0.0
      %2339 = vmatpush.msra.mxu0 0.0
      %2340 = vmatpush.msra.mxu0 0.0
      %2341 = vmatpush.msra.mxu0 0.0
      %2342 = vmatpush.msra.mxu0 0.0
      %2343 = vmatpush.msra.mxu0 0.0
      %2344 = vmatpush.msra.mxu0 0.0
      %2345 = vmatpush.msra.mxu0 0.0
      %2346 = vmatpush.msra.mxu0 0.0
      %2347 = vmatpush.msra.mxu0 0.0
      %2348 = vmatpush.msra.mxu0 0.0
      %2349 = vmatpush.msra.mxu0 0.0
      %2350 = vmatpush.msra.mxu0 0.0
      %2351 = vmatpush.msra.mxu0 0.0
      %2352 = vmatpush.msra.mxu0 0.0
      %2353 = vmatpush.msra.mxu0 %v2291
      %2354 = vmatmul.f32.gmra.mxu0 %v2296
      %v2355 = vpop.f32.mrf.mxu0
      %v2356 = vadd.f32 0.0, %v2355
      %2357 = vdwg.mxu0
      %2358 = vmatpush.msra.mxu0 0.0
      %2359 = vmatpush.msra.mxu0 0.0
      %2360 = vmatpush.msra.mxu0 0.0
      %2361 = vmatpush.msra.mxu0 0.0
      %2362 = vmatpush.msra.mxu0 0.0
      %2363 = vmatpush.msra.mxu0 0.0
      %2364 = vmatpush.msra.mxu0 0.0
      %2365 = vmatpush.msra.mxu0 0.0
      %2366 = vmatpush.msra.mxu0 0.0
      %2367 = vmatpush.msra.mxu0 0.0
      %2368 = vmatpush.msra.mxu0 0.0
      %2369 = vmatpush.msra.mxu0 0.0
      %2370 = vmatpush.msra.mxu0 0.0
      %2371 = vmatpush.msra.mxu0 0.0
      %2372 = vmatpush.msra.mxu0 0.0
      %2373 = vmatpush.msra.mxu0 %v2292
      %2374 = vmatmul.f32.gmra.mxu0 %v2296
      %v2375 = vpop.f32.mrf.mxu0
      %v2376 = vadd.f32 0.0, %v2375
      %2377 = vdwg.mxu0
      %v2378 = vadd.f32 %v2275, %v2316
      %v2379 = vadd.f32 %v2275, %v2336
      %v2380 = vadd.f32 %v2275, %v2356
      %v2381 = vadd.f32 %v2275, %v2376
      %2382 = vrot.lane.b32.xlu0 %v2266, 16
      %v2383 = vpop.permute.xlu0 %2382
      %2384 = vrot.lane.b32.xlu0 %v2267, 16
      %v2385 = vpop.permute.xlu0 %2384
      %2386 = vrot.lane.b32.xlu0 %v2268, 16
      %v2387 = vpop.permute.xlu0 %2386
      %2388 = vrot.lane.b32.xlu0 %v2269, 16
      %v2389 = vpop.permute.xlu0 %2388
      %v2390 = vsel %vm407, %v2387, %v2389
      %v2391 = vsel %vm407, %v2385, %v2387
      %v2392 = vsel %vm407, %v2383, %v2385
      %v2393 = vsel %vm407, %v2389, %v2383
      %v2394 = vmul.f32 %v2393, %v415
      %v2395 = vmul.f32 %v2392, %v416
      %v2396 = vmul.f32 %v2391, %v417
      %v2397 = vmul.f32 %v2390, %v418
      %s2398 = scalar_lea.vmem %s3, 152
      %v2399 = vld [vmem:[%s2398] sm:$0xff]
      %v2401 = vsel %vm311, %v2399, 0
      %2403 = vmatpush.msra.mxu0 0.0
      %2404 = vmatpush.msra.mxu0 0.0
      %2405 = vmatpush.msra.mxu0 0.0
      %2406 = vmatpush.msra.mxu0 0.0
      %2407 = vmatpush.msra.mxu0 0.0
      %2408 = vmatpush.msra.mxu0 0.0
      %2409 = vmatpush.msra.mxu0 0.0
      %2410 = vmatpush.msra.mxu0 0.0
      %2411 = vmatpush.msra.mxu0 0.0
      %2412 = vmatpush.msra.mxu0 0.0
      %2413 = vmatpush.msra.mxu0 0.0
      %2414 = vmatpush.msra.mxu0 0.0
      %2415 = vmatpush.msra.mxu0 0.0
      %2416 = vmatpush.msra.mxu0 0.0
      %2417 = vmatpush.msra.mxu0 0.0
      %2418 = vmatpush.msra.mxu0 %v2394
      %2419 = vmatmul.f32.gmra.mxu0 %v2401
      %v2420 = vpop.f32.mrf.mxu0
      %v2421 = vadd.f32 0.0, %v2420
      %2422 = vdwg.mxu0
      %2423 = vmatpush.msra.mxu0 0.0
      %2424 = vmatpush.msra.mxu0 0.0
      %2425 = vmatpush.msra.mxu0 0.0
      %2426 = vmatpush.msra.mxu0 0.0
      %2427 = vmatpush.msra.mxu0 0.0
      %2428 = vmatpush.msra.mxu0 0.0
      %2429 = vmatpush.msra.mxu0 0.0
      %2430 = vmatpush.msra.mxu0 0.0
      %2431 = vmatpush.msra.mxu0 0.0
      %2432 = vmatpush.msra.mxu0 0.0
      %2433 = vmatpush.msra.mxu0 0.0
      %2434 = vmatpush.msra.mxu0 0.0
      %2435 = vmatpush.msra.mxu0 0.0
      %2436 = vmatpush.msra.mxu0 0.0
      %2437 = vmatpush.msra.mxu0 0.0
      %2438 = vmatpush.msra.mxu0 %v2395
      %2439 = vmatmul.f32.gmra.mxu0 %v2401
      %v2440 = vpop.f32.mrf.mxu0
      %v2441 = vadd.f32 0.0, %v2440
      %2442 = vdwg.mxu0
      %2443 = vmatpush.msra.mxu0 0.0
      %2444 = vmatpush.msra.mxu0 0.0
      %2445 = vmatpush.msra.mxu0 0.0
      %2446 = vmatpush.msra.mxu0 0.0
      %2447 = vmatpush.msra.mxu0 0.0
      %2448 = vmatpush.msra.mxu0 0.0
      %2449 = vmatpush.msra.mxu0 0.0
      %2450 = vmatpush.msra.mxu0 0.0
      %2451 = vmatpush.msra.mxu0 0.0
      %2452 = vmatpush.msra.mxu0 0.0
      %2453 = vmatpush.msra.mxu0 0.0
      %2454 = vmatpush.msra.mxu0 0.0
      %2455 = vmatpush.msra.mxu0 0.0
      %2456 = vmatpush.msra.mxu0 0.0
      %2457 = vmatpush.msra.mxu0 0.0
      %2458 = vmatpush.msra.mxu0 %v2396
      %2459 = vmatmul.f32.gmra.mxu0 %v2401
      %v2460 = vpop.f32.mrf.mxu0
      %v2461 = vadd.f32 0.0, %v2460
      %2462 = vdwg.mxu0
      %2463 = vmatpush.msra.mxu0 0.0
      %2464 = vmatpush.msra.mxu0 0.0
      %2465 = vmatpush.msra.mxu0 0.0
      %2466 = vmatpush.msra.mxu0 0.0
      %2467 = vmatpush.msra.mxu0 0.0
      %2468 = vmatpush.msra.mxu0 0.0
      %2469 = vmatpush.msra.mxu0 0.0
      %2470 = vmatpush.msra.mxu0 0.0
      %2471 = vmatpush.msra.mxu0 0.0
      %2472 = vmatpush.msra.mxu0 0.0
      %2473 = vmatpush.msra.mxu0 0.0
      %2474 = vmatpush.msra.mxu0 0.0
      %2475 = vmatpush.msra.mxu0 0.0
      %2476 = vmatpush.msra.mxu0 0.0
      %2477 = vmatpush.msra.mxu0 0.0
      %2478 = vmatpush.msra.mxu0 %v2397
      %2479 = vmatmul.f32.gmra.mxu0 %v2401
      %v2480 = vpop.f32.mrf.mxu0
      %v2481 = vadd.f32 0.0, %v2480
      %2482 = vdwg.mxu0
      %v2483 = vadd.f32 %v2378, %v2421
      %v2484 = vadd.f32 %v2379, %v2441
      %v2485 = vadd.f32 %v2380, %v2461
      %v2486 = vadd.f32 %v2381, %v2481
      %2487 = vrot.lane.b32.xlu0 %v2266, 15
      %v2488 = vpop.permute.xlu0 %2487
      %2489 = vrot.lane.b32.xlu0 %v2267, 15
      %v2490 = vpop.permute.xlu0 %2489
      %2491 = vrot.lane.b32.xlu0 %v2268, 15
      %v2492 = vpop.permute.xlu0 %2491
      %2493 = vrot.lane.b32.xlu0 %v2269, 15
      %v2494 = vpop.permute.xlu0 %2493
      %v2495 = vsel %vm524, %v2492, %v2494
      %v2496 = vsel %vm524, %v2490, %v2492
      %v2497 = vsel %vm524, %v2488, %v2490
      %v2498 = vsel %vm524, %v2494, %v2488
      %v2499 = vmul.f32 %v2498, %v532
      %v2500 = vmul.f32 %v2497, %v533
      %v2501 = vmul.f32 %v2496, %v534
      %v2502 = vmul.f32 %v2495, %v535
      %s2503 = scalar_lea.vmem %s3, 160
      %v2504 = vld [vmem:[%s2503] sm:$0xff]
      %v2506 = vsel %vm311, %v2504, 0
      %2508 = vmatpush.msra.mxu0 0.0
      %2509 = vmatpush.msra.mxu0 0.0
      %2510 = vmatpush.msra.mxu0 0.0
      %2511 = vmatpush.msra.mxu0 0.0
      %2512 = vmatpush.msra.mxu0 0.0
      %2513 = vmatpush.msra.mxu0 0.0
      %2514 = vmatpush.msra.mxu0 0.0
      %2515 = vmatpush.msra.mxu0 0.0
      %2516 = vmatpush.msra.mxu0 0.0
      %2517 = vmatpush.msra.mxu0 0.0
      %2518 = vmatpush.msra.mxu0 0.0
      %2519 = vmatpush.msra.mxu0 0.0
      %2520 = vmatpush.msra.mxu0 0.0
      %2521 = vmatpush.msra.mxu0 0.0
      %2522 = vmatpush.msra.mxu0 0.0
      %2523 = vmatpush.msra.mxu0 %v2499
      %2524 = vmatmul.f32.gmra.mxu0 %v2506
      %v2525 = vpop.f32.mrf.mxu0
      %v2526 = vadd.f32 0.0, %v2525
      %2527 = vdwg.mxu0
      %2528 = vmatpush.msra.mxu0 0.0
      %2529 = vmatpush.msra.mxu0 0.0
      %2530 = vmatpush.msra.mxu0 0.0
      %2531 = vmatpush.msra.mxu0 0.0
      %2532 = vmatpush.msra.mxu0 0.0
      %2533 = vmatpush.msra.mxu0 0.0
      %2534 = vmatpush.msra.mxu0 0.0
      %2535 = vmatpush.msra.mxu0 0.0
      %2536 = vmatpush.msra.mxu0 0.0
      %2537 = vmatpush.msra.mxu0 0.0
      %2538 = vmatpush.msra.mxu0 0.0
      %2539 = vmatpush.msra.mxu0 0.0
      %2540 = vmatpush.msra.mxu0 0.0
      %2541 = vmatpush.msra.mxu0 0.0
      %2542 = vmatpush.msra.mxu0 0.0
      %2543 = vmatpush.msra.mxu0 %v2500
      %2544 = vmatmul.f32.gmra.mxu0 %v2506
      %v2545 = vpop.f32.mrf.mxu0
      %v2546 = vadd.f32 0.0, %v2545
      %2547 = vdwg.mxu0
      %2548 = vmatpush.msra.mxu0 0.0
      %2549 = vmatpush.msra.mxu0 0.0
      %2550 = vmatpush.msra.mxu0 0.0
      %2551 = vmatpush.msra.mxu0 0.0
      %2552 = vmatpush.msra.mxu0 0.0
      %2553 = vmatpush.msra.mxu0 0.0
      %2554 = vmatpush.msra.mxu0 0.0
      %2555 = vmatpush.msra.mxu0 0.0
      %2556 = vmatpush.msra.mxu0 0.0
      %2557 = vmatpush.msra.mxu0 0.0
      %2558 = vmatpush.msra.mxu0 0.0
      %2559 = vmatpush.msra.mxu0 0.0
      %2560 = vmatpush.msra.mxu0 0.0
      %2561 = vmatpush.msra.mxu0 0.0
      %2562 = vmatpush.msra.mxu0 0.0
      %2563 = vmatpush.msra.mxu0 %v2501
      %2564 = vmatmul.f32.gmra.mxu0 %v2506
      %v2565 = vpop.f32.mrf.mxu0
      %v2566 = vadd.f32 0.0, %v2565
      %2567 = vdwg.mxu0
      %2568 = vmatpush.msra.mxu0 0.0
      %2569 = vmatpush.msra.mxu0 0.0
      %2570 = vmatpush.msra.mxu0 0.0
      %2571 = vmatpush.msra.mxu0 0.0
      %2572 = vmatpush.msra.mxu0 0.0
      %2573 = vmatpush.msra.mxu0 0.0
      %2574 = vmatpush.msra.mxu0 0.0
      %2575 = vmatpush.msra.mxu0 0.0
      %2576 = vmatpush.msra.mxu0 0.0
      %2577 = vmatpush.msra.mxu0 0.0
      %2578 = vmatpush.msra.mxu0 0.0
      %2579 = vmatpush.msra.mxu0 0.0
      %2580 = vmatpush.msra.mxu0 0.0
      %2581 = vmatpush.msra.mxu0 0.0
      %2582 = vmatpush.msra.mxu0 0.0
      %2583 = vmatpush.msra.mxu0 %v2502
      %2584 = vmatmul.f32.gmra.mxu0 %v2506
      %v2585 = vpop.f32.mrf.mxu0
      %v2586 = vadd.f32 0.0, %v2585
      %2587 = vdwg.mxu0
      %v2588 = vadd.f32 %v2483, %v2526
      %v2589 = vadd.f32 %v2484, %v2546
      %v2590 = vadd.f32 %v2485, %v2566
      %v2591 = vadd.f32 %v2486, %v2586
      %2592 = vrot.lane.b32.xlu0 %v2266, 1
      %v2593 = vpop.permute.xlu0 %2592
      %2594 = vrot.lane.b32.xlu0 %v2267, 1
      %v2595 = vpop.permute.xlu0 %2594
      %2596 = vrot.lane.b32.xlu0 %v2268, 1
      %v2597 = vpop.permute.xlu0 %2596
      %2598 = vrot.lane.b32.xlu0 %v2269, 1
      %v2599 = vpop.permute.xlu0 %2598
      %v2600 = vsel %vm641, %v2597, %v2599
      %v2601 = vsel %vm641, %v2595, %v2597
      %v2602 = vsel %vm641, %v2593, %v2595
      %v2603 = vsel %vm641, %v2599, %v2593
      %v2604 = vmul.f32 %v2603, %v649
      %v2605 = vmul.f32 %v2602, %v650
      %v2606 = vmul.f32 %v2601, %v651
      %v2607 = vmul.f32 %v2600, %v652
      %s2608 = scalar_lea.vmem %s3, 168
      %v2609 = vld [vmem:[%s2608] sm:$0xff]
      %v2611 = vsel %vm311, %v2609, 0
      %2613 = vmatpush.msra.mxu0 0.0
      %2614 = vmatpush.msra.mxu0 0.0
      %2615 = vmatpush.msra.mxu0 0.0
      %2616 = vmatpush.msra.mxu0 0.0
      %2617 = vmatpush.msra.mxu0 0.0
      %2618 = vmatpush.msra.mxu0 0.0
      %2619 = vmatpush.msra.mxu0 0.0
      %2620 = vmatpush.msra.mxu0 0.0
      %2621 = vmatpush.msra.mxu0 0.0
      %2622 = vmatpush.msra.mxu0 0.0
      %2623 = vmatpush.msra.mxu0 0.0
      %2624 = vmatpush.msra.mxu0 0.0
      %2625 = vmatpush.msra.mxu0 0.0
      %2626 = vmatpush.msra.mxu0 0.0
      %2627 = vmatpush.msra.mxu0 0.0
      %2628 = vmatpush.msra.mxu0 %v2604
      %2629 = vmatmul.f32.gmra.mxu0 %v2611
      %v2630 = vpop.f32.mrf.mxu0
      %v2631 = vadd.f32 0.0, %v2630
      %2632 = vdwg.mxu0
      %2633 = vmatpush.msra.mxu0 0.0
      %2634 = vmatpush.msra.mxu0 0.0
      %2635 = vmatpush.msra.mxu0 0.0
      %2636 = vmatpush.msra.mxu0 0.0
      %2637 = vmatpush.msra.mxu0 0.0
      %2638 = vmatpush.msra.mxu0 0.0
      %2639 = vmatpush.msra.mxu0 0.0
      %2640 = vmatpush.msra.mxu0 0.0
      %2641 = vmatpush.msra.mxu0 0.0
      %2642 = vmatpush.msra.mxu0 0.0
      %2643 = vmatpush.msra.mxu0 0.0
      %2644 = vmatpush.msra.mxu0 0.0
      %2645 = vmatpush.msra.mxu0 0.0
      %2646 = vmatpush.msra.mxu0 0.0
      %2647 = vmatpush.msra.mxu0 0.0
      %2648 = vmatpush.msra.mxu0 %v2605
      %2649 = vmatmul.f32.gmra.mxu0 %v2611
      %v2650 = vpop.f32.mrf.mxu0
      %v2651 = vadd.f32 0.0, %v2650
      %2652 = vdwg.mxu0
      %2653 = vmatpush.msra.mxu0 0.0
      %2654 = vmatpush.msra.mxu0 0.0
      %2655 = vmatpush.msra.mxu0 0.0
      %2656 = vmatpush.msra.mxu0 0.0
      %2657 = vmatpush.msra.mxu0 0.0
      %2658 = vmatpush.msra.mxu0 0.0
      %2659 = vmatpush.msra.mxu0 0.0
      %2660 = vmatpush.msra.mxu0 0.0
      %2661 = vmatpush.msra.mxu0 0.0
      %2662 = vmatpush.msra.mxu0 0.0
      %2663 = vmatpush.msra.mxu0 0.0
      %2664 = vmatpush.msra.mxu0 0.0
      %2665 = vmatpush.msra.mxu0 0.0
      %2666 = vmatpush.msra.mxu0 0.0
      %2667 = vmatpush.msra.mxu0 0.0
      %2668 = vmatpush.msra.mxu0 %v2606
      %2669 = vmatmul.f32.gmra.mxu0 %v2611
      %v2670 = vpop.f32.mrf.mxu0
      %v2671 = vadd.f32 0.0, %v2670
      %2672 = vdwg.mxu0
      %2673 = vmatpush.msra.mxu0 0.0
      %2674 = vmatpush.msra.mxu0 0.0
      %2675 = vmatpush.msra.mxu0 0.0
      %2676 = vmatpush.msra.mxu0 0.0
      %2677 = vmatpush.msra.mxu0 0.0
      %2678 = vmatpush.msra.mxu0 0.0
      %2679 = vmatpush.msra.mxu0 0.0
      %2680 = vmatpush.msra.mxu0 0.0
      %2681 = vmatpush.msra.mxu0 0.0
      %2682 = vmatpush.msra.mxu0 0.0
      %2683 = vmatpush.msra.mxu0 0.0
      %2684 = vmatpush.msra.mxu0 0.0
      %2685 = vmatpush.msra.mxu0 0.0
      %2686 = vmatpush.msra.mxu0 0.0
      %2687 = vmatpush.msra.mxu0 0.0
      %2688 = vmatpush.msra.mxu0 %v2607
      %2689 = vmatmul.f32.gmra.mxu0 %v2611
      %v2690 = vpop.f32.mrf.mxu0
      %v2691 = vadd.f32 0.0, %v2690
      %2692 = vdwg.mxu0
      %v2693 = vadd.f32 %v2588, %v2631
      %v2694 = vadd.f32 %v2589, %v2651
      %v2695 = vadd.f32 %v2590, %v2671
      %v2696 = vadd.f32 %v2591, %v2691
      %v2697 = vmul.f32 %v2266, %v753
      %v2698 = vmul.f32 %v2267, %v754
      %v2699 = vmul.f32 %v2268, %v755
      %v2700 = vmul.f32 %v2269, %v756
      %s2701 = scalar_lea.vmem %s3, 176
      %v2702 = vld [vmem:[%s2701] sm:$0xff]
      %v2704 = vsel %vm311, %v2702, 0
      %2706 = vmatpush.msra.mxu0 0.0
      %2707 = vmatpush.msra.mxu0 0.0
      %2708 = vmatpush.msra.mxu0 0.0
      %2709 = vmatpush.msra.mxu0 0.0
      %2710 = vmatpush.msra.mxu0 0.0
      %2711 = vmatpush.msra.mxu0 0.0
      %2712 = vmatpush.msra.mxu0 0.0
      %2713 = vmatpush.msra.mxu0 0.0
      %2714 = vmatpush.msra.mxu0 0.0
      %2715 = vmatpush.msra.mxu0 0.0
      %2716 = vmatpush.msra.mxu0 0.0
      %2717 = vmatpush.msra.mxu0 0.0
      %2718 = vmatpush.msra.mxu0 0.0
      %2719 = vmatpush.msra.mxu0 0.0
      %2720 = vmatpush.msra.mxu0 0.0
      %2721 = vmatpush.msra.mxu0 %v2697
      %2722 = vmatmul.f32.gmra.mxu0 %v2704
      %v2723 = vpop.f32.mrf.mxu0
      %v2724 = vadd.f32 0.0, %v2723
      %2725 = vdwg.mxu0
      %2726 = vmatpush.msra.mxu0 0.0
      %2727 = vmatpush.msra.mxu0 0.0
      %2728 = vmatpush.msra.mxu0 0.0
      %2729 = vmatpush.msra.mxu0 0.0
      %2730 = vmatpush.msra.mxu0 0.0
      %2731 = vmatpush.msra.mxu0 0.0
      %2732 = vmatpush.msra.mxu0 0.0
      %2733 = vmatpush.msra.mxu0 0.0
      %2734 = vmatpush.msra.mxu0 0.0
      %2735 = vmatpush.msra.mxu0 0.0
      %2736 = vmatpush.msra.mxu0 0.0
      %2737 = vmatpush.msra.mxu0 0.0
      %2738 = vmatpush.msra.mxu0 0.0
      %2739 = vmatpush.msra.mxu0 0.0
      %2740 = vmatpush.msra.mxu0 0.0
      %2741 = vmatpush.msra.mxu0 %v2698
      %2742 = vmatmul.f32.gmra.mxu0 %v2704
      %v2743 = vpop.f32.mrf.mxu0
      %v2744 = vadd.f32 0.0, %v2743
      %2745 = vdwg.mxu0
      %2746 = vmatpush.msra.mxu0 0.0
      %2747 = vmatpush.msra.mxu0 0.0
      %2748 = vmatpush.msra.mxu0 0.0
      %2749 = vmatpush.msra.mxu0 0.0
      %2750 = vmatpush.msra.mxu0 0.0
      %2751 = vmatpush.msra.mxu0 0.0
      %2752 = vmatpush.msra.mxu0 0.0
      %2753 = vmatpush.msra.mxu0 0.0
      %2754 = vmatpush.msra.mxu0 0.0
      %2755 = vmatpush.msra.mxu0 0.0
      %2756 = vmatpush.msra.mxu0 0.0
      %2757 = vmatpush.msra.mxu0 0.0
      %2758 = vmatpush.msra.mxu0 0.0
      %2759 = vmatpush.msra.mxu0 0.0
      %2760 = vmatpush.msra.mxu0 0.0
      %2761 = vmatpush.msra.mxu0 %v2699
      %2762 = vmatmul.f32.gmra.mxu0 %v2704
      %v2763 = vpop.f32.mrf.mxu0
      %v2764 = vadd.f32 0.0, %v2763
      %2765 = vdwg.mxu0
      %2766 = vmatpush.msra.mxu0 0.0
      %2767 = vmatpush.msra.mxu0 0.0
      %2768 = vmatpush.msra.mxu0 0.0
      %2769 = vmatpush.msra.mxu0 0.0
      %2770 = vmatpush.msra.mxu0 0.0
      %2771 = vmatpush.msra.mxu0 0.0
      %2772 = vmatpush.msra.mxu0 0.0
      %2773 = vmatpush.msra.mxu0 0.0
      %2774 = vmatpush.msra.mxu0 0.0
      %2775 = vmatpush.msra.mxu0 0.0
      %2776 = vmatpush.msra.mxu0 0.0
      %2777 = vmatpush.msra.mxu0 0.0
      %2778 = vmatpush.msra.mxu0 0.0
      %2779 = vmatpush.msra.mxu0 0.0
      %2780 = vmatpush.msra.mxu0 0.0
      %2781 = vmatpush.msra.mxu0 %v2700
      %2782 = vmatmul.f32.gmra.mxu0 %v2704
      %v2783 = vpop.f32.mrf.mxu0
      %v2784 = vadd.f32 0.0, %v2783
      %2785 = vdwg.mxu0
      %v2786 = vadd.f32 %v2693, %v2724
      %v2787 = vadd.f32 %v2694, %v2744
      %v2788 = vadd.f32 %v2695, %v2764
      %v2789 = vadd.f32 %v2696, %v2784
      %2790 = vrot.lane.b32.xlu0 %v2266, 127
      %v2791 = vpop.permute.xlu0 %2790
      %2792 = vrot.lane.b32.xlu0 %v2267, 127
      %v2793 = vpop.permute.xlu0 %2792
      %2794 = vrot.lane.b32.xlu0 %v2268, 127
      %v2795 = vpop.permute.xlu0 %2794
      %2796 = vrot.lane.b32.xlu0 %v2269, 127
      %v2797 = vpop.permute.xlu0 %2796
      %v2798 = vsel %vm862, %v2795, %v2797
      %v2799 = vsel %vm862, %v2793, %v2795
      %v2800 = vsel %vm862, %v2791, %v2793
      %v2801 = vsel %vm862, %v2797, %v2791
      %v2802 = vmul.f32 %v2800, %v870
      %v2803 = vmul.f32 %v2799, %v871
      %v2804 = vmul.f32 %v2798, %v872
      %v2805 = vmul.f32 %v2801, %v873
      %s2806 = scalar_lea.vmem %s3, 184
      %v2807 = vld [vmem:[%s2806] sm:$0xff]
      %v2809 = vsel %vm311, %v2807, 0
      %2811 = vmatpush.msra.mxu0 0.0
      %2812 = vmatpush.msra.mxu0 0.0
      %2813 = vmatpush.msra.mxu0 0.0
      %2814 = vmatpush.msra.mxu0 0.0
      %2815 = vmatpush.msra.mxu0 0.0
      %2816 = vmatpush.msra.mxu0 0.0
      %2817 = vmatpush.msra.mxu0 0.0
      %2818 = vmatpush.msra.mxu0 0.0
      %2819 = vmatpush.msra.mxu0 0.0
      %2820 = vmatpush.msra.mxu0 0.0
      %2821 = vmatpush.msra.mxu0 0.0
      %2822 = vmatpush.msra.mxu0 0.0
      %2823 = vmatpush.msra.mxu0 0.0
      %2824 = vmatpush.msra.mxu0 0.0
      %2825 = vmatpush.msra.mxu0 0.0
      %2826 = vmatpush.msra.mxu0 %v2802
      %2827 = vmatmul.f32.gmra.mxu0 %v2809
      %v2828 = vpop.f32.mrf.mxu0
      %v2829 = vadd.f32 0.0, %v2828
      %2830 = vdwg.mxu0
      %2831 = vmatpush.msra.mxu0 0.0
      %2832 = vmatpush.msra.mxu0 0.0
      %2833 = vmatpush.msra.mxu0 0.0
      %2834 = vmatpush.msra.mxu0 0.0
      %2835 = vmatpush.msra.mxu0 0.0
      %2836 = vmatpush.msra.mxu0 0.0
      %2837 = vmatpush.msra.mxu0 0.0
      %2838 = vmatpush.msra.mxu0 0.0
      %2839 = vmatpush.msra.mxu0 0.0
      %2840 = vmatpush.msra.mxu0 0.0
      %2841 = vmatpush.msra.mxu0 0.0
      %2842 = vmatpush.msra.mxu0 0.0
      %2843 = vmatpush.msra.mxu0 0.0
      %2844 = vmatpush.msra.mxu0 0.0
      %2845 = vmatpush.msra.mxu0 0.0
      %2846 = vmatpush.msra.mxu0 %v2803
      %2847 = vmatmul.f32.gmra.mxu0 %v2809
      %v2848 = vpop.f32.mrf.mxu0
      %v2849 = vadd.f32 0.0, %v2848
      %2850 = vdwg.mxu0
      %2851 = vmatpush.msra.mxu0 0.0
      %2852 = vmatpush.msra.mxu0 0.0
      %2853 = vmatpush.msra.mxu0 0.0
      %2854 = vmatpush.msra.mxu0 0.0
      %2855 = vmatpush.msra.mxu0 0.0
      %2856 = vmatpush.msra.mxu0 0.0
      %2857 = vmatpush.msra.mxu0 0.0
      %2858 = vmatpush.msra.mxu0 0.0
      %2859 = vmatpush.msra.mxu0 0.0
      %2860 = vmatpush.msra.mxu0 0.0
      %2861 = vmatpush.msra.mxu0 0.0
      %2862 = vmatpush.msra.mxu0 0.0
      %2863 = vmatpush.msra.mxu0 0.0
      %2864 = vmatpush.msra.mxu0 0.0
      %2865 = vmatpush.msra.mxu0 0.0
      %2866 = vmatpush.msra.mxu0 %v2804
      %2867 = vmatmul.f32.gmra.mxu0 %v2809
      %v2868 = vpop.f32.mrf.mxu0
      %v2869 = vadd.f32 0.0, %v2868
      %2870 = vdwg.mxu0
      %2871 = vmatpush.msra.mxu0 0.0
      %2872 = vmatpush.msra.mxu0 0.0
      %2873 = vmatpush.msra.mxu0 0.0
      %2874 = vmatpush.msra.mxu0 0.0
      %2875 = vmatpush.msra.mxu0 0.0
      %2876 = vmatpush.msra.mxu0 0.0
      %2877 = vmatpush.msra.mxu0 0.0
      %2878 = vmatpush.msra.mxu0 0.0
      %2879 = vmatpush.msra.mxu0 0.0
      %2880 = vmatpush.msra.mxu0 0.0
      %2881 = vmatpush.msra.mxu0 0.0
      %2882 = vmatpush.msra.mxu0 0.0
      %2883 = vmatpush.msra.mxu0 0.0
      %2884 = vmatpush.msra.mxu0 0.0
      %2885 = vmatpush.msra.mxu0 0.0
      %2886 = vmatpush.msra.mxu0 %v2805
      %2887 = vmatmul.f32.gmra.mxu0 %v2809
      %v2888 = vpop.f32.mrf.mxu0
      %v2889 = vadd.f32 0.0, %v2888
      %2890 = vdwg.mxu0
      %v2891 = vadd.f32 %v2786, %v2829
      %v2892 = vadd.f32 %v2787, %v2849
      %v2893 = vadd.f32 %v2788, %v2869
      %v2894 = vadd.f32 %v2789, %v2889
      %2895 = vrot.lane.b32.xlu0 %v2266, 113
      %v2896 = vpop.permute.xlu0 %2895
      %2897 = vrot.lane.b32.xlu0 %v2267, 113
      %v2898 = vpop.permute.xlu0 %2897
      %2899 = vrot.lane.b32.xlu0 %v2268, 113
      %v2900 = vpop.permute.xlu0 %2899
      %2901 = vrot.lane.b32.xlu0 %v2269, 113
      %v2902 = vpop.permute.xlu0 %2901
      %v2903 = vsel %vm979, %v2900, %v2902
      %v2904 = vsel %vm979, %v2898, %v2900
      %v2905 = vsel %vm979, %v2896, %v2898
      %v2906 = vsel %vm979, %v2902, %v2896
      %v2907 = vmul.f32 %v2905, %v987
      %v2908 = vmul.f32 %v2904, %v988
      %v2909 = vmul.f32 %v2903, %v989
      %v2910 = vmul.f32 %v2906, %v990
      %s2911 = scalar_lea.vmem %s3, 192
      %v2912 = vld [vmem:[%s2911] sm:$0xff]
      %v2914 = vsel %vm311, %v2912, 0
      %2916 = vmatpush.msra.mxu0 0.0
      %2917 = vmatpush.msra.mxu0 0.0
      %2918 = vmatpush.msra.mxu0 0.0
      %2919 = vmatpush.msra.mxu0 0.0
      %2920 = vmatpush.msra.mxu0 0.0
      %2921 = vmatpush.msra.mxu0 0.0
      %2922 = vmatpush.msra.mxu0 0.0
      %2923 = vmatpush.msra.mxu0 0.0
      %2924 = vmatpush.msra.mxu0 0.0
      %2925 = vmatpush.msra.mxu0 0.0
      %2926 = vmatpush.msra.mxu0 0.0
      %2927 = vmatpush.msra.mxu0 0.0
      %2928 = vmatpush.msra.mxu0 0.0
      %2929 = vmatpush.msra.mxu0 0.0
      %2930 = vmatpush.msra.mxu0 0.0
      %2931 = vmatpush.msra.mxu0 %v2907
      %2932 = vmatmul.f32.gmra.mxu0 %v2914
      %v2933 = vpop.f32.mrf.mxu0
      %v2934 = vadd.f32 0.0, %v2933
      %2935 = vdwg.mxu0
      %2936 = vmatpush.msra.mxu0 0.0
      %2937 = vmatpush.msra.mxu0 0.0
      %2938 = vmatpush.msra.mxu0 0.0
      %2939 = vmatpush.msra.mxu0 0.0
      %2940 = vmatpush.msra.mxu0 0.0
      %2941 = vmatpush.msra.mxu0 0.0
      %2942 = vmatpush.msra.mxu0 0.0
      %2943 = vmatpush.msra.mxu0 0.0
      %2944 = vmatpush.msra.mxu0 0.0
      %2945 = vmatpush.msra.mxu0 0.0
      %2946 = vmatpush.msra.mxu0 0.0
      %2947 = vmatpush.msra.mxu0 0.0
      %2948 = vmatpush.msra.mxu0 0.0
      %2949 = vmatpush.msra.mxu0 0.0
      %2950 = vmatpush.msra.mxu0 0.0
      %2951 = vmatpush.msra.mxu0 %v2908
      %2952 = vmatmul.f32.gmra.mxu0 %v2914
      %v2953 = vpop.f32.mrf.mxu0
      %v2954 = vadd.f32 0.0, %v2953
      %2955 = vdwg.mxu0
      %2956 = vmatpush.msra.mxu0 0.0
      %2957 = vmatpush.msra.mxu0 0.0
      %2958 = vmatpush.msra.mxu0 0.0
      %2959 = vmatpush.msra.mxu0 0.0
      %2960 = vmatpush.msra.mxu0 0.0
      %2961 = vmatpush.msra.mxu0 0.0
      %2962 = vmatpush.msra.mxu0 0.0
      %2963 = vmatpush.msra.mxu0 0.0
      %2964 = vmatpush.msra.mxu0 0.0
      %2965 = vmatpush.msra.mxu0 0.0
      %2966 = vmatpush.msra.mxu0 0.0
      %2967 = vmatpush.msra.mxu0 0.0
      %2968 = vmatpush.msra.mxu0 0.0
      %2969 = vmatpush.msra.mxu0 0.0
      %2970 = vmatpush.msra.mxu0 0.0
      %2971 = vmatpush.msra.mxu0 %v2909
      %2972 = vmatmul.f32.gmra.mxu0 %v2914
      %v2973 = vpop.f32.mrf.mxu0
      %v2974 = vadd.f32 0.0, %v2973
      %2975 = vdwg.mxu0
      %2976 = vmatpush.msra.mxu0 0.0
      %2977 = vmatpush.msra.mxu0 0.0
      %2978 = vmatpush.msra.mxu0 0.0
      %2979 = vmatpush.msra.mxu0 0.0
      %2980 = vmatpush.msra.mxu0 0.0
      %2981 = vmatpush.msra.mxu0 0.0
      %2982 = vmatpush.msra.mxu0 0.0
      %2983 = vmatpush.msra.mxu0 0.0
      %2984 = vmatpush.msra.mxu0 0.0
      %2985 = vmatpush.msra.mxu0 0.0
      %2986 = vmatpush.msra.mxu0 0.0
      %2987 = vmatpush.msra.mxu0 0.0
      %2988 = vmatpush.msra.mxu0 0.0
      %2989 = vmatpush.msra.mxu0 0.0
      %2990 = vmatpush.msra.mxu0 0.0
      %2991 = vmatpush.msra.mxu0 %v2910
      %2992 = vmatmul.f32.gmra.mxu0 %v2914
      %v2993 = vpop.f32.mrf.mxu0
      %v2994 = vadd.f32 0.0, %v2993
      %2995 = vdwg.mxu0
      %v2996 = vadd.f32 %v2891, %v2934
      %v2997 = vadd.f32 %v2892, %v2954
      %v2998 = vadd.f32 %v2893, %v2974
      %v2999 = vadd.f32 %v2894, %v2994
      %3000 = vrot.lane.b32.xlu0 %v2266, 112
      %v3001 = vpop.permute.xlu0 %3000
      %3002 = vrot.lane.b32.xlu0 %v2267, 112
      %v3003 = vpop.permute.xlu0 %3002
      %3004 = vrot.lane.b32.xlu0 %v2268, 112
      %v3005 = vpop.permute.xlu0 %3004
      %3006 = vrot.lane.b32.xlu0 %v2269, 112
      %v3007 = vpop.permute.xlu0 %3006
      %v3008 = vsel %vm1096, %v3005, %v3007
      %v3009 = vsel %vm1096, %v3003, %v3005
      %v3010 = vsel %vm1096, %v3001, %v3003
      %v3011 = vsel %vm1096, %v3007, %v3001
      %v3012 = vmul.f32 %v3010, %v1104
      %v3013 = vmul.f32 %v3009, %v1105
      %v3014 = vmul.f32 %v3008, %v1106
      %v3015 = vmul.f32 %v3011, %v1107
      %s3016 = scalar_lea.vmem %s3, 200
      %v3017 = vld [vmem:[%s3016] sm:$0xff]
      %v3019 = vsel %vm311, %v3017, 0
      %3021 = vmatpush.msra.mxu0 0.0
      %3022 = vmatpush.msra.mxu0 0.0
      %3023 = vmatpush.msra.mxu0 0.0
      %3024 = vmatpush.msra.mxu0 0.0
      %3025 = vmatpush.msra.mxu0 0.0
      %3026 = vmatpush.msra.mxu0 0.0
      %3027 = vmatpush.msra.mxu0 0.0
      %3028 = vmatpush.msra.mxu0 0.0
      %3029 = vmatpush.msra.mxu0 0.0
      %3030 = vmatpush.msra.mxu0 0.0
      %3031 = vmatpush.msra.mxu0 0.0
      %3032 = vmatpush.msra.mxu0 0.0
      %3033 = vmatpush.msra.mxu0 0.0
      %3034 = vmatpush.msra.mxu0 0.0
      %3035 = vmatpush.msra.mxu0 0.0
      %3036 = vmatpush.msra.mxu0 %v3012
      %3037 = vmatmul.f32.gmra.mxu0 %v3019
      %v3038 = vpop.f32.mrf.mxu0
      %v3039 = vadd.f32 0.0, %v3038
      %3040 = vdwg.mxu0
      %3041 = vmatpush.msra.mxu0 0.0
      %3042 = vmatpush.msra.mxu0 0.0
      %3043 = vmatpush.msra.mxu0 0.0
      %3044 = vmatpush.msra.mxu0 0.0
      %3045 = vmatpush.msra.mxu0 0.0
      %3046 = vmatpush.msra.mxu0 0.0
      %3047 = vmatpush.msra.mxu0 0.0
      %3048 = vmatpush.msra.mxu0 0.0
      %3049 = vmatpush.msra.mxu0 0.0
      %3050 = vmatpush.msra.mxu0 0.0
      %3051 = vmatpush.msra.mxu0 0.0
      %3052 = vmatpush.msra.mxu0 0.0
      %3053 = vmatpush.msra.mxu0 0.0
      %3054 = vmatpush.msra.mxu0 0.0
      %3055 = vmatpush.msra.mxu0 0.0
      %3056 = vmatpush.msra.mxu0 %v3013
      %3057 = vmatmul.f32.gmra.mxu0 %v3019
      %v3058 = vpop.f32.mrf.mxu0
      %v3059 = vadd.f32 0.0, %v3058
      %3060 = vdwg.mxu0
      %3061 = vmatpush.msra.mxu0 0.0
      %3062 = vmatpush.msra.mxu0 0.0
      %3063 = vmatpush.msra.mxu0 0.0
      %3064 = vmatpush.msra.mxu0 0.0
      %3065 = vmatpush.msra.mxu0 0.0
      %3066 = vmatpush.msra.mxu0 0.0
      %3067 = vmatpush.msra.mxu0 0.0
      %3068 = vmatpush.msra.mxu0 0.0
      %3069 = vmatpush.msra.mxu0 0.0
      %3070 = vmatpush.msra.mxu0 0.0
      %3071 = vmatpush.msra.mxu0 0.0
      %3072 = vmatpush.msra.mxu0 0.0
      %3073 = vmatpush.msra.mxu0 0.0
      %3074 = vmatpush.msra.mxu0 0.0
      %3075 = vmatpush.msra.mxu0 0.0
      %3076 = vmatpush.msra.mxu0 %v3014
      %3077 = vmatmul.f32.gmra.mxu0 %v3019
      %v3078 = vpop.f32.mrf.mxu0
      %v3079 = vadd.f32 0.0, %v3078
      %3080 = vdwg.mxu0
      %3081 = vmatpush.msra.mxu0 0.0
      %3082 = vmatpush.msra.mxu0 0.0
      %3083 = vmatpush.msra.mxu0 0.0
      %3084 = vmatpush.msra.mxu0 0.0
      %3085 = vmatpush.msra.mxu0 0.0
      %3086 = vmatpush.msra.mxu0 0.0
      %3087 = vmatpush.msra.mxu0 0.0
      %3088 = vmatpush.msra.mxu0 0.0
      %3089 = vmatpush.msra.mxu0 0.0
      %3090 = vmatpush.msra.mxu0 0.0
      %3091 = vmatpush.msra.mxu0 0.0
      %3092 = vmatpush.msra.mxu0 0.0
      %3093 = vmatpush.msra.mxu0 0.0
      %3094 = vmatpush.msra.mxu0 0.0
      %3095 = vmatpush.msra.mxu0 0.0
      %3096 = vmatpush.msra.mxu0 %v3015
      %3097 = vmatmul.f32.gmra.mxu0 %v3019
      %v3098 = vpop.f32.mrf.mxu0
      %v3099 = vadd.f32 0.0, %v3098
      %3100 = vdwg.mxu0
      %v3101 = vadd.f32 %v2996, %v3039
      %v3102 = vadd.f32 %v2997, %v3059
      %v3103 = vadd.f32 %v2998, %v3079
      %v3104 = vadd.f32 %v2999, %v3099
      %3105 = vrot.lane.b32.xlu0 %v2266, 111
      %v3106 = vpop.permute.xlu0 %3105
      %3107 = vrot.lane.b32.xlu0 %v2267, 111
      %v3108 = vpop.permute.xlu0 %3107
      %3109 = vrot.lane.b32.xlu0 %v2268, 111
      %v3110 = vpop.permute.xlu0 %3109
      %3111 = vrot.lane.b32.xlu0 %v2269, 111
      %v3112 = vpop.permute.xlu0 %3111
      %v3113 = vsel %vm1213, %v3110, %v3112
      %v3114 = vsel %vm1213, %v3108, %v3110
      %v3115 = vsel %vm1213, %v3106, %v3108
      %v3116 = vsel %vm1213, %v3112, %v3106
      %v3117 = vmul.f32 %v3115, %v1221
      %v3118 = vmul.f32 %v3114, %v1222
      %v3119 = vmul.f32 %v3113, %v1223
      %v3120 = vmul.f32 %v3116, %v1224
      %s3121 = scalar_lea.vmem %s3, 208
      %v3122 = vld [vmem:[%s3121] sm:$0xff]
      %v3124 = vsel %vm311, %v3122, 0
      %3126 = vmatpush.msra.mxu0 0.0
      %3127 = vmatpush.msra.mxu0 0.0
      %3128 = vmatpush.msra.mxu0 0.0
      %3129 = vmatpush.msra.mxu0 0.0
      %3130 = vmatpush.msra.mxu0 0.0
      %3131 = vmatpush.msra.mxu0 0.0
      %3132 = vmatpush.msra.mxu0 0.0
      %3133 = vmatpush.msra.mxu0 0.0
      %3134 = vmatpush.msra.mxu0 0.0
      %3135 = vmatpush.msra.mxu0 0.0
      %3136 = vmatpush.msra.mxu0 0.0
      %3137 = vmatpush.msra.mxu0 0.0
      %3138 = vmatpush.msra.mxu0 0.0
      %3139 = vmatpush.msra.mxu0 0.0
      %3140 = vmatpush.msra.mxu0 0.0
      %3141 = vmatpush.msra.mxu0 %v3117
      %3142 = vmatmul.f32.gmra.mxu0 %v3124
      %v3143 = vpop.f32.mrf.mxu0
      %v3144 = vadd.f32 0.0, %v3143
      %3145 = vdwg.mxu0
      %3146 = vmatpush.msra.mxu0 0.0
      %3147 = vmatpush.msra.mxu0 0.0
      %3148 = vmatpush.msra.mxu0 0.0
      %3149 = vmatpush.msra.mxu0 0.0
      %3150 = vmatpush.msra.mxu0 0.0
      %3151 = vmatpush.msra.mxu0 0.0
      %3152 = vmatpush.msra.mxu0 0.0
      %3153 = vmatpush.msra.mxu0 0.0
      %3154 = vmatpush.msra.mxu0 0.0
      %3155 = vmatpush.msra.mxu0 0.0
      %3156 = vmatpush.msra.mxu0 0.0
      %3157 = vmatpush.msra.mxu0 0.0
      %3158 = vmatpush.msra.mxu0 0.0
      %3159 = vmatpush.msra.mxu0 0.0
      %3160 = vmatpush.msra.mxu0 0.0
      %3161 = vmatpush.msra.mxu0 %v3118
      %3162 = vmatmul.f32.gmra.mxu0 %v3124
      %v3163 = vpop.f32.mrf.mxu0
      %v3164 = vadd.f32 0.0, %v3163
      %3165 = vdwg.mxu0
      %3166 = vmatpush.msra.mxu0 0.0
      %3167 = vmatpush.msra.mxu0 0.0
      %3168 = vmatpush.msra.mxu0 0.0
      %3169 = vmatpush.msra.mxu0 0.0
      %3170 = vmatpush.msra.mxu0 0.0
      %3171 = vmatpush.msra.mxu0 0.0
      %3172 = vmatpush.msra.mxu0 0.0
      %3173 = vmatpush.msra.mxu0 0.0
      %3174 = vmatpush.msra.mxu0 0.0
      %3175 = vmatpush.msra.mxu0 0.0
      %3176 = vmatpush.msra.mxu0 0.0
      %3177 = vmatpush.msra.mxu0 0.0
      %3178 = vmatpush.msra.mxu0 0.0
      %3179 = vmatpush.msra.mxu0 0.0
      %3180 = vmatpush.msra.mxu0 0.0
      %3181 = vmatpush.msra.mxu0 %v3119
      %3182 = vmatmul.f32.gmra.mxu0 %v3124
      %v3183 = vpop.f32.mrf.mxu0
      %v3184 = vadd.f32 0.0, %v3183
      %3185 = vdwg.mxu0
      %3186 = vmatpush.msra.mxu0 0.0
      %3187 = vmatpush.msra.mxu0 0.0
      %3188 = vmatpush.msra.mxu0 0.0
      %3189 = vmatpush.msra.mxu0 0.0
      %3190 = vmatpush.msra.mxu0 0.0
      %3191 = vmatpush.msra.mxu0 0.0
      %3192 = vmatpush.msra.mxu0 0.0
      %3193 = vmatpush.msra.mxu0 0.0
      %3194 = vmatpush.msra.mxu0 0.0
      %3195 = vmatpush.msra.mxu0 0.0
      %3196 = vmatpush.msra.mxu0 0.0
      %3197 = vmatpush.msra.mxu0 0.0
      %3198 = vmatpush.msra.mxu0 0.0
      %3199 = vmatpush.msra.mxu0 0.0
      %3200 = vmatpush.msra.mxu0 0.0
      %3201 = vmatpush.msra.mxu0 %v3120
      %3202 = vmatmul.f32.gmra.mxu0 %v3124
      %v3203 = vpop.f32.mrf.mxu0
      %v3204 = vadd.f32 0.0, %v3203
      %3205 = vdwg.mxu0
      %v3206 = vadd.f32 %v3101, %v3144
      %v3207 = vadd.f32 %v3102, %v3164
      %v3208 = vadd.f32 %v3103, %v3184
      %v3209 = vadd.f32 %v3104, %v3204
      %v3210 = vmax.f32 %v3206, 0.0
      %v3211 = vmax.f32 %v3207, 0.0
      %v3212 = vmax.f32 %v3208, 0.0
      %v3213 = vmax.f32 %v3209, 0.0
      %s3214 = scalar_lea.vmem %s4, 24
      %v3215 = vld [vmem:[%s3214] sm:$0xff]
      %3217 = vset.pattern.permute.xlu0 0
      %3218 = vperm.xlu0 %3217, %v3215
      %v3219 = vpop.permute.xlu0 %3218
      %3221 = vrot.lane.b32.xlu0 %v3210, 17
      %v3222 = vpop.permute.xlu0 %3221
      %3223 = vrot.lane.b32.xlu0 %v3211, 17
      %v3224 = vpop.permute.xlu0 %3223
      %3225 = vrot.lane.b32.xlu0 %v3212, 17
      %v3226 = vpop.permute.xlu0 %3225
      %3227 = vrot.lane.b32.xlu0 %v3213, 17
      %v3228 = vpop.permute.xlu0 %3227
      %v3229 = vsel %vm291, %v3226, %v3228
      %v3230 = vsel %vm291, %v3224, %v3226
      %v3231 = vsel %vm291, %v3222, %v3224
      %v3232 = vsel %vm291, %v3228, %v3222
      %v3233 = vmul.f32 %v3232, %v298
      %v3234 = vmul.f32 %v3231, %v299
      %v3235 = vmul.f32 %v3230, %v300
      %v3236 = vmul.f32 %v3229, %v301
      %s3237 = scalar_lea.vmem %s3, 216
      %v3238 = vld [vmem:[%s3237] sm:$0xff]
      %v3240 = vsel %vm311, %v3238, 0
      %3242 = vmatpush.msra.mxu0 0.0
      %3243 = vmatpush.msra.mxu0 0.0
      %3244 = vmatpush.msra.mxu0 0.0
      %3245 = vmatpush.msra.mxu0 0.0
      %3246 = vmatpush.msra.mxu0 0.0
      %3247 = vmatpush.msra.mxu0 0.0
      %3248 = vmatpush.msra.mxu0 0.0
      %3249 = vmatpush.msra.mxu0 0.0
      %3250 = vmatpush.msra.mxu0 0.0
      %3251 = vmatpush.msra.mxu0 0.0
      %3252 = vmatpush.msra.mxu0 0.0
      %3253 = vmatpush.msra.mxu0 0.0
      %3254 = vmatpush.msra.mxu0 0.0
      %3255 = vmatpush.msra.mxu0 0.0
      %3256 = vmatpush.msra.mxu0 0.0
      %3257 = vmatpush.msra.mxu0 %v3233
      %3258 = vmatmul.f32.gmra.mxu0 %v3240
      %v3259 = vpop.f32.mrf.mxu0
      %v3260 = vadd.f32 0.0, %v3259
      %3261 = vdwg.mxu0
      %3262 = vmatpush.msra.mxu0 0.0
      %3263 = vmatpush.msra.mxu0 0.0
      %3264 = vmatpush.msra.mxu0 0.0
      %3265 = vmatpush.msra.mxu0 0.0
      %3266 = vmatpush.msra.mxu0 0.0
      %3267 = vmatpush.msra.mxu0 0.0
      %3268 = vmatpush.msra.mxu0 0.0
      %3269 = vmatpush.msra.mxu0 0.0
      %3270 = vmatpush.msra.mxu0 0.0
      %3271 = vmatpush.msra.mxu0 0.0
      %3272 = vmatpush.msra.mxu0 0.0
      %3273 = vmatpush.msra.mxu0 0.0
      %3274 = vmatpush.msra.mxu0 0.0
      %3275 = vmatpush.msra.mxu0 0.0
      %3276 = vmatpush.msra.mxu0 0.0
      %3277 = vmatpush.msra.mxu0 %v3234
      %3278 = vmatmul.f32.gmra.mxu0 %v3240
      %v3279 = vpop.f32.mrf.mxu0
      %v3280 = vadd.f32 0.0, %v3279
      %3281 = vdwg.mxu0
      %3282 = vmatpush.msra.mxu0 0.0
      %3283 = vmatpush.msra.mxu0 0.0
      %3284 = vmatpush.msra.mxu0 0.0
      %3285 = vmatpush.msra.mxu0 0.0
      %3286 = vmatpush.msra.mxu0 0.0
      %3287 = vmatpush.msra.mxu0 0.0
      %3288 = vmatpush.msra.mxu0 0.0
      %3289 = vmatpush.msra.mxu0 0.0
      %3290 = vmatpush.msra.mxu0 0.0
      %3291 = vmatpush.msra.mxu0 0.0
      %3292 = vmatpush.msra.mxu0 0.0
      %3293 = vmatpush.msra.mxu0 0.0
      %3294 = vmatpush.msra.mxu0 0.0
      %3295 = vmatpush.msra.mxu0 0.0
      %3296 = vmatpush.msra.mxu0 0.0
      %3297 = vmatpush.msra.mxu0 %v3235
      %3298 = vmatmul.f32.gmra.mxu0 %v3240
      %v3299 = vpop.f32.mrf.mxu0
      %v3300 = vadd.f32 0.0, %v3299
      %3301 = vdwg.mxu0
      %3302 = vmatpush.msra.mxu0 0.0
      %3303 = vmatpush.msra.mxu0 0.0
      %3304 = vmatpush.msra.mxu0 0.0
      %3305 = vmatpush.msra.mxu0 0.0
      %3306 = vmatpush.msra.mxu0 0.0
      %3307 = vmatpush.msra.mxu0 0.0
      %3308 = vmatpush.msra.mxu0 0.0
      %3309 = vmatpush.msra.mxu0 0.0
      %3310 = vmatpush.msra.mxu0 0.0
      %3311 = vmatpush.msra.mxu0 0.0
      %3312 = vmatpush.msra.mxu0 0.0
      %3313 = vmatpush.msra.mxu0 0.0
      %3314 = vmatpush.msra.mxu0 0.0
      %3315 = vmatpush.msra.mxu0 0.0
      %3316 = vmatpush.msra.mxu0 0.0
      %3317 = vmatpush.msra.mxu0 %v3236
      %3318 = vmatmul.f32.gmra.mxu0 %v3240
      %v3319 = vpop.f32.mrf.mxu0
      %v3320 = vadd.f32 0.0, %v3319
      %3321 = vdwg.mxu0
      %v3322 = vadd.f32 %v3219, %v3260
      %v3323 = vadd.f32 %v3219, %v3280
      %v3324 = vadd.f32 %v3219, %v3300
      %v3325 = vadd.f32 %v3219, %v3320
      %3326 = vrot.lane.b32.xlu0 %v3210, 16
      %v3327 = vpop.permute.xlu0 %3326
      %3328 = vrot.lane.b32.xlu0 %v3211, 16
      %v3329 = vpop.permute.xlu0 %3328
      %3330 = vrot.lane.b32.xlu0 %v3212, 16
      %v3331 = vpop.permute.xlu0 %3330
      %3332 = vrot.lane.b32.xlu0 %v3213, 16
      %v3333 = vpop.permute.xlu0 %3332
      %v3334 = vsel %vm407, %v3331, %v3333
      %v3335 = vsel %vm407, %v3329, %v3331
      %v3336 = vsel %vm407, %v3327, %v3329
      %v3337 = vsel %vm407, %v3333, %v3327
      %v3338 = vmul.f32 %v3337, %v415
      %v3339 = vmul.f32 %v3336, %v416
      %v3340 = vmul.f32 %v3335, %v417
      %v3341 = vmul.f32 %v3334, %v418
      %s3342 = scalar_lea.vmem %s3, 224
      %v3343 = vld [vmem:[%s3342] sm:$0xff]
      %v3345 = vsel %vm311, %v3343, 0
      %3347 = vmatpush.msra.mxu0 0.0
      %3348 = vmatpush.msra.mxu0 0.0
      %3349 = vmatpush.msra.mxu0 0.0
      %3350 = vmatpush.msra.mxu0 0.0
      %3351 = vmatpush.msra.mxu0 0.0
      %3352 = vmatpush.msra.mxu0 0.0
      %3353 = vmatpush.msra.mxu0 0.0
      %3354 = vmatpush.msra.mxu0 0.0
      %3355 = vmatpush.msra.mxu0 0.0
      %3356 = vmatpush.msra.mxu0 0.0
      %3357 = vmatpush.msra.mxu0 0.0
      %3358 = vmatpush.msra.mxu0 0.0
      %3359 = vmatpush.msra.mxu0 0.0
      %3360 = vmatpush.msra.mxu0 0.0
      %3361 = vmatpush.msra.mxu0 0.0
      %3362 = vmatpush.msra.mxu0 %v3338
      %3363 = vmatmul.f32.gmra.mxu0 %v3345
      %v3364 = vpop.f32.mrf.mxu0
      %v3365 = vadd.f32 0.0, %v3364
      %3366 = vdwg.mxu0
      %3367 = vmatpush.msra.mxu0 0.0
      %3368 = vmatpush.msra.mxu0 0.0
      %3369 = vmatpush.msra.mxu0 0.0
      %3370 = vmatpush.msra.mxu0 0.0
      %3371 = vmatpush.msra.mxu0 0.0
      %3372 = vmatpush.msra.mxu0 0.0
      %3373 = vmatpush.msra.mxu0 0.0
      %3374 = vmatpush.msra.mxu0 0.0
      %3375 = vmatpush.msra.mxu0 0.0
      %3376 = vmatpush.msra.mxu0 0.0
      %3377 = vmatpush.msra.mxu0 0.0
      %3378 = vmatpush.msra.mxu0 0.0
      %3379 = vmatpush.msra.mxu0 0.0
      %3380 = vmatpush.msra.mxu0 0.0
      %3381 = vmatpush.msra.mxu0 0.0
      %3382 = vmatpush.msra.mxu0 %v3339
      %3383 = vmatmul.f32.gmra.mxu0 %v3345
      %v3384 = vpop.f32.mrf.mxu0
      %v3385 = vadd.f32 0.0, %v3384
      %3386 = vdwg.mxu0
      %3387 = vmatpush.msra.mxu0 0.0
      %3388 = vmatpush.msra.mxu0 0.0
      %3389 = vmatpush.msra.mxu0 0.0
      %3390 = vmatpush.msra.mxu0 0.0
      %3391 = vmatpush.msra.mxu0 0.0
      %3392 = vmatpush.msra.mxu0 0.0
      %3393 = vmatpush.msra.mxu0 0.0
      %3394 = vmatpush.msra.mxu0 0.0
      %3395 = vmatpush.msra.mxu0 0.0
      %3396 = vmatpush.msra.mxu0 0.0
      %3397 = vmatpush.msra.mxu0 0.0
      %3398 = vmatpush.msra.mxu0 0.0
      %3399 = vmatpush.msra.mxu0 0.0
      %3400 = vmatpush.msra.mxu0 0.0
      %3401 = vmatpush.msra.mxu0 0.0
      %3402 = vmatpush.msra.mxu0 %v3340
      %3403 = vmatmul.f32.gmra.mxu0 %v3345
      %v3404 = vpop.f32.mrf.mxu0
      %v3405 = vadd.f32 0.0, %v3404
      %3406 = vdwg.mxu0
      %3407 = vmatpush.msra.mxu0 0.0
      %3408 = vmatpush.msra.mxu0 0.0
      %3409 = vmatpush.msra.mxu0 0.0
      %3410 = vmatpush.msra.mxu0 0.0
      %3411 = vmatpush.msra.mxu0 0.0
      %3412 = vmatpush.msra.mxu0 0.0
      %3413 = vmatpush.msra.mxu0 0.0
      %3414 = vmatpush.msra.mxu0 0.0
      %3415 = vmatpush.msra.mxu0 0.0
      %3416 = vmatpush.msra.mxu0 0.0
      %3417 = vmatpush.msra.mxu0 0.0
      %3418 = vmatpush.msra.mxu0 0.0
      %3419 = vmatpush.msra.mxu0 0.0
      %3420 = vmatpush.msra.mxu0 0.0
      %3421 = vmatpush.msra.mxu0 0.0
      %3422 = vmatpush.msra.mxu0 %v3341
      %3423 = vmatmul.f32.gmra.mxu0 %v3345
      %v3424 = vpop.f32.mrf.mxu0
      %v3425 = vadd.f32 0.0, %v3424
      %3426 = vdwg.mxu0
      %v3427 = vadd.f32 %v3322, %v3365
      %v3428 = vadd.f32 %v3323, %v3385
      %v3429 = vadd.f32 %v3324, %v3405
      %v3430 = vadd.f32 %v3325, %v3425
      %3431 = vrot.lane.b32.xlu0 %v3210, 15
      %v3432 = vpop.permute.xlu0 %3431
      %3433 = vrot.lane.b32.xlu0 %v3211, 15
      %v3434 = vpop.permute.xlu0 %3433
      %3435 = vrot.lane.b32.xlu0 %v3212, 15
      %v3436 = vpop.permute.xlu0 %3435
      %3437 = vrot.lane.b32.xlu0 %v3213, 15
      %v3438 = vpop.permute.xlu0 %3437
      %v3439 = vsel %vm524, %v3436, %v3438
      %v3440 = vsel %vm524, %v3434, %v3436
      %v3441 = vsel %vm524, %v3432, %v3434
      %v3442 = vsel %vm524, %v3438, %v3432
      %v3443 = vmul.f32 %v3442, %v532
      %v3444 = vmul.f32 %v3441, %v533
      %v3445 = vmul.f32 %v3440, %v534
      %v3446 = vmul.f32 %v3439, %v535
      %s3447 = scalar_lea.vmem %s3, 232
      %v3448 = vld [vmem:[%s3447] sm:$0xff]
      %v3450 = vsel %vm311, %v3448, 0
      %3452 = vmatpush.msra.mxu0 0.0
      %3453 = vmatpush.msra.mxu0 0.0
      %3454 = vmatpush.msra.mxu0 0.0
      %3455 = vmatpush.msra.mxu0 0.0
      %3456 = vmatpush.msra.mxu0 0.0
      %3457 = vmatpush.msra.mxu0 0.0
      %3458 = vmatpush.msra.mxu0 0.0
      %3459 = vmatpush.msra.mxu0 0.0
      %3460 = vmatpush.msra.mxu0 0.0
      %3461 = vmatpush.msra.mxu0 0.0
      %3462 = vmatpush.msra.mxu0 0.0
      %3463 = vmatpush.msra.mxu0 0.0
      %3464 = vmatpush.msra.mxu0 0.0
      %3465 = vmatpush.msra.mxu0 0.0
      %3466 = vmatpush.msra.mxu0 0.0
      %3467 = vmatpush.msra.mxu0 %v3443
      %3468 = vmatmul.f32.gmra.mxu0 %v3450
      %v3469 = vpop.f32.mrf.mxu0
      %v3470 = vadd.f32 0.0, %v3469
      %3471 = vdwg.mxu0
      %3472 = vmatpush.msra.mxu0 0.0
      %3473 = vmatpush.msra.mxu0 0.0
      %3474 = vmatpush.msra.mxu0 0.0
      %3475 = vmatpush.msra.mxu0 0.0
      %3476 = vmatpush.msra.mxu0 0.0
      %3477 = vmatpush.msra.mxu0 0.0
      %3478 = vmatpush.msra.mxu0 0.0
      %3479 = vmatpush.msra.mxu0 0.0
      %3480 = vmatpush.msra.mxu0 0.0
      %3481 = vmatpush.msra.mxu0 0.0
      %3482 = vmatpush.msra.mxu0 0.0
      %3483 = vmatpush.msra.mxu0 0.0
      %3484 = vmatpush.msra.mxu0 0.0
      %3485 = vmatpush.msra.mxu0 0.0
      %3486 = vmatpush.msra.mxu0 0.0
      %3487 = vmatpush.msra.mxu0 %v3444
      %3488 = vmatmul.f32.gmra.mxu0 %v3450
      %v3489 = vpop.f32.mrf.mxu0
      %v3490 = vadd.f32 0.0, %v3489
      %3491 = vdwg.mxu0
      %3492 = vmatpush.msra.mxu0 0.0
      %3493 = vmatpush.msra.mxu0 0.0
      %3494 = vmatpush.msra.mxu0 0.0
      %3495 = vmatpush.msra.mxu0 0.0
      %3496 = vmatpush.msra.mxu0 0.0
      %3497 = vmatpush.msra.mxu0 0.0
      %3498 = vmatpush.msra.mxu0 0.0
      %3499 = vmatpush.msra.mxu0 0.0
      %3500 = vmatpush.msra.mxu0 0.0
      %3501 = vmatpush.msra.mxu0 0.0
      %3502 = vmatpush.msra.mxu0 0.0
      %3503 = vmatpush.msra.mxu0 0.0
      %3504 = vmatpush.msra.mxu0 0.0
      %3505 = vmatpush.msra.mxu0 0.0
      %3506 = vmatpush.msra.mxu0 0.0
      %3507 = vmatpush.msra.mxu0 %v3445
      %3508 = vmatmul.f32.gmra.mxu0 %v3450
      %v3509 = vpop.f32.mrf.mxu0
      %v3510 = vadd.f32 0.0, %v3509
      %3511 = vdwg.mxu0
      %3512 = vmatpush.msra.mxu0 0.0
      %3513 = vmatpush.msra.mxu0 0.0
      %3514 = vmatpush.msra.mxu0 0.0
      %3515 = vmatpush.msra.mxu0 0.0
      %3516 = vmatpush.msra.mxu0 0.0
      %3517 = vmatpush.msra.mxu0 0.0
      %3518 = vmatpush.msra.mxu0 0.0
      %3519 = vmatpush.msra.mxu0 0.0
      %3520 = vmatpush.msra.mxu0 0.0
      %3521 = vmatpush.msra.mxu0 0.0
      %3522 = vmatpush.msra.mxu0 0.0
      %3523 = vmatpush.msra.mxu0 0.0
      %3524 = vmatpush.msra.mxu0 0.0
      %3525 = vmatpush.msra.mxu0 0.0
      %3526 = vmatpush.msra.mxu0 0.0
      %3527 = vmatpush.msra.mxu0 %v3446
      %3528 = vmatmul.f32.gmra.mxu0 %v3450
      %v3529 = vpop.f32.mrf.mxu0
      %v3530 = vadd.f32 0.0, %v3529
      %3531 = vdwg.mxu0
      %v3532 = vadd.f32 %v3427, %v3470
      %v3533 = vadd.f32 %v3428, %v3490
      %v3534 = vadd.f32 %v3429, %v3510
      %v3535 = vadd.f32 %v3430, %v3530
      %3536 = vrot.lane.b32.xlu0 %v3210, 1
      %v3537 = vpop.permute.xlu0 %3536
      %3538 = vrot.lane.b32.xlu0 %v3211, 1
      %v3539 = vpop.permute.xlu0 %3538
      %3540 = vrot.lane.b32.xlu0 %v3212, 1
      %v3541 = vpop.permute.xlu0 %3540
      %3542 = vrot.lane.b32.xlu0 %v3213, 1
      %v3543 = vpop.permute.xlu0 %3542
      %v3544 = vsel %vm641, %v3541, %v3543
      %v3545 = vsel %vm641, %v3539, %v3541
      %v3546 = vsel %vm641, %v3537, %v3539
      %v3547 = vsel %vm641, %v3543, %v3537
      %v3548 = vmul.f32 %v3547, %v649
      %v3549 = vmul.f32 %v3546, %v650
      %v3550 = vmul.f32 %v3545, %v651
      %v3551 = vmul.f32 %v3544, %v652
      %s3552 = scalar_lea.vmem %s3, 240
      %v3553 = vld [vmem:[%s3552] sm:$0xff]
      %v3555 = vsel %vm311, %v3553, 0
      %3557 = vmatpush.msra.mxu0 0.0
      %3558 = vmatpush.msra.mxu0 0.0
      %3559 = vmatpush.msra.mxu0 0.0
      %3560 = vmatpush.msra.mxu0 0.0
      %3561 = vmatpush.msra.mxu0 0.0
      %3562 = vmatpush.msra.mxu0 0.0
      %3563 = vmatpush.msra.mxu0 0.0
      %3564 = vmatpush.msra.mxu0 0.0
      %3565 = vmatpush.msra.mxu0 0.0
      %3566 = vmatpush.msra.mxu0 0.0
      %3567 = vmatpush.msra.mxu0 0.0
      %3568 = vmatpush.msra.mxu0 0.0
      %3569 = vmatpush.msra.mxu0 0.0
      %3570 = vmatpush.msra.mxu0 0.0
      %3571 = vmatpush.msra.mxu0 0.0
      %3572 = vmatpush.msra.mxu0 %v3548
      %3573 = vmatmul.f32.gmra.mxu0 %v3555
      %v3574 = vpop.f32.mrf.mxu0
      %v3575 = vadd.f32 0.0, %v3574
      %3576 = vdwg.mxu0
      %3577 = vmatpush.msra.mxu0 0.0
      %3578 = vmatpush.msra.mxu0 0.0
      %3579 = vmatpush.msra.mxu0 0.0
      %3580 = vmatpush.msra.mxu0 0.0
      %3581 = vmatpush.msra.mxu0 0.0
      %3582 = vmatpush.msra.mxu0 0.0
      %3583 = vmatpush.msra.mxu0 0.0
      %3584 = vmatpush.msra.mxu0 0.0
      %3585 = vmatpush.msra.mxu0 0.0
      %3586 = vmatpush.msra.mxu0 0.0
      %3587 = vmatpush.msra.mxu0 0.0
      %3588 = vmatpush.msra.mxu0 0.0
      %3589 = vmatpush.msra.mxu0 0.0
      %3590 = vmatpush.msra.mxu0 0.0
      %3591 = vmatpush.msra.mxu0 0.0
      %3592 = vmatpush.msra.mxu0 %v3549
      %3593 = vmatmul.f32.gmra.mxu0 %v3555
      %v3594 = vpop.f32.mrf.mxu0
      %v3595 = vadd.f32 0.0, %v3594
      %3596 = vdwg.mxu0
      %3597 = vmatpush.msra.mxu0 0.0
      %3598 = vmatpush.msra.mxu0 0.0
      %3599 = vmatpush.msra.mxu0 0.0
      %3600 = vmatpush.msra.mxu0 0.0
      %3601 = vmatpush.msra.mxu0 0.0
      %3602 = vmatpush.msra.mxu0 0.0
      %3603 = vmatpush.msra.mxu0 0.0
      %3604 = vmatpush.msra.mxu0 0.0
      %3605 = vmatpush.msra.mxu0 0.0
      %3606 = vmatpush.msra.mxu0 0.0
      %3607 = vmatpush.msra.mxu0 0.0
      %3608 = vmatpush.msra.mxu0 0.0
      %3609 = vmatpush.msra.mxu0 0.0
      %3610 = vmatpush.msra.mxu0 0.0
      %3611 = vmatpush.msra.mxu0 0.0
      %3612 = vmatpush.msra.mxu0 %v3550
      %3613 = vmatmul.f32.gmra.mxu0 %v3555
      %v3614 = vpop.f32.mrf.mxu0
      %v3615 = vadd.f32 0.0, %v3614
      %3616 = vdwg.mxu0
      %3617 = vmatpush.msra.mxu0 0.0
      %3618 = vmatpush.msra.mxu0 0.0
      %3619 = vmatpush.msra.mxu0 0.0
      %3620 = vmatpush.msra.mxu0 0.0
      %3621 = vmatpush.msra.mxu0 0.0
      %3622 = vmatpush.msra.mxu0 0.0
      %3623 = vmatpush.msra.mxu0 0.0
      %3624 = vmatpush.msra.mxu0 0.0
      %3625 = vmatpush.msra.mxu0 0.0
      %3626 = vmatpush.msra.mxu0 0.0
      %3627 = vmatpush.msra.mxu0 0.0
      %3628 = vmatpush.msra.mxu0 0.0
      %3629 = vmatpush.msra.mxu0 0.0
      %3630 = vmatpush.msra.mxu0 0.0
      %3631 = vmatpush.msra.mxu0 0.0
      %3632 = vmatpush.msra.mxu0 %v3551
      %3633 = vmatmul.f32.gmra.mxu0 %v3555
      %v3634 = vpop.f32.mrf.mxu0
      %v3635 = vadd.f32 0.0, %v3634
      %3636 = vdwg.mxu0
      %v3637 = vadd.f32 %v3532, %v3575
      %v3638 = vadd.f32 %v3533, %v3595
      %v3639 = vadd.f32 %v3534, %v3615
      %v3640 = vadd.f32 %v3535, %v3635
      %v3641 = vmul.f32 %v3210, %v753
      %v3642 = vmul.f32 %v3211, %v754
      %v3643 = vmul.f32 %v3212, %v755
      %v3644 = vmul.f32 %v3213, %v756
      %s3645 = scalar_lea.vmem %s3, 248
      %v3646 = vld [vmem:[%s3645] sm:$0xff]
      %v3648 = vsel %vm311, %v3646, 0
      %3650 = vmatpush.msra.mxu0 0.0
      %3651 = vmatpush.msra.mxu0 0.0
      %3652 = vmatpush.msra.mxu0 0.0
      %3653 = vmatpush.msra.mxu0 0.0
      %3654 = vmatpush.msra.mxu0 0.0
      %3655 = vmatpush.msra.mxu0 0.0
      %3656 = vmatpush.msra.mxu0 0.0
      %3657 = vmatpush.msra.mxu0 0.0
      %3658 = vmatpush.msra.mxu0 0.0
      %3659 = vmatpush.msra.mxu0 0.0
      %3660 = vmatpush.msra.mxu0 0.0
      %3661 = vmatpush.msra.mxu0 0.0
      %3662 = vmatpush.msra.mxu0 0.0
      %3663 = vmatpush.msra.mxu0 0.0
      %3664 = vmatpush.msra.mxu0 0.0
      %3665 = vmatpush.msra.mxu0 %v3641
      %3666 = vmatmul.f32.gmra.mxu0 %v3648
      %v3667 = vpop.f32.mrf.mxu0
      %v3668 = vadd.f32 0.0, %v3667
      %3669 = vdwg.mxu0
      %3670 = vmatpush.msra.mxu0 0.0
      %3671 = vmatpush.msra.mxu0 0.0
      %3672 = vmatpush.msra.mxu0 0.0
      %3673 = vmatpush.msra.mxu0 0.0
      %3674 = vmatpush.msra.mxu0 0.0
      %3675 = vmatpush.msra.mxu0 0.0
      %3676 = vmatpush.msra.mxu0 0.0
      %3677 = vmatpush.msra.mxu0 0.0
      %3678 = vmatpush.msra.mxu0 0.0
      %3679 = vmatpush.msra.mxu0 0.0
      %3680 = vmatpush.msra.mxu0 0.0
      %3681 = vmatpush.msra.mxu0 0.0
      %3682 = vmatpush.msra.mxu0 0.0
      %3683 = vmatpush.msra.mxu0 0.0
      %3684 = vmatpush.msra.mxu0 0.0
      %3685 = vmatpush.msra.mxu0 %v3642
      %3686 = vmatmul.f32.gmra.mxu0 %v3648
      %v3687 = vpop.f32.mrf.mxu0
      %v3688 = vadd.f32 0.0, %v3687
      %3689 = vdwg.mxu0
      %3690 = vmatpush.msra.mxu0 0.0
      %3691 = vmatpush.msra.mxu0 0.0
      %3692 = vmatpush.msra.mxu0 0.0
      %3693 = vmatpush.msra.mxu0 0.0
      %3694 = vmatpush.msra.mxu0 0.0
      %3695 = vmatpush.msra.mxu0 0.0
      %3696 = vmatpush.msra.mxu0 0.0
      %3697 = vmatpush.msra.mxu0 0.0
      %3698 = vmatpush.msra.mxu0 0.0
      %3699 = vmatpush.msra.mxu0 0.0
      %3700 = vmatpush.msra.mxu0 0.0
      %3701 = vmatpush.msra.mxu0 0.0
      %3702 = vmatpush.msra.mxu0 0.0
      %3703 = vmatpush.msra.mxu0 0.0
      %3704 = vmatpush.msra.mxu0 0.0
      %3705 = vmatpush.msra.mxu0 %v3643
      %3706 = vmatmul.f32.gmra.mxu0 %v3648
      %v3707 = vpop.f32.mrf.mxu0
      %v3708 = vadd.f32 0.0, %v3707
      %3709 = vdwg.mxu0
      %3710 = vmatpush.msra.mxu0 0.0
      %3711 = vmatpush.msra.mxu0 0.0
      %3712 = vmatpush.msra.mxu0 0.0
      %3713 = vmatpush.msra.mxu0 0.0
      %3714 = vmatpush.msra.mxu0 0.0
      %3715 = vmatpush.msra.mxu0 0.0
      %3716 = vmatpush.msra.mxu0 0.0
      %3717 = vmatpush.msra.mxu0 0.0
      %3718 = vmatpush.msra.mxu0 0.0
      %3719 = vmatpush.msra.mxu0 0.0
      %3720 = vmatpush.msra.mxu0 0.0
      %3721 = vmatpush.msra.mxu0 0.0
      %3722 = vmatpush.msra.mxu0 0.0
      %3723 = vmatpush.msra.mxu0 0.0
      %3724 = vmatpush.msra.mxu0 0.0
      %3725 = vmatpush.msra.mxu0 %v3644
      %3726 = vmatmul.f32.gmra.mxu0 %v3648
      %v3727 = vpop.f32.mrf.mxu0
      %v3728 = vadd.f32 0.0, %v3727
      %3729 = vdwg.mxu0
      %v3730 = vadd.f32 %v3637, %v3668
      %v3731 = vadd.f32 %v3638, %v3688
      %v3732 = vadd.f32 %v3639, %v3708
      %v3733 = vadd.f32 %v3640, %v3728
      %3734 = vrot.lane.b32.xlu0 %v3210, 127
      %v3735 = vpop.permute.xlu0 %3734
      %3736 = vrot.lane.b32.xlu0 %v3211, 127
      %v3737 = vpop.permute.xlu0 %3736
      %3738 = vrot.lane.b32.xlu0 %v3212, 127
      %v3739 = vpop.permute.xlu0 %3738
      %3740 = vrot.lane.b32.xlu0 %v3213, 127
      %v3741 = vpop.permute.xlu0 %3740
      %v3742 = vsel %vm862, %v3739, %v3741
      %v3743 = vsel %vm862, %v3737, %v3739
      %v3744 = vsel %vm862, %v3735, %v3737
      %v3745 = vsel %vm862, %v3741, %v3735
      %v3746 = vmul.f32 %v3744, %v870
      %v3747 = vmul.f32 %v3743, %v871
      %v3748 = vmul.f32 %v3742, %v872
      %v3749 = vmul.f32 %v3745, %v873
      %s3750 = scalar_lea.vmem %s3, 256
      %v3751 = vld [vmem:[%s3750] sm:$0xff]
      %v3753 = vsel %vm311, %v3751, 0
      %3755 = vmatpush.msra.mxu0 0.0
      %3756 = vmatpush.msra.mxu0 0.0
      %3757 = vmatpush.msra.mxu0 0.0
      %3758 = vmatpush.msra.mxu0 0.0
      %3759 = vmatpush.msra.mxu0 0.0
      %3760 = vmatpush.msra.mxu0 0.0
      %3761 = vmatpush.msra.mxu0 0.0
      %3762 = vmatpush.msra.mxu0 0.0
      %3763 = vmatpush.msra.mxu0 0.0
      %3764 = vmatpush.msra.mxu0 0.0
      %3765 = vmatpush.msra.mxu0 0.0
      %3766 = vmatpush.msra.mxu0 0.0
      %3767 = vmatpush.msra.mxu0 0.0
      %3768 = vmatpush.msra.mxu0 0.0
      %3769 = vmatpush.msra.mxu0 0.0
      %3770 = vmatpush.msra.mxu0 %v3746
      %3771 = vmatmul.f32.gmra.mxu0 %v3753
      %v3772 = vpop.f32.mrf.mxu0
      %v3773 = vadd.f32 0.0, %v3772
      %3774 = vdwg.mxu0
      %3775 = vmatpush.msra.mxu0 0.0
      %3776 = vmatpush.msra.mxu0 0.0
      %3777 = vmatpush.msra.mxu0 0.0
      %3778 = vmatpush.msra.mxu0 0.0
      %3779 = vmatpush.msra.mxu0 0.0
      %3780 = vmatpush.msra.mxu0 0.0
      %3781 = vmatpush.msra.mxu0 0.0
      %3782 = vmatpush.msra.mxu0 0.0
      %3783 = vmatpush.msra.mxu0 0.0
      %3784 = vmatpush.msra.mxu0 0.0
      %3785 = vmatpush.msra.mxu0 0.0
      %3786 = vmatpush.msra.mxu0 0.0
      %3787 = vmatpush.msra.mxu0 0.0
      %3788 = vmatpush.msra.mxu0 0.0
      %3789 = vmatpush.msra.mxu0 0.0
      %3790 = vmatpush.msra.mxu0 %v3747
      %3791 = vmatmul.f32.gmra.mxu0 %v3753
      %v3792 = vpop.f32.mrf.mxu0
      %v3793 = vadd.f32 0.0, %v3792
      %3794 = vdwg.mxu0
      %3795 = vmatpush.msra.mxu0 0.0
      %3796 = vmatpush.msra.mxu0 0.0
      %3797 = vmatpush.msra.mxu0 0.0
      %3798 = vmatpush.msra.mxu0 0.0
      %3799 = vmatpush.msra.mxu0 0.0
      %3800 = vmatpush.msra.mxu0 0.0
      %3801 = vmatpush.msra.mxu0 0.0
      %3802 = vmatpush.msra.mxu0 0.0
      %3803 = vmatpush.msra.mxu0 0.0
      %3804 = vmatpush.msra.mxu0 0.0
      %3805 = vmatpush.msra.mxu0 0.0
      %3806 = vmatpush.msra.mxu0 0.0
      %3807 = vmatpush.msra.mxu0 0.0
      %3808 = vmatpush.msra.mxu0 0.0
      %3809 = vmatpush.msra.mxu0 0.0
      %3810 = vmatpush.msra.mxu0 %v3748
      %3811 = vmatmul.f32.gmra.mxu0 %v3753
      %v3812 = vpop.f32.mrf.mxu0
      %v3813 = vadd.f32 0.0, %v3812
      %3814 = vdwg.mxu0
      %3815 = vmatpush.msra.mxu0 0.0
      %3816 = vmatpush.msra.mxu0 0.0
      %3817 = vmatpush.msra.mxu0 0.0
      %3818 = vmatpush.msra.mxu0 0.0
      %3819 = vmatpush.msra.mxu0 0.0
      %3820 = vmatpush.msra.mxu0 0.0
      %3821 = vmatpush.msra.mxu0 0.0
      %3822 = vmatpush.msra.mxu0 0.0
      %3823 = vmatpush.msra.mxu0 0.0
      %3824 = vmatpush.msra.mxu0 0.0
      %3825 = vmatpush.msra.mxu0 0.0
      %3826 = vmatpush.msra.mxu0 0.0
      %3827 = vmatpush.msra.mxu0 0.0
      %3828 = vmatpush.msra.mxu0 0.0
      %3829 = vmatpush.msra.mxu0 0.0
      %3830 = vmatpush.msra.mxu0 %v3749
      %3831 = vmatmul.f32.gmra.mxu0 %v3753
      %v3832 = vpop.f32.mrf.mxu0
      %v3833 = vadd.f32 0.0, %v3832
      %3834 = vdwg.mxu0
      %v3835 = vadd.f32 %v3730, %v3773
      %v3836 = vadd.f32 %v3731, %v3793
      %v3837 = vadd.f32 %v3732, %v3813
      %v3838 = vadd.f32 %v3733, %v3833
      %3839 = vrot.lane.b32.xlu0 %v3210, 113
      %v3840 = vpop.permute.xlu0 %3839
      %3841 = vrot.lane.b32.xlu0 %v3211, 113
      %v3842 = vpop.permute.xlu0 %3841
      %3843 = vrot.lane.b32.xlu0 %v3212, 113
      %v3844 = vpop.permute.xlu0 %3843
      %3845 = vrot.lane.b32.xlu0 %v3213, 113
      %v3846 = vpop.permute.xlu0 %3845
      %v3847 = vsel %vm979, %v3844, %v3846
      %v3848 = vsel %vm979, %v3842, %v3844
      %v3849 = vsel %vm979, %v3840, %v3842
      %v3850 = vsel %vm979, %v3846, %v3840
      %v3851 = vmul.f32 %v3849, %v987
      %v3852 = vmul.f32 %v3848, %v988
      %v3853 = vmul.f32 %v3847, %v989
      %v3854 = vmul.f32 %v3850, %v990
      %s3855 = scalar_lea.vmem %s3, 264
      %v3856 = vld [vmem:[%s3855] sm:$0xff]
      %v3858 = vsel %vm311, %v3856, 0
      %3860 = vmatpush.msra.mxu0 0.0
      %3861 = vmatpush.msra.mxu0 0.0
      %3862 = vmatpush.msra.mxu0 0.0
      %3863 = vmatpush.msra.mxu0 0.0
      %3864 = vmatpush.msra.mxu0 0.0
      %3865 = vmatpush.msra.mxu0 0.0
      %3866 = vmatpush.msra.mxu0 0.0
      %3867 = vmatpush.msra.mxu0 0.0
      %3868 = vmatpush.msra.mxu0 0.0
      %3869 = vmatpush.msra.mxu0 0.0
      %3870 = vmatpush.msra.mxu0 0.0
      %3871 = vmatpush.msra.mxu0 0.0
      %3872 = vmatpush.msra.mxu0 0.0
      %3873 = vmatpush.msra.mxu0 0.0
      %3874 = vmatpush.msra.mxu0 0.0
      %3875 = vmatpush.msra.mxu0 %v3851
      %3876 = vmatmul.f32.gmra.mxu0 %v3858
      %v3877 = vpop.f32.mrf.mxu0
      %v3878 = vadd.f32 0.0, %v3877
      %3879 = vdwg.mxu0
      %3880 = vmatpush.msra.mxu0 0.0
      %3881 = vmatpush.msra.mxu0 0.0
      %3882 = vmatpush.msra.mxu0 0.0
      %3883 = vmatpush.msra.mxu0 0.0
      %3884 = vmatpush.msra.mxu0 0.0
      %3885 = vmatpush.msra.mxu0 0.0
      %3886 = vmatpush.msra.mxu0 0.0
      %3887 = vmatpush.msra.mxu0 0.0
      %3888 = vmatpush.msra.mxu0 0.0
      %3889 = vmatpush.msra.mxu0 0.0
      %3890 = vmatpush.msra.mxu0 0.0
      %3891 = vmatpush.msra.mxu0 0.0
      %3892 = vmatpush.msra.mxu0 0.0
      %3893 = vmatpush.msra.mxu0 0.0
      %3894 = vmatpush.msra.mxu0 0.0
      %3895 = vmatpush.msra.mxu0 %v3852
      %3896 = vmatmul.f32.gmra.mxu0 %v3858
      %v3897 = vpop.f32.mrf.mxu0
      %v3898 = vadd.f32 0.0, %v3897
      %3899 = vdwg.mxu0
      %3900 = vmatpush.msra.mxu0 0.0
      %3901 = vmatpush.msra.mxu0 0.0
      %3902 = vmatpush.msra.mxu0 0.0
      %3903 = vmatpush.msra.mxu0 0.0
      %3904 = vmatpush.msra.mxu0 0.0
      %3905 = vmatpush.msra.mxu0 0.0
      %3906 = vmatpush.msra.mxu0 0.0
      %3907 = vmatpush.msra.mxu0 0.0
      %3908 = vmatpush.msra.mxu0 0.0
      %3909 = vmatpush.msra.mxu0 0.0
      %3910 = vmatpush.msra.mxu0 0.0
      %3911 = vmatpush.msra.mxu0 0.0
      %3912 = vmatpush.msra.mxu0 0.0
      %3913 = vmatpush.msra.mxu0 0.0
      %3914 = vmatpush.msra.mxu0 0.0
      %3915 = vmatpush.msra.mxu0 %v3853
      %3916 = vmatmul.f32.gmra.mxu0 %v3858
      %v3917 = vpop.f32.mrf.mxu0
      %v3918 = vadd.f32 0.0, %v3917
      %3919 = vdwg.mxu0
      %3920 = vmatpush.msra.mxu0 0.0
      %3921 = vmatpush.msra.mxu0 0.0
      %3922 = vmatpush.msra.mxu0 0.0
      %3923 = vmatpush.msra.mxu0 0.0
      %3924 = vmatpush.msra.mxu0 0.0
      %3925 = vmatpush.msra.mxu0 0.0
      %3926 = vmatpush.msra.mxu0 0.0
      %3927 = vmatpush.msra.mxu0 0.0
      %3928 = vmatpush.msra.mxu0 0.0
      %3929 = vmatpush.msra.mxu0 0.0
      %3930 = vmatpush.msra.mxu0 0.0
      %3931 = vmatpush.msra.mxu0 0.0
      %3932 = vmatpush.msra.mxu0 0.0
      %3933 = vmatpush.msra.mxu0 0.0
      %3934 = vmatpush.msra.mxu0 0.0
      %3935 = vmatpush.msra.mxu0 %v3854
      %3936 = vmatmul.f32.gmra.mxu0 %v3858
      %v3937 = vpop.f32.mrf.mxu0
      %v3938 = vadd.f32 0.0, %v3937
      %3939 = vdwg.mxu0
      %v3940 = vadd.f32 %v3835, %v3878
      %v3941 = vadd.f32 %v3836, %v3898
      %v3942 = vadd.f32 %v3837, %v3918
      %v3943 = vadd.f32 %v3838, %v3938
      %3944 = vrot.lane.b32.xlu0 %v3210, 112
      %v3945 = vpop.permute.xlu0 %3944
      %3946 = vrot.lane.b32.xlu0 %v3211, 112
      %v3947 = vpop.permute.xlu0 %3946
      %3948 = vrot.lane.b32.xlu0 %v3212, 112
      %v3949 = vpop.permute.xlu0 %3948
      %3950 = vrot.lane.b32.xlu0 %v3213, 112
      %v3951 = vpop.permute.xlu0 %3950
      %v3952 = vsel %vm1096, %v3949, %v3951
      %v3953 = vsel %vm1096, %v3947, %v3949
      %v3954 = vsel %vm1096, %v3945, %v3947
      %v3955 = vsel %vm1096, %v3951, %v3945
      %v3956 = vmul.f32 %v3954, %v1104
      %v3957 = vmul.f32 %v3953, %v1105
      %v3958 = vmul.f32 %v3952, %v1106
      %v3959 = vmul.f32 %v3955, %v1107
      %s3960 = scalar_lea.vmem %s3, 272
      %v3961 = vld [vmem:[%s3960] sm:$0xff]
      %v3963 = vsel %vm311, %v3961, 0
      %3965 = vmatpush.msra.mxu0 0.0
      %3966 = vmatpush.msra.mxu0 0.0
      %3967 = vmatpush.msra.mxu0 0.0
      %3968 = vmatpush.msra.mxu0 0.0
      %3969 = vmatpush.msra.mxu0 0.0
      %3970 = vmatpush.msra.mxu0 0.0
      %3971 = vmatpush.msra.mxu0 0.0
      %3972 = vmatpush.msra.mxu0 0.0
      %3973 = vmatpush.msra.mxu0 0.0
      %3974 = vmatpush.msra.mxu0 0.0
      %3975 = vmatpush.msra.mxu0 0.0
      %3976 = vmatpush.msra.mxu0 0.0
      %3977 = vmatpush.msra.mxu0 0.0
      %3978 = vmatpush.msra.mxu0 0.0
      %3979 = vmatpush.msra.mxu0 0.0
      %3980 = vmatpush.msra.mxu0 %v3956
      %3981 = vmatmul.f32.gmra.mxu0 %v3963
      %v3982 = vpop.f32.mrf.mxu0
      %v3983 = vadd.f32 0.0, %v3982
      %3984 = vdwg.mxu0
      %3985 = vmatpush.msra.mxu0 0.0
      %3986 = vmatpush.msra.mxu0 0.0
      %3987 = vmatpush.msra.mxu0 0.0
      %3988 = vmatpush.msra.mxu0 0.0
      %3989 = vmatpush.msra.mxu0 0.0
      %3990 = vmatpush.msra.mxu0 0.0
      %3991 = vmatpush.msra.mxu0 0.0
      %3992 = vmatpush.msra.mxu0 0.0
      %3993 = vmatpush.msra.mxu0 0.0
      %3994 = vmatpush.msra.mxu0 0.0
      %3995 = vmatpush.msra.mxu0 0.0
      %3996 = vmatpush.msra.mxu0 0.0
      %3997 = vmatpush.msra.mxu0 0.0
      %3998 = vmatpush.msra.mxu0 0.0
      %3999 = vmatpush.msra.mxu0 0.0
      %4000 = vmatpush.msra.mxu0 %v3957
      %4001 = vmatmul.f32.gmra.mxu0 %v3963
      %v4002 = vpop.f32.mrf.mxu0
      %v4003 = vadd.f32 0.0, %v4002
      %4004 = vdwg.mxu0
      %4005 = vmatpush.msra.mxu0 0.0
      %4006 = vmatpush.msra.mxu0 0.0
      %4007 = vmatpush.msra.mxu0 0.0
      %4008 = vmatpush.msra.mxu0 0.0
      %4009 = vmatpush.msra.mxu0 0.0
      %4010 = vmatpush.msra.mxu0 0.0
      %4011 = vmatpush.msra.mxu0 0.0
      %4012 = vmatpush.msra.mxu0 0.0
      %4013 = vmatpush.msra.mxu0 0.0
      %4014 = vmatpush.msra.mxu0 0.0
      %4015 = vmatpush.msra.mxu0 0.0
      %4016 = vmatpush.msra.mxu0 0.0
      %4017 = vmatpush.msra.mxu0 0.0
      %4018 = vmatpush.msra.mxu0 0.0
      %4019 = vmatpush.msra.mxu0 0.0
      %4020 = vmatpush.msra.mxu0 %v3958
      %4021 = vmatmul.f32.gmra.mxu0 %v3963
      %v4022 = vpop.f32.mrf.mxu0
      %v4023 = vadd.f32 0.0, %v4022
      %4024 = vdwg.mxu0
      %4025 = vmatpush.msra.mxu0 0.0
      %4026 = vmatpush.msra.mxu0 0.0
      %4027 = vmatpush.msra.mxu0 0.0
      %4028 = vmatpush.msra.mxu0 0.0
      %4029 = vmatpush.msra.mxu0 0.0
      %4030 = vmatpush.msra.mxu0 0.0
      %4031 = vmatpush.msra.mxu0 0.0
      %4032 = vmatpush.msra.mxu0 0.0
      %4033 = vmatpush.msra.mxu0 0.0
      %4034 = vmatpush.msra.mxu0 0.0
      %4035 = vmatpush.msra.mxu0 0.0
      %4036 = vmatpush.msra.mxu0 0.0
      %4037 = vmatpush.msra.mxu0 0.0
      %4038 = vmatpush.msra.mxu0 0.0
      %4039 = vmatpush.msra.mxu0 0.0
      %4040 = vmatpush.msra.mxu0 %v3959
      %4041 = vmatmul.f32.gmra.mxu0 %v3963
      %v4042 = vpop.f32.mrf.mxu0
      %v4043 = vadd.f32 0.0, %v4042
      %4044 = vdwg.mxu0
      %v4045 = vadd.f32 %v3940, %v3983
      %v4046 = vadd.f32 %v3941, %v4003
      %v4047 = vadd.f32 %v3942, %v4023
      %v4048 = vadd.f32 %v3943, %v4043
      %4049 = vrot.lane.b32.xlu0 %v3210, 111
      %v4050 = vpop.permute.xlu0 %4049
      %4051 = vrot.lane.b32.xlu0 %v3211, 111
      %v4052 = vpop.permute.xlu0 %4051
      %4053 = vrot.lane.b32.xlu0 %v3212, 111
      %v4054 = vpop.permute.xlu0 %4053
      %4055 = vrot.lane.b32.xlu0 %v3213, 111
      %v4056 = vpop.permute.xlu0 %4055
      %v4057 = vsel %vm1213, %v4054, %v4056
      %v4058 = vsel %vm1213, %v4052, %v4054
      %v4059 = vsel %vm1213, %v4050, %v4052
      %v4060 = vsel %vm1213, %v4056, %v4050
      %v4061 = vmul.f32 %v4059, %v1221
      %v4062 = vmul.f32 %v4058, %v1222
      %v4063 = vmul.f32 %v4057, %v1223
      %v4064 = vmul.f32 %v4060, %v1224
      %s4065 = scalar_lea.vmem %s3, 280
      %v4066 = vld [vmem:[%s4065] sm:$0xff]
      %v4068 = vsel %vm311, %v4066, 0
      %4070 = vmatpush.msra.mxu0 0.0
      %4071 = vmatpush.msra.mxu0 0.0
      %4072 = vmatpush.msra.mxu0 0.0
      %4073 = vmatpush.msra.mxu0 0.0
      %4074 = vmatpush.msra.mxu0 0.0
      %4075 = vmatpush.msra.mxu0 0.0
      %4076 = vmatpush.msra.mxu0 0.0
      %4077 = vmatpush.msra.mxu0 0.0
      %4078 = vmatpush.msra.mxu0 0.0
      %4079 = vmatpush.msra.mxu0 0.0
      %4080 = vmatpush.msra.mxu0 0.0
      %4081 = vmatpush.msra.mxu0 0.0
      %4082 = vmatpush.msra.mxu0 0.0
      %4083 = vmatpush.msra.mxu0 0.0
      %4084 = vmatpush.msra.mxu0 0.0
      %4085 = vmatpush.msra.mxu0 %v4061
      %4086 = vmatmul.f32.gmra.mxu0 %v4068
      %v4087 = vpop.f32.mrf.mxu0
      %v4088 = vadd.f32 0.0, %v4087
      %4089 = vdwg.mxu0
      %4090 = vmatpush.msra.mxu0 0.0
      %4091 = vmatpush.msra.mxu0 0.0
      %4092 = vmatpush.msra.mxu0 0.0
      %4093 = vmatpush.msra.mxu0 0.0
      %4094 = vmatpush.msra.mxu0 0.0
      %4095 = vmatpush.msra.mxu0 0.0
      %4096 = vmatpush.msra.mxu0 0.0
      %4097 = vmatpush.msra.mxu0 0.0
      %4098 = vmatpush.msra.mxu0 0.0
      %4099 = vmatpush.msra.mxu0 0.0
      %4100 = vmatpush.msra.mxu0 0.0
      %4101 = vmatpush.msra.mxu0 0.0
      %4102 = vmatpush.msra.mxu0 0.0
      %4103 = vmatpush.msra.mxu0 0.0
      %4104 = vmatpush.msra.mxu0 0.0
      %4105 = vmatpush.msra.mxu0 %v4062
      %4106 = vmatmul.f32.gmra.mxu0 %v4068
      %v4107 = vpop.f32.mrf.mxu0
      %v4108 = vadd.f32 0.0, %v4107
      %4109 = vdwg.mxu0
      %4110 = vmatpush.msra.mxu0 0.0
      %4111 = vmatpush.msra.mxu0 0.0
      %4112 = vmatpush.msra.mxu0 0.0
      %4113 = vmatpush.msra.mxu0 0.0
      %4114 = vmatpush.msra.mxu0 0.0
      %4115 = vmatpush.msra.mxu0 0.0
      %4116 = vmatpush.msra.mxu0 0.0
      %4117 = vmatpush.msra.mxu0 0.0
      %4118 = vmatpush.msra.mxu0 0.0
      %4119 = vmatpush.msra.mxu0 0.0
      %4120 = vmatpush.msra.mxu0 0.0
      %4121 = vmatpush.msra.mxu0 0.0
      %4122 = vmatpush.msra.mxu0 0.0
      %4123 = vmatpush.msra.mxu0 0.0
      %4124 = vmatpush.msra.mxu0 0.0
      %4125 = vmatpush.msra.mxu0 %v4063
      %4126 = vmatmul.f32.gmra.mxu0 %v4068
      %v4127 = vpop.f32.mrf.mxu0
      %v4128 = vadd.f32 0.0, %v4127
      %4129 = vdwg.mxu0
      %4130 = vmatpush.msra.mxu0 0.0
      %4131 = vmatpush.msra.mxu0 0.0
      %4132 = vmatpush.msra.mxu0 0.0
      %4133 = vmatpush.msra.mxu0 0.0
      %4134 = vmatpush.msra.mxu0 0.0
      %4135 = vmatpush.msra.mxu0 0.0
      %4136 = vmatpush.msra.mxu0 0.0
      %4137 = vmatpush.msra.mxu0 0.0
      %4138 = vmatpush.msra.mxu0 0.0
      %4139 = vmatpush.msra.mxu0 0.0
      %4140 = vmatpush.msra.mxu0 0.0
      %4141 = vmatpush.msra.mxu0 0.0
      %4142 = vmatpush.msra.mxu0 0.0
      %4143 = vmatpush.msra.mxu0 0.0
      %4144 = vmatpush.msra.mxu0 0.0
      %4145 = vmatpush.msra.mxu0 %v4064
      %4146 = vmatmul.f32.gmra.mxu0 %v4068
      %v4147 = vpop.f32.mrf.mxu0
      %v4148 = vadd.f32 0.0, %v4147
      %4149 = vdwg.mxu0
      %v4150 = vadd.f32 %v4045, %v4088
      %v4151 = vadd.f32 %v4046, %v4108
      %v4152 = vadd.f32 %v4047, %v4128
      %v4153 = vadd.f32 %v4048, %v4148
      %v4154 = vmax.f32 %v4150, 0.0
      %v4155 = vmax.f32 %v4151, 0.0
      %v4156 = vmax.f32 %v4152, 0.0
      %v4157 = vmax.f32 %v4153, 0.0
      %s4158 = ssub.f32 0.0, %s270
      %v4159 = vstv %s4158
      %v4160 = vmax.f32 %v4159, %v4154
      %v4161 = vmax.f32 %v4159, %v4155
      %v4162 = vmax.f32 %v4159, %v4156
      %v4163 = vmax.f32 %v4159, %v4157
      %v4164 = vstv %s270
      %v4165 = vmin.f32 %v4164, %v4160
      %v4166 = vmin.f32 %v4164, %v4161
      %v4167 = vmin.f32 %v4164, %v4162
      %v4168 = vmin.f32 %v4164, %v4163
      %v4169 = vsub.f32 %v4154, %v4165
      %v4170 = vsub.f32 %v4155, %v4166
      %v4171 = vsub.f32 %v4156, %v4167
      %v4172 = vsub.f32 %v4157, %v4168
      %4173 = vst [vmem:[%s268] sm:$0xff] %v4169
      %4174 = vst [vmem:[%s268 + $0x8] sm:$0xff] %v4170
      %4175 = vst [vmem:[%s268 + $0x10] sm:$0xff] %v4171
      %4176 = vst [vmem:[%s268 + $0x18] sm:$0xff] %v4172
      %s4177 = scalar_lea.vmem %s4, 32
      %v4178 = vld [vmem:[%s4177] sm:$0xff]
      %4180 = vset.pattern.permute.xlu0 0
      %4181 = vperm.xlu0 %4180, %v4178
      %v4182 = vpop.permute.xlu0 %4181
      %4184 = vrot.lane.b32.xlu0 %v4169, 17
      %v4185 = vpop.permute.xlu0 %4184
      %4186 = vrot.lane.b32.xlu0 %v4170, 17
      %v4187 = vpop.permute.xlu0 %4186
      %4188 = vrot.lane.b32.xlu0 %v4171, 17
      %v4189 = vpop.permute.xlu0 %4188
      %4190 = vrot.lane.b32.xlu0 %v4172, 17
      %v4191 = vpop.permute.xlu0 %4190
      %v4192 = vsel %vm291, %v4189, %v4191
      %v4193 = vsel %vm291, %v4187, %v4189
      %v4194 = vsel %vm291, %v4185, %v4187
      %v4195 = vsel %vm291, %v4191, %v4185
      %v4196 = vld [vmem:[%s1] ss:$8 sm:$0xf]
      %v4198 = vperm.slane %v4196, 0
      %v4199 = vperm.slane %v4196, 1
      %v4200 = vperm.slane %v4196, 2
      %v4201 = vperm.slane %v4196, 3
      %v4206 = vmul.f32 %v4195, %v4198
      %v4207 = vmul.f32 %v4194, %v4199
      %v4208 = vmul.f32 %v4193, %v4200
      %v4209 = vmul.f32 %v4192, %v4201
      %s4210 = scalar_lea.vmem %s3, 288
      %v4211 = vld [vmem:[%s4210] sm:$0xff]
      %v4213 = vsel %vm311, %v4211, 0
      %4215 = vmatpush.msra.mxu0 0.0
      %4216 = vmatpush.msra.mxu0 0.0
      %4217 = vmatpush.msra.mxu0 0.0
      %4218 = vmatpush.msra.mxu0 0.0
      %4219 = vmatpush.msra.mxu0 0.0
      %4220 = vmatpush.msra.mxu0 0.0
      %4221 = vmatpush.msra.mxu0 0.0
      %4222 = vmatpush.msra.mxu0 0.0
      %4223 = vmatpush.msra.mxu0 0.0
      %4224 = vmatpush.msra.mxu0 0.0
      %4225 = vmatpush.msra.mxu0 0.0
      %4226 = vmatpush.msra.mxu0 0.0
      %4227 = vmatpush.msra.mxu0 0.0
      %4228 = vmatpush.msra.mxu0 0.0
      %4229 = vmatpush.msra.mxu0 0.0
      %4230 = vmatpush.msra.mxu0 %v4206
      %4231 = vmatmul.f32.gmra.mxu0 %v4213
      %v4232 = vpop.f32.mrf.mxu0
      %v4233 = vadd.f32 0.0, %v4232
      %4234 = vdwg.mxu0
      %4235 = vmatpush.msra.mxu0 0.0
      %4236 = vmatpush.msra.mxu0 0.0
      %4237 = vmatpush.msra.mxu0 0.0
      %4238 = vmatpush.msra.mxu0 0.0
      %4239 = vmatpush.msra.mxu0 0.0
      %4240 = vmatpush.msra.mxu0 0.0
      %4241 = vmatpush.msra.mxu0 0.0
      %4242 = vmatpush.msra.mxu0 0.0
      %4243 = vmatpush.msra.mxu0 0.0
      %4244 = vmatpush.msra.mxu0 0.0
      %4245 = vmatpush.msra.mxu0 0.0
      %4246 = vmatpush.msra.mxu0 0.0
      %4247 = vmatpush.msra.mxu0 0.0
      %4248 = vmatpush.msra.mxu0 0.0
      %4249 = vmatpush.msra.mxu0 0.0
      %4250 = vmatpush.msra.mxu0 %v4207
      %4251 = vmatmul.f32.gmra.mxu0 %v4213
      %v4252 = vpop.f32.mrf.mxu0
      %v4253 = vadd.f32 0.0, %v4252
      %4254 = vdwg.mxu0
      %4255 = vmatpush.msra.mxu0 0.0
      %4256 = vmatpush.msra.mxu0 0.0
      %4257 = vmatpush.msra.mxu0 0.0
      %4258 = vmatpush.msra.mxu0 0.0
      %4259 = vmatpush.msra.mxu0 0.0
      %4260 = vmatpush.msra.mxu0 0.0
      %4261 = vmatpush.msra.mxu0 0.0
      %4262 = vmatpush.msra.mxu0 0.0
      %4263 = vmatpush.msra.mxu0 0.0
      %4264 = vmatpush.msra.mxu0 0.0
      %4265 = vmatpush.msra.mxu0 0.0
      %4266 = vmatpush.msra.mxu0 0.0
      %4267 = vmatpush.msra.mxu0 0.0
      %4268 = vmatpush.msra.mxu0 0.0
      %4269 = vmatpush.msra.mxu0 0.0
      %4270 = vmatpush.msra.mxu0 %v4208
      %4271 = vmatmul.f32.gmra.mxu0 %v4213
      %v4272 = vpop.f32.mrf.mxu0
      %v4273 = vadd.f32 0.0, %v4272
      %4274 = vdwg.mxu0
      %4275 = vmatpush.msra.mxu0 0.0
      %4276 = vmatpush.msra.mxu0 0.0
      %4277 = vmatpush.msra.mxu0 0.0
      %4278 = vmatpush.msra.mxu0 0.0
      %4279 = vmatpush.msra.mxu0 0.0
      %4280 = vmatpush.msra.mxu0 0.0
      %4281 = vmatpush.msra.mxu0 0.0
      %4282 = vmatpush.msra.mxu0 0.0
      %4283 = vmatpush.msra.mxu0 0.0
      %4284 = vmatpush.msra.mxu0 0.0
      %4285 = vmatpush.msra.mxu0 0.0
      %4286 = vmatpush.msra.mxu0 0.0
      %4287 = vmatpush.msra.mxu0 0.0
      %4288 = vmatpush.msra.mxu0 0.0
      %4289 = vmatpush.msra.mxu0 0.0
      %4290 = vmatpush.msra.mxu0 %v4209
      %4291 = vmatmul.f32.gmra.mxu0 %v4213
      %v4292 = vpop.f32.mrf.mxu0
      %v4293 = vadd.f32 0.0, %v4292
      %4294 = vdwg.mxu0
      %v4295 = vadd.f32 %v4182, %v4233
      %v4296 = vadd.f32 %v4182, %v4253
      %v4297 = vadd.f32 %v4182, %v4273
      %v4298 = vadd.f32 %v4182, %v4293
      %4299 = vrot.lane.b32.xlu0 %v4169, 16
      %v4300 = vpop.permute.xlu0 %4299
      %4301 = vrot.lane.b32.xlu0 %v4170, 16
      %v4302 = vpop.permute.xlu0 %4301
      %4303 = vrot.lane.b32.xlu0 %v4171, 16
      %v4304 = vpop.permute.xlu0 %4303
      %4305 = vrot.lane.b32.xlu0 %v4172, 16
      %v4306 = vpop.permute.xlu0 %4305
      %v4307 = vsel %vm407, %v4304, %v4306
      %v4308 = vsel %vm407, %v4302, %v4304
      %v4309 = vsel %vm407, %v4300, %v4302
      %v4310 = vsel %vm407, %v4306, %v4300
      %v4311 = vld [vmem:[%s412] ss:$8 sm:$0xf]
      %v4313 = vperm.slane %v4311, 0
      %v4314 = vperm.slane %v4311, 1
      %v4315 = vperm.slane %v4311, 2
      %v4316 = vperm.slane %v4311, 3
      %v4321 = vmul.f32 %v4310, %v4313
      %v4322 = vmul.f32 %v4309, %v4314
      %v4323 = vmul.f32 %v4308, %v4315
      %v4324 = vmul.f32 %v4307, %v4316
      %s4325 = scalar_lea.vmem %s3, 296
      %v4326 = vld [vmem:[%s4325] sm:$0xff]
      %v4328 = vsel %vm311, %v4326, 0
      %4330 = vmatpush.msra.mxu0 0.0
      %4331 = vmatpush.msra.mxu0 0.0
      %4332 = vmatpush.msra.mxu0 0.0
      %4333 = vmatpush.msra.mxu0 0.0
      %4334 = vmatpush.msra.mxu0 0.0
      %4335 = vmatpush.msra.mxu0 0.0
      %4336 = vmatpush.msra.mxu0 0.0
      %4337 = vmatpush.msra.mxu0 0.0
      %4338 = vmatpush.msra.mxu0 0.0
      %4339 = vmatpush.msra.mxu0 0.0
      %4340 = vmatpush.msra.mxu0 0.0
      %4341 = vmatpush.msra.mxu0 0.0
      %4342 = vmatpush.msra.mxu0 0.0
      %4343 = vmatpush.msra.mxu0 0.0
      %4344 = vmatpush.msra.mxu0 0.0
      %4345 = vmatpush.msra.mxu0 %v4321
      %4346 = vmatmul.f32.gmra.mxu0 %v4328
      %v4347 = vpop.f32.mrf.mxu0
      %v4348 = vadd.f32 0.0, %v4347
      %4349 = vdwg.mxu0
      %4350 = vmatpush.msra.mxu0 0.0
      %4351 = vmatpush.msra.mxu0 0.0
      %4352 = vmatpush.msra.mxu0 0.0
      %4353 = vmatpush.msra.mxu0 0.0
      %4354 = vmatpush.msra.mxu0 0.0
      %4355 = vmatpush.msra.mxu0 0.0
      %4356 = vmatpush.msra.mxu0 0.0
      %4357 = vmatpush.msra.mxu0 0.0
      %4358 = vmatpush.msra.mxu0 0.0
      %4359 = vmatpush.msra.mxu0 0.0
      %4360 = vmatpush.msra.mxu0 0.0
      %4361 = vmatpush.msra.mxu0 0.0
      %4362 = vmatpush.msra.mxu0 0.0
      %4363 = vmatpush.msra.mxu0 0.0
      %4364 = vmatpush.msra.mxu0 0.0
      %4365 = vmatpush.msra.mxu0 %v4322
      %4366 = vmatmul.f32.gmra.mxu0 %v4328
      %v4367 = vpop.f32.mrf.mxu0
      %v4368 = vadd.f32 0.0, %v4367
      %4369 = vdwg.mxu0
      %4370 = vmatpush.msra.mxu0 0.0
      %4371 = vmatpush.msra.mxu0 0.0
      %4372 = vmatpush.msra.mxu0 0.0
      %4373 = vmatpush.msra.mxu0 0.0
      %4374 = vmatpush.msra.mxu0 0.0
      %4375 = vmatpush.msra.mxu0 0.0
      %4376 = vmatpush.msra.mxu0 0.0
      %4377 = vmatpush.msra.mxu0 0.0
      %4378 = vmatpush.msra.mxu0 0.0
      %4379 = vmatpush.msra.mxu0 0.0
      %4380 = vmatpush.msra.mxu0 0.0
      %4381 = vmatpush.msra.mxu0 0.0
      %4382 = vmatpush.msra.mxu0 0.0
      %4383 = vmatpush.msra.mxu0 0.0
      %4384 = vmatpush.msra.mxu0 0.0
      %4385 = vmatpush.msra.mxu0 %v4323
      %4386 = vmatmul.f32.gmra.mxu0 %v4328
      %v4387 = vpop.f32.mrf.mxu0
      %v4388 = vadd.f32 0.0, %v4387
      %4389 = vdwg.mxu0
      %4390 = vmatpush.msra.mxu0 0.0
      %4391 = vmatpush.msra.mxu0 0.0
      %4392 = vmatpush.msra.mxu0 0.0
      %4393 = vmatpush.msra.mxu0 0.0
      %4394 = vmatpush.msra.mxu0 0.0
      %4395 = vmatpush.msra.mxu0 0.0
      %4396 = vmatpush.msra.mxu0 0.0
      %4397 = vmatpush.msra.mxu0 0.0
      %4398 = vmatpush.msra.mxu0 0.0
      %4399 = vmatpush.msra.mxu0 0.0
      %4400 = vmatpush.msra.mxu0 0.0
      %4401 = vmatpush.msra.mxu0 0.0
      %4402 = vmatpush.msra.mxu0 0.0
      %4403 = vmatpush.msra.mxu0 0.0
      %4404 = vmatpush.msra.mxu0 0.0
      %4405 = vmatpush.msra.mxu0 %v4324
      %4406 = vmatmul.f32.gmra.mxu0 %v4328
      %v4407 = vpop.f32.mrf.mxu0
      %v4408 = vadd.f32 0.0, %v4407
      %4409 = vdwg.mxu0
      %v4410 = vadd.f32 %v4295, %v4348
      %v4411 = vadd.f32 %v4296, %v4368
      %v4412 = vadd.f32 %v4297, %v4388
      %v4413 = vadd.f32 %v4298, %v4408
      %4414 = vrot.lane.b32.xlu0 %v4169, 15
      %v4415 = vpop.permute.xlu0 %4414
      %4416 = vrot.lane.b32.xlu0 %v4170, 15
      %v4417 = vpop.permute.xlu0 %4416
      %4418 = vrot.lane.b32.xlu0 %v4171, 15
      %v4419 = vpop.permute.xlu0 %4418
      %4420 = vrot.lane.b32.xlu0 %v4172, 15
      %v4421 = vpop.permute.xlu0 %4420
      %v4422 = vsel %vm524, %v4419, %v4421
      %v4423 = vsel %vm524, %v4417, %v4419
      %v4424 = vsel %vm524, %v4415, %v4417
      %v4425 = vsel %vm524, %v4421, %v4415
      %v4426 = vld [vmem:[%s529] ss:$8 sm:$0xf]
      %v4428 = vperm.slane %v4426, 0
      %v4429 = vperm.slane %v4426, 1
      %v4430 = vperm.slane %v4426, 2
      %v4431 = vperm.slane %v4426, 3
      %v4436 = vmul.f32 %v4425, %v4428
      %v4437 = vmul.f32 %v4424, %v4429
      %v4438 = vmul.f32 %v4423, %v4430
      %v4439 = vmul.f32 %v4422, %v4431
      %s4440 = scalar_lea.vmem %s3, 304
      %v4441 = vld [vmem:[%s4440] sm:$0xff]
      %v4443 = vsel %vm311, %v4441, 0
      %4445 = vmatpush.msra.mxu0 0.0
      %4446 = vmatpush.msra.mxu0 0.0
      %4447 = vmatpush.msra.mxu0 0.0
      %4448 = vmatpush.msra.mxu0 0.0
      %4449 = vmatpush.msra.mxu0 0.0
      %4450 = vmatpush.msra.mxu0 0.0
      %4451 = vmatpush.msra.mxu0 0.0
      %4452 = vmatpush.msra.mxu0 0.0
      %4453 = vmatpush.msra.mxu0 0.0
      %4454 = vmatpush.msra.mxu0 0.0
      %4455 = vmatpush.msra.mxu0 0.0
      %4456 = vmatpush.msra.mxu0 0.0
      %4457 = vmatpush.msra.mxu0 0.0
      %4458 = vmatpush.msra.mxu0 0.0
      %4459 = vmatpush.msra.mxu0 0.0
      %4460 = vmatpush.msra.mxu0 %v4436
      %4461 = vmatmul.f32.gmra.mxu0 %v4443
      %v4462 = vpop.f32.mrf.mxu0
      %v4463 = vadd.f32 0.0, %v4462
      %4464 = vdwg.mxu0
      %4465 = vmatpush.msra.mxu0 0.0
      %4466 = vmatpush.msra.mxu0 0.0
      %4467 = vmatpush.msra.mxu0 0.0
      %4468 = vmatpush.msra.mxu0 0.0
      %4469 = vmatpush.msra.mxu0 0.0
      %4470 = vmatpush.msra.mxu0 0.0
      %4471 = vmatpush.msra.mxu0 0.0
      %4472 = vmatpush.msra.mxu0 0.0
      %4473 = vmatpush.msra.mxu0 0.0
      %4474 = vmatpush.msra.mxu0 0.0
      %4475 = vmatpush.msra.mxu0 0.0
      %4476 = vmatpush.msra.mxu0 0.0
      %4477 = vmatpush.msra.mxu0 0.0
      %4478 = vmatpush.msra.mxu0 0.0
      %4479 = vmatpush.msra.mxu0 0.0
      %4480 = vmatpush.msra.mxu0 %v4437
      %4481 = vmatmul.f32.gmra.mxu0 %v4443
      %v4482 = vpop.f32.mrf.mxu0
      %v4483 = vadd.f32 0.0, %v4482
      %4484 = vdwg.mxu0
      %4485 = vmatpush.msra.mxu0 0.0
      %4486 = vmatpush.msra.mxu0 0.0
      %4487 = vmatpush.msra.mxu0 0.0
      %4488 = vmatpush.msra.mxu0 0.0
      %4489 = vmatpush.msra.mxu0 0.0
      %4490 = vmatpush.msra.mxu0 0.0
      %4491 = vmatpush.msra.mxu0 0.0
      %4492 = vmatpush.msra.mxu0 0.0
      %4493 = vmatpush.msra.mxu0 0.0
      %4494 = vmatpush.msra.mxu0 0.0
      %4495 = vmatpush.msra.mxu0 0.0
      %4496 = vmatpush.msra.mxu0 0.0
      %4497 = vmatpush.msra.mxu0 0.0
      %4498 = vmatpush.msra.mxu0 0.0
      %4499 = vmatpush.msra.mxu0 0.0
      %4500 = vmatpush.msra.mxu0 %v4438
      %4501 = vmatmul.f32.gmra.mxu0 %v4443
      %v4502 = vpop.f32.mrf.mxu0
      %v4503 = vadd.f32 0.0, %v4502
      %4504 = vdwg.mxu0
      %4505 = vmatpush.msra.mxu0 0.0
      %4506 = vmatpush.msra.mxu0 0.0
      %4507 = vmatpush.msra.mxu0 0.0
      %4508 = vmatpush.msra.mxu0 0.0
      %4509 = vmatpush.msra.mxu0 0.0
      %4510 = vmatpush.msra.mxu0 0.0
      %4511 = vmatpush.msra.mxu0 0.0
      %4512 = vmatpush.msra.mxu0 0.0
      %4513 = vmatpush.msra.mxu0 0.0
      %4514 = vmatpush.msra.mxu0 0.0
      %4515 = vmatpush.msra.mxu0 0.0
      %4516 = vmatpush.msra.mxu0 0.0
      %4517 = vmatpush.msra.mxu0 0.0
      %4518 = vmatpush.msra.mxu0 0.0
      %4519 = vmatpush.msra.mxu0 0.0
      %4520 = vmatpush.msra.mxu0 %v4439
      %4521 = vmatmul.f32.gmra.mxu0 %v4443
      %v4522 = vpop.f32.mrf.mxu0
      %v4523 = vadd.f32 0.0, %v4522
      %4524 = vdwg.mxu0
      %v4525 = vadd.f32 %v4410, %v4463
      %v4526 = vadd.f32 %v4411, %v4483
      %v4527 = vadd.f32 %v4412, %v4503
      %v4528 = vadd.f32 %v4413, %v4523
      %4529 = vrot.lane.b32.xlu0 %v4169, 1
      %v4530 = vpop.permute.xlu0 %4529
      %4531 = vrot.lane.b32.xlu0 %v4170, 1
      %v4532 = vpop.permute.xlu0 %4531
      %4533 = vrot.lane.b32.xlu0 %v4171, 1
      %v4534 = vpop.permute.xlu0 %4533
      %4535 = vrot.lane.b32.xlu0 %v4172, 1
      %v4536 = vpop.permute.xlu0 %4535
      %v4537 = vsel %vm641, %v4534, %v4536
      %v4538 = vsel %vm641, %v4532, %v4534
      %v4539 = vsel %vm641, %v4530, %v4532
      %v4540 = vsel %vm641, %v4536, %v4530
      %v4541 = vld [vmem:[%s646] ss:$8 sm:$0xf]
      %v4543 = vperm.slane %v4541, 0
      %v4544 = vperm.slane %v4541, 1
      %v4545 = vperm.slane %v4541, 2
      %v4546 = vperm.slane %v4541, 3
      %v4551 = vmul.f32 %v4540, %v4543
      %v4552 = vmul.f32 %v4539, %v4544
      %v4553 = vmul.f32 %v4538, %v4545
      %v4554 = vmul.f32 %v4537, %v4546
      %s4555 = scalar_lea.vmem %s3, 312
      %v4556 = vld [vmem:[%s4555] sm:$0xff]
      %v4558 = vsel %vm311, %v4556, 0
      %4560 = vmatpush.msra.mxu0 0.0
      %4561 = vmatpush.msra.mxu0 0.0
      %4562 = vmatpush.msra.mxu0 0.0
      %4563 = vmatpush.msra.mxu0 0.0
      %4564 = vmatpush.msra.mxu0 0.0
      %4565 = vmatpush.msra.mxu0 0.0
      %4566 = vmatpush.msra.mxu0 0.0
      %4567 = vmatpush.msra.mxu0 0.0
      %4568 = vmatpush.msra.mxu0 0.0
      %4569 = vmatpush.msra.mxu0 0.0
      %4570 = vmatpush.msra.mxu0 0.0
      %4571 = vmatpush.msra.mxu0 0.0
      %4572 = vmatpush.msra.mxu0 0.0
      %4573 = vmatpush.msra.mxu0 0.0
      %4574 = vmatpush.msra.mxu0 0.0
      %4575 = vmatpush.msra.mxu0 %v4551
      %4576 = vmatmul.f32.gmra.mxu0 %v4558
      %v4577 = vpop.f32.mrf.mxu0
      %v4578 = vadd.f32 0.0, %v4577
      %4579 = vdwg.mxu0
      %4580 = vmatpush.msra.mxu0 0.0
      %4581 = vmatpush.msra.mxu0 0.0
      %4582 = vmatpush.msra.mxu0 0.0
      %4583 = vmatpush.msra.mxu0 0.0
      %4584 = vmatpush.msra.mxu0 0.0
      %4585 = vmatpush.msra.mxu0 0.0
      %4586 = vmatpush.msra.mxu0 0.0
      %4587 = vmatpush.msra.mxu0 0.0
      %4588 = vmatpush.msra.mxu0 0.0
      %4589 = vmatpush.msra.mxu0 0.0
      %4590 = vmatpush.msra.mxu0 0.0
      %4591 = vmatpush.msra.mxu0 0.0
      %4592 = vmatpush.msra.mxu0 0.0
      %4593 = vmatpush.msra.mxu0 0.0
      %4594 = vmatpush.msra.mxu0 0.0
      %4595 = vmatpush.msra.mxu0 %v4552
      %4596 = vmatmul.f32.gmra.mxu0 %v4558
      %v4597 = vpop.f32.mrf.mxu0
      %v4598 = vadd.f32 0.0, %v4597
      %4599 = vdwg.mxu0
      %4600 = vmatpush.msra.mxu0 0.0
      %4601 = vmatpush.msra.mxu0 0.0
      %4602 = vmatpush.msra.mxu0 0.0
      %4603 = vmatpush.msra.mxu0 0.0
      %4604 = vmatpush.msra.mxu0 0.0
      %4605 = vmatpush.msra.mxu0 0.0
      %4606 = vmatpush.msra.mxu0 0.0
      %4607 = vmatpush.msra.mxu0 0.0
      %4608 = vmatpush.msra.mxu0 0.0
      %4609 = vmatpush.msra.mxu0 0.0
      %4610 = vmatpush.msra.mxu0 0.0
      %4611 = vmatpush.msra.mxu0 0.0
      %4612 = vmatpush.msra.mxu0 0.0
      %4613 = vmatpush.msra.mxu0 0.0
      %4614 = vmatpush.msra.mxu0 0.0
      %4615 = vmatpush.msra.mxu0 %v4553
      %4616 = vmatmul.f32.gmra.mxu0 %v4558
      %v4617 = vpop.f32.mrf.mxu0
      %v4618 = vadd.f32 0.0, %v4617
      %4619 = vdwg.mxu0
      %4620 = vmatpush.msra.mxu0 0.0
      %4621 = vmatpush.msra.mxu0 0.0
      %4622 = vmatpush.msra.mxu0 0.0
      %4623 = vmatpush.msra.mxu0 0.0
      %4624 = vmatpush.msra.mxu0 0.0
      %4625 = vmatpush.msra.mxu0 0.0
      %4626 = vmatpush.msra.mxu0 0.0
      %4627 = vmatpush.msra.mxu0 0.0
      %4628 = vmatpush.msra.mxu0 0.0
      %4629 = vmatpush.msra.mxu0 0.0
      %4630 = vmatpush.msra.mxu0 0.0
      %4631 = vmatpush.msra.mxu0 0.0
      %4632 = vmatpush.msra.mxu0 0.0
      %4633 = vmatpush.msra.mxu0 0.0
      %4634 = vmatpush.msra.mxu0 0.0
      %4635 = vmatpush.msra.mxu0 %v4554
      %4636 = vmatmul.f32.gmra.mxu0 %v4558
      %v4637 = vpop.f32.mrf.mxu0
      %v4638 = vadd.f32 0.0, %v4637
      %4639 = vdwg.mxu0
      %v4640 = vadd.f32 %v4525, %v4578
      %v4641 = vadd.f32 %v4526, %v4598
      %v4642 = vadd.f32 %v4527, %v4618
      %v4643 = vadd.f32 %v4528, %v4638
      %v4644 = vld [vmem:[%s750] ss:$8 sm:$0xf]
      %v4646 = vperm.slane %v4644, 0
      %v4647 = vperm.slane %v4644, 1
      %v4648 = vperm.slane %v4644, 2
      %v4649 = vperm.slane %v4644, 3
      %v4654 = vmul.f32 %v4169, %v4646
      %v4655 = vmul.f32 %v4170, %v4647
      %v4656 = vmul.f32 %v4171, %v4648
      %v4657 = vmul.f32 %v4172, %v4649
      %s4658 = scalar_lea.vmem %s3, 320
      %v4659 = vld [vmem:[%s4658] sm:$0xff]
      %v4661 = vsel %vm311, %v4659, 0
      %4663 = vmatpush.msra.mxu0 0.0
      %4664 = vmatpush.msra.mxu0 0.0
      %4665 = vmatpush.msra.mxu0 0.0
      %4666 = vmatpush.msra.mxu0 0.0
      %4667 = vmatpush.msra.mxu0 0.0
      %4668 = vmatpush.msra.mxu0 0.0
      %4669 = vmatpush.msra.mxu0 0.0
      %4670 = vmatpush.msra.mxu0 0.0
      %4671 = vmatpush.msra.mxu0 0.0
      %4672 = vmatpush.msra.mxu0 0.0
      %4673 = vmatpush.msra.mxu0 0.0
      %4674 = vmatpush.msra.mxu0 0.0
      %4675 = vmatpush.msra.mxu0 0.0
      %4676 = vmatpush.msra.mxu0 0.0
      %4677 = vmatpush.msra.mxu0 0.0
      %4678 = vmatpush.msra.mxu0 %v4654
      %4679 = vmatmul.f32.gmra.mxu0 %v4661
      %v4680 = vpop.f32.mrf.mxu0
      %v4681 = vadd.f32 0.0, %v4680
      %4682 = vdwg.mxu0
      %4683 = vmatpush.msra.mxu0 0.0
      %4684 = vmatpush.msra.mxu0 0.0
      %4685 = vmatpush.msra.mxu0 0.0
      %4686 = vmatpush.msra.mxu0 0.0
      %4687 = vmatpush.msra.mxu0 0.0
      %4688 = vmatpush.msra.mxu0 0.0
      %4689 = vmatpush.msra.mxu0 0.0
      %4690 = vmatpush.msra.mxu0 0.0
      %4691 = vmatpush.msra.mxu0 0.0
      %4692 = vmatpush.msra.mxu0 0.0
      %4693 = vmatpush.msra.mxu0 0.0
      %4694 = vmatpush.msra.mxu0 0.0
      %4695 = vmatpush.msra.mxu0 0.0
      %4696 = vmatpush.msra.mxu0 0.0
      %4697 = vmatpush.msra.mxu0 0.0
      %4698 = vmatpush.msra.mxu0 %v4655
      %4699 = vmatmul.f32.gmra.mxu0 %v4661
      %v4700 = vpop.f32.mrf.mxu0
      %v4701 = vadd.f32 0.0, %v4700
      %4702 = vdwg.mxu0
      %4703 = vmatpush.msra.mxu0 0.0
      %4704 = vmatpush.msra.mxu0 0.0
      %4705 = vmatpush.msra.mxu0 0.0
      %4706 = vmatpush.msra.mxu0 0.0
      %4707 = vmatpush.msra.mxu0 0.0
      %4708 = vmatpush.msra.mxu0 0.0
      %4709 = vmatpush.msra.mxu0 0.0
      %4710 = vmatpush.msra.mxu0 0.0
      %4711 = vmatpush.msra.mxu0 0.0
      %4712 = vmatpush.msra.mxu0 0.0
      %4713 = vmatpush.msra.mxu0 0.0
      %4714 = vmatpush.msra.mxu0 0.0
      %4715 = vmatpush.msra.mxu0 0.0
      %4716 = vmatpush.msra.mxu0 0.0
      %4717 = vmatpush.msra.mxu0 0.0
      %4718 = vmatpush.msra.mxu0 %v4656
      %4719 = vmatmul.f32.gmra.mxu0 %v4661
      %v4720 = vpop.f32.mrf.mxu0
      %v4721 = vadd.f32 0.0, %v4720
      %4722 = vdwg.mxu0
      %4723 = vmatpush.msra.mxu0 0.0
      %4724 = vmatpush.msra.mxu0 0.0
      %4725 = vmatpush.msra.mxu0 0.0
      %4726 = vmatpush.msra.mxu0 0.0
      %4727 = vmatpush.msra.mxu0 0.0
      %4728 = vmatpush.msra.mxu0 0.0
      %4729 = vmatpush.msra.mxu0 0.0
      %4730 = vmatpush.msra.mxu0 0.0
      %4731 = vmatpush.msra.mxu0 0.0
      %4732 = vmatpush.msra.mxu0 0.0
      %4733 = vmatpush.msra.mxu0 0.0
      %4734 = vmatpush.msra.mxu0 0.0
      %4735 = vmatpush.msra.mxu0 0.0
      %4736 = vmatpush.msra.mxu0 0.0
      %4737 = vmatpush.msra.mxu0 0.0
      %4738 = vmatpush.msra.mxu0 %v4657
      %4739 = vmatmul.f32.gmra.mxu0 %v4661
      %v4740 = vpop.f32.mrf.mxu0
      %v4741 = vadd.f32 0.0, %v4740
      %4742 = vdwg.mxu0
      %v4743 = vadd.f32 %v4640, %v4681
      %v4744 = vadd.f32 %v4641, %v4701
      %v4745 = vadd.f32 %v4642, %v4721
      %v4746 = vadd.f32 %v4643, %v4741
      %4747 = vrot.lane.b32.xlu0 %v4169, 127
      %v4748 = vpop.permute.xlu0 %4747
      %4749 = vrot.lane.b32.xlu0 %v4170, 127
      %v4750 = vpop.permute.xlu0 %4749
      %4751 = vrot.lane.b32.xlu0 %v4171, 127
      %v4752 = vpop.permute.xlu0 %4751
      %4753 = vrot.lane.b32.xlu0 %v4172, 127
      %v4754 = vpop.permute.xlu0 %4753
      %v4755 = vsel %vm862, %v4752, %v4754
      %v4756 = vsel %vm862, %v4750, %v4752
      %v4757 = vsel %vm862, %v4748, %v4750
      %v4758 = vsel %vm862, %v4754, %v4748
      %v4759 = vld [vmem:[%s867] ss:$8 sm:$0xf]
      %v4761 = vperm.slane %v4759, 0
      %v4762 = vperm.slane %v4759, 1
      %v4763 = vperm.slane %v4759, 2
      %v4764 = vperm.slane %v4759, 3
      %v4769 = vmul.f32 %v4757, %v4761
      %v4770 = vmul.f32 %v4756, %v4762
      %v4771 = vmul.f32 %v4755, %v4763
      %v4772 = vmul.f32 %v4758, %v4764
      %s4773 = scalar_lea.vmem %s3, 328
      %v4774 = vld [vmem:[%s4773] sm:$0xff]
      %v4776 = vsel %vm311, %v4774, 0
      %4778 = vmatpush.msra.mxu0 0.0
      %4779 = vmatpush.msra.mxu0 0.0
      %4780 = vmatpush.msra.mxu0 0.0
      %4781 = vmatpush.msra.mxu0 0.0
      %4782 = vmatpush.msra.mxu0 0.0
      %4783 = vmatpush.msra.mxu0 0.0
      %4784 = vmatpush.msra.mxu0 0.0
      %4785 = vmatpush.msra.mxu0 0.0
      %4786 = vmatpush.msra.mxu0 0.0
      %4787 = vmatpush.msra.mxu0 0.0
      %4788 = vmatpush.msra.mxu0 0.0
      %4789 = vmatpush.msra.mxu0 0.0
      %4790 = vmatpush.msra.mxu0 0.0
      %4791 = vmatpush.msra.mxu0 0.0
      %4792 = vmatpush.msra.mxu0 0.0
      %4793 = vmatpush.msra.mxu0 %v4769
      %4794 = vmatmul.f32.gmra.mxu0 %v4776
      %v4795 = vpop.f32.mrf.mxu0
      %v4796 = vadd.f32 0.0, %v4795
      %4797 = vdwg.mxu0
      %4798 = vmatpush.msra.mxu0 0.0
      %4799 = vmatpush.msra.mxu0 0.0
      %4800 = vmatpush.msra.mxu0 0.0
      %4801 = vmatpush.msra.mxu0 0.0
      %4802 = vmatpush.msra.mxu0 0.0
      %4803 = vmatpush.msra.mxu0 0.0
      %4804 = vmatpush.msra.mxu0 0.0
      %4805 = vmatpush.msra.mxu0 0.0
      %4806 = vmatpush.msra.mxu0 0.0
      %4807 = vmatpush.msra.mxu0 0.0
      %4808 = vmatpush.msra.mxu0 0.0
      %4809 = vmatpush.msra.mxu0 0.0
      %4810 = vmatpush.msra.mxu0 0.0
      %4811 = vmatpush.msra.mxu0 0.0
      %4812 = vmatpush.msra.mxu0 0.0
      %4813 = vmatpush.msra.mxu0 %v4770
      %4814 = vmatmul.f32.gmra.mxu0 %v4776
      %v4815 = vpop.f32.mrf.mxu0
      %v4816 = vadd.f32 0.0, %v4815
      %4817 = vdwg.mxu0
      %4818 = vmatpush.msra.mxu0 0.0
      %4819 = vmatpush.msra.mxu0 0.0
      %4820 = vmatpush.msra.mxu0 0.0
      %4821 = vmatpush.msra.mxu0 0.0
      %4822 = vmatpush.msra.mxu0 0.0
      %4823 = vmatpush.msra.mxu0 0.0
      %4824 = vmatpush.msra.mxu0 0.0
      %4825 = vmatpush.msra.mxu0 0.0
      %4826 = vmatpush.msra.mxu0 0.0
      %4827 = vmatpush.msra.mxu0 0.0
      %4828 = vmatpush.msra.mxu0 0.0
      %4829 = vmatpush.msra.mxu0 0.0
      %4830 = vmatpush.msra.mxu0 0.0
      %4831 = vmatpush.msra.mxu0 0.0
      %4832 = vmatpush.msra.mxu0 0.0
      %4833 = vmatpush.msra.mxu0 %v4771
      %4834 = vmatmul.f32.gmra.mxu0 %v4776
      %v4835 = vpop.f32.mrf.mxu0
      %v4836 = vadd.f32 0.0, %v4835
      %4837 = vdwg.mxu0
      %4838 = vmatpush.msra.mxu0 0.0
      %4839 = vmatpush.msra.mxu0 0.0
      %4840 = vmatpush.msra.mxu0 0.0
      %4841 = vmatpush.msra.mxu0 0.0
      %4842 = vmatpush.msra.mxu0 0.0
      %4843 = vmatpush.msra.mxu0 0.0
      %4844 = vmatpush.msra.mxu0 0.0
      %4845 = vmatpush.msra.mxu0 0.0
      %4846 = vmatpush.msra.mxu0 0.0
      %4847 = vmatpush.msra.mxu0 0.0
      %4848 = vmatpush.msra.mxu0 0.0
      %4849 = vmatpush.msra.mxu0 0.0
      %4850 = vmatpush.msra.mxu0 0.0
      %4851 = vmatpush.msra.mxu0 0.0
      %4852 = vmatpush.msra.mxu0 0.0
      %4853 = vmatpush.msra.mxu0 %v4772
      %4854 = vmatmul.f32.gmra.mxu0 %v4776
      %v4855 = vpop.f32.mrf.mxu0
      %v4856 = vadd.f32 0.0, %v4855
      %4857 = vdwg.mxu0
      %v4858 = vadd.f32 %v4743, %v4796
      %v4859 = vadd.f32 %v4744, %v4816
      %v4860 = vadd.f32 %v4745, %v4836
      %v4861 = vadd.f32 %v4746, %v4856
      %4862 = vrot.lane.b32.xlu0 %v4169, 113
      %v4863 = vpop.permute.xlu0 %4862
      %4864 = vrot.lane.b32.xlu0 %v4170, 113
      %v4865 = vpop.permute.xlu0 %4864
      %4866 = vrot.lane.b32.xlu0 %v4171, 113
      %v4867 = vpop.permute.xlu0 %4866
      %4868 = vrot.lane.b32.xlu0 %v4172, 113
      %v4869 = vpop.permute.xlu0 %4868
      %v4870 = vsel %vm979, %v4867, %v4869
      %v4871 = vsel %vm979, %v4865, %v4867
      %v4872 = vsel %vm979, %v4863, %v4865
      %v4873 = vsel %vm979, %v4869, %v4863
      %v4874 = vld [vmem:[%s984] ss:$8 sm:$0xf]
      %v4876 = vperm.slane %v4874, 0
      %v4877 = vperm.slane %v4874, 1
      %v4878 = vperm.slane %v4874, 2
      %v4879 = vperm.slane %v4874, 3
      %v4884 = vmul.f32 %v4872, %v4876
      %v4885 = vmul.f32 %v4871, %v4877
      %v4886 = vmul.f32 %v4870, %v4878
      %v4887 = vmul.f32 %v4873, %v4879
      %s4888 = scalar_lea.vmem %s3, 336
      %v4889 = vld [vmem:[%s4888] sm:$0xff]
      %v4891 = vsel %vm311, %v4889, 0
      %4893 = vmatpush.msra.mxu0 0.0
      %4894 = vmatpush.msra.mxu0 0.0
      %4895 = vmatpush.msra.mxu0 0.0
      %4896 = vmatpush.msra.mxu0 0.0
      %4897 = vmatpush.msra.mxu0 0.0
      %4898 = vmatpush.msra.mxu0 0.0
      %4899 = vmatpush.msra.mxu0 0.0
      %4900 = vmatpush.msra.mxu0 0.0
      %4901 = vmatpush.msra.mxu0 0.0
      %4902 = vmatpush.msra.mxu0 0.0
      %4903 = vmatpush.msra.mxu0 0.0
      %4904 = vmatpush.msra.mxu0 0.0
      %4905 = vmatpush.msra.mxu0 0.0
      %4906 = vmatpush.msra.mxu0 0.0
      %4907 = vmatpush.msra.mxu0 0.0
      %4908 = vmatpush.msra.mxu0 %v4884
      %4909 = vmatmul.f32.gmra.mxu0 %v4891
      %v4910 = vpop.f32.mrf.mxu0
      %v4911 = vadd.f32 0.0, %v4910
      %4912 = vdwg.mxu0
      %4913 = vmatpush.msra.mxu0 0.0
      %4914 = vmatpush.msra.mxu0 0.0
      %4915 = vmatpush.msra.mxu0 0.0
      %4916 = vmatpush.msra.mxu0 0.0
      %4917 = vmatpush.msra.mxu0 0.0
      %4918 = vmatpush.msra.mxu0 0.0
      %4919 = vmatpush.msra.mxu0 0.0
      %4920 = vmatpush.msra.mxu0 0.0
      %4921 = vmatpush.msra.mxu0 0.0
      %4922 = vmatpush.msra.mxu0 0.0
      %4923 = vmatpush.msra.mxu0 0.0
      %4924 = vmatpush.msra.mxu0 0.0
      %4925 = vmatpush.msra.mxu0 0.0
      %4926 = vmatpush.msra.mxu0 0.0
      %4927 = vmatpush.msra.mxu0 0.0
      %4928 = vmatpush.msra.mxu0 %v4885
      %4929 = vmatmul.f32.gmra.mxu0 %v4891
      %v4930 = vpop.f32.mrf.mxu0
      %v4931 = vadd.f32 0.0, %v4930
      %4932 = vdwg.mxu0
      %4933 = vmatpush.msra.mxu0 0.0
      %4934 = vmatpush.msra.mxu0 0.0
      %4935 = vmatpush.msra.mxu0 0.0
      %4936 = vmatpush.msra.mxu0 0.0
      %4937 = vmatpush.msra.mxu0 0.0
      %4938 = vmatpush.msra.mxu0 0.0
      %4939 = vmatpush.msra.mxu0 0.0
      %4940 = vmatpush.msra.mxu0 0.0
      %4941 = vmatpush.msra.mxu0 0.0
      %4942 = vmatpush.msra.mxu0 0.0
      %4943 = vmatpush.msra.mxu0 0.0
      %4944 = vmatpush.msra.mxu0 0.0
      %4945 = vmatpush.msra.mxu0 0.0
      %4946 = vmatpush.msra.mxu0 0.0
      %4947 = vmatpush.msra.mxu0 0.0
      %4948 = vmatpush.msra.mxu0 %v4886
      %4949 = vmatmul.f32.gmra.mxu0 %v4891
      %v4950 = vpop.f32.mrf.mxu0
      %v4951 = vadd.f32 0.0, %v4950
      %4952 = vdwg.mxu0
      %4953 = vmatpush.msra.mxu0 0.0
      %4954 = vmatpush.msra.mxu0 0.0
      %4955 = vmatpush.msra.mxu0 0.0
      %4956 = vmatpush.msra.mxu0 0.0
      %4957 = vmatpush.msra.mxu0 0.0
      %4958 = vmatpush.msra.mxu0 0.0
      %4959 = vmatpush.msra.mxu0 0.0
      %4960 = vmatpush.msra.mxu0 0.0
      %4961 = vmatpush.msra.mxu0 0.0
      %4962 = vmatpush.msra.mxu0 0.0
      %4963 = vmatpush.msra.mxu0 0.0
      %4964 = vmatpush.msra.mxu0 0.0
      %4965 = vmatpush.msra.mxu0 0.0
      %4966 = vmatpush.msra.mxu0 0.0
      %4967 = vmatpush.msra.mxu0 0.0
      %4968 = vmatpush.msra.mxu0 %v4887
      %4969 = vmatmul.f32.gmra.mxu0 %v4891
      %v4970 = vpop.f32.mrf.mxu0
      %v4971 = vadd.f32 0.0, %v4970
      %4972 = vdwg.mxu0
      %v4973 = vadd.f32 %v4858, %v4911
      %v4974 = vadd.f32 %v4859, %v4931
      %v4975 = vadd.f32 %v4860, %v4951
      %v4976 = vadd.f32 %v4861, %v4971
      %4977 = vrot.lane.b32.xlu0 %v4169, 112
      %v4978 = vpop.permute.xlu0 %4977
      %4979 = vrot.lane.b32.xlu0 %v4170, 112
      %v4980 = vpop.permute.xlu0 %4979
      %4981 = vrot.lane.b32.xlu0 %v4171, 112
      %v4982 = vpop.permute.xlu0 %4981
      %4983 = vrot.lane.b32.xlu0 %v4172, 112
      %v4984 = vpop.permute.xlu0 %4983
      %v4985 = vsel %vm1096, %v4982, %v4984
      %v4986 = vsel %vm1096, %v4980, %v4982
      %v4987 = vsel %vm1096, %v4978, %v4980
      %v4988 = vsel %vm1096, %v4984, %v4978
      %v4989 = vld [vmem:[%s1101] ss:$8 sm:$0xf]
      %v4991 = vperm.slane %v4989, 0
      %v4992 = vperm.slane %v4989, 1
      %v4993 = vperm.slane %v4989, 2
      %v4994 = vperm.slane %v4989, 3
      %v4999 = vmul.f32 %v4987, %v4991
      %v5000 = vmul.f32 %v4986, %v4992
      %v5001 = vmul.f32 %v4985, %v4993
      %v5002 = vmul.f32 %v4988, %v4994
      %s5003 = scalar_lea.vmem %s3, 344
      %v5004 = vld [vmem:[%s5003] sm:$0xff]
      %v5006 = vsel %vm311, %v5004, 0
      %5008 = vmatpush.msra.mxu0 0.0
      %5009 = vmatpush.msra.mxu0 0.0
      %5010 = vmatpush.msra.mxu0 0.0
      %5011 = vmatpush.msra.mxu0 0.0
      %5012 = vmatpush.msra.mxu0 0.0
      %5013 = vmatpush.msra.mxu0 0.0
      %5014 = vmatpush.msra.mxu0 0.0
      %5015 = vmatpush.msra.mxu0 0.0
      %5016 = vmatpush.msra.mxu0 0.0
      %5017 = vmatpush.msra.mxu0 0.0
      %5018 = vmatpush.msra.mxu0 0.0
      %5019 = vmatpush.msra.mxu0 0.0
      %5020 = vmatpush.msra.mxu0 0.0
      %5021 = vmatpush.msra.mxu0 0.0
      %5022 = vmatpush.msra.mxu0 0.0
      %5023 = vmatpush.msra.mxu0 %v4999
      %5024 = vmatmul.f32.gmra.mxu0 %v5006
      %v5025 = vpop.f32.mrf.mxu0
      %v5026 = vadd.f32 0.0, %v5025
      %5027 = vdwg.mxu0
      %5028 = vmatpush.msra.mxu0 0.0
      %5029 = vmatpush.msra.mxu0 0.0
      %5030 = vmatpush.msra.mxu0 0.0
      %5031 = vmatpush.msra.mxu0 0.0
      %5032 = vmatpush.msra.mxu0 0.0
      %5033 = vmatpush.msra.mxu0 0.0
      %5034 = vmatpush.msra.mxu0 0.0
      %5035 = vmatpush.msra.mxu0 0.0
      %5036 = vmatpush.msra.mxu0 0.0
      %5037 = vmatpush.msra.mxu0 0.0
      %5038 = vmatpush.msra.mxu0 0.0
      %5039 = vmatpush.msra.mxu0 0.0
      %5040 = vmatpush.msra.mxu0 0.0
      %5041 = vmatpush.msra.mxu0 0.0
      %5042 = vmatpush.msra.mxu0 0.0
      %5043 = vmatpush.msra.mxu0 %v5000
      %5044 = vmatmul.f32.gmra.mxu0 %v5006
      %v5045 = vpop.f32.mrf.mxu0
      %v5046 = vadd.f32 0.0, %v5045
      %5047 = vdwg.mxu0
      %5048 = vmatpush.msra.mxu0 0.0
      %5049 = vmatpush.msra.mxu0 0.0
      %5050 = vmatpush.msra.mxu0 0.0
      %5051 = vmatpush.msra.mxu0 0.0
      %5052 = vmatpush.msra.mxu0 0.0
      %5053 = vmatpush.msra.mxu0 0.0
      %5054 = vmatpush.msra.mxu0 0.0
      %5055 = vmatpush.msra.mxu0 0.0
      %5056 = vmatpush.msra.mxu0 0.0
      %5057 = vmatpush.msra.mxu0 0.0
      %5058 = vmatpush.msra.mxu0 0.0
      %5059 = vmatpush.msra.mxu0 0.0
      %5060 = vmatpush.msra.mxu0 0.0
      %5061 = vmatpush.msra.mxu0 0.0
      %5062 = vmatpush.msra.mxu0 0.0
      %5063 = vmatpush.msra.mxu0 %v5001
      %5064 = vmatmul.f32.gmra.mxu0 %v5006
      %v5065 = vpop.f32.mrf.mxu0
      %v5066 = vadd.f32 0.0, %v5065
      %5067 = vdwg.mxu0
      %5068 = vmatpush.msra.mxu0 0.0
      %5069 = vmatpush.msra.mxu0 0.0
      %5070 = vmatpush.msra.mxu0 0.0
      %5071 = vmatpush.msra.mxu0 0.0
      %5072 = vmatpush.msra.mxu0 0.0
      %5073 = vmatpush.msra.mxu0 0.0
      %5074 = vmatpush.msra.mxu0 0.0
      %5075 = vmatpush.msra.mxu0 0.0
      %5076 = vmatpush.msra.mxu0 0.0
      %5077 = vmatpush.msra.mxu0 0.0
      %5078 = vmatpush.msra.mxu0 0.0
      %5079 = vmatpush.msra.mxu0 0.0
      %5080 = vmatpush.msra.mxu0 0.0
      %5081 = vmatpush.msra.mxu0 0.0
      %5082 = vmatpush.msra.mxu0 0.0
      %5083 = vmatpush.msra.mxu0 %v5002
      %5084 = vmatmul.f32.gmra.mxu0 %v5006
      %v5085 = vpop.f32.mrf.mxu0
      %v5086 = vadd.f32 0.0, %v5085
      %5087 = vdwg.mxu0
      %v5088 = vadd.f32 %v4973, %v5026
      %v5089 = vadd.f32 %v4974, %v5046
      %v5090 = vadd.f32 %v4975, %v5066
      %v5091 = vadd.f32 %v4976, %v5086
      %5092 = vrot.lane.b32.xlu0 %v4169, 111
      %v5093 = vpop.permute.xlu0 %5092
      %5094 = vrot.lane.b32.xlu0 %v4170, 111
      %v5095 = vpop.permute.xlu0 %5094
      %5096 = vrot.lane.b32.xlu0 %v4171, 111
      %v5097 = vpop.permute.xlu0 %5096
      %5098 = vrot.lane.b32.xlu0 %v4172, 111
      %v5099 = vpop.permute.xlu0 %5098
      %v5100 = vsel %vm1213, %v5097, %v5099
      %v5101 = vsel %vm1213, %v5095, %v5097
      %v5102 = vsel %vm1213, %v5093, %v5095
      %v5103 = vsel %vm1213, %v5099, %v5093
      %v5104 = vld [vmem:[%s1218] ss:$8 sm:$0xf]
      %v5106 = vperm.slane %v5104, 0
      %v5107 = vperm.slane %v5104, 1
      %v5108 = vperm.slane %v5104, 2
      %v5109 = vperm.slane %v5104, 3
      %v5114 = vmul.f32 %v5102, %v5106
      %v5115 = vmul.f32 %v5101, %v5107
      %v5116 = vmul.f32 %v5100, %v5108
      %v5117 = vmul.f32 %v5103, %v5109
      %s5118 = scalar_lea.vmem %s3, 352
      %v5119 = vld [vmem:[%s5118] sm:$0xff]
      %v5121 = vsel %vm311, %v5119, 0
      %5123 = vmatpush.msra.mxu0 0.0
      %5124 = vmatpush.msra.mxu0 0.0
      %5125 = vmatpush.msra.mxu0 0.0
      %5126 = vmatpush.msra.mxu0 0.0
      %5127 = vmatpush.msra.mxu0 0.0
      %5128 = vmatpush.msra.mxu0 0.0
      %5129 = vmatpush.msra.mxu0 0.0
      %5130 = vmatpush.msra.mxu0 0.0
      %5131 = vmatpush.msra.mxu0 0.0
      %5132 = vmatpush.msra.mxu0 0.0
      %5133 = vmatpush.msra.mxu0 0.0
      %5134 = vmatpush.msra.mxu0 0.0
      %5135 = vmatpush.msra.mxu0 0.0
      %5136 = vmatpush.msra.mxu0 0.0
      %5137 = vmatpush.msra.mxu0 0.0
      %5138 = vmatpush.msra.mxu0 %v5114
      %5139 = vmatmul.f32.gmra.mxu0 %v5121
      %v5140 = vpop.f32.mrf.mxu0
      %v5141 = vadd.f32 0.0, %v5140
      %5142 = vdwg.mxu0
      %5143 = vmatpush.msra.mxu0 0.0
      %5144 = vmatpush.msra.mxu0 0.0
      %5145 = vmatpush.msra.mxu0 0.0
      %5146 = vmatpush.msra.mxu0 0.0
      %5147 = vmatpush.msra.mxu0 0.0
      %5148 = vmatpush.msra.mxu0 0.0
      %5149 = vmatpush.msra.mxu0 0.0
      %5150 = vmatpush.msra.mxu0 0.0
      %5151 = vmatpush.msra.mxu0 0.0
      %5152 = vmatpush.msra.mxu0 0.0
      %5153 = vmatpush.msra.mxu0 0.0
      %5154 = vmatpush.msra.mxu0 0.0
      %5155 = vmatpush.msra.mxu0 0.0
      %5156 = vmatpush.msra.mxu0 0.0
      %5157 = vmatpush.msra.mxu0 0.0
      %5158 = vmatpush.msra.mxu0 %v5115
      %5159 = vmatmul.f32.gmra.mxu0 %v5121
      %v5160 = vpop.f32.mrf.mxu0
      %v5161 = vadd.f32 0.0, %v5160
      %5162 = vdwg.mxu0
      %5163 = vmatpush.msra.mxu0 0.0
      %5164 = vmatpush.msra.mxu0 0.0
      %5165 = vmatpush.msra.mxu0 0.0
      %5166 = vmatpush.msra.mxu0 0.0
      %5167 = vmatpush.msra.mxu0 0.0
      %5168 = vmatpush.msra.mxu0 0.0
      %5169 = vmatpush.msra.mxu0 0.0
      %5170 = vmatpush.msra.mxu0 0.0
      %5171 = vmatpush.msra.mxu0 0.0
      %5172 = vmatpush.msra.mxu0 0.0
      %5173 = vmatpush.msra.mxu0 0.0
      %5174 = vmatpush.msra.mxu0 0.0
      %5175 = vmatpush.msra.mxu0 0.0
      %5176 = vmatpush.msra.mxu0 0.0
      %5177 = vmatpush.msra.mxu0 0.0
      %5178 = vmatpush.msra.mxu0 %v5116
      %5179 = vmatmul.f32.gmra.mxu0 %v5121
      %v5180 = vpop.f32.mrf.mxu0
      %v5181 = vadd.f32 0.0, %v5180
      %5182 = vdwg.mxu0
      %5183 = vmatpush.msra.mxu0 0.0
      %5184 = vmatpush.msra.mxu0 0.0
      %5185 = vmatpush.msra.mxu0 0.0
      %5186 = vmatpush.msra.mxu0 0.0
      %5187 = vmatpush.msra.mxu0 0.0
      %5188 = vmatpush.msra.mxu0 0.0
      %5189 = vmatpush.msra.mxu0 0.0
      %5190 = vmatpush.msra.mxu0 0.0
      %5191 = vmatpush.msra.mxu0 0.0
      %5192 = vmatpush.msra.mxu0 0.0
      %5193 = vmatpush.msra.mxu0 0.0
      %5194 = vmatpush.msra.mxu0 0.0
      %5195 = vmatpush.msra.mxu0 0.0
      %5196 = vmatpush.msra.mxu0 0.0
      %5197 = vmatpush.msra.mxu0 0.0
      %5198 = vmatpush.msra.mxu0 %v5117
      %5199 = vmatmul.f32.gmra.mxu0 %v5121
      %v5200 = vpop.f32.mrf.mxu0
      %v5201 = vadd.f32 0.0, %v5200
      %5202 = vdwg.mxu0
      %v5203 = vadd.f32 %v5088, %v5141
      %v5204 = vadd.f32 %v5089, %v5161
      %v5205 = vadd.f32 %v5090, %v5181
      %v5206 = vadd.f32 %v5091, %v5201
      %v5207 = vmax.f32 %v5203, 0.0
      %v5208 = vmax.f32 %v5204, 0.0
      %v5209 = vmax.f32 %v5205, 0.0
      %v5210 = vmax.f32 %v5206, 0.0
      %s5211 = scalar_lea.vmem %s4, 40
      %v5212 = vld [vmem:[%s5211] sm:$0xff]
      %5214 = vset.pattern.permute.xlu0 0
      %5215 = vperm.xlu0 %5214, %v5212
      %v5216 = vpop.permute.xlu0 %5215
      %5218 = vrot.lane.b32.xlu0 %v5207, 17
      %v5219 = vpop.permute.xlu0 %5218
      %5220 = vrot.lane.b32.xlu0 %v5208, 17
      %v5221 = vpop.permute.xlu0 %5220
      %5222 = vrot.lane.b32.xlu0 %v5209, 17
      %v5223 = vpop.permute.xlu0 %5222
      %5224 = vrot.lane.b32.xlu0 %v5210, 17
      %v5225 = vpop.permute.xlu0 %5224
      %v5226 = vsel %vm291, %v5223, %v5225
      %v5227 = vsel %vm291, %v5221, %v5223
      %v5228 = vsel %vm291, %v5219, %v5221
      %v5229 = vsel %vm291, %v5225, %v5219
      %v5230 = vmul.f32 %v5229, %v4198
      %v5231 = vmul.f32 %v5228, %v4199
      %v5232 = vmul.f32 %v5227, %v4200
      %v5233 = vmul.f32 %v5226, %v4201
      %s5234 = scalar_lea.vmem %s3, 360
      %v5235 = vld [vmem:[%s5234] sm:$0xff]
      %v5237 = vsel %vm311, %v5235, 0
      %5239 = vmatpush.msra.mxu0 0.0
      %5240 = vmatpush.msra.mxu0 0.0
      %5241 = vmatpush.msra.mxu0 0.0
      %5242 = vmatpush.msra.mxu0 0.0
      %5243 = vmatpush.msra.mxu0 0.0
      %5244 = vmatpush.msra.mxu0 0.0
      %5245 = vmatpush.msra.mxu0 0.0
      %5246 = vmatpush.msra.mxu0 0.0
      %5247 = vmatpush.msra.mxu0 0.0
      %5248 = vmatpush.msra.mxu0 0.0
      %5249 = vmatpush.msra.mxu0 0.0
      %5250 = vmatpush.msra.mxu0 0.0
      %5251 = vmatpush.msra.mxu0 0.0
      %5252 = vmatpush.msra.mxu0 0.0
      %5253 = vmatpush.msra.mxu0 0.0
      %5254 = vmatpush.msra.mxu0 %v5230
      %5255 = vmatmul.f32.gmra.mxu0 %v5237
      %v5256 = vpop.f32.mrf.mxu0
      %v5257 = vadd.f32 0.0, %v5256
      %5258 = vdwg.mxu0
      %5259 = vmatpush.msra.mxu0 0.0
      %5260 = vmatpush.msra.mxu0 0.0
      %5261 = vmatpush.msra.mxu0 0.0
      %5262 = vmatpush.msra.mxu0 0.0
      %5263 = vmatpush.msra.mxu0 0.0
      %5264 = vmatpush.msra.mxu0 0.0
      %5265 = vmatpush.msra.mxu0 0.0
      %5266 = vmatpush.msra.mxu0 0.0
      %5267 = vmatpush.msra.mxu0 0.0
      %5268 = vmatpush.msra.mxu0 0.0
      %5269 = vmatpush.msra.mxu0 0.0
      %5270 = vmatpush.msra.mxu0 0.0
      %5271 = vmatpush.msra.mxu0 0.0
      %5272 = vmatpush.msra.mxu0 0.0
      %5273 = vmatpush.msra.mxu0 0.0
      %5274 = vmatpush.msra.mxu0 %v5231
      %5275 = vmatmul.f32.gmra.mxu0 %v5237
      %v5276 = vpop.f32.mrf.mxu0
      %v5277 = vadd.f32 0.0, %v5276
      %5278 = vdwg.mxu0
      %5279 = vmatpush.msra.mxu0 0.0
      %5280 = vmatpush.msra.mxu0 0.0
      %5281 = vmatpush.msra.mxu0 0.0
      %5282 = vmatpush.msra.mxu0 0.0
      %5283 = vmatpush.msra.mxu0 0.0
      %5284 = vmatpush.msra.mxu0 0.0
      %5285 = vmatpush.msra.mxu0 0.0
      %5286 = vmatpush.msra.mxu0 0.0
      %5287 = vmatpush.msra.mxu0 0.0
      %5288 = vmatpush.msra.mxu0 0.0
      %5289 = vmatpush.msra.mxu0 0.0
      %5290 = vmatpush.msra.mxu0 0.0
      %5291 = vmatpush.msra.mxu0 0.0
      %5292 = vmatpush.msra.mxu0 0.0
      %5293 = vmatpush.msra.mxu0 0.0
      %5294 = vmatpush.msra.mxu0 %v5232
      %5295 = vmatmul.f32.gmra.mxu0 %v5237
      %v5296 = vpop.f32.mrf.mxu0
      %v5297 = vadd.f32 0.0, %v5296
      %5298 = vdwg.mxu0
      %5299 = vmatpush.msra.mxu0 0.0
      %5300 = vmatpush.msra.mxu0 0.0
      %5301 = vmatpush.msra.mxu0 0.0
      %5302 = vmatpush.msra.mxu0 0.0
      %5303 = vmatpush.msra.mxu0 0.0
      %5304 = vmatpush.msra.mxu0 0.0
      %5305 = vmatpush.msra.mxu0 0.0
      %5306 = vmatpush.msra.mxu0 0.0
      %5307 = vmatpush.msra.mxu0 0.0
      %5308 = vmatpush.msra.mxu0 0.0
      %5309 = vmatpush.msra.mxu0 0.0
      %5310 = vmatpush.msra.mxu0 0.0
      %5311 = vmatpush.msra.mxu0 0.0
      %5312 = vmatpush.msra.mxu0 0.0
      %5313 = vmatpush.msra.mxu0 0.0
      %5314 = vmatpush.msra.mxu0 %v5233
      %5315 = vmatmul.f32.gmra.mxu0 %v5237
      %v5316 = vpop.f32.mrf.mxu0
      %v5317 = vadd.f32 0.0, %v5316
      %5318 = vdwg.mxu0
      %v5319 = vadd.f32 %v5216, %v5257
      %v5320 = vadd.f32 %v5216, %v5277
      %v5321 = vadd.f32 %v5216, %v5297
      %v5322 = vadd.f32 %v5216, %v5317
      %5323 = vrot.lane.b32.xlu0 %v5207, 16
      %v5324 = vpop.permute.xlu0 %5323
      %5325 = vrot.lane.b32.xlu0 %v5208, 16
      %v5326 = vpop.permute.xlu0 %5325
      %5327 = vrot.lane.b32.xlu0 %v5209, 16
      %v5328 = vpop.permute.xlu0 %5327
      %5329 = vrot.lane.b32.xlu0 %v5210, 16
      %v5330 = vpop.permute.xlu0 %5329
      %v5331 = vsel %vm407, %v5328, %v5330
      %v5332 = vsel %vm407, %v5326, %v5328
      %v5333 = vsel %vm407, %v5324, %v5326
      %v5334 = vsel %vm407, %v5330, %v5324
      %v5335 = vmul.f32 %v5334, %v4313
      %v5336 = vmul.f32 %v5333, %v4314
      %v5337 = vmul.f32 %v5332, %v4315
      %v5338 = vmul.f32 %v5331, %v4316
      %s5339 = scalar_lea.vmem %s3, 368
      %v5340 = vld [vmem:[%s5339] sm:$0xff]
      %v5342 = vsel %vm311, %v5340, 0
      %5344 = vmatpush.msra.mxu0 0.0
      %5345 = vmatpush.msra.mxu0 0.0
      %5346 = vmatpush.msra.mxu0 0.0
      %5347 = vmatpush.msra.mxu0 0.0
      %5348 = vmatpush.msra.mxu0 0.0
      %5349 = vmatpush.msra.mxu0 0.0
      %5350 = vmatpush.msra.mxu0 0.0
      %5351 = vmatpush.msra.mxu0 0.0
      %5352 = vmatpush.msra.mxu0 0.0
      %5353 = vmatpush.msra.mxu0 0.0
      %5354 = vmatpush.msra.mxu0 0.0
      %5355 = vmatpush.msra.mxu0 0.0
      %5356 = vmatpush.msra.mxu0 0.0
      %5357 = vmatpush.msra.mxu0 0.0
      %5358 = vmatpush.msra.mxu0 0.0
      %5359 = vmatpush.msra.mxu0 %v5335
      %5360 = vmatmul.f32.gmra.mxu0 %v5342
      %v5361 = vpop.f32.mrf.mxu0
      %v5362 = vadd.f32 0.0, %v5361
      %5363 = vdwg.mxu0
      %5364 = vmatpush.msra.mxu0 0.0
      %5365 = vmatpush.msra.mxu0 0.0
      %5366 = vmatpush.msra.mxu0 0.0
      %5367 = vmatpush.msra.mxu0 0.0
      %5368 = vmatpush.msra.mxu0 0.0
      %5369 = vmatpush.msra.mxu0 0.0
      %5370 = vmatpush.msra.mxu0 0.0
      %5371 = vmatpush.msra.mxu0 0.0
      %5372 = vmatpush.msra.mxu0 0.0
      %5373 = vmatpush.msra.mxu0 0.0
      %5374 = vmatpush.msra.mxu0 0.0
      %5375 = vmatpush.msra.mxu0 0.0
      %5376 = vmatpush.msra.mxu0 0.0
      %5377 = vmatpush.msra.mxu0 0.0
      %5378 = vmatpush.msra.mxu0 0.0
      %5379 = vmatpush.msra.mxu0 %v5336
      %5380 = vmatmul.f32.gmra.mxu0 %v5342
      %v5381 = vpop.f32.mrf.mxu0
      %v5382 = vadd.f32 0.0, %v5381
      %5383 = vdwg.mxu0
      %5384 = vmatpush.msra.mxu0 0.0
      %5385 = vmatpush.msra.mxu0 0.0
      %5386 = vmatpush.msra.mxu0 0.0
      %5387 = vmatpush.msra.mxu0 0.0
      %5388 = vmatpush.msra.mxu0 0.0
      %5389 = vmatpush.msra.mxu0 0.0
      %5390 = vmatpush.msra.mxu0 0.0
      %5391 = vmatpush.msra.mxu0 0.0
      %5392 = vmatpush.msra.mxu0 0.0
      %5393 = vmatpush.msra.mxu0 0.0
      %5394 = vmatpush.msra.mxu0 0.0
      %5395 = vmatpush.msra.mxu0 0.0
      %5396 = vmatpush.msra.mxu0 0.0
      %5397 = vmatpush.msra.mxu0 0.0
      %5398 = vmatpush.msra.mxu0 0.0
      %5399 = vmatpush.msra.mxu0 %v5337
      %5400 = vmatmul.f32.gmra.mxu0 %v5342
      %v5401 = vpop.f32.mrf.mxu0
      %v5402 = vadd.f32 0.0, %v5401
      %5403 = vdwg.mxu0
      %5404 = vmatpush.msra.mxu0 0.0
      %5405 = vmatpush.msra.mxu0 0.0
      %5406 = vmatpush.msra.mxu0 0.0
      %5407 = vmatpush.msra.mxu0 0.0
      %5408 = vmatpush.msra.mxu0 0.0
      %5409 = vmatpush.msra.mxu0 0.0
      %5410 = vmatpush.msra.mxu0 0.0
      %5411 = vmatpush.msra.mxu0 0.0
      %5412 = vmatpush.msra.mxu0 0.0
      %5413 = vmatpush.msra.mxu0 0.0
      %5414 = vmatpush.msra.mxu0 0.0
      %5415 = vmatpush.msra.mxu0 0.0
      %5416 = vmatpush.msra.mxu0 0.0
      %5417 = vmatpush.msra.mxu0 0.0
      %5418 = vmatpush.msra.mxu0 0.0
      %5419 = vmatpush.msra.mxu0 %v5338
      %5420 = vmatmul.f32.gmra.mxu0 %v5342
      %v5421 = vpop.f32.mrf.mxu0
      %v5422 = vadd.f32 0.0, %v5421
      %5423 = vdwg.mxu0
      %v5424 = vadd.f32 %v5319, %v5362
      %v5425 = vadd.f32 %v5320, %v5382
      %v5426 = vadd.f32 %v5321, %v5402
      %v5427 = vadd.f32 %v5322, %v5422
      %5428 = vrot.lane.b32.xlu0 %v5207, 15
      %v5429 = vpop.permute.xlu0 %5428
      %5430 = vrot.lane.b32.xlu0 %v5208, 15
      %v5431 = vpop.permute.xlu0 %5430
      %5432 = vrot.lane.b32.xlu0 %v5209, 15
      %v5433 = vpop.permute.xlu0 %5432
      %5434 = vrot.lane.b32.xlu0 %v5210, 15
      %v5435 = vpop.permute.xlu0 %5434
      %v5436 = vsel %vm524, %v5433, %v5435
      %v5437 = vsel %vm524, %v5431, %v5433
      %v5438 = vsel %vm524, %v5429, %v5431
      %v5439 = vsel %vm524, %v5435, %v5429
      %v5440 = vmul.f32 %v5439, %v4428
      %v5441 = vmul.f32 %v5438, %v4429
      %v5442 = vmul.f32 %v5437, %v4430
      %v5443 = vmul.f32 %v5436, %v4431
      %s5444 = scalar_lea.vmem %s3, 376
      %v5445 = vld [vmem:[%s5444] sm:$0xff]
      %v5447 = vsel %vm311, %v5445, 0
      %5449 = vmatpush.msra.mxu0 0.0
      %5450 = vmatpush.msra.mxu0 0.0
      %5451 = vmatpush.msra.mxu0 0.0
      %5452 = vmatpush.msra.mxu0 0.0
      %5453 = vmatpush.msra.mxu0 0.0
      %5454 = vmatpush.msra.mxu0 0.0
      %5455 = vmatpush.msra.mxu0 0.0
      %5456 = vmatpush.msra.mxu0 0.0
      %5457 = vmatpush.msra.mxu0 0.0
      %5458 = vmatpush.msra.mxu0 0.0
      %5459 = vmatpush.msra.mxu0 0.0
      %5460 = vmatpush.msra.mxu0 0.0
      %5461 = vmatpush.msra.mxu0 0.0
      %5462 = vmatpush.msra.mxu0 0.0
      %5463 = vmatpush.msra.mxu0 0.0
      %5464 = vmatpush.msra.mxu0 %v5440
      %5465 = vmatmul.f32.gmra.mxu0 %v5447
      %v5466 = vpop.f32.mrf.mxu0
      %v5467 = vadd.f32 0.0, %v5466
      %5468 = vdwg.mxu0
      %5469 = vmatpush.msra.mxu0 0.0
      %5470 = vmatpush.msra.mxu0 0.0
      %5471 = vmatpush.msra.mxu0 0.0
      %5472 = vmatpush.msra.mxu0 0.0
      %5473 = vmatpush.msra.mxu0 0.0
      %5474 = vmatpush.msra.mxu0 0.0
      %5475 = vmatpush.msra.mxu0 0.0
      %5476 = vmatpush.msra.mxu0 0.0
      %5477 = vmatpush.msra.mxu0 0.0
      %5478 = vmatpush.msra.mxu0 0.0
      %5479 = vmatpush.msra.mxu0 0.0
      %5480 = vmatpush.msra.mxu0 0.0
      %5481 = vmatpush.msra.mxu0 0.0
      %5482 = vmatpush.msra.mxu0 0.0
      %5483 = vmatpush.msra.mxu0 0.0
      %5484 = vmatpush.msra.mxu0 %v5441
      %5485 = vmatmul.f32.gmra.mxu0 %v5447
      %v5486 = vpop.f32.mrf.mxu0
      %v5487 = vadd.f32 0.0, %v5486
      %5488 = vdwg.mxu0
      %5489 = vmatpush.msra.mxu0 0.0
      %5490 = vmatpush.msra.mxu0 0.0
      %5491 = vmatpush.msra.mxu0 0.0
      %5492 = vmatpush.msra.mxu0 0.0
      %5493 = vmatpush.msra.mxu0 0.0
      %5494 = vmatpush.msra.mxu0 0.0
      %5495 = vmatpush.msra.mxu0 0.0
      %5496 = vmatpush.msra.mxu0 0.0
      %5497 = vmatpush.msra.mxu0 0.0
      %5498 = vmatpush.msra.mxu0 0.0
      %5499 = vmatpush.msra.mxu0 0.0
      %5500 = vmatpush.msra.mxu0 0.0
      %5501 = vmatpush.msra.mxu0 0.0
      %5502 = vmatpush.msra.mxu0 0.0
      %5503 = vmatpush.msra.mxu0 0.0
      %5504 = vmatpush.msra.mxu0 %v5442
      %5505 = vmatmul.f32.gmra.mxu0 %v5447
      %v5506 = vpop.f32.mrf.mxu0
      %v5507 = vadd.f32 0.0, %v5506
      %5508 = vdwg.mxu0
      %5509 = vmatpush.msra.mxu0 0.0
      %5510 = vmatpush.msra.mxu0 0.0
      %5511 = vmatpush.msra.mxu0 0.0
      %5512 = vmatpush.msra.mxu0 0.0
      %5513 = vmatpush.msra.mxu0 0.0
      %5514 = vmatpush.msra.mxu0 0.0
      %5515 = vmatpush.msra.mxu0 0.0
      %5516 = vmatpush.msra.mxu0 0.0
      %5517 = vmatpush.msra.mxu0 0.0
      %5518 = vmatpush.msra.mxu0 0.0
      %5519 = vmatpush.msra.mxu0 0.0
      %5520 = vmatpush.msra.mxu0 0.0
      %5521 = vmatpush.msra.mxu0 0.0
      %5522 = vmatpush.msra.mxu0 0.0
      %5523 = vmatpush.msra.mxu0 0.0
      %5524 = vmatpush.msra.mxu0 %v5443
      %5525 = vmatmul.f32.gmra.mxu0 %v5447
      %v5526 = vpop.f32.mrf.mxu0
      %v5527 = vadd.f32 0.0, %v5526
      %5528 = vdwg.mxu0
      %v5529 = vadd.f32 %v5424, %v5467
      %v5530 = vadd.f32 %v5425, %v5487
      %v5531 = vadd.f32 %v5426, %v5507
      %v5532 = vadd.f32 %v5427, %v5527
      %5533 = vrot.lane.b32.xlu0 %v5207, 1
      %v5534 = vpop.permute.xlu0 %5533
      %5535 = vrot.lane.b32.xlu0 %v5208, 1
      %v5536 = vpop.permute.xlu0 %5535
      %5537 = vrot.lane.b32.xlu0 %v5209, 1
      %v5538 = vpop.permute.xlu0 %5537
      %5539 = vrot.lane.b32.xlu0 %v5210, 1
      %v5540 = vpop.permute.xlu0 %5539
      %v5541 = vsel %vm641, %v5538, %v5540
      %v5542 = vsel %vm641, %v5536, %v5538
      %v5543 = vsel %vm641, %v5534, %v5536
      %v5544 = vsel %vm641, %v5540, %v5534
      %v5545 = vmul.f32 %v5544, %v4543
      %v5546 = vmul.f32 %v5543, %v4544
      %v5547 = vmul.f32 %v5542, %v4545
      %v5548 = vmul.f32 %v5541, %v4546
      %s5549 = scalar_lea.vmem %s3, 384
      %v5550 = vld [vmem:[%s5549] sm:$0xff]
      %v5552 = vsel %vm311, %v5550, 0
      %5554 = vmatpush.msra.mxu0 0.0
      %5555 = vmatpush.msra.mxu0 0.0
      %5556 = vmatpush.msra.mxu0 0.0
      %5557 = vmatpush.msra.mxu0 0.0
      %5558 = vmatpush.msra.mxu0 0.0
      %5559 = vmatpush.msra.mxu0 0.0
      %5560 = vmatpush.msra.mxu0 0.0
      %5561 = vmatpush.msra.mxu0 0.0
      %5562 = vmatpush.msra.mxu0 0.0
      %5563 = vmatpush.msra.mxu0 0.0
      %5564 = vmatpush.msra.mxu0 0.0
      %5565 = vmatpush.msra.mxu0 0.0
      %5566 = vmatpush.msra.mxu0 0.0
      %5567 = vmatpush.msra.mxu0 0.0
      %5568 = vmatpush.msra.mxu0 0.0
      %5569 = vmatpush.msra.mxu0 %v5545
      %5570 = vmatmul.f32.gmra.mxu0 %v5552
      %v5571 = vpop.f32.mrf.mxu0
      %v5572 = vadd.f32 0.0, %v5571
      %5573 = vdwg.mxu0
      %5574 = vmatpush.msra.mxu0 0.0
      %5575 = vmatpush.msra.mxu0 0.0
      %5576 = vmatpush.msra.mxu0 0.0
      %5577 = vmatpush.msra.mxu0 0.0
      %5578 = vmatpush.msra.mxu0 0.0
      %5579 = vmatpush.msra.mxu0 0.0
      %5580 = vmatpush.msra.mxu0 0.0
      %5581 = vmatpush.msra.mxu0 0.0
      %5582 = vmatpush.msra.mxu0 0.0
      %5583 = vmatpush.msra.mxu0 0.0
      %5584 = vmatpush.msra.mxu0 0.0
      %5585 = vmatpush.msra.mxu0 0.0
      %5586 = vmatpush.msra.mxu0 0.0
      %5587 = vmatpush.msra.mxu0 0.0
      %5588 = vmatpush.msra.mxu0 0.0
      %5589 = vmatpush.msra.mxu0 %v5546
      %5590 = vmatmul.f32.gmra.mxu0 %v5552
      %v5591 = vpop.f32.mrf.mxu0
      %v5592 = vadd.f32 0.0, %v5591
      %5593 = vdwg.mxu0
      %5594 = vmatpush.msra.mxu0 0.0
      %5595 = vmatpush.msra.mxu0 0.0
      %5596 = vmatpush.msra.mxu0 0.0
      %5597 = vmatpush.msra.mxu0 0.0
      %5598 = vmatpush.msra.mxu0 0.0
      %5599 = vmatpush.msra.mxu0 0.0
      %5600 = vmatpush.msra.mxu0 0.0
      %5601 = vmatpush.msra.mxu0 0.0
      %5602 = vmatpush.msra.mxu0 0.0
      %5603 = vmatpush.msra.mxu0 0.0
      %5604 = vmatpush.msra.mxu0 0.0
      %5605 = vmatpush.msra.mxu0 0.0
      %5606 = vmatpush.msra.mxu0 0.0
      %5607 = vmatpush.msra.mxu0 0.0
      %5608 = vmatpush.msra.mxu0 0.0
      %5609 = vmatpush.msra.mxu0 %v5547
      %5610 = vmatmul.f32.gmra.mxu0 %v5552
      %v5611 = vpop.f32.mrf.mxu0
      %v5612 = vadd.f32 0.0, %v5611
      %5613 = vdwg.mxu0
      %5614 = vmatpush.msra.mxu0 0.0
      %5615 = vmatpush.msra.mxu0 0.0
      %5616 = vmatpush.msra.mxu0 0.0
      %5617 = vmatpush.msra.mxu0 0.0
      %5618 = vmatpush.msra.mxu0 0.0
      %5619 = vmatpush.msra.mxu0 0.0
      %5620 = vmatpush.msra.mxu0 0.0
      %5621 = vmatpush.msra.mxu0 0.0
      %5622 = vmatpush.msra.mxu0 0.0
      %5623 = vmatpush.msra.mxu0 0.0
      %5624 = vmatpush.msra.mxu0 0.0
      %5625 = vmatpush.msra.mxu0 0.0
      %5626 = vmatpush.msra.mxu0 0.0
      %5627 = vmatpush.msra.mxu0 0.0
      %5628 = vmatpush.msra.mxu0 0.0
      %5629 = vmatpush.msra.mxu0 %v5548
      %5630 = vmatmul.f32.gmra.mxu0 %v5552
      %v5631 = vpop.f32.mrf.mxu0
      %v5632 = vadd.f32 0.0, %v5631
      %5633 = vdwg.mxu0
      %v5634 = vadd.f32 %v5529, %v5572
      %v5635 = vadd.f32 %v5530, %v5592
      %v5636 = vadd.f32 %v5531, %v5612
      %v5637 = vadd.f32 %v5532, %v5632
      %v5638 = vmul.f32 %v5207, %v4646
      %v5639 = vmul.f32 %v5208, %v4647
      %v5640 = vmul.f32 %v5209, %v4648
      %v5641 = vmul.f32 %v5210, %v4649
      %s5642 = scalar_lea.vmem %s3, 392
      %v5643 = vld [vmem:[%s5642] sm:$0xff]
      %v5645 = vsel %vm311, %v5643, 0
      %5647 = vmatpush.msra.mxu0 0.0
      %5648 = vmatpush.msra.mxu0 0.0
      %5649 = vmatpush.msra.mxu0 0.0
      %5650 = vmatpush.msra.mxu0 0.0
      %5651 = vmatpush.msra.mxu0 0.0
      %5652 = vmatpush.msra.mxu0 0.0
      %5653 = vmatpush.msra.mxu0 0.0
      %5654 = vmatpush.msra.mxu0 0.0
      %5655 = vmatpush.msra.mxu0 0.0
      %5656 = vmatpush.msra.mxu0 0.0
      %5657 = vmatpush.msra.mxu0 0.0
      %5658 = vmatpush.msra.mxu0 0.0
      %5659 = vmatpush.msra.mxu0 0.0
      %5660 = vmatpush.msra.mxu0 0.0
      %5661 = vmatpush.msra.mxu0 0.0
      %5662 = vmatpush.msra.mxu0 %v5638
      %5663 = vmatmul.f32.gmra.mxu0 %v5645
      %v5664 = vpop.f32.mrf.mxu0
      %v5665 = vadd.f32 0.0, %v5664
      %5666 = vdwg.mxu0
      %5667 = vmatpush.msra.mxu0 0.0
      %5668 = vmatpush.msra.mxu0 0.0
      %5669 = vmatpush.msra.mxu0 0.0
      %5670 = vmatpush.msra.mxu0 0.0
      %5671 = vmatpush.msra.mxu0 0.0
      %5672 = vmatpush.msra.mxu0 0.0
      %5673 = vmatpush.msra.mxu0 0.0
      %5674 = vmatpush.msra.mxu0 0.0
      %5675 = vmatpush.msra.mxu0 0.0
      %5676 = vmatpush.msra.mxu0 0.0
      %5677 = vmatpush.msra.mxu0 0.0
      %5678 = vmatpush.msra.mxu0 0.0
      %5679 = vmatpush.msra.mxu0 0.0
      %5680 = vmatpush.msra.mxu0 0.0
      %5681 = vmatpush.msra.mxu0 0.0
      %5682 = vmatpush.msra.mxu0 %v5639
      %5683 = vmatmul.f32.gmra.mxu0 %v5645
      %v5684 = vpop.f32.mrf.mxu0
      %v5685 = vadd.f32 0.0, %v5684
      %5686 = vdwg.mxu0
      %5687 = vmatpush.msra.mxu0 0.0
      %5688 = vmatpush.msra.mxu0 0.0
      %5689 = vmatpush.msra.mxu0 0.0
      %5690 = vmatpush.msra.mxu0 0.0
      %5691 = vmatpush.msra.mxu0 0.0
      %5692 = vmatpush.msra.mxu0 0.0
      %5693 = vmatpush.msra.mxu0 0.0
      %5694 = vmatpush.msra.mxu0 0.0
      %5695 = vmatpush.msra.mxu0 0.0
      %5696 = vmatpush.msra.mxu0 0.0
      %5697 = vmatpush.msra.mxu0 0.0
      %5698 = vmatpush.msra.mxu0 0.0
      %5699 = vmatpush.msra.mxu0 0.0
      %5700 = vmatpush.msra.mxu0 0.0
      %5701 = vmatpush.msra.mxu0 0.0
      %5702 = vmatpush.msra.mxu0 %v5640
      %5703 = vmatmul.f32.gmra.mxu0 %v5645
      %v5704 = vpop.f32.mrf.mxu0
      %v5705 = vadd.f32 0.0, %v5704
      %5706 = vdwg.mxu0
      %5707 = vmatpush.msra.mxu0 0.0
      %5708 = vmatpush.msra.mxu0 0.0
      %5709 = vmatpush.msra.mxu0 0.0
      %5710 = vmatpush.msra.mxu0 0.0
      %5711 = vmatpush.msra.mxu0 0.0
      %5712 = vmatpush.msra.mxu0 0.0
      %5713 = vmatpush.msra.mxu0 0.0
      %5714 = vmatpush.msra.mxu0 0.0
      %5715 = vmatpush.msra.mxu0 0.0
      %5716 = vmatpush.msra.mxu0 0.0
      %5717 = vmatpush.msra.mxu0 0.0
      %5718 = vmatpush.msra.mxu0 0.0
      %5719 = vmatpush.msra.mxu0 0.0
      %5720 = vmatpush.msra.mxu0 0.0
      %5721 = vmatpush.msra.mxu0 0.0
      %5722 = vmatpush.msra.mxu0 %v5641
      %5723 = vmatmul.f32.gmra.mxu0 %v5645
      %v5724 = vpop.f32.mrf.mxu0
      %v5725 = vadd.f32 0.0, %v5724
      %5726 = vdwg.mxu0
      %v5727 = vadd.f32 %v5634, %v5665
      %v5728 = vadd.f32 %v5635, %v5685
      %v5729 = vadd.f32 %v5636, %v5705
      %v5730 = vadd.f32 %v5637, %v5725
      %5731 = vrot.lane.b32.xlu0 %v5207, 127
      %v5732 = vpop.permute.xlu0 %5731
      %5733 = vrot.lane.b32.xlu0 %v5208, 127
      %v5734 = vpop.permute.xlu0 %5733
      %5735 = vrot.lane.b32.xlu0 %v5209, 127
      %v5736 = vpop.permute.xlu0 %5735
      %5737 = vrot.lane.b32.xlu0 %v5210, 127
      %v5738 = vpop.permute.xlu0 %5737
      %v5739 = vsel %vm862, %v5736, %v5738
      %v5740 = vsel %vm862, %v5734, %v5736
      %v5741 = vsel %vm862, %v5732, %v5734
      %v5742 = vsel %vm862, %v5738, %v5732
      %v5743 = vmul.f32 %v5741, %v4761
      %v5744 = vmul.f32 %v5740, %v4762
      %v5745 = vmul.f32 %v5739, %v4763
      %v5746 = vmul.f32 %v5742, %v4764
      %s5747 = scalar_lea.vmem %s3, 400
      %v5748 = vld [vmem:[%s5747] sm:$0xff]
      %v5750 = vsel %vm311, %v5748, 0
      %5752 = vmatpush.msra.mxu0 0.0
      %5753 = vmatpush.msra.mxu0 0.0
      %5754 = vmatpush.msra.mxu0 0.0
      %5755 = vmatpush.msra.mxu0 0.0
      %5756 = vmatpush.msra.mxu0 0.0
      %5757 = vmatpush.msra.mxu0 0.0
      %5758 = vmatpush.msra.mxu0 0.0
      %5759 = vmatpush.msra.mxu0 0.0
      %5760 = vmatpush.msra.mxu0 0.0
      %5761 = vmatpush.msra.mxu0 0.0
      %5762 = vmatpush.msra.mxu0 0.0
      %5763 = vmatpush.msra.mxu0 0.0
      %5764 = vmatpush.msra.mxu0 0.0
      %5765 = vmatpush.msra.mxu0 0.0
      %5766 = vmatpush.msra.mxu0 0.0
      %5767 = vmatpush.msra.mxu0 %v5743
      %5768 = vmatmul.f32.gmra.mxu0 %v5750
      %v5769 = vpop.f32.mrf.mxu0
      %v5770 = vadd.f32 0.0, %v5769
      %5771 = vdwg.mxu0
      %5772 = vmatpush.msra.mxu0 0.0
      %5773 = vmatpush.msra.mxu0 0.0
      %5774 = vmatpush.msra.mxu0 0.0
      %5775 = vmatpush.msra.mxu0 0.0
      %5776 = vmatpush.msra.mxu0 0.0
      %5777 = vmatpush.msra.mxu0 0.0
      %5778 = vmatpush.msra.mxu0 0.0
      %5779 = vmatpush.msra.mxu0 0.0
      %5780 = vmatpush.msra.mxu0 0.0
      %5781 = vmatpush.msra.mxu0 0.0
      %5782 = vmatpush.msra.mxu0 0.0
      %5783 = vmatpush.msra.mxu0 0.0
      %5784 = vmatpush.msra.mxu0 0.0
      %5785 = vmatpush.msra.mxu0 0.0
      %5786 = vmatpush.msra.mxu0 0.0
      %5787 = vmatpush.msra.mxu0 %v5744
      %5788 = vmatmul.f32.gmra.mxu0 %v5750
      %v5789 = vpop.f32.mrf.mxu0
      %v5790 = vadd.f32 0.0, %v5789
      %5791 = vdwg.mxu0
      %5792 = vmatpush.msra.mxu0 0.0
      %5793 = vmatpush.msra.mxu0 0.0
      %5794 = vmatpush.msra.mxu0 0.0
      %5795 = vmatpush.msra.mxu0 0.0
      %5796 = vmatpush.msra.mxu0 0.0
      %5797 = vmatpush.msra.mxu0 0.0
      %5798 = vmatpush.msra.mxu0 0.0
      %5799 = vmatpush.msra.mxu0 0.0
      %5800 = vmatpush.msra.mxu0 0.0
      %5801 = vmatpush.msra.mxu0 0.0
      %5802 = vmatpush.msra.mxu0 0.0
      %5803 = vmatpush.msra.mxu0 0.0
      %5804 = vmatpush.msra.mxu0 0.0
      %5805 = vmatpush.msra.mxu0 0.0
      %5806 = vmatpush.msra.mxu0 0.0
      %5807 = vmatpush.msra.mxu0 %v5745
      %5808 = vmatmul.f32.gmra.mxu0 %v5750
      %v5809 = vpop.f32.mrf.mxu0
      %v5810 = vadd.f32 0.0, %v5809
      %5811 = vdwg.mxu0
      %5812 = vmatpush.msra.mxu0 0.0
      %5813 = vmatpush.msra.mxu0 0.0
      %5814 = vmatpush.msra.mxu0 0.0
      %5815 = vmatpush.msra.mxu0 0.0
      %5816 = vmatpush.msra.mxu0 0.0
      %5817 = vmatpush.msra.mxu0 0.0
      %5818 = vmatpush.msra.mxu0 0.0
      %5819 = vmatpush.msra.mxu0 0.0
      %5820 = vmatpush.msra.mxu0 0.0
      %5821 = vmatpush.msra.mxu0 0.0
      %5822 = vmatpush.msra.mxu0 0.0
      %5823 = vmatpush.msra.mxu0 0.0
      %5824 = vmatpush.msra.mxu0 0.0
      %5825 = vmatpush.msra.mxu0 0.0
      %5826 = vmatpush.msra.mxu0 0.0
      %5827 = vmatpush.msra.mxu0 %v5746
      %5828 = vmatmul.f32.gmra.mxu0 %v5750
      %v5829 = vpop.f32.mrf.mxu0
      %v5830 = vadd.f32 0.0, %v5829
      %5831 = vdwg.mxu0
      %v5832 = vadd.f32 %v5727, %v5770
      %v5833 = vadd.f32 %v5728, %v5790
      %v5834 = vadd.f32 %v5729, %v5810
      %v5835 = vadd.f32 %v5730, %v5830
      %5836 = vrot.lane.b32.xlu0 %v5207, 113
      %v5837 = vpop.permute.xlu0 %5836
      %5838 = vrot.lane.b32.xlu0 %v5208, 113
      %v5839 = vpop.permute.xlu0 %5838
      %5840 = vrot.lane.b32.xlu0 %v5209, 113
      %v5841 = vpop.permute.xlu0 %5840
      %5842 = vrot.lane.b32.xlu0 %v5210, 113
      %v5843 = vpop.permute.xlu0 %5842
      %v5844 = vsel %vm979, %v5841, %v5843
      %v5845 = vsel %vm979, %v5839, %v5841
      %v5846 = vsel %vm979, %v5837, %v5839
      %v5847 = vsel %vm979, %v5843, %v5837
      %v5848 = vmul.f32 %v5846, %v4876
      %v5849 = vmul.f32 %v5845, %v4877
      %v5850 = vmul.f32 %v5844, %v4878
      %v5851 = vmul.f32 %v5847, %v4879
      %s5852 = scalar_lea.vmem %s3, 408
      %v5853 = vld [vmem:[%s5852] sm:$0xff]
      %v5855 = vsel %vm311, %v5853, 0
      %5857 = vmatpush.msra.mxu0 0.0
      %5858 = vmatpush.msra.mxu0 0.0
      %5859 = vmatpush.msra.mxu0 0.0
      %5860 = vmatpush.msra.mxu0 0.0
      %5861 = vmatpush.msra.mxu0 0.0
      %5862 = vmatpush.msra.mxu0 0.0
      %5863 = vmatpush.msra.mxu0 0.0
      %5864 = vmatpush.msra.mxu0 0.0
      %5865 = vmatpush.msra.mxu0 0.0
      %5866 = vmatpush.msra.mxu0 0.0
      %5867 = vmatpush.msra.mxu0 0.0
      %5868 = vmatpush.msra.mxu0 0.0
      %5869 = vmatpush.msra.mxu0 0.0
      %5870 = vmatpush.msra.mxu0 0.0
      %5871 = vmatpush.msra.mxu0 0.0
      %5872 = vmatpush.msra.mxu0 %v5848
      %5873 = vmatmul.f32.gmra.mxu0 %v5855
      %v5874 = vpop.f32.mrf.mxu0
      %v5875 = vadd.f32 0.0, %v5874
      %5876 = vdwg.mxu0
      %5877 = vmatpush.msra.mxu0 0.0
      %5878 = vmatpush.msra.mxu0 0.0
      %5879 = vmatpush.msra.mxu0 0.0
      %5880 = vmatpush.msra.mxu0 0.0
      %5881 = vmatpush.msra.mxu0 0.0
      %5882 = vmatpush.msra.mxu0 0.0
      %5883 = vmatpush.msra.mxu0 0.0
      %5884 = vmatpush.msra.mxu0 0.0
      %5885 = vmatpush.msra.mxu0 0.0
      %5886 = vmatpush.msra.mxu0 0.0
      %5887 = vmatpush.msra.mxu0 0.0
      %5888 = vmatpush.msra.mxu0 0.0
      %5889 = vmatpush.msra.mxu0 0.0
      %5890 = vmatpush.msra.mxu0 0.0
      %5891 = vmatpush.msra.mxu0 0.0
      %5892 = vmatpush.msra.mxu0 %v5849
      %5893 = vmatmul.f32.gmra.mxu0 %v5855
      %v5894 = vpop.f32.mrf.mxu0
      %v5895 = vadd.f32 0.0, %v5894
      %5896 = vdwg.mxu0
      %5897 = vmatpush.msra.mxu0 0.0
      %5898 = vmatpush.msra.mxu0 0.0
      %5899 = vmatpush.msra.mxu0 0.0
      %5900 = vmatpush.msra.mxu0 0.0
      %5901 = vmatpush.msra.mxu0 0.0
      %5902 = vmatpush.msra.mxu0 0.0
      %5903 = vmatpush.msra.mxu0 0.0
      %5904 = vmatpush.msra.mxu0 0.0
      %5905 = vmatpush.msra.mxu0 0.0
      %5906 = vmatpush.msra.mxu0 0.0
      %5907 = vmatpush.msra.mxu0 0.0
      %5908 = vmatpush.msra.mxu0 0.0
      %5909 = vmatpush.msra.mxu0 0.0
      %5910 = vmatpush.msra.mxu0 0.0
      %5911 = vmatpush.msra.mxu0 0.0
      %5912 = vmatpush.msra.mxu0 %v5850
      %5913 = vmatmul.f32.gmra.mxu0 %v5855
      %v5914 = vpop.f32.mrf.mxu0
      %v5915 = vadd.f32 0.0, %v5914
      %5916 = vdwg.mxu0
      %5917 = vmatpush.msra.mxu0 0.0
      %5918 = vmatpush.msra.mxu0 0.0
      %5919 = vmatpush.msra.mxu0 0.0
      %5920 = vmatpush.msra.mxu0 0.0
      %5921 = vmatpush.msra.mxu0 0.0
      %5922 = vmatpush.msra.mxu0 0.0
      %5923 = vmatpush.msra.mxu0 0.0
      %5924 = vmatpush.msra.mxu0 0.0
      %5925 = vmatpush.msra.mxu0 0.0
      %5926 = vmatpush.msra.mxu0 0.0
      %5927 = vmatpush.msra.mxu0 0.0
      %5928 = vmatpush.msra.mxu0 0.0
      %5929 = vmatpush.msra.mxu0 0.0
      %5930 = vmatpush.msra.mxu0 0.0
      %5931 = vmatpush.msra.mxu0 0.0
      %5932 = vmatpush.msra.mxu0 %v5851
      %5933 = vmatmul.f32.gmra.mxu0 %v5855
      %v5934 = vpop.f32.mrf.mxu0
      %v5935 = vadd.f32 0.0, %v5934
      %5936 = vdwg.mxu0
      %v5937 = vadd.f32 %v5832, %v5875
      %v5938 = vadd.f32 %v5833, %v5895
      %v5939 = vadd.f32 %v5834, %v5915
      %v5940 = vadd.f32 %v5835, %v5935
      %5941 = vrot.lane.b32.xlu0 %v5207, 112
      %v5942 = vpop.permute.xlu0 %5941
      %5943 = vrot.lane.b32.xlu0 %v5208, 112
      %v5944 = vpop.permute.xlu0 %5943
      %5945 = vrot.lane.b32.xlu0 %v5209, 112
      %v5946 = vpop.permute.xlu0 %5945
      %5947 = vrot.lane.b32.xlu0 %v5210, 112
      %v5948 = vpop.permute.xlu0 %5947
      %v5949 = vsel %vm1096, %v5946, %v5948
      %v5950 = vsel %vm1096, %v5944, %v5946
      %v5951 = vsel %vm1096, %v5942, %v5944
      %v5952 = vsel %vm1096, %v5948, %v5942
      %v5953 = vmul.f32 %v5951, %v4991
      %v5954 = vmul.f32 %v5950, %v4992
      %v5955 = vmul.f32 %v5949, %v4993
      %v5956 = vmul.f32 %v5952, %v4994
      %s5957 = scalar_lea.vmem %s3, 416
      %v5958 = vld [vmem:[%s5957] sm:$0xff]
      %v5960 = vsel %vm311, %v5958, 0
      %5962 = vmatpush.msra.mxu0 0.0
      %5963 = vmatpush.msra.mxu0 0.0
      %5964 = vmatpush.msra.mxu0 0.0
      %5965 = vmatpush.msra.mxu0 0.0
      %5966 = vmatpush.msra.mxu0 0.0
      %5967 = vmatpush.msra.mxu0 0.0
      %5968 = vmatpush.msra.mxu0 0.0
      %5969 = vmatpush.msra.mxu0 0.0
      %5970 = vmatpush.msra.mxu0 0.0
      %5971 = vmatpush.msra.mxu0 0.0
      %5972 = vmatpush.msra.mxu0 0.0
      %5973 = vmatpush.msra.mxu0 0.0
      %5974 = vmatpush.msra.mxu0 0.0
      %5975 = vmatpush.msra.mxu0 0.0
      %5976 = vmatpush.msra.mxu0 0.0
      %5977 = vmatpush.msra.mxu0 %v5953
      %5978 = vmatmul.f32.gmra.mxu0 %v5960
      %v5979 = vpop.f32.mrf.mxu0
      %v5980 = vadd.f32 0.0, %v5979
      %5981 = vdwg.mxu0
      %5982 = vmatpush.msra.mxu0 0.0
      %5983 = vmatpush.msra.mxu0 0.0
      %5984 = vmatpush.msra.mxu0 0.0
      %5985 = vmatpush.msra.mxu0 0.0
      %5986 = vmatpush.msra.mxu0 0.0
      %5987 = vmatpush.msra.mxu0 0.0
      %5988 = vmatpush.msra.mxu0 0.0
      %5989 = vmatpush.msra.mxu0 0.0
      %5990 = vmatpush.msra.mxu0 0.0
      %5991 = vmatpush.msra.mxu0 0.0
      %5992 = vmatpush.msra.mxu0 0.0
      %5993 = vmatpush.msra.mxu0 0.0
      %5994 = vmatpush.msra.mxu0 0.0
      %5995 = vmatpush.msra.mxu0 0.0
      %5996 = vmatpush.msra.mxu0 0.0
      %5997 = vmatpush.msra.mxu0 %v5954
      %5998 = vmatmul.f32.gmra.mxu0 %v5960
      %v5999 = vpop.f32.mrf.mxu0
      %v6000 = vadd.f32 0.0, %v5999
      %6001 = vdwg.mxu0
      %6002 = vmatpush.msra.mxu0 0.0
      %6003 = vmatpush.msra.mxu0 0.0
      %6004 = vmatpush.msra.mxu0 0.0
      %6005 = vmatpush.msra.mxu0 0.0
      %6006 = vmatpush.msra.mxu0 0.0
      %6007 = vmatpush.msra.mxu0 0.0
      %6008 = vmatpush.msra.mxu0 0.0
      %6009 = vmatpush.msra.mxu0 0.0
      %6010 = vmatpush.msra.mxu0 0.0
      %6011 = vmatpush.msra.mxu0 0.0
      %6012 = vmatpush.msra.mxu0 0.0
      %6013 = vmatpush.msra.mxu0 0.0
      %6014 = vmatpush.msra.mxu0 0.0
      %6015 = vmatpush.msra.mxu0 0.0
      %6016 = vmatpush.msra.mxu0 0.0
      %6017 = vmatpush.msra.mxu0 %v5955
      %6018 = vmatmul.f32.gmra.mxu0 %v5960
      %v6019 = vpop.f32.mrf.mxu0
      %v6020 = vadd.f32 0.0, %v6019
      %6021 = vdwg.mxu0
      %6022 = vmatpush.msra.mxu0 0.0
      %6023 = vmatpush.msra.mxu0 0.0
      %6024 = vmatpush.msra.mxu0 0.0
      %6025 = vmatpush.msra.mxu0 0.0
      %6026 = vmatpush.msra.mxu0 0.0
      %6027 = vmatpush.msra.mxu0 0.0
      %6028 = vmatpush.msra.mxu0 0.0
      %6029 = vmatpush.msra.mxu0 0.0
      %6030 = vmatpush.msra.mxu0 0.0
      %6031 = vmatpush.msra.mxu0 0.0
      %6032 = vmatpush.msra.mxu0 0.0
      %6033 = vmatpush.msra.mxu0 0.0
      %6034 = vmatpush.msra.mxu0 0.0
      %6035 = vmatpush.msra.mxu0 0.0
      %6036 = vmatpush.msra.mxu0 0.0
      %6037 = vmatpush.msra.mxu0 %v5956
      %6038 = vmatmul.f32.gmra.mxu0 %v5960
      %v6039 = vpop.f32.mrf.mxu0
      %v6040 = vadd.f32 0.0, %v6039
      %6041 = vdwg.mxu0
      %v6042 = vadd.f32 %v5937, %v5980
      %v6043 = vadd.f32 %v5938, %v6000
      %v6044 = vadd.f32 %v5939, %v6020
      %v6045 = vadd.f32 %v5940, %v6040
      %6046 = vrot.lane.b32.xlu0 %v5207, 111
      %v6047 = vpop.permute.xlu0 %6046
      %6048 = vrot.lane.b32.xlu0 %v5208, 111
      %v6049 = vpop.permute.xlu0 %6048
      %6050 = vrot.lane.b32.xlu0 %v5209, 111
      %v6051 = vpop.permute.xlu0 %6050
      %6052 = vrot.lane.b32.xlu0 %v5210, 111
      %v6053 = vpop.permute.xlu0 %6052
      %v6054 = vsel %vm1213, %v6051, %v6053
      %v6055 = vsel %vm1213, %v6049, %v6051
      %v6056 = vsel %vm1213, %v6047, %v6049
      %v6057 = vsel %vm1213, %v6053, %v6047
      %v6058 = vmul.f32 %v6056, %v5106
      %v6059 = vmul.f32 %v6055, %v5107
      %v6060 = vmul.f32 %v6054, %v5108
      %v6061 = vmul.f32 %v6057, %v5109
      %s6062 = scalar_lea.vmem %s3, 424
      %v6063 = vld [vmem:[%s6062] sm:$0xff]
      %v6065 = vsel %vm311, %v6063, 0
      %6067 = vmatpush.msra.mxu0 0.0
      %6068 = vmatpush.msra.mxu0 0.0
      %6069 = vmatpush.msra.mxu0 0.0
      %6070 = vmatpush.msra.mxu0 0.0
      %6071 = vmatpush.msra.mxu0 0.0
      %6072 = vmatpush.msra.mxu0 0.0
      %6073 = vmatpush.msra.mxu0 0.0
      %6074 = vmatpush.msra.mxu0 0.0
      %6075 = vmatpush.msra.mxu0 0.0
      %6076 = vmatpush.msra.mxu0 0.0
      %6077 = vmatpush.msra.mxu0 0.0
      %6078 = vmatpush.msra.mxu0 0.0
      %6079 = vmatpush.msra.mxu0 0.0
      %6080 = vmatpush.msra.mxu0 0.0
      %6081 = vmatpush.msra.mxu0 0.0
      %6082 = vmatpush.msra.mxu0 %v6058
      %6083 = vmatmul.f32.gmra.mxu0 %v6065
      %v6084 = vpop.f32.mrf.mxu0
      %v6085 = vadd.f32 0.0, %v6084
      %6086 = vdwg.mxu0
      %6087 = vmatpush.msra.mxu0 0.0
      %6088 = vmatpush.msra.mxu0 0.0
      %6089 = vmatpush.msra.mxu0 0.0
      %6090 = vmatpush.msra.mxu0 0.0
      %6091 = vmatpush.msra.mxu0 0.0
      %6092 = vmatpush.msra.mxu0 0.0
      %6093 = vmatpush.msra.mxu0 0.0
      %6094 = vmatpush.msra.mxu0 0.0
      %6095 = vmatpush.msra.mxu0 0.0
      %6096 = vmatpush.msra.mxu0 0.0
      %6097 = vmatpush.msra.mxu0 0.0
      %6098 = vmatpush.msra.mxu0 0.0
      %6099 = vmatpush.msra.mxu0 0.0
      %6100 = vmatpush.msra.mxu0 0.0
      %6101 = vmatpush.msra.mxu0 0.0
      %6102 = vmatpush.msra.mxu0 %v6059
      %6103 = vmatmul.f32.gmra.mxu0 %v6065
      %v6104 = vpop.f32.mrf.mxu0
      %v6105 = vadd.f32 0.0, %v6104
      %6106 = vdwg.mxu0
      %6107 = vmatpush.msra.mxu0 0.0
      %6108 = vmatpush.msra.mxu0 0.0
      %6109 = vmatpush.msra.mxu0 0.0
      %6110 = vmatpush.msra.mxu0 0.0
      %6111 = vmatpush.msra.mxu0 0.0
      %6112 = vmatpush.msra.mxu0 0.0
      %6113 = vmatpush.msra.mxu0 0.0
      %6114 = vmatpush.msra.mxu0 0.0
      %6115 = vmatpush.msra.mxu0 0.0
      %6116 = vmatpush.msra.mxu0 0.0
      %6117 = vmatpush.msra.mxu0 0.0
      %6118 = vmatpush.msra.mxu0 0.0
      %6119 = vmatpush.msra.mxu0 0.0
      %6120 = vmatpush.msra.mxu0 0.0
      %6121 = vmatpush.msra.mxu0 0.0
      %6122 = vmatpush.msra.mxu0 %v6060
      %6123 = vmatmul.f32.gmra.mxu0 %v6065
      %v6124 = vpop.f32.mrf.mxu0
      %v6125 = vadd.f32 0.0, %v6124
      %6126 = vdwg.mxu0
      %6127 = vmatpush.msra.mxu0 0.0
      %6128 = vmatpush.msra.mxu0 0.0
      %6129 = vmatpush.msra.mxu0 0.0
      %6130 = vmatpush.msra.mxu0 0.0
      %6131 = vmatpush.msra.mxu0 0.0
      %6132 = vmatpush.msra.mxu0 0.0
      %6133 = vmatpush.msra.mxu0 0.0
      %6134 = vmatpush.msra.mxu0 0.0
      %6135 = vmatpush.msra.mxu0 0.0
      %6136 = vmatpush.msra.mxu0 0.0
      %6137 = vmatpush.msra.mxu0 0.0
      %6138 = vmatpush.msra.mxu0 0.0
      %6139 = vmatpush.msra.mxu0 0.0
      %6140 = vmatpush.msra.mxu0 0.0
      %6141 = vmatpush.msra.mxu0 0.0
      %6142 = vmatpush.msra.mxu0 %v6061
      %6143 = vmatmul.f32.gmra.mxu0 %v6065
      %v6144 = vpop.f32.mrf.mxu0
      %v6145 = vadd.f32 0.0, %v6144
      %6146 = vdwg.mxu0
      %v6147 = vadd.f32 %v6042, %v6085
      %v6148 = vadd.f32 %v6043, %v6105
      %v6149 = vadd.f32 %v6044, %v6125
      %v6150 = vadd.f32 %v6045, %v6145
      %v6151 = vmax.f32 %v6147, 0.0
      %v6152 = vmax.f32 %v6148, 0.0
      %v6153 = vmax.f32 %v6149, 0.0
      %v6154 = vmax.f32 %v6150, 0.0
      %s6155 = scalar_lea.vmem %s4, 48
      %v6156 = vld [vmem:[%s6155] sm:$0xff]
      %6158 = vset.pattern.permute.xlu0 0
      %6159 = vperm.xlu0 %6158, %v6156
      %v6160 = vpop.permute.xlu0 %6159
      %6162 = vrot.lane.b32.xlu0 %v6151, 17
      %v6163 = vpop.permute.xlu0 %6162
      %6164 = vrot.lane.b32.xlu0 %v6152, 17
      %v6165 = vpop.permute.xlu0 %6164
      %6166 = vrot.lane.b32.xlu0 %v6153, 17
      %v6167 = vpop.permute.xlu0 %6166
      %6168 = vrot.lane.b32.xlu0 %v6154, 17
      %v6169 = vpop.permute.xlu0 %6168
      %v6170 = vsel %vm291, %v6167, %v6169
      %v6171 = vsel %vm291, %v6165, %v6167
      %v6172 = vsel %vm291, %v6163, %v6165
      %v6173 = vsel %vm291, %v6169, %v6163
      %v6174 = vmul.f32 %v6173, %v4198
      %v6175 = vmul.f32 %v6172, %v4199
      %v6176 = vmul.f32 %v6171, %v4200
      %v6177 = vmul.f32 %v6170, %v4201
      %s6178 = scalar_lea.vmem %s3, 432
      %v6179 = vld [vmem:[%s6178] sm:$0xff]
      %v6181 = vsel %vm311, %v6179, 0
      %6183 = vmatpush.msra.mxu0 0.0
      %6184 = vmatpush.msra.mxu0 0.0
      %6185 = vmatpush.msra.mxu0 0.0
      %6186 = vmatpush.msra.mxu0 0.0
      %6187 = vmatpush.msra.mxu0 0.0
      %6188 = vmatpush.msra.mxu0 0.0
      %6189 = vmatpush.msra.mxu0 0.0
      %6190 = vmatpush.msra.mxu0 0.0
      %6191 = vmatpush.msra.mxu0 0.0
      %6192 = vmatpush.msra.mxu0 0.0
      %6193 = vmatpush.msra.mxu0 0.0
      %6194 = vmatpush.msra.mxu0 0.0
      %6195 = vmatpush.msra.mxu0 0.0
      %6196 = vmatpush.msra.mxu0 0.0
      %6197 = vmatpush.msra.mxu0 0.0
      %6198 = vmatpush.msra.mxu0 %v6174
      %6199 = vmatmul.f32.gmra.mxu0 %v6181
      %v6200 = vpop.f32.mrf.mxu0
      %v6201 = vadd.f32 0.0, %v6200
      %6202 = vdwg.mxu0
      %6203 = vmatpush.msra.mxu0 0.0
      %6204 = vmatpush.msra.mxu0 0.0
      %6205 = vmatpush.msra.mxu0 0.0
      %6206 = vmatpush.msra.mxu0 0.0
      %6207 = vmatpush.msra.mxu0 0.0
      %6208 = vmatpush.msra.mxu0 0.0
      %6209 = vmatpush.msra.mxu0 0.0
      %6210 = vmatpush.msra.mxu0 0.0
      %6211 = vmatpush.msra.mxu0 0.0
      %6212 = vmatpush.msra.mxu0 0.0
      %6213 = vmatpush.msra.mxu0 0.0
      %6214 = vmatpush.msra.mxu0 0.0
      %6215 = vmatpush.msra.mxu0 0.0
      %6216 = vmatpush.msra.mxu0 0.0
      %6217 = vmatpush.msra.mxu0 0.0
      %6218 = vmatpush.msra.mxu0 %v6175
      %6219 = vmatmul.f32.gmra.mxu0 %v6181
      %v6220 = vpop.f32.mrf.mxu0
      %v6221 = vadd.f32 0.0, %v6220
      %6222 = vdwg.mxu0
      %6223 = vmatpush.msra.mxu0 0.0
      %6224 = vmatpush.msra.mxu0 0.0
      %6225 = vmatpush.msra.mxu0 0.0
      %6226 = vmatpush.msra.mxu0 0.0
      %6227 = vmatpush.msra.mxu0 0.0
      %6228 = vmatpush.msra.mxu0 0.0
      %6229 = vmatpush.msra.mxu0 0.0
      %6230 = vmatpush.msra.mxu0 0.0
      %6231 = vmatpush.msra.mxu0 0.0
      %6232 = vmatpush.msra.mxu0 0.0
      %6233 = vmatpush.msra.mxu0 0.0
      %6234 = vmatpush.msra.mxu0 0.0
      %6235 = vmatpush.msra.mxu0 0.0
      %6236 = vmatpush.msra.mxu0 0.0
      %6237 = vmatpush.msra.mxu0 0.0
      %6238 = vmatpush.msra.mxu0 %v6176
      %6239 = vmatmul.f32.gmra.mxu0 %v6181
      %v6240 = vpop.f32.mrf.mxu0
      %v6241 = vadd.f32 0.0, %v6240
      %6242 = vdwg.mxu0
      %6243 = vmatpush.msra.mxu0 0.0
      %6244 = vmatpush.msra.mxu0 0.0
      %6245 = vmatpush.msra.mxu0 0.0
      %6246 = vmatpush.msra.mxu0 0.0
      %6247 = vmatpush.msra.mxu0 0.0
      %6248 = vmatpush.msra.mxu0 0.0
      %6249 = vmatpush.msra.mxu0 0.0
      %6250 = vmatpush.msra.mxu0 0.0
      %6251 = vmatpush.msra.mxu0 0.0
      %6252 = vmatpush.msra.mxu0 0.0
      %6253 = vmatpush.msra.mxu0 0.0
      %6254 = vmatpush.msra.mxu0 0.0
      %6255 = vmatpush.msra.mxu0 0.0
      %6256 = vmatpush.msra.mxu0 0.0
      %6257 = vmatpush.msra.mxu0 0.0
      %6258 = vmatpush.msra.mxu0 %v6177
      %6259 = vmatmul.f32.gmra.mxu0 %v6181
      %v6260 = vpop.f32.mrf.mxu0
      %v6261 = vadd.f32 0.0, %v6260
      %6262 = vdwg.mxu0
      %v6263 = vadd.f32 %v6160, %v6201
      %v6264 = vadd.f32 %v6160, %v6221
      %v6265 = vadd.f32 %v6160, %v6241
      %v6266 = vadd.f32 %v6160, %v6261
      %6267 = vrot.lane.b32.xlu0 %v6151, 16
      %v6268 = vpop.permute.xlu0 %6267
      %6269 = vrot.lane.b32.xlu0 %v6152, 16
      %v6270 = vpop.permute.xlu0 %6269
      %6271 = vrot.lane.b32.xlu0 %v6153, 16
      %v6272 = vpop.permute.xlu0 %6271
      %6273 = vrot.lane.b32.xlu0 %v6154, 16
      %v6274 = vpop.permute.xlu0 %6273
      %v6275 = vsel %vm407, %v6272, %v6274
      %v6276 = vsel %vm407, %v6270, %v6272
      %v6277 = vsel %vm407, %v6268, %v6270
      %v6278 = vsel %vm407, %v6274, %v6268
      %v6279 = vmul.f32 %v6278, %v4313
      %v6280 = vmul.f32 %v6277, %v4314
      %v6281 = vmul.f32 %v6276, %v4315
      %v6282 = vmul.f32 %v6275, %v4316
      %s6283 = scalar_lea.vmem %s3, 440
      %v6284 = vld [vmem:[%s6283] sm:$0xff]
      %v6286 = vsel %vm311, %v6284, 0
      %6288 = vmatpush.msra.mxu0 0.0
      %6289 = vmatpush.msra.mxu0 0.0
      %6290 = vmatpush.msra.mxu0 0.0
      %6291 = vmatpush.msra.mxu0 0.0
      %6292 = vmatpush.msra.mxu0 0.0
      %6293 = vmatpush.msra.mxu0 0.0
      %6294 = vmatpush.msra.mxu0 0.0
      %6295 = vmatpush.msra.mxu0 0.0
      %6296 = vmatpush.msra.mxu0 0.0
      %6297 = vmatpush.msra.mxu0 0.0
      %6298 = vmatpush.msra.mxu0 0.0
      %6299 = vmatpush.msra.mxu0 0.0
      %6300 = vmatpush.msra.mxu0 0.0
      %6301 = vmatpush.msra.mxu0 0.0
      %6302 = vmatpush.msra.mxu0 0.0
      %6303 = vmatpush.msra.mxu0 %v6279
      %6304 = vmatmul.f32.gmra.mxu0 %v6286
      %v6305 = vpop.f32.mrf.mxu0
      %v6306 = vadd.f32 0.0, %v6305
      %6307 = vdwg.mxu0
      %6308 = vmatpush.msra.mxu0 0.0
      %6309 = vmatpush.msra.mxu0 0.0
      %6310 = vmatpush.msra.mxu0 0.0
      %6311 = vmatpush.msra.mxu0 0.0
      %6312 = vmatpush.msra.mxu0 0.0
      %6313 = vmatpush.msra.mxu0 0.0
      %6314 = vmatpush.msra.mxu0 0.0
      %6315 = vmatpush.msra.mxu0 0.0
      %6316 = vmatpush.msra.mxu0 0.0
      %6317 = vmatpush.msra.mxu0 0.0
      %6318 = vmatpush.msra.mxu0 0.0
      %6319 = vmatpush.msra.mxu0 0.0
      %6320 = vmatpush.msra.mxu0 0.0
      %6321 = vmatpush.msra.mxu0 0.0
      %6322 = vmatpush.msra.mxu0 0.0
      %6323 = vmatpush.msra.mxu0 %v6280
      %6324 = vmatmul.f32.gmra.mxu0 %v6286
      %v6325 = vpop.f32.mrf.mxu0
      %v6326 = vadd.f32 0.0, %v6325
      %6327 = vdwg.mxu0
      %6328 = vmatpush.msra.mxu0 0.0
      %6329 = vmatpush.msra.mxu0 0.0
      %6330 = vmatpush.msra.mxu0 0.0
      %6331 = vmatpush.msra.mxu0 0.0
      %6332 = vmatpush.msra.mxu0 0.0
      %6333 = vmatpush.msra.mxu0 0.0
      %6334 = vmatpush.msra.mxu0 0.0
      %6335 = vmatpush.msra.mxu0 0.0
      %6336 = vmatpush.msra.mxu0 0.0
      %6337 = vmatpush.msra.mxu0 0.0
      %6338 = vmatpush.msra.mxu0 0.0
      %6339 = vmatpush.msra.mxu0 0.0
      %6340 = vmatpush.msra.mxu0 0.0
      %6341 = vmatpush.msra.mxu0 0.0
      %6342 = vmatpush.msra.mxu0 0.0
      %6343 = vmatpush.msra.mxu0 %v6281
      %6344 = vmatmul.f32.gmra.mxu0 %v6286
      %v6345 = vpop.f32.mrf.mxu0
      %v6346 = vadd.f32 0.0, %v6345
      %6347 = vdwg.mxu0
      %6348 = vmatpush.msra.mxu0 0.0
      %6349 = vmatpush.msra.mxu0 0.0
      %6350 = vmatpush.msra.mxu0 0.0
      %6351 = vmatpush.msra.mxu0 0.0
      %6352 = vmatpush.msra.mxu0 0.0
      %6353 = vmatpush.msra.mxu0 0.0
      %6354 = vmatpush.msra.mxu0 0.0
      %6355 = vmatpush.msra.mxu0 0.0
      %6356 = vmatpush.msra.mxu0 0.0
      %6357 = vmatpush.msra.mxu0 0.0
      %6358 = vmatpush.msra.mxu0 0.0
      %6359 = vmatpush.msra.mxu0 0.0
      %6360 = vmatpush.msra.mxu0 0.0
      %6361 = vmatpush.msra.mxu0 0.0
      %6362 = vmatpush.msra.mxu0 0.0
      %6363 = vmatpush.msra.mxu0 %v6282
      %6364 = vmatmul.f32.gmra.mxu0 %v6286
      %v6365 = vpop.f32.mrf.mxu0
      %v6366 = vadd.f32 0.0, %v6365
      %6367 = vdwg.mxu0
      %v6368 = vadd.f32 %v6263, %v6306
      %v6369 = vadd.f32 %v6264, %v6326
      %v6370 = vadd.f32 %v6265, %v6346
      %v6371 = vadd.f32 %v6266, %v6366
      %6372 = vrot.lane.b32.xlu0 %v6151, 15
      %v6373 = vpop.permute.xlu0 %6372
      %6374 = vrot.lane.b32.xlu0 %v6152, 15
      %v6375 = vpop.permute.xlu0 %6374
      %6376 = vrot.lane.b32.xlu0 %v6153, 15
      %v6377 = vpop.permute.xlu0 %6376
      %6378 = vrot.lane.b32.xlu0 %v6154, 15
      %v6379 = vpop.permute.xlu0 %6378
      %v6380 = vsel %vm524, %v6377, %v6379
      %v6381 = vsel %vm524, %v6375, %v6377
      %v6382 = vsel %vm524, %v6373, %v6375
      %v6383 = vsel %vm524, %v6379, %v6373
      %v6384 = vmul.f32 %v6383, %v4428
      %v6385 = vmul.f32 %v6382, %v4429
      %v6386 = vmul.f32 %v6381, %v4430
      %v6387 = vmul.f32 %v6380, %v4431
      %s6388 = scalar_lea.vmem %s3, 448
      %v6389 = vld [vmem:[%s6388] sm:$0xff]
      %v6391 = vsel %vm311, %v6389, 0
      %6393 = vmatpush.msra.mxu0 0.0
      %6394 = vmatpush.msra.mxu0 0.0
      %6395 = vmatpush.msra.mxu0 0.0
      %6396 = vmatpush.msra.mxu0 0.0
      %6397 = vmatpush.msra.mxu0 0.0
      %6398 = vmatpush.msra.mxu0 0.0
      %6399 = vmatpush.msra.mxu0 0.0
      %6400 = vmatpush.msra.mxu0 0.0
      %6401 = vmatpush.msra.mxu0 0.0
      %6402 = vmatpush.msra.mxu0 0.0
      %6403 = vmatpush.msra.mxu0 0.0
      %6404 = vmatpush.msra.mxu0 0.0
      %6405 = vmatpush.msra.mxu0 0.0
      %6406 = vmatpush.msra.mxu0 0.0
      %6407 = vmatpush.msra.mxu0 0.0
      %6408 = vmatpush.msra.mxu0 %v6384
      %6409 = vmatmul.f32.gmra.mxu0 %v6391
      %v6410 = vpop.f32.mrf.mxu0
      %v6411 = vadd.f32 0.0, %v6410
      %6412 = vdwg.mxu0
      %6413 = vmatpush.msra.mxu0 0.0
      %6414 = vmatpush.msra.mxu0 0.0
      %6415 = vmatpush.msra.mxu0 0.0
      %6416 = vmatpush.msra.mxu0 0.0
      %6417 = vmatpush.msra.mxu0 0.0
      %6418 = vmatpush.msra.mxu0 0.0
      %6419 = vmatpush.msra.mxu0 0.0
      %6420 = vmatpush.msra.mxu0 0.0
      %6421 = vmatpush.msra.mxu0 0.0
      %6422 = vmatpush.msra.mxu0 0.0
      %6423 = vmatpush.msra.mxu0 0.0
      %6424 = vmatpush.msra.mxu0 0.0
      %6425 = vmatpush.msra.mxu0 0.0
      %6426 = vmatpush.msra.mxu0 0.0
      %6427 = vmatpush.msra.mxu0 0.0
      %6428 = vmatpush.msra.mxu0 %v6385
      %6429 = vmatmul.f32.gmra.mxu0 %v6391
      %v6430 = vpop.f32.mrf.mxu0
      %v6431 = vadd.f32 0.0, %v6430
      %6432 = vdwg.mxu0
      %6433 = vmatpush.msra.mxu0 0.0
      %6434 = vmatpush.msra.mxu0 0.0
      %6435 = vmatpush.msra.mxu0 0.0
      %6436 = vmatpush.msra.mxu0 0.0
      %6437 = vmatpush.msra.mxu0 0.0
      %6438 = vmatpush.msra.mxu0 0.0
      %6439 = vmatpush.msra.mxu0 0.0
      %6440 = vmatpush.msra.mxu0 0.0
      %6441 = vmatpush.msra.mxu0 0.0
      %6442 = vmatpush.msra.mxu0 0.0
      %6443 = vmatpush.msra.mxu0 0.0
      %6444 = vmatpush.msra.mxu0 0.0
      %6445 = vmatpush.msra.mxu0 0.0
      %6446 = vmatpush.msra.mxu0 0.0
      %6447 = vmatpush.msra.mxu0 0.0
      %6448 = vmatpush.msra.mxu0 %v6386
      %6449 = vmatmul.f32.gmra.mxu0 %v6391
      %v6450 = vpop.f32.mrf.mxu0
      %v6451 = vadd.f32 0.0, %v6450
      %6452 = vdwg.mxu0
      %6453 = vmatpush.msra.mxu0 0.0
      %6454 = vmatpush.msra.mxu0 0.0
      %6455 = vmatpush.msra.mxu0 0.0
      %6456 = vmatpush.msra.mxu0 0.0
      %6457 = vmatpush.msra.mxu0 0.0
      %6458 = vmatpush.msra.mxu0 0.0
      %6459 = vmatpush.msra.mxu0 0.0
      %6460 = vmatpush.msra.mxu0 0.0
      %6461 = vmatpush.msra.mxu0 0.0
      %6462 = vmatpush.msra.mxu0 0.0
      %6463 = vmatpush.msra.mxu0 0.0
      %6464 = vmatpush.msra.mxu0 0.0
      %6465 = vmatpush.msra.mxu0 0.0
      %6466 = vmatpush.msra.mxu0 0.0
      %6467 = vmatpush.msra.mxu0 0.0
      %6468 = vmatpush.msra.mxu0 %v6387
      %6469 = vmatmul.f32.gmra.mxu0 %v6391
      %v6470 = vpop.f32.mrf.mxu0
      %v6471 = vadd.f32 0.0, %v6470
      %6472 = vdwg.mxu0
      %v6473 = vadd.f32 %v6368, %v6411
      %v6474 = vadd.f32 %v6369, %v6431
      %v6475 = vadd.f32 %v6370, %v6451
      %v6476 = vadd.f32 %v6371, %v6471
      %6477 = vrot.lane.b32.xlu0 %v6151, 1
      %v6478 = vpop.permute.xlu0 %6477
      %6479 = vrot.lane.b32.xlu0 %v6152, 1
      %v6480 = vpop.permute.xlu0 %6479
      %6481 = vrot.lane.b32.xlu0 %v6153, 1
      %v6482 = vpop.permute.xlu0 %6481
      %6483 = vrot.lane.b32.xlu0 %v6154, 1
      %v6484 = vpop.permute.xlu0 %6483
      %v6485 = vsel %vm641, %v6482, %v6484
      %v6486 = vsel %vm641, %v6480, %v6482
      %v6487 = vsel %vm641, %v6478, %v6480
      %v6488 = vsel %vm641, %v6484, %v6478
      %v6489 = vmul.f32 %v6488, %v4543
      %v6490 = vmul.f32 %v6487, %v4544
      %v6491 = vmul.f32 %v6486, %v4545
      %v6492 = vmul.f32 %v6485, %v4546
      %s6493 = scalar_lea.vmem %s3, 456
      %v6494 = vld [vmem:[%s6493] sm:$0xff]
      %v6496 = vsel %vm311, %v6494, 0
      %6498 = vmatpush.msra.mxu0 0.0
      %6499 = vmatpush.msra.mxu0 0.0
      %6500 = vmatpush.msra.mxu0 0.0
      %6501 = vmatpush.msra.mxu0 0.0
      %6502 = vmatpush.msra.mxu0 0.0
      %6503 = vmatpush.msra.mxu0 0.0
      %6504 = vmatpush.msra.mxu0 0.0
      %6505 = vmatpush.msra.mxu0 0.0
      %6506 = vmatpush.msra.mxu0 0.0
      %6507 = vmatpush.msra.mxu0 0.0
      %6508 = vmatpush.msra.mxu0 0.0
      %6509 = vmatpush.msra.mxu0 0.0
      %6510 = vmatpush.msra.mxu0 0.0
      %6511 = vmatpush.msra.mxu0 0.0
      %6512 = vmatpush.msra.mxu0 0.0
      %6513 = vmatpush.msra.mxu0 %v6489
      %6514 = vmatmul.f32.gmra.mxu0 %v6496
      %v6515 = vpop.f32.mrf.mxu0
      %v6516 = vadd.f32 0.0, %v6515
      %6517 = vdwg.mxu0
      %6518 = vmatpush.msra.mxu0 0.0
      %6519 = vmatpush.msra.mxu0 0.0
      %6520 = vmatpush.msra.mxu0 0.0
      %6521 = vmatpush.msra.mxu0 0.0
      %6522 = vmatpush.msra.mxu0 0.0
      %6523 = vmatpush.msra.mxu0 0.0
      %6524 = vmatpush.msra.mxu0 0.0
      %6525 = vmatpush.msra.mxu0 0.0
      %6526 = vmatpush.msra.mxu0 0.0
      %6527 = vmatpush.msra.mxu0 0.0
      %6528 = vmatpush.msra.mxu0 0.0
      %6529 = vmatpush.msra.mxu0 0.0
      %6530 = vmatpush.msra.mxu0 0.0
      %6531 = vmatpush.msra.mxu0 0.0
      %6532 = vmatpush.msra.mxu0 0.0
      %6533 = vmatpush.msra.mxu0 %v6490
      %6534 = vmatmul.f32.gmra.mxu0 %v6496
      %v6535 = vpop.f32.mrf.mxu0
      %v6536 = vadd.f32 0.0, %v6535
      %6537 = vdwg.mxu0
      %6538 = vmatpush.msra.mxu0 0.0
      %6539 = vmatpush.msra.mxu0 0.0
      %6540 = vmatpush.msra.mxu0 0.0
      %6541 = vmatpush.msra.mxu0 0.0
      %6542 = vmatpush.msra.mxu0 0.0
      %6543 = vmatpush.msra.mxu0 0.0
      %6544 = vmatpush.msra.mxu0 0.0
      %6545 = vmatpush.msra.mxu0 0.0
      %6546 = vmatpush.msra.mxu0 0.0
      %6547 = vmatpush.msra.mxu0 0.0
      %6548 = vmatpush.msra.mxu0 0.0
      %6549 = vmatpush.msra.mxu0 0.0
      %6550 = vmatpush.msra.mxu0 0.0
      %6551 = vmatpush.msra.mxu0 0.0
      %6552 = vmatpush.msra.mxu0 0.0
      %6553 = vmatpush.msra.mxu0 %v6491
      %6554 = vmatmul.f32.gmra.mxu0 %v6496
      %v6555 = vpop.f32.mrf.mxu0
      %v6556 = vadd.f32 0.0, %v6555
      %6557 = vdwg.mxu0
      %6558 = vmatpush.msra.mxu0 0.0
      %6559 = vmatpush.msra.mxu0 0.0
      %6560 = vmatpush.msra.mxu0 0.0
      %6561 = vmatpush.msra.mxu0 0.0
      %6562 = vmatpush.msra.mxu0 0.0
      %6563 = vmatpush.msra.mxu0 0.0
      %6564 = vmatpush.msra.mxu0 0.0
      %6565 = vmatpush.msra.mxu0 0.0
      %6566 = vmatpush.msra.mxu0 0.0
      %6567 = vmatpush.msra.mxu0 0.0
      %6568 = vmatpush.msra.mxu0 0.0
      %6569 = vmatpush.msra.mxu0 0.0
      %6570 = vmatpush.msra.mxu0 0.0
      %6571 = vmatpush.msra.mxu0 0.0
      %6572 = vmatpush.msra.mxu0 0.0
      %6573 = vmatpush.msra.mxu0 %v6492
      %6574 = vmatmul.f32.gmra.mxu0 %v6496
      %v6575 = vpop.f32.mrf.mxu0
      %v6576 = vadd.f32 0.0, %v6575
      %6577 = vdwg.mxu0
      %v6578 = vadd.f32 %v6473, %v6516
      %v6579 = vadd.f32 %v6474, %v6536
      %v6580 = vadd.f32 %v6475, %v6556
      %v6581 = vadd.f32 %v6476, %v6576
      %v6582 = vmul.f32 %v6151, %v4646
      %v6583 = vmul.f32 %v6152, %v4647
      %v6584 = vmul.f32 %v6153, %v4648
      %v6585 = vmul.f32 %v6154, %v4649
      %s6586 = scalar_lea.vmem %s3, 464
      %v6587 = vld [vmem:[%s6586] sm:$0xff]
      %v6589 = vsel %vm311, %v6587, 0
      %6591 = vmatpush.msra.mxu0 0.0
      %6592 = vmatpush.msra.mxu0 0.0
      %6593 = vmatpush.msra.mxu0 0.0
      %6594 = vmatpush.msra.mxu0 0.0
      %6595 = vmatpush.msra.mxu0 0.0
      %6596 = vmatpush.msra.mxu0 0.0
      %6597 = vmatpush.msra.mxu0 0.0
      %6598 = vmatpush.msra.mxu0 0.0
      %6599 = vmatpush.msra.mxu0 0.0
      %6600 = vmatpush.msra.mxu0 0.0
      %6601 = vmatpush.msra.mxu0 0.0
      %6602 = vmatpush.msra.mxu0 0.0
      %6603 = vmatpush.msra.mxu0 0.0
      %6604 = vmatpush.msra.mxu0 0.0
      %6605 = vmatpush.msra.mxu0 0.0
      %6606 = vmatpush.msra.mxu0 %v6582
      %6607 = vmatmul.f32.gmra.mxu0 %v6589
      %v6608 = vpop.f32.mrf.mxu0
      %v6609 = vadd.f32 0.0, %v6608
      %6610 = vdwg.mxu0
      %6611 = vmatpush.msra.mxu0 0.0
      %6612 = vmatpush.msra.mxu0 0.0
      %6613 = vmatpush.msra.mxu0 0.0
      %6614 = vmatpush.msra.mxu0 0.0
      %6615 = vmatpush.msra.mxu0 0.0
      %6616 = vmatpush.msra.mxu0 0.0
      %6617 = vmatpush.msra.mxu0 0.0
      %6618 = vmatpush.msra.mxu0 0.0
      %6619 = vmatpush.msra.mxu0 0.0
      %6620 = vmatpush.msra.mxu0 0.0
      %6621 = vmatpush.msra.mxu0 0.0
      %6622 = vmatpush.msra.mxu0 0.0
      %6623 = vmatpush.msra.mxu0 0.0
      %6624 = vmatpush.msra.mxu0 0.0
      %6625 = vmatpush.msra.mxu0 0.0
      %6626 = vmatpush.msra.mxu0 %v6583
      %6627 = vmatmul.f32.gmra.mxu0 %v6589
      %v6628 = vpop.f32.mrf.mxu0
      %v6629 = vadd.f32 0.0, %v6628
      %6630 = vdwg.mxu0
      %6631 = vmatpush.msra.mxu0 0.0
      %6632 = vmatpush.msra.mxu0 0.0
      %6633 = vmatpush.msra.mxu0 0.0
      %6634 = vmatpush.msra.mxu0 0.0
      %6635 = vmatpush.msra.mxu0 0.0
      %6636 = vmatpush.msra.mxu0 0.0
      %6637 = vmatpush.msra.mxu0 0.0
      %6638 = vmatpush.msra.mxu0 0.0
      %6639 = vmatpush.msra.mxu0 0.0
      %6640 = vmatpush.msra.mxu0 0.0
      %6641 = vmatpush.msra.mxu0 0.0
      %6642 = vmatpush.msra.mxu0 0.0
      %6643 = vmatpush.msra.mxu0 0.0
      %6644 = vmatpush.msra.mxu0 0.0
      %6645 = vmatpush.msra.mxu0 0.0
      %6646 = vmatpush.msra.mxu0 %v6584
      %6647 = vmatmul.f32.gmra.mxu0 %v6589
      %v6648 = vpop.f32.mrf.mxu0
      %v6649 = vadd.f32 0.0, %v6648
      %6650 = vdwg.mxu0
      %6651 = vmatpush.msra.mxu0 0.0
      %6652 = vmatpush.msra.mxu0 0.0
      %6653 = vmatpush.msra.mxu0 0.0
      %6654 = vmatpush.msra.mxu0 0.0
      %6655 = vmatpush.msra.mxu0 0.0
      %6656 = vmatpush.msra.mxu0 0.0
      %6657 = vmatpush.msra.mxu0 0.0
      %6658 = vmatpush.msra.mxu0 0.0
      %6659 = vmatpush.msra.mxu0 0.0
      %6660 = vmatpush.msra.mxu0 0.0
      %6661 = vmatpush.msra.mxu0 0.0
      %6662 = vmatpush.msra.mxu0 0.0
      %6663 = vmatpush.msra.mxu0 0.0
      %6664 = vmatpush.msra.mxu0 0.0
      %6665 = vmatpush.msra.mxu0 0.0
      %6666 = vmatpush.msra.mxu0 %v6585
      %6667 = vmatmul.f32.gmra.mxu0 %v6589
      %v6668 = vpop.f32.mrf.mxu0
      %v6669 = vadd.f32 0.0, %v6668
      %6670 = vdwg.mxu0
      %v6671 = vadd.f32 %v6578, %v6609
      %v6672 = vadd.f32 %v6579, %v6629
      %v6673 = vadd.f32 %v6580, %v6649
      %v6674 = vadd.f32 %v6581, %v6669
      %6675 = vrot.lane.b32.xlu0 %v6151, 127
      %v6676 = vpop.permute.xlu0 %6675
      %6677 = vrot.lane.b32.xlu0 %v6152, 127
      %v6678 = vpop.permute.xlu0 %6677
      %6679 = vrot.lane.b32.xlu0 %v6153, 127
      %v6680 = vpop.permute.xlu0 %6679
      %6681 = vrot.lane.b32.xlu0 %v6154, 127
      %v6682 = vpop.permute.xlu0 %6681
      %v6683 = vsel %vm862, %v6680, %v6682
      %v6684 = vsel %vm862, %v6678, %v6680
      %v6685 = vsel %vm862, %v6676, %v6678
      %v6686 = vsel %vm862, %v6682, %v6676
      %v6687 = vmul.f32 %v6685, %v4761
      %v6688 = vmul.f32 %v6684, %v4762
      %v6689 = vmul.f32 %v6683, %v4763
      %v6690 = vmul.f32 %v6686, %v4764
      %s6691 = scalar_lea.vmem %s3, 472
      %v6692 = vld [vmem:[%s6691] sm:$0xff]
      %v6694 = vsel %vm311, %v6692, 0
      %6696 = vmatpush.msra.mxu0 0.0
      %6697 = vmatpush.msra.mxu0 0.0
      %6698 = vmatpush.msra.mxu0 0.0
      %6699 = vmatpush.msra.mxu0 0.0
      %6700 = vmatpush.msra.mxu0 0.0
      %6701 = vmatpush.msra.mxu0 0.0
      %6702 = vmatpush.msra.mxu0 0.0
      %6703 = vmatpush.msra.mxu0 0.0
      %6704 = vmatpush.msra.mxu0 0.0
      %6705 = vmatpush.msra.mxu0 0.0
      %6706 = vmatpush.msra.mxu0 0.0
      %6707 = vmatpush.msra.mxu0 0.0
      %6708 = vmatpush.msra.mxu0 0.0
      %6709 = vmatpush.msra.mxu0 0.0
      %6710 = vmatpush.msra.mxu0 0.0
      %6711 = vmatpush.msra.mxu0 %v6687
      %6712 = vmatmul.f32.gmra.mxu0 %v6694
      %v6713 = vpop.f32.mrf.mxu0
      %v6714 = vadd.f32 0.0, %v6713
      %6715 = vdwg.mxu0
      %6716 = vmatpush.msra.mxu0 0.0
      %6717 = vmatpush.msra.mxu0 0.0
      %6718 = vmatpush.msra.mxu0 0.0
      %6719 = vmatpush.msra.mxu0 0.0
      %6720 = vmatpush.msra.mxu0 0.0
      %6721 = vmatpush.msra.mxu0 0.0
      %6722 = vmatpush.msra.mxu0 0.0
      %6723 = vmatpush.msra.mxu0 0.0
      %6724 = vmatpush.msra.mxu0 0.0
      %6725 = vmatpush.msra.mxu0 0.0
      %6726 = vmatpush.msra.mxu0 0.0
      %6727 = vmatpush.msra.mxu0 0.0
      %6728 = vmatpush.msra.mxu0 0.0
      %6729 = vmatpush.msra.mxu0 0.0
      %6730 = vmatpush.msra.mxu0 0.0
      %6731 = vmatpush.msra.mxu0 %v6688
      %6732 = vmatmul.f32.gmra.mxu0 %v6694
      %v6733 = vpop.f32.mrf.mxu0
      %v6734 = vadd.f32 0.0, %v6733
      %6735 = vdwg.mxu0
      %6736 = vmatpush.msra.mxu0 0.0
      %6737 = vmatpush.msra.mxu0 0.0
      %6738 = vmatpush.msra.mxu0 0.0
      %6739 = vmatpush.msra.mxu0 0.0
      %6740 = vmatpush.msra.mxu0 0.0
      %6741 = vmatpush.msra.mxu0 0.0
      %6742 = vmatpush.msra.mxu0 0.0
      %6743 = vmatpush.msra.mxu0 0.0
      %6744 = vmatpush.msra.mxu0 0.0
      %6745 = vmatpush.msra.mxu0 0.0
      %6746 = vmatpush.msra.mxu0 0.0
      %6747 = vmatpush.msra.mxu0 0.0
      %6748 = vmatpush.msra.mxu0 0.0
      %6749 = vmatpush.msra.mxu0 0.0
      %6750 = vmatpush.msra.mxu0 0.0
      %6751 = vmatpush.msra.mxu0 %v6689
      %6752 = vmatmul.f32.gmra.mxu0 %v6694
      %v6753 = vpop.f32.mrf.mxu0
      %v6754 = vadd.f32 0.0, %v6753
      %6755 = vdwg.mxu0
      %6756 = vmatpush.msra.mxu0 0.0
      %6757 = vmatpush.msra.mxu0 0.0
      %6758 = vmatpush.msra.mxu0 0.0
      %6759 = vmatpush.msra.mxu0 0.0
      %6760 = vmatpush.msra.mxu0 0.0
      %6761 = vmatpush.msra.mxu0 0.0
      %6762 = vmatpush.msra.mxu0 0.0
      %6763 = vmatpush.msra.mxu0 0.0
      %6764 = vmatpush.msra.mxu0 0.0
      %6765 = vmatpush.msra.mxu0 0.0
      %6766 = vmatpush.msra.mxu0 0.0
      %6767 = vmatpush.msra.mxu0 0.0
      %6768 = vmatpush.msra.mxu0 0.0
      %6769 = vmatpush.msra.mxu0 0.0
      %6770 = vmatpush.msra.mxu0 0.0
      %6771 = vmatpush.msra.mxu0 %v6690
      %6772 = vmatmul.f32.gmra.mxu0 %v6694
      %v6773 = vpop.f32.mrf.mxu0
      %v6774 = vadd.f32 0.0, %v6773
      %6775 = vdwg.mxu0
      %v6776 = vadd.f32 %v6671, %v6714
      %v6777 = vadd.f32 %v6672, %v6734
      %v6778 = vadd.f32 %v6673, %v6754
      %v6779 = vadd.f32 %v6674, %v6774
      %6780 = vrot.lane.b32.xlu0 %v6151, 113
      %v6781 = vpop.permute.xlu0 %6780
      %6782 = vrot.lane.b32.xlu0 %v6152, 113
      %v6783 = vpop.permute.xlu0 %6782
      %6784 = vrot.lane.b32.xlu0 %v6153, 113
      %v6785 = vpop.permute.xlu0 %6784
      %6786 = vrot.lane.b32.xlu0 %v6154, 113
      %v6787 = vpop.permute.xlu0 %6786
      %v6788 = vsel %vm979, %v6785, %v6787
      %v6789 = vsel %vm979, %v6783, %v6785
      %v6790 = vsel %vm979, %v6781, %v6783
      %v6791 = vsel %vm979, %v6787, %v6781
      %v6792 = vmul.f32 %v6790, %v4876
      %v6793 = vmul.f32 %v6789, %v4877
      %v6794 = vmul.f32 %v6788, %v4878
      %v6795 = vmul.f32 %v6791, %v4879
      %s6796 = scalar_lea.vmem %s3, 480
      %v6797 = vld [vmem:[%s6796] sm:$0xff]
      %v6799 = vsel %vm311, %v6797, 0
      %6801 = vmatpush.msra.mxu0 0.0
      %6802 = vmatpush.msra.mxu0 0.0
      %6803 = vmatpush.msra.mxu0 0.0
      %6804 = vmatpush.msra.mxu0 0.0
      %6805 = vmatpush.msra.mxu0 0.0
      %6806 = vmatpush.msra.mxu0 0.0
      %6807 = vmatpush.msra.mxu0 0.0
      %6808 = vmatpush.msra.mxu0 0.0
      %6809 = vmatpush.msra.mxu0 0.0
      %6810 = vmatpush.msra.mxu0 0.0
      %6811 = vmatpush.msra.mxu0 0.0
      %6812 = vmatpush.msra.mxu0 0.0
      %6813 = vmatpush.msra.mxu0 0.0
      %6814 = vmatpush.msra.mxu0 0.0
      %6815 = vmatpush.msra.mxu0 0.0
      %6816 = vmatpush.msra.mxu0 %v6792
      %6817 = vmatmul.f32.gmra.mxu0 %v6799
      %v6818 = vpop.f32.mrf.mxu0
      %v6819 = vadd.f32 0.0, %v6818
      %6820 = vdwg.mxu0
      %6821 = vmatpush.msra.mxu0 0.0
      %6822 = vmatpush.msra.mxu0 0.0
      %6823 = vmatpush.msra.mxu0 0.0
      %6824 = vmatpush.msra.mxu0 0.0
      %6825 = vmatpush.msra.mxu0 0.0
      %6826 = vmatpush.msra.mxu0 0.0
      %6827 = vmatpush.msra.mxu0 0.0
      %6828 = vmatpush.msra.mxu0 0.0
      %6829 = vmatpush.msra.mxu0 0.0
      %6830 = vmatpush.msra.mxu0 0.0
      %6831 = vmatpush.msra.mxu0 0.0
      %6832 = vmatpush.msra.mxu0 0.0
      %6833 = vmatpush.msra.mxu0 0.0
      %6834 = vmatpush.msra.mxu0 0.0
      %6835 = vmatpush.msra.mxu0 0.0
      %6836 = vmatpush.msra.mxu0 %v6793
      %6837 = vmatmul.f32.gmra.mxu0 %v6799
      %v6838 = vpop.f32.mrf.mxu0
      %v6839 = vadd.f32 0.0, %v6838
      %6840 = vdwg.mxu0
      %6841 = vmatpush.msra.mxu0 0.0
      %6842 = vmatpush.msra.mxu0 0.0
      %6843 = vmatpush.msra.mxu0 0.0
      %6844 = vmatpush.msra.mxu0 0.0
      %6845 = vmatpush.msra.mxu0 0.0
      %6846 = vmatpush.msra.mxu0 0.0
      %6847 = vmatpush.msra.mxu0 0.0
      %6848 = vmatpush.msra.mxu0 0.0
      %6849 = vmatpush.msra.mxu0 0.0
      %6850 = vmatpush.msra.mxu0 0.0
      %6851 = vmatpush.msra.mxu0 0.0
      %6852 = vmatpush.msra.mxu0 0.0
      %6853 = vmatpush.msra.mxu0 0.0
      %6854 = vmatpush.msra.mxu0 0.0
      %6855 = vmatpush.msra.mxu0 0.0
      %6856 = vmatpush.msra.mxu0 %v6794
      %6857 = vmatmul.f32.gmra.mxu0 %v6799
      %v6858 = vpop.f32.mrf.mxu0
      %v6859 = vadd.f32 0.0, %v6858
      %6860 = vdwg.mxu0
      %6861 = vmatpush.msra.mxu0 0.0
      %6862 = vmatpush.msra.mxu0 0.0
      %6863 = vmatpush.msra.mxu0 0.0
      %6864 = vmatpush.msra.mxu0 0.0
      %6865 = vmatpush.msra.mxu0 0.0
      %6866 = vmatpush.msra.mxu0 0.0
      %6867 = vmatpush.msra.mxu0 0.0
      %6868 = vmatpush.msra.mxu0 0.0
      %6869 = vmatpush.msra.mxu0 0.0
      %6870 = vmatpush.msra.mxu0 0.0
      %6871 = vmatpush.msra.mxu0 0.0
      %6872 = vmatpush.msra.mxu0 0.0
      %6873 = vmatpush.msra.mxu0 0.0
      %6874 = vmatpush.msra.mxu0 0.0
      %6875 = vmatpush.msra.mxu0 0.0
      %6876 = vmatpush.msra.mxu0 %v6795
      %6877 = vmatmul.f32.gmra.mxu0 %v6799
      %v6878 = vpop.f32.mrf.mxu0
      %v6879 = vadd.f32 0.0, %v6878
      %6880 = vdwg.mxu0
      %v6881 = vadd.f32 %v6776, %v6819
      %v6882 = vadd.f32 %v6777, %v6839
      %v6883 = vadd.f32 %v6778, %v6859
      %v6884 = vadd.f32 %v6779, %v6879
      %6885 = vrot.lane.b32.xlu0 %v6151, 112
      %v6886 = vpop.permute.xlu0 %6885
      %6887 = vrot.lane.b32.xlu0 %v6152, 112
      %v6888 = vpop.permute.xlu0 %6887
      %6889 = vrot.lane.b32.xlu0 %v6153, 112
      %v6890 = vpop.permute.xlu0 %6889
      %6891 = vrot.lane.b32.xlu0 %v6154, 112
      %v6892 = vpop.permute.xlu0 %6891
      %v6893 = vsel %vm1096, %v6890, %v6892
      %v6894 = vsel %vm1096, %v6888, %v6890
      %v6895 = vsel %vm1096, %v6886, %v6888
      %v6896 = vsel %vm1096, %v6892, %v6886
      %v6897 = vmul.f32 %v6895, %v4991
      %v6898 = vmul.f32 %v6894, %v4992
      %v6899 = vmul.f32 %v6893, %v4993
      %v6900 = vmul.f32 %v6896, %v4994
      %s6901 = scalar_lea.vmem %s3, 488
      %v6902 = vld [vmem:[%s6901] sm:$0xff]
      %v6904 = vsel %vm311, %v6902, 0
      %6906 = vmatpush.msra.mxu0 0.0
      %6907 = vmatpush.msra.mxu0 0.0
      %6908 = vmatpush.msra.mxu0 0.0
      %6909 = vmatpush.msra.mxu0 0.0
      %6910 = vmatpush.msra.mxu0 0.0
      %6911 = vmatpush.msra.mxu0 0.0
      %6912 = vmatpush.msra.mxu0 0.0
      %6913 = vmatpush.msra.mxu0 0.0
      %6914 = vmatpush.msra.mxu0 0.0
      %6915 = vmatpush.msra.mxu0 0.0
      %6916 = vmatpush.msra.mxu0 0.0
      %6917 = vmatpush.msra.mxu0 0.0
      %6918 = vmatpush.msra.mxu0 0.0
      %6919 = vmatpush.msra.mxu0 0.0
      %6920 = vmatpush.msra.mxu0 0.0
      %6921 = vmatpush.msra.mxu0 %v6897
      %6922 = vmatmul.f32.gmra.mxu0 %v6904
      %v6923 = vpop.f32.mrf.mxu0
      %v6924 = vadd.f32 0.0, %v6923
      %6925 = vdwg.mxu0
      %6926 = vmatpush.msra.mxu0 0.0
      %6927 = vmatpush.msra.mxu0 0.0
      %6928 = vmatpush.msra.mxu0 0.0
      %6929 = vmatpush.msra.mxu0 0.0
      %6930 = vmatpush.msra.mxu0 0.0
      %6931 = vmatpush.msra.mxu0 0.0
      %6932 = vmatpush.msra.mxu0 0.0
      %6933 = vmatpush.msra.mxu0 0.0
      %6934 = vmatpush.msra.mxu0 0.0
      %6935 = vmatpush.msra.mxu0 0.0
      %6936 = vmatpush.msra.mxu0 0.0
      %6937 = vmatpush.msra.mxu0 0.0
      %6938 = vmatpush.msra.mxu0 0.0
      %6939 = vmatpush.msra.mxu0 0.0
      %6940 = vmatpush.msra.mxu0 0.0
      %6941 = vmatpush.msra.mxu0 %v6898
      %6942 = vmatmul.f32.gmra.mxu0 %v6904
      %v6943 = vpop.f32.mrf.mxu0
      %v6944 = vadd.f32 0.0, %v6943
      %6945 = vdwg.mxu0
      %6946 = vmatpush.msra.mxu0 0.0
      %6947 = vmatpush.msra.mxu0 0.0
      %6948 = vmatpush.msra.mxu0 0.0
      %6949 = vmatpush.msra.mxu0 0.0
      %6950 = vmatpush.msra.mxu0 0.0
      %6951 = vmatpush.msra.mxu0 0.0
      %6952 = vmatpush.msra.mxu0 0.0
      %6953 = vmatpush.msra.mxu0 0.0
      %6954 = vmatpush.msra.mxu0 0.0
      %6955 = vmatpush.msra.mxu0 0.0
      %6956 = vmatpush.msra.mxu0 0.0
      %6957 = vmatpush.msra.mxu0 0.0
      %6958 = vmatpush.msra.mxu0 0.0
      %6959 = vmatpush.msra.mxu0 0.0
      %6960 = vmatpush.msra.mxu0 0.0
      %6961 = vmatpush.msra.mxu0 %v6899
      %6962 = vmatmul.f32.gmra.mxu0 %v6904
      %v6963 = vpop.f32.mrf.mxu0
      %v6964 = vadd.f32 0.0, %v6963
      %6965 = vdwg.mxu0
      %6966 = vmatpush.msra.mxu0 0.0
      %6967 = vmatpush.msra.mxu0 0.0
      %6968 = vmatpush.msra.mxu0 0.0
      %6969 = vmatpush.msra.mxu0 0.0
      %6970 = vmatpush.msra.mxu0 0.0
      %6971 = vmatpush.msra.mxu0 0.0
      %6972 = vmatpush.msra.mxu0 0.0
      %6973 = vmatpush.msra.mxu0 0.0
      %6974 = vmatpush.msra.mxu0 0.0
      %6975 = vmatpush.msra.mxu0 0.0
      %6976 = vmatpush.msra.mxu0 0.0
      %6977 = vmatpush.msra.mxu0 0.0
      %6978 = vmatpush.msra.mxu0 0.0
      %6979 = vmatpush.msra.mxu0 0.0
      %6980 = vmatpush.msra.mxu0 0.0
      %6981 = vmatpush.msra.mxu0 %v6900
      %6982 = vmatmul.f32.gmra.mxu0 %v6904
      %v6983 = vpop.f32.mrf.mxu0
      %v6984 = vadd.f32 0.0, %v6983
      %6985 = vdwg.mxu0
      %v6986 = vadd.f32 %v6881, %v6924
      %v6987 = vadd.f32 %v6882, %v6944
      %v6988 = vadd.f32 %v6883, %v6964
      %v6989 = vadd.f32 %v6884, %v6984
      %6990 = vrot.lane.b32.xlu0 %v6151, 111
      %v6991 = vpop.permute.xlu0 %6990
      %6992 = vrot.lane.b32.xlu0 %v6152, 111
      %v6993 = vpop.permute.xlu0 %6992
      %6994 = vrot.lane.b32.xlu0 %v6153, 111
      %v6995 = vpop.permute.xlu0 %6994
      %6996 = vrot.lane.b32.xlu0 %v6154, 111
      %v6997 = vpop.permute.xlu0 %6996
      %v6998 = vsel %vm1213, %v6995, %v6997
      %v6999 = vsel %vm1213, %v6993, %v6995
      %v7000 = vsel %vm1213, %v6991, %v6993
      %v7001 = vsel %vm1213, %v6997, %v6991
      %v7002 = vmul.f32 %v7000, %v5106
      %v7003 = vmul.f32 %v6999, %v5107
      %v7004 = vmul.f32 %v6998, %v5108
      %v7005 = vmul.f32 %v7001, %v5109
      %s7006 = scalar_lea.vmem %s3, 496
      %v7007 = vld [vmem:[%s7006] sm:$0xff]
      %v7009 = vsel %vm311, %v7007, 0
      %7011 = vmatpush.msra.mxu0 0.0
      %7012 = vmatpush.msra.mxu0 0.0
      %7013 = vmatpush.msra.mxu0 0.0
      %7014 = vmatpush.msra.mxu0 0.0
      %7015 = vmatpush.msra.mxu0 0.0
      %7016 = vmatpush.msra.mxu0 0.0
      %7017 = vmatpush.msra.mxu0 0.0
      %7018 = vmatpush.msra.mxu0 0.0
      %7019 = vmatpush.msra.mxu0 0.0
      %7020 = vmatpush.msra.mxu0 0.0
      %7021 = vmatpush.msra.mxu0 0.0
      %7022 = vmatpush.msra.mxu0 0.0
      %7023 = vmatpush.msra.mxu0 0.0
      %7024 = vmatpush.msra.mxu0 0.0
      %7025 = vmatpush.msra.mxu0 0.0
      %7026 = vmatpush.msra.mxu0 %v7002
      %7027 = vmatmul.f32.gmra.mxu0 %v7009
      %v7028 = vpop.f32.mrf.mxu0
      %v7029 = vadd.f32 0.0, %v7028
      %7030 = vdwg.mxu0
      %7031 = vmatpush.msra.mxu0 0.0
      %7032 = vmatpush.msra.mxu0 0.0
      %7033 = vmatpush.msra.mxu0 0.0
      %7034 = vmatpush.msra.mxu0 0.0
      %7035 = vmatpush.msra.mxu0 0.0
      %7036 = vmatpush.msra.mxu0 0.0
      %7037 = vmatpush.msra.mxu0 0.0
      %7038 = vmatpush.msra.mxu0 0.0
      %7039 = vmatpush.msra.mxu0 0.0
      %7040 = vmatpush.msra.mxu0 0.0
      %7041 = vmatpush.msra.mxu0 0.0
      %7042 = vmatpush.msra.mxu0 0.0
      %7043 = vmatpush.msra.mxu0 0.0
      %7044 = vmatpush.msra.mxu0 0.0
      %7045 = vmatpush.msra.mxu0 0.0
      %7046 = vmatpush.msra.mxu0 %v7003
      %7047 = vmatmul.f32.gmra.mxu0 %v7009
      %v7048 = vpop.f32.mrf.mxu0
      %v7049 = vadd.f32 0.0, %v7048
      %7050 = vdwg.mxu0
      %7051 = vmatpush.msra.mxu0 0.0
      %7052 = vmatpush.msra.mxu0 0.0
      %7053 = vmatpush.msra.mxu0 0.0
      %7054 = vmatpush.msra.mxu0 0.0
      %7055 = vmatpush.msra.mxu0 0.0
      %7056 = vmatpush.msra.mxu0 0.0
      %7057 = vmatpush.msra.mxu0 0.0
      %7058 = vmatpush.msra.mxu0 0.0
      %7059 = vmatpush.msra.mxu0 0.0
      %7060 = vmatpush.msra.mxu0 0.0
      %7061 = vmatpush.msra.mxu0 0.0
      %7062 = vmatpush.msra.mxu0 0.0
      %7063 = vmatpush.msra.mxu0 0.0
      %7064 = vmatpush.msra.mxu0 0.0
      %7065 = vmatpush.msra.mxu0 0.0
      %7066 = vmatpush.msra.mxu0 %v7004
      %7067 = vmatmul.f32.gmra.mxu0 %v7009
      %v7068 = vpop.f32.mrf.mxu0
      %v7069 = vadd.f32 0.0, %v7068
      %7070 = vdwg.mxu0
      %7071 = vmatpush.msra.mxu0 0.0
      %7072 = vmatpush.msra.mxu0 0.0
      %7073 = vmatpush.msra.mxu0 0.0
      %7074 = vmatpush.msra.mxu0 0.0
      %7075 = vmatpush.msra.mxu0 0.0
      %7076 = vmatpush.msra.mxu0 0.0
      %7077 = vmatpush.msra.mxu0 0.0
      %7078 = vmatpush.msra.mxu0 0.0
      %7079 = vmatpush.msra.mxu0 0.0
      %7080 = vmatpush.msra.mxu0 0.0
      %7081 = vmatpush.msra.mxu0 0.0
      %7082 = vmatpush.msra.mxu0 0.0
      %7083 = vmatpush.msra.mxu0 0.0
      %7084 = vmatpush.msra.mxu0 0.0
      %7085 = vmatpush.msra.mxu0 0.0
      %7086 = vmatpush.msra.mxu0 %v7005
      %7087 = vmatmul.f32.gmra.mxu0 %v7009
      %v7088 = vpop.f32.mrf.mxu0
      %v7089 = vadd.f32 0.0, %v7088
      %7090 = vdwg.mxu0
      %v7091 = vadd.f32 %v6986, %v7029
      %v7092 = vadd.f32 %v6987, %v7049
      %v7093 = vadd.f32 %v6988, %v7069
      %v7094 = vadd.f32 %v6989, %v7089
      %v7095 = vmax.f32 %v7091, 0.0
      %v7096 = vmax.f32 %v7092, 0.0
      %v7097 = vmax.f32 %v7093, 0.0
      %v7098 = vmax.f32 %v7094, 0.0
      %s7099 = scalar_lea.vmem %s4, 56
      %v7100 = vld [vmem:[%s7099] sm:$0xff]
      %7102 = vset.pattern.permute.xlu0 0
      %7103 = vperm.xlu0 %7102, %v7100
      %v7104 = vpop.permute.xlu0 %7103
      %7106 = vrot.lane.b32.xlu0 %v7095, 17
      %v7107 = vpop.permute.xlu0 %7106
      %7108 = vrot.lane.b32.xlu0 %v7096, 17
      %v7109 = vpop.permute.xlu0 %7108
      %7110 = vrot.lane.b32.xlu0 %v7097, 17
      %v7111 = vpop.permute.xlu0 %7110
      %7112 = vrot.lane.b32.xlu0 %v7098, 17
      %v7113 = vpop.permute.xlu0 %7112
      %v7114 = vsel %vm291, %v7111, %v7113
      %v7115 = vsel %vm291, %v7109, %v7111
      %v7116 = vsel %vm291, %v7107, %v7109
      %v7117 = vsel %vm291, %v7113, %v7107
      %v7118 = vmul.f32 %v7117, %v4198
      %v7119 = vmul.f32 %v7116, %v4199
      %v7120 = vmul.f32 %v7115, %v4200
      %v7121 = vmul.f32 %v7114, %v4201
      %s7122 = scalar_lea.vmem %s3, 504
      %v7123 = vld [vmem:[%s7122] sm:$0xff]
      %v7125 = vsel %vm311, %v7123, 0
      %7127 = vmatpush.msra.mxu0 0.0
      %7128 = vmatpush.msra.mxu0 0.0
      %7129 = vmatpush.msra.mxu0 0.0
      %7130 = vmatpush.msra.mxu0 0.0
      %7131 = vmatpush.msra.mxu0 0.0
      %7132 = vmatpush.msra.mxu0 0.0
      %7133 = vmatpush.msra.mxu0 0.0
      %7134 = vmatpush.msra.mxu0 0.0
      %7135 = vmatpush.msra.mxu0 0.0
      %7136 = vmatpush.msra.mxu0 0.0
      %7137 = vmatpush.msra.mxu0 0.0
      %7138 = vmatpush.msra.mxu0 0.0
      %7139 = vmatpush.msra.mxu0 0.0
      %7140 = vmatpush.msra.mxu0 0.0
      %7141 = vmatpush.msra.mxu0 0.0
      %7142 = vmatpush.msra.mxu0 %v7118
      %7143 = vmatmul.f32.gmra.mxu0 %v7125
      %v7144 = vpop.f32.mrf.mxu0
      %v7145 = vadd.f32 0.0, %v7144
      %7146 = vdwg.mxu0
      %7147 = vmatpush.msra.mxu0 0.0
      %7148 = vmatpush.msra.mxu0 0.0
      %7149 = vmatpush.msra.mxu0 0.0
      %7150 = vmatpush.msra.mxu0 0.0
      %7151 = vmatpush.msra.mxu0 0.0
      %7152 = vmatpush.msra.mxu0 0.0
      %7153 = vmatpush.msra.mxu0 0.0
      %7154 = vmatpush.msra.mxu0 0.0
      %7155 = vmatpush.msra.mxu0 0.0
      %7156 = vmatpush.msra.mxu0 0.0
      %7157 = vmatpush.msra.mxu0 0.0
      %7158 = vmatpush.msra.mxu0 0.0
      %7159 = vmatpush.msra.mxu0 0.0
      %7160 = vmatpush.msra.mxu0 0.0
      %7161 = vmatpush.msra.mxu0 0.0
      %7162 = vmatpush.msra.mxu0 %v7119
      %7163 = vmatmul.f32.gmra.mxu0 %v7125
      %v7164 = vpop.f32.mrf.mxu0
      %v7165 = vadd.f32 0.0, %v7164
      %7166 = vdwg.mxu0
      %7167 = vmatpush.msra.mxu0 0.0
      %7168 = vmatpush.msra.mxu0 0.0
      %7169 = vmatpush.msra.mxu0 0.0
      %7170 = vmatpush.msra.mxu0 0.0
      %7171 = vmatpush.msra.mxu0 0.0
      %7172 = vmatpush.msra.mxu0 0.0
      %7173 = vmatpush.msra.mxu0 0.0
      %7174 = vmatpush.msra.mxu0 0.0
      %7175 = vmatpush.msra.mxu0 0.0
      %7176 = vmatpush.msra.mxu0 0.0
      %7177 = vmatpush.msra.mxu0 0.0
      %7178 = vmatpush.msra.mxu0 0.0
      %7179 = vmatpush.msra.mxu0 0.0
      %7180 = vmatpush.msra.mxu0 0.0
      %7181 = vmatpush.msra.mxu0 0.0
      %7182 = vmatpush.msra.mxu0 %v7120
      %7183 = vmatmul.f32.gmra.mxu0 %v7125
      %v7184 = vpop.f32.mrf.mxu0
      %v7185 = vadd.f32 0.0, %v7184
      %7186 = vdwg.mxu0
      %7187 = vmatpush.msra.mxu0 0.0
      %7188 = vmatpush.msra.mxu0 0.0
      %7189 = vmatpush.msra.mxu0 0.0
      %7190 = vmatpush.msra.mxu0 0.0
      %7191 = vmatpush.msra.mxu0 0.0
      %7192 = vmatpush.msra.mxu0 0.0
      %7193 = vmatpush.msra.mxu0 0.0
      %7194 = vmatpush.msra.mxu0 0.0
      %7195 = vmatpush.msra.mxu0 0.0
      %7196 = vmatpush.msra.mxu0 0.0
      %7197 = vmatpush.msra.mxu0 0.0
      %7198 = vmatpush.msra.mxu0 0.0
      %7199 = vmatpush.msra.mxu0 0.0
      %7200 = vmatpush.msra.mxu0 0.0
      %7201 = vmatpush.msra.mxu0 0.0
      %7202 = vmatpush.msra.mxu0 %v7121
      %7203 = vmatmul.f32.gmra.mxu0 %v7125
      %v7204 = vpop.f32.mrf.mxu0
      %v7205 = vadd.f32 0.0, %v7204
      %7206 = vdwg.mxu0
      %v7207 = vadd.f32 %v7104, %v7145
      %v7208 = vadd.f32 %v7104, %v7165
      %v7209 = vadd.f32 %v7104, %v7185
      %v7210 = vadd.f32 %v7104, %v7205
      %7211 = vrot.lane.b32.xlu0 %v7095, 16
      %v7212 = vpop.permute.xlu0 %7211
      %7213 = vrot.lane.b32.xlu0 %v7096, 16
      %v7214 = vpop.permute.xlu0 %7213
      %7215 = vrot.lane.b32.xlu0 %v7097, 16
      %v7216 = vpop.permute.xlu0 %7215
      %7217 = vrot.lane.b32.xlu0 %v7098, 16
      %v7218 = vpop.permute.xlu0 %7217
      %v7219 = vsel %vm407, %v7216, %v7218
      %v7220 = vsel %vm407, %v7214, %v7216
      %v7221 = vsel %vm407, %v7212, %v7214
      %v7222 = vsel %vm407, %v7218, %v7212
      %v7223 = vmul.f32 %v7222, %v4313
      %v7224 = vmul.f32 %v7221, %v4314
      %v7225 = vmul.f32 %v7220, %v4315
      %v7226 = vmul.f32 %v7219, %v4316
      %s7227 = scalar_lea.vmem %s3, 512
      %v7228 = vld [vmem:[%s7227] sm:$0xff]
      %v7230 = vsel %vm311, %v7228, 0
      %7232 = vmatpush.msra.mxu0 0.0
      %7233 = vmatpush.msra.mxu0 0.0
      %7234 = vmatpush.msra.mxu0 0.0
      %7235 = vmatpush.msra.mxu0 0.0
      %7236 = vmatpush.msra.mxu0 0.0
      %7237 = vmatpush.msra.mxu0 0.0
      %7238 = vmatpush.msra.mxu0 0.0
      %7239 = vmatpush.msra.mxu0 0.0
      %7240 = vmatpush.msra.mxu0 0.0
      %7241 = vmatpush.msra.mxu0 0.0
      %7242 = vmatpush.msra.mxu0 0.0
      %7243 = vmatpush.msra.mxu0 0.0
      %7244 = vmatpush.msra.mxu0 0.0
      %7245 = vmatpush.msra.mxu0 0.0
      %7246 = vmatpush.msra.mxu0 0.0
      %7247 = vmatpush.msra.mxu0 %v7223
      %7248 = vmatmul.f32.gmra.mxu0 %v7230
      %v7249 = vpop.f32.mrf.mxu0
      %v7250 = vadd.f32 0.0, %v7249
      %7251 = vdwg.mxu0
      %7252 = vmatpush.msra.mxu0 0.0
      %7253 = vmatpush.msra.mxu0 0.0
      %7254 = vmatpush.msra.mxu0 0.0
      %7255 = vmatpush.msra.mxu0 0.0
      %7256 = vmatpush.msra.mxu0 0.0
      %7257 = vmatpush.msra.mxu0 0.0
      %7258 = vmatpush.msra.mxu0 0.0
      %7259 = vmatpush.msra.mxu0 0.0
      %7260 = vmatpush.msra.mxu0 0.0
      %7261 = vmatpush.msra.mxu0 0.0
      %7262 = vmatpush.msra.mxu0 0.0
      %7263 = vmatpush.msra.mxu0 0.0
      %7264 = vmatpush.msra.mxu0 0.0
      %7265 = vmatpush.msra.mxu0 0.0
      %7266 = vmatpush.msra.mxu0 0.0
      %7267 = vmatpush.msra.mxu0 %v7224
      %7268 = vmatmul.f32.gmra.mxu0 %v7230
      %v7269 = vpop.f32.mrf.mxu0
      %v7270 = vadd.f32 0.0, %v7269
      %7271 = vdwg.mxu0
      %7272 = vmatpush.msra.mxu0 0.0
      %7273 = vmatpush.msra.mxu0 0.0
      %7274 = vmatpush.msra.mxu0 0.0
      %7275 = vmatpush.msra.mxu0 0.0
      %7276 = vmatpush.msra.mxu0 0.0
      %7277 = vmatpush.msra.mxu0 0.0
      %7278 = vmatpush.msra.mxu0 0.0
      %7279 = vmatpush.msra.mxu0 0.0
      %7280 = vmatpush.msra.mxu0 0.0
      %7281 = vmatpush.msra.mxu0 0.0
      %7282 = vmatpush.msra.mxu0 0.0
      %7283 = vmatpush.msra.mxu0 0.0
      %7284 = vmatpush.msra.mxu0 0.0
      %7285 = vmatpush.msra.mxu0 0.0
      %7286 = vmatpush.msra.mxu0 0.0
      %7287 = vmatpush.msra.mxu0 %v7225
      %7288 = vmatmul.f32.gmra.mxu0 %v7230
      %v7289 = vpop.f32.mrf.mxu0
      %v7290 = vadd.f32 0.0, %v7289
      %7291 = vdwg.mxu0
      %7292 = vmatpush.msra.mxu0 0.0
      %7293 = vmatpush.msra.mxu0 0.0
      %7294 = vmatpush.msra.mxu0 0.0
      %7295 = vmatpush.msra.mxu0 0.0
      %7296 = vmatpush.msra.mxu0 0.0
      %7297 = vmatpush.msra.mxu0 0.0
      %7298 = vmatpush.msra.mxu0 0.0
      %7299 = vmatpush.msra.mxu0 0.0
      %7300 = vmatpush.msra.mxu0 0.0
      %7301 = vmatpush.msra.mxu0 0.0
      %7302 = vmatpush.msra.mxu0 0.0
      %7303 = vmatpush.msra.mxu0 0.0
      %7304 = vmatpush.msra.mxu0 0.0
      %7305 = vmatpush.msra.mxu0 0.0
      %7306 = vmatpush.msra.mxu0 0.0
      %7307 = vmatpush.msra.mxu0 %v7226
      %7308 = vmatmul.f32.gmra.mxu0 %v7230
      %v7309 = vpop.f32.mrf.mxu0
      %v7310 = vadd.f32 0.0, %v7309
      %7311 = vdwg.mxu0
      %v7312 = vadd.f32 %v7207, %v7250
      %v7313 = vadd.f32 %v7208, %v7270
      %v7314 = vadd.f32 %v7209, %v7290
      %v7315 = vadd.f32 %v7210, %v7310
      %7316 = vrot.lane.b32.xlu0 %v7095, 15
      %v7317 = vpop.permute.xlu0 %7316
      %7318 = vrot.lane.b32.xlu0 %v7096, 15
      %v7319 = vpop.permute.xlu0 %7318
      %7320 = vrot.lane.b32.xlu0 %v7097, 15
      %v7321 = vpop.permute.xlu0 %7320
      %7322 = vrot.lane.b32.xlu0 %v7098, 15
      %v7323 = vpop.permute.xlu0 %7322
      %v7324 = vsel %vm524, %v7321, %v7323
      %v7325 = vsel %vm524, %v7319, %v7321
      %v7326 = vsel %vm524, %v7317, %v7319
      %v7327 = vsel %vm524, %v7323, %v7317
      %v7328 = vmul.f32 %v7327, %v4428
      %v7329 = vmul.f32 %v7326, %v4429
      %v7330 = vmul.f32 %v7325, %v4430
      %v7331 = vmul.f32 %v7324, %v4431
      %s7332 = scalar_lea.vmem %s3, 520
      %v7333 = vld [vmem:[%s7332] sm:$0xff]
      %v7335 = vsel %vm311, %v7333, 0
      %7337 = vmatpush.msra.mxu0 0.0
      %7338 = vmatpush.msra.mxu0 0.0
      %7339 = vmatpush.msra.mxu0 0.0
      %7340 = vmatpush.msra.mxu0 0.0
      %7341 = vmatpush.msra.mxu0 0.0
      %7342 = vmatpush.msra.mxu0 0.0
      %7343 = vmatpush.msra.mxu0 0.0
      %7344 = vmatpush.msra.mxu0 0.0
      %7345 = vmatpush.msra.mxu0 0.0
      %7346 = vmatpush.msra.mxu0 0.0
      %7347 = vmatpush.msra.mxu0 0.0
      %7348 = vmatpush.msra.mxu0 0.0
      %7349 = vmatpush.msra.mxu0 0.0
      %7350 = vmatpush.msra.mxu0 0.0
      %7351 = vmatpush.msra.mxu0 0.0
      %7352 = vmatpush.msra.mxu0 %v7328
      %7353 = vmatmul.f32.gmra.mxu0 %v7335
      %v7354 = vpop.f32.mrf.mxu0
      %v7355 = vadd.f32 0.0, %v7354
      %7356 = vdwg.mxu0
      %7357 = vmatpush.msra.mxu0 0.0
      %7358 = vmatpush.msra.mxu0 0.0
      %7359 = vmatpush.msra.mxu0 0.0
      %7360 = vmatpush.msra.mxu0 0.0
      %7361 = vmatpush.msra.mxu0 0.0
      %7362 = vmatpush.msra.mxu0 0.0
      %7363 = vmatpush.msra.mxu0 0.0
      %7364 = vmatpush.msra.mxu0 0.0
      %7365 = vmatpush.msra.mxu0 0.0
      %7366 = vmatpush.msra.mxu0 0.0
      %7367 = vmatpush.msra.mxu0 0.0
      %7368 = vmatpush.msra.mxu0 0.0
      %7369 = vmatpush.msra.mxu0 0.0
      %7370 = vmatpush.msra.mxu0 0.0
      %7371 = vmatpush.msra.mxu0 0.0
      %7372 = vmatpush.msra.mxu0 %v7329
      %7373 = vmatmul.f32.gmra.mxu0 %v7335
      %v7374 = vpop.f32.mrf.mxu0
      %v7375 = vadd.f32 0.0, %v7374
      %7376 = vdwg.mxu0
      %7377 = vmatpush.msra.mxu0 0.0
      %7378 = vmatpush.msra.mxu0 0.0
      %7379 = vmatpush.msra.mxu0 0.0
      %7380 = vmatpush.msra.mxu0 0.0
      %7381 = vmatpush.msra.mxu0 0.0
      %7382 = vmatpush.msra.mxu0 0.0
      %7383 = vmatpush.msra.mxu0 0.0
      %7384 = vmatpush.msra.mxu0 0.0
      %7385 = vmatpush.msra.mxu0 0.0
      %7386 = vmatpush.msra.mxu0 0.0
      %7387 = vmatpush.msra.mxu0 0.0
      %7388 = vmatpush.msra.mxu0 0.0
      %7389 = vmatpush.msra.mxu0 0.0
      %7390 = vmatpush.msra.mxu0 0.0
      %7391 = vmatpush.msra.mxu0 0.0
      %7392 = vmatpush.msra.mxu0 %v7330
      %7393 = vmatmul.f32.gmra.mxu0 %v7335
      %v7394 = vpop.f32.mrf.mxu0
      %v7395 = vadd.f32 0.0, %v7394
      %7396 = vdwg.mxu0
      %7397 = vmatpush.msra.mxu0 0.0
      %7398 = vmatpush.msra.mxu0 0.0
      %7399 = vmatpush.msra.mxu0 0.0
      %7400 = vmatpush.msra.mxu0 0.0
      %7401 = vmatpush.msra.mxu0 0.0
      %7402 = vmatpush.msra.mxu0 0.0
      %7403 = vmatpush.msra.mxu0 0.0
      %7404 = vmatpush.msra.mxu0 0.0
      %7405 = vmatpush.msra.mxu0 0.0
      %7406 = vmatpush.msra.mxu0 0.0
      %7407 = vmatpush.msra.mxu0 0.0
      %7408 = vmatpush.msra.mxu0 0.0
      %7409 = vmatpush.msra.mxu0 0.0
      %7410 = vmatpush.msra.mxu0 0.0
      %7411 = vmatpush.msra.mxu0 0.0
      %7412 = vmatpush.msra.mxu0 %v7331
      %7413 = vmatmul.f32.gmra.mxu0 %v7335
      %v7414 = vpop.f32.mrf.mxu0
      %v7415 = vadd.f32 0.0, %v7414
      %7416 = vdwg.mxu0
      %v7417 = vadd.f32 %v7312, %v7355
      %v7418 = vadd.f32 %v7313, %v7375
      %v7419 = vadd.f32 %v7314, %v7395
      %v7420 = vadd.f32 %v7315, %v7415
      %7421 = vrot.lane.b32.xlu0 %v7095, 1
      %v7422 = vpop.permute.xlu0 %7421
      %7423 = vrot.lane.b32.xlu0 %v7096, 1
      %v7424 = vpop.permute.xlu0 %7423
      %7425 = vrot.lane.b32.xlu0 %v7097, 1
      %v7426 = vpop.permute.xlu0 %7425
      %7427 = vrot.lane.b32.xlu0 %v7098, 1
      %v7428 = vpop.permute.xlu0 %7427
      %v7429 = vsel %vm641, %v7426, %v7428
      %v7430 = vsel %vm641, %v7424, %v7426
      %v7431 = vsel %vm641, %v7422, %v7424
      %v7432 = vsel %vm641, %v7428, %v7422
      %v7433 = vmul.f32 %v7432, %v4543
      %v7434 = vmul.f32 %v7431, %v4544
      %v7435 = vmul.f32 %v7430, %v4545
      %v7436 = vmul.f32 %v7429, %v4546
      %s7437 = scalar_lea.vmem %s3, 528
      %v7438 = vld [vmem:[%s7437] sm:$0xff]
      %v7440 = vsel %vm311, %v7438, 0
      %7442 = vmatpush.msra.mxu0 0.0
      %7443 = vmatpush.msra.mxu0 0.0
      %7444 = vmatpush.msra.mxu0 0.0
      %7445 = vmatpush.msra.mxu0 0.0
      %7446 = vmatpush.msra.mxu0 0.0
      %7447 = vmatpush.msra.mxu0 0.0
      %7448 = vmatpush.msra.mxu0 0.0
      %7449 = vmatpush.msra.mxu0 0.0
      %7450 = vmatpush.msra.mxu0 0.0
      %7451 = vmatpush.msra.mxu0 0.0
      %7452 = vmatpush.msra.mxu0 0.0
      %7453 = vmatpush.msra.mxu0 0.0
      %7454 = vmatpush.msra.mxu0 0.0
      %7455 = vmatpush.msra.mxu0 0.0
      %7456 = vmatpush.msra.mxu0 0.0
      %7457 = vmatpush.msra.mxu0 %v7433
      %7458 = vmatmul.f32.gmra.mxu0 %v7440
      %v7459 = vpop.f32.mrf.mxu0
      %v7460 = vadd.f32 0.0, %v7459
      %7461 = vdwg.mxu0
      %7462 = vmatpush.msra.mxu0 0.0
      %7463 = vmatpush.msra.mxu0 0.0
      %7464 = vmatpush.msra.mxu0 0.0
      %7465 = vmatpush.msra.mxu0 0.0
      %7466 = vmatpush.msra.mxu0 0.0
      %7467 = vmatpush.msra.mxu0 0.0
      %7468 = vmatpush.msra.mxu0 0.0
      %7469 = vmatpush.msra.mxu0 0.0
      %7470 = vmatpush.msra.mxu0 0.0
      %7471 = vmatpush.msra.mxu0 0.0
      %7472 = vmatpush.msra.mxu0 0.0
      %7473 = vmatpush.msra.mxu0 0.0
      %7474 = vmatpush.msra.mxu0 0.0
      %7475 = vmatpush.msra.mxu0 0.0
      %7476 = vmatpush.msra.mxu0 0.0
      %7477 = vmatpush.msra.mxu0 %v7434
      %7478 = vmatmul.f32.gmra.mxu0 %v7440
      %v7479 = vpop.f32.mrf.mxu0
      %v7480 = vadd.f32 0.0, %v7479
      %7481 = vdwg.mxu0
      %7482 = vmatpush.msra.mxu0 0.0
      %7483 = vmatpush.msra.mxu0 0.0
      %7484 = vmatpush.msra.mxu0 0.0
      %7485 = vmatpush.msra.mxu0 0.0
      %7486 = vmatpush.msra.mxu0 0.0
      %7487 = vmatpush.msra.mxu0 0.0
      %7488 = vmatpush.msra.mxu0 0.0
      %7489 = vmatpush.msra.mxu0 0.0
      %7490 = vmatpush.msra.mxu0 0.0
      %7491 = vmatpush.msra.mxu0 0.0
      %7492 = vmatpush.msra.mxu0 0.0
      %7493 = vmatpush.msra.mxu0 0.0
      %7494 = vmatpush.msra.mxu0 0.0
      %7495 = vmatpush.msra.mxu0 0.0
      %7496 = vmatpush.msra.mxu0 0.0
      %7497 = vmatpush.msra.mxu0 %v7435
      %7498 = vmatmul.f32.gmra.mxu0 %v7440
      %v7499 = vpop.f32.mrf.mxu0
      %v7500 = vadd.f32 0.0, %v7499
      %7501 = vdwg.mxu0
      %7502 = vmatpush.msra.mxu0 0.0
      %7503 = vmatpush.msra.mxu0 0.0
      %7504 = vmatpush.msra.mxu0 0.0
      %7505 = vmatpush.msra.mxu0 0.0
      %7506 = vmatpush.msra.mxu0 0.0
      %7507 = vmatpush.msra.mxu0 0.0
      %7508 = vmatpush.msra.mxu0 0.0
      %7509 = vmatpush.msra.mxu0 0.0
      %7510 = vmatpush.msra.mxu0 0.0
      %7511 = vmatpush.msra.mxu0 0.0
      %7512 = vmatpush.msra.mxu0 0.0
      %7513 = vmatpush.msra.mxu0 0.0
      %7514 = vmatpush.msra.mxu0 0.0
      %7515 = vmatpush.msra.mxu0 0.0
      %7516 = vmatpush.msra.mxu0 0.0
      %7517 = vmatpush.msra.mxu0 %v7436
      %7518 = vmatmul.f32.gmra.mxu0 %v7440
      %v7519 = vpop.f32.mrf.mxu0
      %v7520 = vadd.f32 0.0, %v7519
      %7521 = vdwg.mxu0
      %v7522 = vadd.f32 %v7417, %v7460
      %v7523 = vadd.f32 %v7418, %v7480
      %v7524 = vadd.f32 %v7419, %v7500
      %v7525 = vadd.f32 %v7420, %v7520
      %v7526 = vmul.f32 %v7095, %v4646
      %v7527 = vmul.f32 %v7096, %v4647
      %v7528 = vmul.f32 %v7097, %v4648
      %v7529 = vmul.f32 %v7098, %v4649
      %s7530 = scalar_lea.vmem %s3, 536
      %v7531 = vld [vmem:[%s7530] sm:$0xff]
      %v7533 = vsel %vm311, %v7531, 0
      %7535 = vmatpush.msra.mxu0 0.0
      %7536 = vmatpush.msra.mxu0 0.0
      %7537 = vmatpush.msra.mxu0 0.0
      %7538 = vmatpush.msra.mxu0 0.0
      %7539 = vmatpush.msra.mxu0 0.0
      %7540 = vmatpush.msra.mxu0 0.0
      %7541 = vmatpush.msra.mxu0 0.0
      %7542 = vmatpush.msra.mxu0 0.0
      %7543 = vmatpush.msra.mxu0 0.0
      %7544 = vmatpush.msra.mxu0 0.0
      %7545 = vmatpush.msra.mxu0 0.0
      %7546 = vmatpush.msra.mxu0 0.0
      %7547 = vmatpush.msra.mxu0 0.0
      %7548 = vmatpush.msra.mxu0 0.0
      %7549 = vmatpush.msra.mxu0 0.0
      %7550 = vmatpush.msra.mxu0 %v7526
      %7551 = vmatmul.f32.gmra.mxu0 %v7533
      %v7552 = vpop.f32.mrf.mxu0
      %v7553 = vadd.f32 0.0, %v7552
      %7554 = vdwg.mxu0
      %7555 = vmatpush.msra.mxu0 0.0
      %7556 = vmatpush.msra.mxu0 0.0
      %7557 = vmatpush.msra.mxu0 0.0
      %7558 = vmatpush.msra.mxu0 0.0
      %7559 = vmatpush.msra.mxu0 0.0
      %7560 = vmatpush.msra.mxu0 0.0
      %7561 = vmatpush.msra.mxu0 0.0
      %7562 = vmatpush.msra.mxu0 0.0
      %7563 = vmatpush.msra.mxu0 0.0
      %7564 = vmatpush.msra.mxu0 0.0
      %7565 = vmatpush.msra.mxu0 0.0
      %7566 = vmatpush.msra.mxu0 0.0
      %7567 = vmatpush.msra.mxu0 0.0
      %7568 = vmatpush.msra.mxu0 0.0
      %7569 = vmatpush.msra.mxu0 0.0
      %7570 = vmatpush.msra.mxu0 %v7527
      %7571 = vmatmul.f32.gmra.mxu0 %v7533
      %v7572 = vpop.f32.mrf.mxu0
      %v7573 = vadd.f32 0.0, %v7572
      %7574 = vdwg.mxu0
      %7575 = vmatpush.msra.mxu0 0.0
      %7576 = vmatpush.msra.mxu0 0.0
      %7577 = vmatpush.msra.mxu0 0.0
      %7578 = vmatpush.msra.mxu0 0.0
      %7579 = vmatpush.msra.mxu0 0.0
      %7580 = vmatpush.msra.mxu0 0.0
      %7581 = vmatpush.msra.mxu0 0.0
      %7582 = vmatpush.msra.mxu0 0.0
      %7583 = vmatpush.msra.mxu0 0.0
      %7584 = vmatpush.msra.mxu0 0.0
      %7585 = vmatpush.msra.mxu0 0.0
      %7586 = vmatpush.msra.mxu0 0.0
      %7587 = vmatpush.msra.mxu0 0.0
      %7588 = vmatpush.msra.mxu0 0.0
      %7589 = vmatpush.msra.mxu0 0.0
      %7590 = vmatpush.msra.mxu0 %v7528
      %7591 = vmatmul.f32.gmra.mxu0 %v7533
      %v7592 = vpop.f32.mrf.mxu0
      %v7593 = vadd.f32 0.0, %v7592
      %7594 = vdwg.mxu0
      %7595 = vmatpush.msra.mxu0 0.0
      %7596 = vmatpush.msra.mxu0 0.0
      %7597 = vmatpush.msra.mxu0 0.0
      %7598 = vmatpush.msra.mxu0 0.0
      %7599 = vmatpush.msra.mxu0 0.0
      %7600 = vmatpush.msra.mxu0 0.0
      %7601 = vmatpush.msra.mxu0 0.0
      %7602 = vmatpush.msra.mxu0 0.0
      %7603 = vmatpush.msra.mxu0 0.0
      %7604 = vmatpush.msra.mxu0 0.0
      %7605 = vmatpush.msra.mxu0 0.0
      %7606 = vmatpush.msra.mxu0 0.0
      %7607 = vmatpush.msra.mxu0 0.0
      %7608 = vmatpush.msra.mxu0 0.0
      %7609 = vmatpush.msra.mxu0 0.0
      %7610 = vmatpush.msra.mxu0 %v7529
      %7611 = vmatmul.f32.gmra.mxu0 %v7533
      %v7612 = vpop.f32.mrf.mxu0
      %v7613 = vadd.f32 0.0, %v7612
      %7614 = vdwg.mxu0
      %v7615 = vadd.f32 %v7522, %v7553
      %v7616 = vadd.f32 %v7523, %v7573
      %v7617 = vadd.f32 %v7524, %v7593
      %v7618 = vadd.f32 %v7525, %v7613
      %7619 = vrot.lane.b32.xlu0 %v7095, 127
      %v7620 = vpop.permute.xlu0 %7619
      %7621 = vrot.lane.b32.xlu0 %v7096, 127
      %v7622 = vpop.permute.xlu0 %7621
      %7623 = vrot.lane.b32.xlu0 %v7097, 127
      %v7624 = vpop.permute.xlu0 %7623
      %7625 = vrot.lane.b32.xlu0 %v7098, 127
      %v7626 = vpop.permute.xlu0 %7625
      %v7627 = vsel %vm862, %v7624, %v7626
      %v7628 = vsel %vm862, %v7622, %v7624
      %v7629 = vsel %vm862, %v7620, %v7622
      %v7630 = vsel %vm862, %v7626, %v7620
      %v7631 = vmul.f32 %v7629, %v4761
      %v7632 = vmul.f32 %v7628, %v4762
      %v7633 = vmul.f32 %v7627, %v4763
      %v7634 = vmul.f32 %v7630, %v4764
      %s7635 = scalar_lea.vmem %s3, 544
      %v7636 = vld [vmem:[%s7635] sm:$0xff]
      %v7638 = vsel %vm311, %v7636, 0
      %7640 = vmatpush.msra.mxu0 0.0
      %7641 = vmatpush.msra.mxu0 0.0
      %7642 = vmatpush.msra.mxu0 0.0
      %7643 = vmatpush.msra.mxu0 0.0
      %7644 = vmatpush.msra.mxu0 0.0
      %7645 = vmatpush.msra.mxu0 0.0
      %7646 = vmatpush.msra.mxu0 0.0
      %7647 = vmatpush.msra.mxu0 0.0
      %7648 = vmatpush.msra.mxu0 0.0
      %7649 = vmatpush.msra.mxu0 0.0
      %7650 = vmatpush.msra.mxu0 0.0
      %7651 = vmatpush.msra.mxu0 0.0
      %7652 = vmatpush.msra.mxu0 0.0
      %7653 = vmatpush.msra.mxu0 0.0
      %7654 = vmatpush.msra.mxu0 0.0
      %7655 = vmatpush.msra.mxu0 %v7631
      %7656 = vmatmul.f32.gmra.mxu0 %v7638
      %v7657 = vpop.f32.mrf.mxu0
      %v7658 = vadd.f32 0.0, %v7657
      %7659 = vdwg.mxu0
      %7660 = vmatpush.msra.mxu0 0.0
      %7661 = vmatpush.msra.mxu0 0.0
      %7662 = vmatpush.msra.mxu0 0.0
      %7663 = vmatpush.msra.mxu0 0.0
      %7664 = vmatpush.msra.mxu0 0.0
      %7665 = vmatpush.msra.mxu0 0.0
      %7666 = vmatpush.msra.mxu0 0.0
      %7667 = vmatpush.msra.mxu0 0.0
      %7668 = vmatpush.msra.mxu0 0.0
      %7669 = vmatpush.msra.mxu0 0.0
      %7670 = vmatpush.msra.mxu0 0.0
      %7671 = vmatpush.msra.mxu0 0.0
      %7672 = vmatpush.msra.mxu0 0.0
      %7673 = vmatpush.msra.mxu0 0.0
      %7674 = vmatpush.msra.mxu0 0.0
      %7675 = vmatpush.msra.mxu0 %v7632
      %7676 = vmatmul.f32.gmra.mxu0 %v7638
      %v7677 = vpop.f32.mrf.mxu0
      %v7678 = vadd.f32 0.0, %v7677
      %7679 = vdwg.mxu0
      %7680 = vmatpush.msra.mxu0 0.0
      %7681 = vmatpush.msra.mxu0 0.0
      %7682 = vmatpush.msra.mxu0 0.0
      %7683 = vmatpush.msra.mxu0 0.0
      %7684 = vmatpush.msra.mxu0 0.0
      %7685 = vmatpush.msra.mxu0 0.0
      %7686 = vmatpush.msra.mxu0 0.0
      %7687 = vmatpush.msra.mxu0 0.0
      %7688 = vmatpush.msra.mxu0 0.0
      %7689 = vmatpush.msra.mxu0 0.0
      %7690 = vmatpush.msra.mxu0 0.0
      %7691 = vmatpush.msra.mxu0 0.0
      %7692 = vmatpush.msra.mxu0 0.0
      %7693 = vmatpush.msra.mxu0 0.0
      %7694 = vmatpush.msra.mxu0 0.0
      %7695 = vmatpush.msra.mxu0 %v7633
      %7696 = vmatmul.f32.gmra.mxu0 %v7638
      %v7697 = vpop.f32.mrf.mxu0
      %v7698 = vadd.f32 0.0, %v7697
      %7699 = vdwg.mxu0
      %7700 = vmatpush.msra.mxu0 0.0
      %7701 = vmatpush.msra.mxu0 0.0
      %7702 = vmatpush.msra.mxu0 0.0
      %7703 = vmatpush.msra.mxu0 0.0
      %7704 = vmatpush.msra.mxu0 0.0
      %7705 = vmatpush.msra.mxu0 0.0
      %7706 = vmatpush.msra.mxu0 0.0
      %7707 = vmatpush.msra.mxu0 0.0
      %7708 = vmatpush.msra.mxu0 0.0
      %7709 = vmatpush.msra.mxu0 0.0
      %7710 = vmatpush.msra.mxu0 0.0
      %7711 = vmatpush.msra.mxu0 0.0
      %7712 = vmatpush.msra.mxu0 0.0
      %7713 = vmatpush.msra.mxu0 0.0
      %7714 = vmatpush.msra.mxu0 0.0
      %7715 = vmatpush.msra.mxu0 %v7634
      %7716 = vmatmul.f32.gmra.mxu0 %v7638
      %v7717 = vpop.f32.mrf.mxu0
      %v7718 = vadd.f32 0.0, %v7717
      %7719 = vdwg.mxu0
      %v7720 = vadd.f32 %v7615, %v7658
      %v7721 = vadd.f32 %v7616, %v7678
      %v7722 = vadd.f32 %v7617, %v7698
      %v7723 = vadd.f32 %v7618, %v7718
      %7724 = vrot.lane.b32.xlu0 %v7095, 113
      %v7725 = vpop.permute.xlu0 %7724
      %7726 = vrot.lane.b32.xlu0 %v7096, 113
      %v7727 = vpop.permute.xlu0 %7726
      %7728 = vrot.lane.b32.xlu0 %v7097, 113
      %v7729 = vpop.permute.xlu0 %7728
      %7730 = vrot.lane.b32.xlu0 %v7098, 113
      %v7731 = vpop.permute.xlu0 %7730
      %v7732 = vsel %vm979, %v7729, %v7731
      %v7733 = vsel %vm979, %v7727, %v7729
      %v7734 = vsel %vm979, %v7725, %v7727
      %v7735 = vsel %vm979, %v7731, %v7725
      %v7736 = vmul.f32 %v7734, %v4876
      %v7737 = vmul.f32 %v7733, %v4877
      %v7738 = vmul.f32 %v7732, %v4878
      %v7739 = vmul.f32 %v7735, %v4879
      %s7740 = scalar_lea.vmem %s3, 552
      %v7741 = vld [vmem:[%s7740] sm:$0xff]
      %v7743 = vsel %vm311, %v7741, 0
      %7745 = vmatpush.msra.mxu0 0.0
      %7746 = vmatpush.msra.mxu0 0.0
      %7747 = vmatpush.msra.mxu0 0.0
      %7748 = vmatpush.msra.mxu0 0.0
      %7749 = vmatpush.msra.mxu0 0.0
      %7750 = vmatpush.msra.mxu0 0.0
      %7751 = vmatpush.msra.mxu0 0.0
      %7752 = vmatpush.msra.mxu0 0.0
      %7753 = vmatpush.msra.mxu0 0.0
      %7754 = vmatpush.msra.mxu0 0.0
      %7755 = vmatpush.msra.mxu0 0.0
      %7756 = vmatpush.msra.mxu0 0.0
      %7757 = vmatpush.msra.mxu0 0.0
      %7758 = vmatpush.msra.mxu0 0.0
      %7759 = vmatpush.msra.mxu0 0.0
      %7760 = vmatpush.msra.mxu0 %v7736
      %7761 = vmatmul.f32.gmra.mxu0 %v7743
      %v7762 = vpop.f32.mrf.mxu0
      %v7763 = vadd.f32 0.0, %v7762
      %7764 = vdwg.mxu0
      %7765 = vmatpush.msra.mxu0 0.0
      %7766 = vmatpush.msra.mxu0 0.0
      %7767 = vmatpush.msra.mxu0 0.0
      %7768 = vmatpush.msra.mxu0 0.0
      %7769 = vmatpush.msra.mxu0 0.0
      %7770 = vmatpush.msra.mxu0 0.0
      %7771 = vmatpush.msra.mxu0 0.0
      %7772 = vmatpush.msra.mxu0 0.0
      %7773 = vmatpush.msra.mxu0 0.0
      %7774 = vmatpush.msra.mxu0 0.0
      %7775 = vmatpush.msra.mxu0 0.0
      %7776 = vmatpush.msra.mxu0 0.0
      %7777 = vmatpush.msra.mxu0 0.0
      %7778 = vmatpush.msra.mxu0 0.0
      %7779 = vmatpush.msra.mxu0 0.0
      %7780 = vmatpush.msra.mxu0 %v7737
      %7781 = vmatmul.f32.gmra.mxu0 %v7743
      %v7782 = vpop.f32.mrf.mxu0
      %v7783 = vadd.f32 0.0, %v7782
      %7784 = vdwg.mxu0
      %7785 = vmatpush.msra.mxu0 0.0
      %7786 = vmatpush.msra.mxu0 0.0
      %7787 = vmatpush.msra.mxu0 0.0
      %7788 = vmatpush.msra.mxu0 0.0
      %7789 = vmatpush.msra.mxu0 0.0
      %7790 = vmatpush.msra.mxu0 0.0
      %7791 = vmatpush.msra.mxu0 0.0
      %7792 = vmatpush.msra.mxu0 0.0
      %7793 = vmatpush.msra.mxu0 0.0
      %7794 = vmatpush.msra.mxu0 0.0
      %7795 = vmatpush.msra.mxu0 0.0
      %7796 = vmatpush.msra.mxu0 0.0
      %7797 = vmatpush.msra.mxu0 0.0
      %7798 = vmatpush.msra.mxu0 0.0
      %7799 = vmatpush.msra.mxu0 0.0
      %7800 = vmatpush.msra.mxu0 %v7738
      %7801 = vmatmul.f32.gmra.mxu0 %v7743
      %v7802 = vpop.f32.mrf.mxu0
      %v7803 = vadd.f32 0.0, %v7802
      %7804 = vdwg.mxu0
      %7805 = vmatpush.msra.mxu0 0.0
      %7806 = vmatpush.msra.mxu0 0.0
      %7807 = vmatpush.msra.mxu0 0.0
      %7808 = vmatpush.msra.mxu0 0.0
      %7809 = vmatpush.msra.mxu0 0.0
      %7810 = vmatpush.msra.mxu0 0.0
      %7811 = vmatpush.msra.mxu0 0.0
      %7812 = vmatpush.msra.mxu0 0.0
      %7813 = vmatpush.msra.mxu0 0.0
      %7814 = vmatpush.msra.mxu0 0.0
      %7815 = vmatpush.msra.mxu0 0.0
      %7816 = vmatpush.msra.mxu0 0.0
      %7817 = vmatpush.msra.mxu0 0.0
      %7818 = vmatpush.msra.mxu0 0.0
      %7819 = vmatpush.msra.mxu0 0.0
      %7820 = vmatpush.msra.mxu0 %v7739
      %7821 = vmatmul.f32.gmra.mxu0 %v7743
      %v7822 = vpop.f32.mrf.mxu0
      %v7823 = vadd.f32 0.0, %v7822
      %7824 = vdwg.mxu0
      %v7825 = vadd.f32 %v7720, %v7763
      %v7826 = vadd.f32 %v7721, %v7783
      %v7827 = vadd.f32 %v7722, %v7803
      %v7828 = vadd.f32 %v7723, %v7823
      %7829 = vrot.lane.b32.xlu0 %v7095, 112
      %v7830 = vpop.permute.xlu0 %7829
      %7831 = vrot.lane.b32.xlu0 %v7096, 112
      %v7832 = vpop.permute.xlu0 %7831
      %7833 = vrot.lane.b32.xlu0 %v7097, 112
      %v7834 = vpop.permute.xlu0 %7833
      %7835 = vrot.lane.b32.xlu0 %v7098, 112
      %v7836 = vpop.permute.xlu0 %7835
      %v7837 = vsel %vm1096, %v7834, %v7836
      %v7838 = vsel %vm1096, %v7832, %v7834
      %v7839 = vsel %vm1096, %v7830, %v7832
      %v7840 = vsel %vm1096, %v7836, %v7830
      %v7841 = vmul.f32 %v7839, %v4991
      %v7842 = vmul.f32 %v7838, %v4992
      %v7843 = vmul.f32 %v7837, %v4993
      %v7844 = vmul.f32 %v7840, %v4994
      %s7845 = scalar_lea.vmem %s3, 560
      %v7846 = vld [vmem:[%s7845] sm:$0xff]
      %v7848 = vsel %vm311, %v7846, 0
      %7850 = vmatpush.msra.mxu0 0.0
      %7851 = vmatpush.msra.mxu0 0.0
      %7852 = vmatpush.msra.mxu0 0.0
      %7853 = vmatpush.msra.mxu0 0.0
      %7854 = vmatpush.msra.mxu0 0.0
      %7855 = vmatpush.msra.mxu0 0.0
      %7856 = vmatpush.msra.mxu0 0.0
      %7857 = vmatpush.msra.mxu0 0.0
      %7858 = vmatpush.msra.mxu0 0.0
      %7859 = vmatpush.msra.mxu0 0.0
      %7860 = vmatpush.msra.mxu0 0.0
      %7861 = vmatpush.msra.mxu0 0.0
      %7862 = vmatpush.msra.mxu0 0.0
      %7863 = vmatpush.msra.mxu0 0.0
      %7864 = vmatpush.msra.mxu0 0.0
      %7865 = vmatpush.msra.mxu0 %v7841
      %7866 = vmatmul.f32.gmra.mxu0 %v7848
      %v7867 = vpop.f32.mrf.mxu0
      %v7868 = vadd.f32 0.0, %v7867
      %7869 = vdwg.mxu0
      %7870 = vmatpush.msra.mxu0 0.0
      %7871 = vmatpush.msra.mxu0 0.0
      %7872 = vmatpush.msra.mxu0 0.0
      %7873 = vmatpush.msra.mxu0 0.0
      %7874 = vmatpush.msra.mxu0 0.0
      %7875 = vmatpush.msra.mxu0 0.0
      %7876 = vmatpush.msra.mxu0 0.0
      %7877 = vmatpush.msra.mxu0 0.0
      %7878 = vmatpush.msra.mxu0 0.0
      %7879 = vmatpush.msra.mxu0 0.0
      %7880 = vmatpush.msra.mxu0 0.0
      %7881 = vmatpush.msra.mxu0 0.0
      %7882 = vmatpush.msra.mxu0 0.0
      %7883 = vmatpush.msra.mxu0 0.0
      %7884 = vmatpush.msra.mxu0 0.0
      %7885 = vmatpush.msra.mxu0 %v7842
      %7886 = vmatmul.f32.gmra.mxu0 %v7848
      %v7887 = vpop.f32.mrf.mxu0
      %v7888 = vadd.f32 0.0, %v7887
      %7889 = vdwg.mxu0
      %7890 = vmatpush.msra.mxu0 0.0
      %7891 = vmatpush.msra.mxu0 0.0
      %7892 = vmatpush.msra.mxu0 0.0
      %7893 = vmatpush.msra.mxu0 0.0
      %7894 = vmatpush.msra.mxu0 0.0
      %7895 = vmatpush.msra.mxu0 0.0
      %7896 = vmatpush.msra.mxu0 0.0
      %7897 = vmatpush.msra.mxu0 0.0
      %7898 = vmatpush.msra.mxu0 0.0
      %7899 = vmatpush.msra.mxu0 0.0
      %7900 = vmatpush.msra.mxu0 0.0
      %7901 = vmatpush.msra.mxu0 0.0
      %7902 = vmatpush.msra.mxu0 0.0
      %7903 = vmatpush.msra.mxu0 0.0
      %7904 = vmatpush.msra.mxu0 0.0
      %7905 = vmatpush.msra.mxu0 %v7843
      %7906 = vmatmul.f32.gmra.mxu0 %v7848
      %v7907 = vpop.f32.mrf.mxu0
      %v7908 = vadd.f32 0.0, %v7907
      %7909 = vdwg.mxu0
      %7910 = vmatpush.msra.mxu0 0.0
      %7911 = vmatpush.msra.mxu0 0.0
      %7912 = vmatpush.msra.mxu0 0.0
      %7913 = vmatpush.msra.mxu0 0.0
      %7914 = vmatpush.msra.mxu0 0.0
      %7915 = vmatpush.msra.mxu0 0.0
      %7916 = vmatpush.msra.mxu0 0.0
      %7917 = vmatpush.msra.mxu0 0.0
      %7918 = vmatpush.msra.mxu0 0.0
      %7919 = vmatpush.msra.mxu0 0.0
      %7920 = vmatpush.msra.mxu0 0.0
      %7921 = vmatpush.msra.mxu0 0.0
      %7922 = vmatpush.msra.mxu0 0.0
      %7923 = vmatpush.msra.mxu0 0.0
      %7924 = vmatpush.msra.mxu0 0.0
      %7925 = vmatpush.msra.mxu0 %v7844
      %7926 = vmatmul.f32.gmra.mxu0 %v7848
      %v7927 = vpop.f32.mrf.mxu0
      %v7928 = vadd.f32 0.0, %v7927
      %7929 = vdwg.mxu0
      %v7930 = vadd.f32 %v7825, %v7868
      %v7931 = vadd.f32 %v7826, %v7888
      %v7932 = vadd.f32 %v7827, %v7908
      %v7933 = vadd.f32 %v7828, %v7928
      %7934 = vrot.lane.b32.xlu0 %v7095, 111
      %v7935 = vpop.permute.xlu0 %7934
      %7936 = vrot.lane.b32.xlu0 %v7096, 111
      %v7937 = vpop.permute.xlu0 %7936
      %7938 = vrot.lane.b32.xlu0 %v7097, 111
      %v7939 = vpop.permute.xlu0 %7938
      %7940 = vrot.lane.b32.xlu0 %v7098, 111
      %v7941 = vpop.permute.xlu0 %7940
      %v7942 = vsel %vm1213, %v7939, %v7941
      %v7943 = vsel %vm1213, %v7937, %v7939
      %v7944 = vsel %vm1213, %v7935, %v7937
      %v7945 = vsel %vm1213, %v7941, %v7935
      %v7946 = vmul.f32 %v7944, %v5106
      %v7947 = vmul.f32 %v7943, %v5107
      %v7948 = vmul.f32 %v7942, %v5108
      %v7949 = vmul.f32 %v7945, %v5109
      %s7950 = scalar_lea.vmem %s3, 568
      %v7951 = vld [vmem:[%s7950] sm:$0xff]
      %v7953 = vsel %vm311, %v7951, 0
      %7955 = vmatpush.msra.mxu0 0.0
      %7956 = vmatpush.msra.mxu0 0.0
      %7957 = vmatpush.msra.mxu0 0.0
      %7958 = vmatpush.msra.mxu0 0.0
      %7959 = vmatpush.msra.mxu0 0.0
      %7960 = vmatpush.msra.mxu0 0.0
      %7961 = vmatpush.msra.mxu0 0.0
      %7962 = vmatpush.msra.mxu0 0.0
      %7963 = vmatpush.msra.mxu0 0.0
      %7964 = vmatpush.msra.mxu0 0.0
      %7965 = vmatpush.msra.mxu0 0.0
      %7966 = vmatpush.msra.mxu0 0.0
      %7967 = vmatpush.msra.mxu0 0.0
      %7968 = vmatpush.msra.mxu0 0.0
      %7969 = vmatpush.msra.mxu0 0.0
      %7970 = vmatpush.msra.mxu0 %v7946
      %7971 = vmatmul.f32.gmra.mxu0 %v7953
      %v7972 = vpop.f32.mrf.mxu0
      %v7973 = vadd.f32 0.0, %v7972
      %7974 = vdwg.mxu0
      %7975 = vmatpush.msra.mxu0 0.0
      %7976 = vmatpush.msra.mxu0 0.0
      %7977 = vmatpush.msra.mxu0 0.0
      %7978 = vmatpush.msra.mxu0 0.0
      %7979 = vmatpush.msra.mxu0 0.0
      %7980 = vmatpush.msra.mxu0 0.0
      %7981 = vmatpush.msra.mxu0 0.0
      %7982 = vmatpush.msra.mxu0 0.0
      %7983 = vmatpush.msra.mxu0 0.0
      %7984 = vmatpush.msra.mxu0 0.0
      %7985 = vmatpush.msra.mxu0 0.0
      %7986 = vmatpush.msra.mxu0 0.0
      %7987 = vmatpush.msra.mxu0 0.0
      %7988 = vmatpush.msra.mxu0 0.0
      %7989 = vmatpush.msra.mxu0 0.0
      %7990 = vmatpush.msra.mxu0 %v7947
      %7991 = vmatmul.f32.gmra.mxu0 %v7953
      %v7992 = vpop.f32.mrf.mxu0
      %v7993 = vadd.f32 0.0, %v7992
      %7994 = vdwg.mxu0
      %7995 = vmatpush.msra.mxu0 0.0
      %7996 = vmatpush.msra.mxu0 0.0
      %7997 = vmatpush.msra.mxu0 0.0
      %7998 = vmatpush.msra.mxu0 0.0
      %7999 = vmatpush.msra.mxu0 0.0
      %8000 = vmatpush.msra.mxu0 0.0
      %8001 = vmatpush.msra.mxu0 0.0
      %8002 = vmatpush.msra.mxu0 0.0
      %8003 = vmatpush.msra.mxu0 0.0
      %8004 = vmatpush.msra.mxu0 0.0
      %8005 = vmatpush.msra.mxu0 0.0
      %8006 = vmatpush.msra.mxu0 0.0
      %8007 = vmatpush.msra.mxu0 0.0
      %8008 = vmatpush.msra.mxu0 0.0
      %8009 = vmatpush.msra.mxu0 0.0
      %8010 = vmatpush.msra.mxu0 %v7948
      %8011 = vmatmul.f32.gmra.mxu0 %v7953
      %v8012 = vpop.f32.mrf.mxu0
      %v8013 = vadd.f32 0.0, %v8012
      %8014 = vdwg.mxu0
      %8015 = vmatpush.msra.mxu0 0.0
      %8016 = vmatpush.msra.mxu0 0.0
      %8017 = vmatpush.msra.mxu0 0.0
      %8018 = vmatpush.msra.mxu0 0.0
      %8019 = vmatpush.msra.mxu0 0.0
      %8020 = vmatpush.msra.mxu0 0.0
      %8021 = vmatpush.msra.mxu0 0.0
      %8022 = vmatpush.msra.mxu0 0.0
      %8023 = vmatpush.msra.mxu0 0.0
      %8024 = vmatpush.msra.mxu0 0.0
      %8025 = vmatpush.msra.mxu0 0.0
      %8026 = vmatpush.msra.mxu0 0.0
      %8027 = vmatpush.msra.mxu0 0.0
      %8028 = vmatpush.msra.mxu0 0.0
      %8029 = vmatpush.msra.mxu0 0.0
      %8030 = vmatpush.msra.mxu0 %v7949
      %8031 = vmatmul.f32.gmra.mxu0 %v7953
      %v8032 = vpop.f32.mrf.mxu0
      %v8033 = vadd.f32 0.0, %v8032
      %8034 = vdwg.mxu0
      %v8035 = vadd.f32 %v7930, %v7973
      %v8036 = vadd.f32 %v7931, %v7993
      %v8037 = vadd.f32 %v7932, %v8013
      %v8038 = vadd.f32 %v7933, %v8033
      %v8039 = vmax.f32 %v8035, 0.0
      %v8040 = vmax.f32 %v8036, 0.0
      %v8041 = vmax.f32 %v8037, 0.0
      %v8042 = vmax.f32 %v8038, 0.0
      %8043 = vst [vmem:[%s262] sm:$0xff] %v8039
      %8044 = vst [vmem:[%s262 + $0x8] sm:$0xff] %v8040
      %8045 = vst [vmem:[%s262 + $0x10] sm:$0xff] %v8041
      %8046 = vst [vmem:[%s262 + $0x18] sm:$0xff] %v8042
      %s8047 = smul.u32 4, %s19
      %p8048 = scmp.lt.s32.totalorder %s8047, 7
      %s8049 = scalar_select %p8048, %s8047, 7
      %s8050 = smul.addr %s8049, 8
      %s8051 = scalar_lea.vmem %s5, %s8050
      %s8052 = smul.u32 4, %s19
      %p8053 = scmp.lt.s32.totalorder %s8052, 7
      %s8054 = scalar_select %p8053, %s8052, 7
      %s8055 = smul.addr %s8054, 8
      %s8056 = scalar_lea.vmem %s6, %s8055
      // Predicated region
      $region41: #{proximal_mapping_forward.1} parent=39 // pred_check
        %p8057 = pneg %p147
      $region42: #{proximal_mapping_forward.1} parent=39 // pred_check_branch
        %8059 = sbr.rel (%p8057) target = $region44
      $region43: #{proximal_mapping_forward.1} parent=39 // pred_region
        %s8060 = smul.u32 4, %s19
      $region44: #{proximal_mapping_forward.1} parent=39 // pred_fallthru
        _
      // Predicated region
      $region45: #{proximal_mapping_forward.1} parent=39 // pred_check
        %p8061 = pneg %p173
      $region46: #{proximal_mapping_forward.1} parent=39 // pred_check_branch
        %8063 = sbr.rel (%p8061) target = $region48
      $region47: #{proximal_mapping_forward.1} parent=39 // pred_region
        %s8064 = smul.u32 4, %s19
      $region48: #{proximal_mapping_forward.1} parent=39 // pred_fallthru
        _
    $region40: #{proximal_mapping_forward.1} parent=5 // pred_fallthru
      _
    %p8065 = scmp.le.s32.totalorder 2, %s14
    // Predicated region
    $region49: #{proximal_mapping_forward.1} parent=5 // pred_check
      %p8066 = pneg %p8065
    $region50: #{proximal_mapping_forward.1} parent=5 // pred_check_branch
      %8068 = sbr.rel (%p8066) target = $region52
    $region51: #{proximal_mapping_forward.1} parent=5 // pred_region
      %s8069 = ssub.s32 %s14, 2
      // Predicated region
      $region53: #{proximal_mapping_forward.1} parent=51 // pred_check
        %p8070 = pneg %p153
      $region54: #{proximal_mapping_forward.1} parent=51 // pred_check_branch
        %8072 = sbr.rel (%p8070) target = $region56
      $region55: #{proximal_mapping_forward.1} parent=51 // pred_region
        %s8073 = smul.u32 4, %s20
        %p8074 = scmp.lt.s32.totalorder %s8073, 7
        %s8075 = scalar_select %p8074, %s8073, 7
        %s8076 = smul.addr %s8075, 8
        %s8077 = scalar_lea.vmem %s5, %s8076
      $region56: #{proximal_mapping_forward.1} parent=51 // pred_fallthru
        _
      // Predicated region
      $region57: #{proximal_mapping_forward.1} parent=51 // pred_check
        %p8078 = pneg %p179
      $region58: #{proximal_mapping_forward.1} parent=51 // pred_check_branch
        %8080 = sbr.rel (%p8078) target = $region60
      $region59: #{proximal_mapping_forward.1} parent=51 // pred_region
        %s8081 = smul.u32 4, %s20
        %p8082 = scmp.lt.s32.totalorder %s8081, 7
        %s8083 = scalar_select %p8082, %s8081, 7
        %s8084 = smul.addr %s8083, 8
        %s8085 = scalar_lea.vmem %s6, %s8084
      $region60: #{proximal_mapping_forward.1} parent=51 // pred_fallthru
        _
    $region52: #{proximal_mapping_forward.1} parent=5 // pred_fallthru
      _
  $region6: #{proximal_mapping_forward.1} parent=0 // loop_footer
    %s18 = sadd.s32 1, %s14
  $region7: #{proximal_mapping_forward.1} parent=0 // loop_footer_branch
    %13 = sbr.rel target = $region3
  $region8: #{proximal_mapping_forward.1} parent=0 // loop_exit
    _

</llo_original>
